<compile_context>
chip_gen: v7x
topology: tpu7x:2x2x1
jax: 0.10.0
libtpu: 0.0.40
codegen_flags: <defaults>
</compile_context>

<pallas_src>
import functools

import numpy as np

import jax
import jax.numpy as jnp
from jax.experimental import pallas as pl
from jax.experimental.pallas import tpu as pltpu


# ---------------------------------------------------------------------------
# Megakernel
# ---------------------------------------------------------------------------
def _rcan_kernel(x_ref, whead_ref, bhead_ref, wmain_ref, bmain_ref,
                 caw1_ref, cab1_ref, caw2_ref, cab2_ref,
                 wup_ref, bup_ref, wtail_ref, btail_ref, o_ref, *,
                 n_resgroups, n_resblocks, n_feats, H, W, r):
    C = n_feats

    def conv(xv, w0, w1, w2, b, relu=False):
        """3x3 conv (stride 1, pad 1) on a lane-dense (rows, width*Cin) value.

        w_dy are block-tridiagonal (width*Cin, width*Cout) matrices: the
        W-direction taps and W zero-padding are absorbed into the band
        structure, so only the H-direction taps need sublane row shifts.
        """
        zero_row = jnp.zeros((1, xv.shape[1]), jnp.float32)
        x_dn = jnp.concatenate([zero_row, xv[:-1]], axis=0)   # row h -> x[h-1]
        x_up = jnp.concatenate([xv[1:], zero_row], axis=0)    # row h -> x[h+1]
        y = (jnp.dot(x_dn, w0, preferred_element_type=jnp.float32)
             + jnp.dot(xv, w1, preferred_element_type=jnp.float32)
             + jnp.dot(x_up, w2, preferred_element_type=jnp.float32)
             + b)
        return jnp.maximum(y, 0.0) if relu else y

    def ca(xv, w1t, b1, w2, b2):
        """Channel attention on the lane-dense layout (VPU/XLU only, no MXU).

        w1t: (C//red, C) [transposed FC1], b1: (C//red, 1),
        w2:  (C//red, C), b2: (1, C).
        """
        col_mean = jnp.mean(xv, axis=0, keepdims=True)            # (1, W*C)
        pooled = col_mean[:, :C]
        for w_ in range(1, W):                                    # avg over W
            pooled = pooled + col_mean[:, w_ * C:(w_ + 1) * C]
        pooled = pooled * (1.0 / W)                               # (1, C)
        y = jnp.sum(w1t * pooled, axis=1, keepdims=True) + b1     # (C//red, 1)
        y = jnp.maximum(y, 0.0)
        s = jnp.sum(y * w2, axis=0, keepdims=True) + b2           # (1, C)
        s = jax.nn.sigmoid(s)
        scale = jnp.concatenate([s] * W, axis=1)                  # (1, W*C)
        return xv * scale

    x = x_ref[0].astype(jnp.float32)                              # (H, W*in_ch)

    # head conv
    h = conv(x, whead_ref[0], whead_ref[1], whead_ref[2], bhead_ref[...])

    # body: residual groups of RCABs
    li = 0          # index into stacked n_feats->n_feats conv weights
    bi = 0          # index into stacked CA weights
    res = h
    for _ in range(n_resgroups):
        gin = res
        cur = gin
        for _ in range(n_resblocks):                              # RCAB
            t = conv(cur, wmain_ref[li, 0], wmain_ref[li, 1], wmain_ref[li, 2],
                     bmain_ref[li], relu=True)
            li += 1
            t = conv(t, wmain_ref[li, 0], wmain_ref[li, 1], wmain_ref[li, 2],
                     bmain_ref[li])
            li += 1
            t = ca(t, caw1_ref[bi], cab1_ref[bi], caw2_ref[bi], cab2_ref[bi])
            bi += 1
            cur = cur + t
        cur = conv(cur, wmain_ref[li, 0], wmain_ref[li, 1], wmain_ref[li, 2],
                   bmain_ref[li])                                 # group tail
        li += 1
        res = gin + cur
    res = conv(res, wmain_ref[li, 0], wmain_ref[li, 1], wmain_ref[li, 2],
               bmain_ref[li])                                     # body tail
    li += 1
    res = res + h                                                 # global res

    # upsampler conv; output columns were pre-permuted in the wrapper so that
    # PixelShuffle(r) is a plain reshape of the lane-dense value.
    u = conv(res, wup_ref[0], wup_ref[1], wup_ref[2], bup_ref[...])
    hr = u.reshape(H, r, r * W * C).reshape(H * r, r * W * C)     # (H*r, W*r*C)

    # hi-res tail conv (n_feats -> in_channels)
    out = conv(hr, wtail_ref[0], wtail_ref[1], wtail_ref[2], btail_ref[...])
    o_ref[0] = out.astype(o_ref.dtype)


# ---------------------------------------------------------------------------
# Weight packing: banded conv matrices + stacked parameter arrays (numpy,
# done once outside jit).
# ---------------------------------------------------------------------------
def _banded_conv_weight(w_hwio, width):
    """HWIO (3,3,Cin,Cout) -> (3, width*Cin, width*Cout) block-tridiagonal."""
    w = np.asarray(w_hwio, np.float32)
    kh, kw, cin, cout = w.shape
    M = np.zeros((kh, width * cin, width * cout), np.float32)
    for wp in range(width):
        for wo in range(width):
            dx = wp - wo + 1
            if 0 <= dx < kw:
                M[:, wp * cin:(wp + 1) * cin, wo * cout:(wo + 1) * cout] = w[:, dx]
    return M


def _lane_bias(b, width):
    return np.tile(np.asarray(b, np.float32), width)      # (width*Cout,)


def pack_rcan_params(params, *, W, scale):
    r = scale
    nf = params["head"][0].shape[-1]

    whead = _banded_conv_weight(params["head"][0], W)
    bhead = _lane_bias(params["head"][1], W)[None, :]

    wmain, bmain = [], []
    caw1, cab1, caw2, cab2 = [], [], [], []
    for g in params["groups"]:
        for blk in g["blocks"]:
            wmain.append(_banded_conv_weight(blk["w1"], W))
            bmain.append(_lane_bias(blk["b1"], W))
            wmain.append(_banded_conv_weight(blk["w2"], W))
            bmain.append(_lane_bias(blk["b2"], W))
            caw1.append(np.asarray(blk["ca_w1"], np.float32).T)        # (cr, C)
            cab1.append(np.asarray(blk["ca_b1"], np.float32)[:, None])  # (cr, 1)
            caw2.append(np.asarray(blk["ca_w2"], np.float32))           # (cr, C)
            cab2.append(np.asarray(blk["ca_b2"], np.float32)[None, :])  # (1, C)
        wmain.append(_banded_conv_weight(g["tail_w"], W))
        bmain.append(_lane_bias(g["tail_b"], W))
    wmain.append(_banded_conv_weight(params["body_tail"][0], W))
    bmain.append(_lane_bias(params["body_tail"][1], W))

    # Upsampler conv, with output columns permuted so PixelShuffle(r) becomes
    # a reshape: natural order (w, c*r*r + i*r + j) -> (i, w, j, c).
    uw, ub = params["up"]
    wup = _banded_conv_weight(uw, W)                  # (3, W*nf, W*nf*r*r)
    bup = _lane_bias(ub, W)[None, :]
    upc = nf * r * r
    perm = np.empty(W * upc, np.int64)
    for i in range(r):
        for w_ in range(W):
            for j in range(r):
                for c in range(nf):
                    new = ((i * W + w_) * r + j) * nf + c
                    old = w_ * upc + (c * r + i) * r + j
                    perm[new] = old
    wup = wup[:, :, perm]
    bup = bup[:, perm]

    Ws = W * r
    wtail = _banded_conv_weight(params["tail"][0], Ws)
    btail = _lane_bias(params["tail"][1], Ws)[None, :]

    pk = dict(
        whead=whead, bhead=bhead,
        wmain=np.stack(wmain), bmain=np.stack(bmain),
        caw1=np.stack(caw1), cab1=np.stack(cab1),
        caw2=np.stack(caw2), cab2=np.stack(cab2),
        wup=wup, bup=bup, wtail=wtail, btail=btail)
    # TODO(synk): bf16 weight storage would halve DMA / resident VMEM on
    #             v6e/v7x; kept f32 here for fidelity and v5e friendliness.
    return {k: jnp.asarray(v) for k, v in pk.items()}


# ---------------------------------------------------------------------------
# Forward wrapper (one pallas_call total)
# ---------------------------------------------------------------------------
def rcan_forward(x_nchw, packed, *, n_resgroups, n_resblocks, n_feats, in_ch,
                 scale):
    N, Cin, H, W = x_nchw.shape
    r = scale
    Hs, Ws = H * r, W * r
    out_lanes = Ws * in_ch

    # NCHW -> lane-dense (N, H, W*Cin); reshape is contiguous (free in XLA).
    x = jnp.transpose(x_nchw, (0, 2, 3, 1)).reshape(N, H, W * Cin)

    names = ["whead", "bhead", "wmain", "bmain", "caw1", "cab1", "caw2",
             "cab2", "wup", "bup", "wtail", "btail"]
    weights = [packed[k] for k in names]

    kernel = functools.partial(
        _rcan_kernel, n_resgroups=n_resgroups, n_resblocks=n_resblocks,
        n_feats=n_feats, H=H, W=W, r=r)

    def const_map(ndim):
        return lambda n: (0,) * ndim

    weight_specs = [pl.BlockSpec(a.shape, const_map(a.ndim)) for a in weights]

    out = pl.pallas_call(
        kernel,
        out_shape=jax.ShapeDtypeStruct((N, Hs, out_lanes), x_nchw.dtype),
        grid=(N,),
        in_specs=[pl.BlockSpec((1, H, W * Cin), lambda n: (n, 0, 0))]
                 + weight_specs,
        out_specs=pl.BlockSpec((1, Hs, out_lanes), lambda n: (n, 0, 0)),
        compiler_params=pltpu.CompilerParams(
            dimension_semantics=("parallel",),
            vmem_limit_bytes=32 * 1024 * 1024),
    )(x, *weights)

    # lane-dense (N, Hs, Ws*in_ch) -> NCHW
    out = out.reshape(N, Hs, Ws, in_ch)
    return jnp.transpose(out, (0, 3, 1, 2))


# ---------------------------------------------------------------------------
# Parameter construction (deterministic, synthetic)
# ---------------------------------------------------------------------------
def _init_conv(key, cin, cout, k=3, scale=0.1):
    kw, kb = jax.random.split(key)
    w = jax.random.normal(kw, (k, k, cin, cout), jnp.float32) * scale
    b = jax.random.normal(kb, (cout,), jnp.float32) * scale
    return w, b


def init_rcan_params(key, *, in_channels, n_feats, n_resgroups, n_resblocks,
                     reduction, scale):
    keys = iter(jax.random.split(key, 1024))
    params = {}
    params["head"] = _init_conv(next(keys), in_channels, n_feats)

    groups = []
    for _ in range(n_resgroups):
        blocks = []
        for _ in range(n_resblocks):
            w1, b1 = _init_conv(next(keys), n_feats, n_feats)
            w2, b2 = _init_conv(next(keys), n_feats, n_feats)
            cr = n_feats // reduction
            k1, k2, k3, k4 = jax.random.split(next(keys), 4)
            # NOTE: real PyTorch CA layers are 1x1 convs with (Cout, Cin, 1, 1)
            # weights — a loader would need a transpose; here the synthetic
            # (Cin, Cout) convention is used consistently by kernel + reference.
            blocks.append(dict(
                w1=w1, b1=b1, w2=w2, b2=b2,
                ca_w1=jax.random.normal(k1, (n_feats, cr), jnp.float32) * 0.1,
                ca_b1=jax.random.normal(k2, (cr,), jnp.float32) * 0.1,
                ca_w2=jax.random.normal(k3, (cr, n_feats), jnp.float32) * 0.1,
                ca_b2=jax.random.normal(k4, (n_feats,), jnp.float32) * 0.1,
            ))
        gw, gb = _init_conv(next(keys), n_feats, n_feats)
        groups.append(dict(blocks=blocks, tail_w=gw, tail_b=gb))
    params["groups"] = groups

    params["body_tail"] = _init_conv(next(keys), n_feats, n_feats)

    # PixelUpSampler (EDSR style): scale=2 -> conv(n_feats, 4*n_feats) + shuffle
    assert scale == 2, "this synthetic setup uses upscale_factor=2"
    params["up"] = _init_conv(next(keys), n_feats, n_feats * scale * scale)
    params["tail"] = _init_conv(next(keys), n_feats, in_channels)
    return params


# ---------------------------------------------------------------------------
# Pure-XLA reference (used only for a numerical self-check in __main__)
# ---------------------------------------------------------------------------
def _conv3x3_ref(x, w, b):
    y = jax.lax.conv_general_dilated(
        x, w, window_strides=(1, 1), padding="SAME",
        dimension_numbers=("NHWC", "HWIO", "NHWC"),
        precision=jax.lax.Precision.HIGHEST)
    return y + b


def rcan_reference(x_nchw, params, scale):
    hp = jax.lax.Precision.HIGHEST
    x = jnp.transpose(x_nchw, (0, 2, 3, 1))
    h = _conv3x3_ref(x, *params["head"])
    res = h
    for g in params["groups"]:
        gin = res
        cur = gin
        for blk in g["blocks"]:
            t = jax.nn.relu(_conv3x3_ref(cur, blk["w1"], blk["b1"]))
            t = _conv3x3_ref(t, blk["w2"], blk["b2"])
            pooled = jnp.mean(t, axis=(1, 2), keepdims=True)
            a = jax.nn.relu(jnp.einsum("nxyc,cr->nxyr", pooled, blk["ca_w1"],
                                       precision=hp) + blk["ca_b1"])
            a = jax.nn.sigmoid(jnp.einsum("nxyr,rc->nxyc", a, blk["ca_w2"],
                                          precision=hp) + blk["ca_b2"])
            cur = cur + t * a
        cur = _conv3x3_ref(cur, g["tail_w"], g["tail_b"])
        res = gin + cur
    res = _conv3x3_ref(res, *params["body_tail"]) + h
    u = _conv3x3_ref(res, *params["up"])
    N, H, W, Crr = u.shape
    r = scale
    C = Crr // (r * r)
    u = u.reshape(N, H, W, C, r, r).transpose(0, 1, 4, 2, 5, 3)
    u = u.reshape(N, H * r, W * r, C)
    t = _conv3x3_ref(u, *params["tail"])
    return jnp.transpose(t, (0, 3, 1, 2))


# ---------------------------------------------------------------------------
if __name__ == "__main__":
    key = jax.random.PRNGKey(0)
    k_params, k_x = jax.random.split(key)

    cfg = dict(in_channels=3, n_feats=16, n_resgroups=2, n_resblocks=2,
               reduction=4, scale=2)
    params = init_rcan_params(k_params, **cfg)
    x = jax.random.normal(k_x, (2, 3, 8, 8), jnp.float32)   # NCHW input

    packed = pack_rcan_params(params, W=8, scale=2)
    fwd = jax.jit(functools.partial(
        rcan_forward, n_resgroups=2, n_resblocks=2, n_feats=16, in_ch=3,
        scale=2))
    out = jax.block_until_ready(fwd(x, packed))
    assert out.shape == (2, 3, 16, 16), out.shape

    # numerical self-check against a pure-XLA reference of the same forward
    ref = jax.block_until_ready(
        jax.jit(functools.partial(rcan_reference, scale=2))(x, params))
    np.testing.assert_allclose(np.asarray(out), np.asarray(ref),
                               rtol=5e-2, atol=5e-2)
    print("KERNEL_OK")
</pallas_src>

<mosaic_0001>
module attributes {stable_mosaic.version = 11 : i64} {
  func.func @_rcan_kernel(%arg0: i32, %arg1: memref<1x8x24xf32, #tpu.memory_space<vmem>>, %arg2: memref<3x24x128xf32, #tpu.memory_space<vmem>>, %arg3: memref<1x128xf32, #tpu.memory_space<vmem>>, %arg4: memref<11x3x128x128xf32, #tpu.memory_space<vmem>>, %arg5: memref<11x128xf32, #tpu.memory_space<vmem>>, %arg6: memref<4x4x16xf32, #tpu.memory_space<vmem>>, %arg7: memref<4x4x1xf32, #tpu.memory_space<vmem>>, %arg8: memref<4x4x16xf32, #tpu.memory_space<vmem>>, %arg9: memref<4x1x16xf32, #tpu.memory_space<vmem>>, %arg10: memref<3x128x512xf32, #tpu.memory_space<vmem>>, %arg11: memref<1x512xf32, #tpu.memory_space<vmem>>, %arg12: memref<3x256x48xf32, #tpu.memory_space<vmem>>, %arg13: memref<1x48xf32, #tpu.memory_space<vmem>>, %arg14: memref<1x16x48xf32, #tpu.memory_space<vmem>>) attributes {dimension_semantics = [#tpu.dimension_semantics<parallel>], iteration_bounds = array<i64: 2>, scalar_prefetch = 0 : i64, scratch_operands = 0 : i64, tpu.core_type = #tpu.core_type<tc>, window_params = [{transform_indices = @transform_0, window_bounds = array<i64: 1, 8, 24>}, {pipeline_mode = #tpu.pipeline_mode<synchronous>, transform_indices = @transform_1, window_bounds = array<i64: 3, 24, 128>}, {pipeline_mode = #tpu.pipeline_mode<synchronous>, transform_indices = @transform_2, window_bounds = array<i64: 1, 128>}, {pipeline_mode = #tpu.pipeline_mode<synchronous>, transform_indices = @transform_3, window_bounds = array<i64: 11, 3, 128, 128>}, {pipeline_mode = #tpu.pipeline_mode<synchronous>, transform_indices = @transform_4, window_bounds = array<i64: 11, 128>}, {pipeline_mode = #tpu.pipeline_mode<synchronous>, transform_indices = @transform_5, window_bounds = array<i64: 4, 4, 16>}, {pipeline_mode = #tpu.pipeline_mode<synchronous>, transform_indices = @transform_6, window_bounds = array<i64: 4, 4, 1>}, {pipeline_mode = #tpu.pipeline_mode<synchronous>, transform_indices = @transform_7, window_bounds = array<i64: 4, 4, 16>}, {pipeline_mode = #tpu.pipeline_mode<synchronous>, transform_indices = @transform_8, window_bounds = array<i64: 4, 1, 16>}, {pipeline_mode = #tpu.pipeline_mode<synchronous>, transform_indices = @transform_9, window_bounds = array<i64: 3, 128, 512>}, {pipeline_mode = #tpu.pipeline_mode<synchronous>, transform_indices = @transform_10, window_bounds = array<i64: 1, 512>}, {pipeline_mode = #tpu.pipeline_mode<synchronous>, transform_indices = @transform_11, window_bounds = array<i64: 3, 256, 48>}, {pipeline_mode = #tpu.pipeline_mode<synchronous>, transform_indices = @transform_12, window_bounds = array<i64: 1, 48>}, {transform_indices = @transform_13, window_bounds = array<i64: 1, 16, 48>}]} {
    %c0 = arith.constant 0 : index
    %c0_0 = arith.constant 0 : index
    %c0_1 = arith.constant 0 : index
    %0 = vector.load %arg1[%c0, %c0_0, %c0_1] : memref<1x8x24xf32, #tpu.memory_space<vmem>>, vector<1x8x24xf32>
    %1 = vector.shape_cast %0 : vector<1x8x24xf32> to vector<8x24xf32>
    %c0_2 = arith.constant 0 : index
    %c0_3 = arith.constant 0 : index
    %c0_4 = arith.constant 0 : index
    %2 = vector.load %arg2[%c0_2, %c0_3, %c0_4] : memref<3x24x128xf32, #tpu.memory_space<vmem>>, vector<1x24x128xf32>
    %3 = vector.shape_cast %2 : vector<1x24x128xf32> to vector<24x128xf32>
    %c1 = arith.constant 1 : index
    %c0_5 = arith.constant 0 : index
    %c0_6 = arith.constant 0 : index
    %4 = vector.load %arg2[%c1, %c0_5, %c0_6] : memref<3x24x128xf32, #tpu.memory_space<vmem>>, vector<1x24x128xf32>
    %5 = vector.shape_cast %4 : vector<1x24x128xf32> to vector<24x128xf32>
    %c2 = arith.constant 2 : index
    %c0_7 = arith.constant 0 : index
    %c0_8 = arith.constant 0 : index
    %6 = vector.load %arg2[%c2, %c0_7, %c0_8] : memref<3x24x128xf32, #tpu.memory_space<vmem>>, vector<1x24x128xf32>
    %7 = vector.shape_cast %6 : vector<1x24x128xf32> to vector<24x128xf32>
    %c0_9 = arith.constant 0 : index
    %c0_10 = arith.constant 0 : index
    %8 = vector.load %arg3[%c0_9, %c0_10] : memref<1x128xf32, #tpu.memory_space<vmem>>, vector<1x128xf32>
    %cst = arith.constant 0.000000e+00 : f32
    %9 = vector.broadcast %cst : f32 to vector<1x24xf32>
    %10 = vector.extract_strided_slice %1 {offsets = [0, 0], sizes = [7, 24], strides = [1, 1]} : vector<8x24xf32> to vector<7x24xf32>
    %11 = tpu.concatenate %9, %10 in 0 : vector<1x24xf32>, vector<7x24xf32> -> vector<8x24xf32>
    %12 = vector.extract_strided_slice %1 {offsets = [1, 0], sizes = [7, 24], strides = [1, 1]} : vector<8x24xf32> to vector<7x24xf32>
    %13 = tpu.concatenate %12, %9 in 0 : vector<7x24xf32>, vector<1x24xf32> -> vector<8x24xf32>
    %cst_11 = arith.constant dense<0.000000e+00> : vector<8x128xf32>
    %14 = tpu.matmul %11, %3, %cst_11 {dimension_numbers = #tpu.dot_dimension_numbers<[1], [0], [0], [1], [0, 0, 1, 1], [], []>} : vector<8x24xf32>, vector<24x128xf32>, vector<8x128xf32> -> vector<8x128xf32>
    %cst_12 = arith.constant dense<0.000000e+00> : vector<8x128xf32>
    %15 = tpu.matmul %1, %5, %cst_12 {dimension_numbers = #tpu.dot_dimension_numbers<[1], [0], [0], [1], [0, 0, 1, 1], [], []>} : vector<8x24xf32>, vector<24x128xf32>, vector<8x128xf32> -> vector<8x128xf32>
    %16 = arith.addf %14, %15 : vector<8x128xf32>
    %cst_13 = arith.constant dense<0.000000e+00> : vector<8x128xf32>
    %17 = tpu.matmul %13, %7, %cst_13 {dimension_numbers = #tpu.dot_dimension_numbers<[1], [0], [0], [1], [0, 0, 1, 1], [], []>} : vector<8x24xf32>, vector<24x128xf32>, vector<8x128xf32> -> vector<8x128xf32>
    %18 = arith.addf %16, %17 : vector<8x128xf32>
    %19 = vector.broadcast %8 : vector<1x128xf32> to vector<8x128xf32>
    %20 = arith.addf %18, %19 : vector<8x128xf32>
    %c0_14 = arith.constant 0 : index
    %c0_15 = arith.constant 0 : index
    %c0_16 = arith.constant 0 : index
    %c0_17 = arith.constant 0 : index
    %21 = vector.load %arg4[%c0_14, %c0_15, %c0_16, %c0_17] : memref<11x3x128x128xf32, #tpu.memory_space<vmem>>, vector<1x1x128x128xf32>
    %22 = vector.shape_cast %21 : vector<1x1x128x128xf32> to vector<128x128xf32>
    %c0_18 = arith.constant 0 : index
    %c1_19 = arith.constant 1 : index
    %c0_20 = arith.constant 0 : index
    %c0_21 = arith.constant 0 : index
    %23 = vector.load %arg4[%c0_18, %c1_19, %c0_20, %c0_21] : memref<11x3x128x128xf32, #tpu.memory_space<vmem>>, vector<1x1x128x128xf32>
    %24 = vector.shape_cast %23 : vector<1x1x128x128xf32> to vector<128x128xf32>
    %c0_22 = arith.constant 0 : index
    %c2_23 = arith.constant 2 : index
    %c0_24 = arith.constant 0 : index
    %c0_25 = arith.constant 0 : index
    %25 = vector.load %arg4[%c0_22, %c2_23, %c0_24, %c0_25] : memref<11x3x128x128xf32, #tpu.memory_space<vmem>>, vector<1x1x128x128xf32>
    %26 = vector.shape_cast %25 : vector<1x1x128x128xf32> to vector<128x128xf32>
    %c0_26 = arith.constant 0 : index
    %c0_27 = arith.constant 0 : index
    %27 = vector.load %arg5[%c0_26, %c0_27] : memref<11x128xf32, #tpu.memory_space<vmem>>, vector<1x128xf32>
    %28 = vector.shape_cast %27 : vector<1x128xf32> to vector<128xf32>
    %cst_28 = arith.constant 0.000000e+00 : f32
    %29 = vector.broadcast %cst_28 : f32 to vector<1x128xf32>
    %30 = vector.extract_strided_slice %20 {offsets = [0, 0], sizes = [7, 128], strides = [1, 1]} : vector<8x128xf32> to vector<7x128xf32>
    %31 = tpu.concatenate %29, %30 in 0 : vector<1x128xf32>, vector<7x128xf32> -> vector<8x128xf32>
    %32 = vector.extract_strided_slice %20 {offsets = [1, 0], sizes = [7, 128], strides = [1, 1]} : vector<8x128xf32> to vector<7x128xf32>
    %33 = tpu.concatenate %32, %29 in 0 : vector<7x128xf32>, vector<1x128xf32> -> vector<8x128xf32>
    %cst_29 = arith.constant dense<0.000000e+00> : vector<8x128xf32>
    %34 = tpu.matmul %31, %22, %cst_29 {dimension_numbers = #tpu.dot_dimension_numbers<[1], [0], [0], [1], [0, 0, 1, 1], [], []>} : vector<8x128xf32>, vector<128x128xf32>, vector<8x128xf32> -> vector<8x128xf32>
    %cst_30 = arith.constant dense<0.000000e+00> : vector<8x128xf32>
    %35 = tpu.matmul %20, %24, %cst_30 {dimension_numbers = #tpu.dot_dimension_numbers<[1], [0], [0], [1], [0, 0, 1, 1], [], []>} : vector<8x128xf32>, vector<128x128xf32>, vector<8x128xf32> -> vector<8x128xf32>
    %36 = arith.addf %34, %35 : vector<8x128xf32>
    %cst_31 = arith.constant dense<0.000000e+00> : vector<8x128xf32>
    %37 = tpu.matmul %33, %26, %cst_31 {dimension_numbers = #tpu.dot_dimension_numbers<[1], [0], [0], [1], [0, 0, 1, 1], [], []>} : vector<8x128xf32>, vector<128x128xf32>, vector<8x128xf32> -> vector<8x128xf32>
    %38 = arith.addf %36, %37 : vector<8x128xf32>
    %39 = vector.shape_cast %28 : vector<128xf32> to vector<1x128xf32>
    %40 = vector.broadcast %39 : vector<1x128xf32> to vector<8x128xf32>
    %41 = arith.addf %38, %40 : vector<8x128xf32>
    %cst_32 = arith.constant 0.000000e+00 : f32
    %42 = vector.broadcast %cst_32 : f32 to vector<8x128xf32>
    %43 = arith.maximumf %41, %42 : vector<8x128xf32>
    %c1_33 = arith.constant 1 : index
    %c0_34 = arith.constant 0 : index
    %c0_35 = arith.constant 0 : index
    %c0_36 = arith.constant 0 : index
    %44 = vector.load %arg4[%c1_33, %c0_34, %c0_35, %c0_36] : memref<11x3x128x128xf32, #tpu.memory_space<vmem>>, vector<1x1x128x128xf32>
    %45 = vector.shape_cast %44 : vector<1x1x128x128xf32> to vector<128x128xf32>
    %c1_37 = arith.constant 1 : index
    %c1_38 = arith.constant 1 : index
    %c0_39 = arith.constant 0 : index
    %c0_40 = arith.constant 0 : index
    %46 = vector.load %arg4[%c1_37, %c1_38, %c0_39, %c0_40] : memref<11x3x128x128xf32, #tpu.memory_space<vmem>>, vector<1x1x128x128xf32>
    %47 = vector.shape_cast %46 : vector<1x1x128x128xf32> to vector<128x128xf32>
    %c1_41 = arith.constant 1 : index
    %c2_42 = arith.constant 2 : index
    %c0_43 = arith.constant 0 : index
    %c0_44 = arith.constant 0 : index
    %48 = vector.load %arg4[%c1_41, %c2_42, %c0_43, %c0_44] : memref<11x3x128x128xf32, #tpu.memory_space<vmem>>, vector<1x1x128x128xf32>
    %49 = vector.shape_cast %48 : vector<1x1x128x128xf32> to vector<128x128xf32>
    %c1_45 = arith.constant 1 : index
    %c0_46 = arith.constant 0 : index
    %50 = vector.load %arg5[%c1_45, %c0_46] : memref<11x128xf32, #tpu.memory_space<vmem>>, vector<1x128xf32>
    %51 = vector.shape_cast %50 : vector<1x128xf32> to vector<128xf32>
    %cst_47 = arith.constant 0.000000e+00 : f32
    %52 = vector.broadcast %cst_47 : f32 to vector<1x128xf32>
    %53 = vector.extract_strided_slice %43 {offsets = [0, 0], sizes = [7, 128], strides = [1, 1]} : vector<8x128xf32> to vector<7x128xf32>
    %54 = tpu.concatenate %52, %53 in 0 : vector<1x128xf32>, vector<7x128xf32> -> vector<8x128xf32>
    %55 = vector.extract_strided_slice %43 {offsets = [1, 0], sizes = [7, 128], strides = [1, 1]} : vector<8x128xf32> to vector<7x128xf32>
    %56 = tpu.concatenate %55, %52 in 0 : vector<7x128xf32>, vector<1x128xf32> -> vector<8x128xf32>
    %cst_48 = arith.constant dense<0.000000e+00> : vector<8x128xf32>
    %57 = tpu.matmul %54, %45, %cst_48 {dimension_numbers = #tpu.dot_dimension_numbers<[1], [0], [0], [1], [0, 0, 1, 1], [], []>} : vector<8x128xf32>, vector<128x128xf32>, vector<8x128xf32> -> vector<8x128xf32>
    %cst_49 = arith.constant dense<0.000000e+00> : vector<8x128xf32>
    %58 = tpu.matmul %43, %47, %cst_49 {dimension_numbers = #tpu.dot_dimension_numbers<[1], [0], [0], [1], [0, 0, 1, 1], [], []>} : vector<8x128xf32>, vector<128x128xf32>, vector<8x128xf32> -> vector<8x128xf32>
    %59 = arith.addf %57, %58 : vector<8x128xf32>
    %cst_50 = arith.constant dense<0.000000e+00> : vector<8x128xf32>
    %60 = tpu.matmul %56, %49, %cst_50 {dimension_numbers = #tpu.dot_dimension_numbers<[1], [0], [0], [1], [0, 0, 1, 1], [], []>} : vector<8x128xf32>, vector<128x128xf32>, vector<8x128xf32> -> vector<8x128xf32>
    %61 = arith.addf %59, %60 : vector<8x128xf32>
    %62 = vector.shape_cast %51 : vector<128xf32> to vector<1x128xf32>
    %63 = vector.broadcast %62 : vector<1x128xf32> to vector<8x128xf32>
    %64 = arith.addf %61, %63 : vector<8x128xf32>
    %c0_51 = arith.constant 0 : index
    %c0_52 = arith.constant 0 : index
    %c0_53 = arith.constant 0 : index
    %65 = vector.load %arg6[%c0_51, %c0_52, %c0_53] : memref<4x4x16xf32, #tpu.memory_space<vmem>>, vector<1x4x16xf32>
    %66 = vector.shape_cast %65 : vector<1x4x16xf32> to vector<4x16xf32>
    %c0_54 = arith.constant 0 : index
    %c0_55 = arith.constant 0 : index
    %c0_56 = arith.constant 0 : index
    %67 = vector.load %arg7[%c0_54, %c0_55, %c0_56] : memref<4x4x1xf32, #tpu.memory_space<vmem>>, vector<1x4x1xf32>
    %68 = vector.shape_cast %67 : vector<1x4x1xf32> to vector<4x1xf32>
    %c0_57 = arith.constant 0 : index
    %c0_58 = arith.constant 0 : index
    %c0_59 = arith.constant 0 : index
    %69 = vector.load %arg8[%c0_57, %c0_58, %c0_59] : memref<4x4x16xf32, #tpu.memory_space<vmem>>, vector<1x4x16xf32>
    %70 = vector.shape_cast %69 : vector<1x4x16xf32> to vector<4x16xf32>
    %c0_60 = arith.constant 0 : index
    %c0_61 = arith.constant 0 : index
    %c0_62 = arith.constant 0 : index
    %71 = vector.load %arg9[%c0_60, %c0_61, %c0_62] : memref<4x1x16xf32, #tpu.memory_space<vmem>>, vector<1x1x16xf32>
    %72 = vector.shape_cast %71 : vector<1x1x16xf32> to vector<1x16xf32>
    %cst_63 = arith.constant dense<0.000000e+00> : vector<128xf32>
    %73 = vector.multi_reduction <add>, %64, %cst_63 [0] : vector<8x128xf32> to vector<128xf32>
    %74 = vector.shape_cast %73 : vector<128xf32> to vector<1x128xf32>
    %cst_64 = arith.constant 8.000000e+00 : f32
    %75 = vector.broadcast %cst_64 : f32 to vector<1x128xf32>
    %76 = arith.divf %74, %75 : vector<1x128xf32>
    %77 = vector.extract_strided_slice %76 {offsets = [0, 0], sizes = [1, 16], strides = [1, 1]} : vector<1x128xf32> to vector<1x16xf32>
    %78 = vector.extract_strided_slice %76 {offsets = [0, 16], sizes = [1, 16], strides = [1, 1]} : vector<1x128xf32> to vector<1x16xf32>
    %79 = arith.addf %77, %78 : vector<1x16xf32>
    %80 = vector.extract_strided_slice %76 {offsets = [0, 32], sizes = [1, 16], strides = [1, 1]} : vector<1x128xf32> to vector<1x16xf32>
    %81 = arith.addf %79, %80 : vector<1x16xf32>
    %82 = vector.extract_strided_slice %76 {offsets = [0, 48], sizes = [1, 16], strides = [1, 1]} : vector<1x128xf32> to vector<1x16xf32>
    %83 = arith.addf %81, %82 : vector<1x16xf32>
    %84 = vector.extract_strided_slice %76 {offsets = [0, 64], sizes = [1, 16], strides = [1, 1]} : vector<1x128xf32> to vector<1x16xf32>
    %85 = arith.addf %83, %84 : vector<1x16xf32>
    %86 = vector.extract_strided_slice %76 {offsets = [0, 80], sizes = [1, 16], strides = [1, 1]} : vector<1x128xf32> to vector<1x16xf32>
    %87 = arith.addf %85, %86 : vector<1x16xf32>
    %88 = vector.extract_strided_slice %76 {offsets = [0, 96], sizes = [1, 16], strides = [1, 1]} : vector<1x128xf32> to vector<1x16xf32>
    %89 = arith.addf %87, %88 : vector<1x16xf32>
    %90 = vector.extract_strided_slice %76 {offsets = [0, 112], sizes = [1, 16], strides = [1, 1]} : vector<1x128xf32> to vector<1x16xf32>
    %91 = arith.addf %89, %90 : vector<1x16xf32>
    %cst_65 = arith.constant 1.250000e-01 : f32
    %92 = vector.broadcast %cst_65 : f32 to vector<1x16xf32>
    %93 = arith.mulf %91, %92 : vector<1x16xf32>
    %94 = vector.broadcast %93 : vector<1x16xf32> to vector<4x16xf32>
    %95 = arith.mulf %66, %94 : vector<4x16xf32>
    %cst_66 = arith.constant dense<0.000000e+00> : vector<4xf32>
    %96 = vector.multi_reduction <add>, %95, %cst_66 [1] : vector<4x16xf32> to vector<4xf32>
    %97 = vector.shape_cast %96 : vector<4xf32> to vector<4x1xf32>
    %98 = arith.addf %97, %68 : vector<4x1xf32>
    %cst_67 = arith.constant 0.000000e+00 : f32
    %99 = vector.broadcast %cst_67 : f32 to vector<4x1xf32>
    %100 = arith.maximumf %98, %99 : vector<4x1xf32>
    %101 = vector.broadcast %100 : vector<4x1xf32> to vector<4x16xf32>
    %102 = arith.mulf %101, %70 : vector<4x16xf32>
    %cst_68 = arith.constant dense<0.000000e+00> : vector<16xf32>
    %103 = vector.multi_reduction <add>, %102, %cst_68 [0] : vector<4x16xf32> to vector<16xf32>
    %104 = vector.shape_cast %103 : vector<16xf32> to vector<1x16xf32>
    %105 = arith.addf %104, %72 : vector<1x16xf32>
    %106 = arith.negf %105 : vector<1x16xf32>
    %107 = math.exp %106 : vector<1x16xf32>
    %cst_69 = arith.constant 1.000000e+00 : f32
    %108 = vector.broadcast %cst_69 : f32 to vector<1x16xf32>
    %109 = arith.addf %108, %107 : vector<1x16xf32>
    %110 = arith.divf %108, %109 : vector<1x16xf32>
    %111 = tpu.concatenate %110, %110, %110, %110, %110, %110, %110, %110 in 1 : vector<1x16xf32>, vector<1x16xf32>, vector<1x16xf32>, vector<1x16xf32>, vector<1x16xf32>, vector<1x16xf32>, vector<1x16xf32>, vector<1x16xf32> -> vector<1x128xf32>
    %112 = vector.broadcast %111 : vector<1x128xf32> to vector<8x128xf32>
    %113 = arith.mulf %64, %112 : vector<8x128xf32>
    %114 = arith.addf %20, %113 : vector<8x128xf32>
    %c2_70 = arith.constant 2 : index
    %c0_71 = arith.constant 0 : index
    %c0_72 = arith.constant 0 : index
    %c0_73 = arith.constant 0 : index
    %115 = vector.load %arg4[%c2_70, %c0_71, %c0_72, %c0_73] : memref<11x3x128x128xf32, #tpu.memory_space<vmem>>, vector<1x1x128x128xf32>
    %116 = vector.shape_cast %115 : vector<1x1x128x128xf32> to vector<128x128xf32>
    %c2_74 = arith.constant 2 : index
    %c1_75 = arith.constant 1 : index
    %c0_76 = arith.constant 0 : index
    %c0_77 = arith.constant 0 : index
    %117 = vector.load %arg4[%c2_74, %c1_75, %c0_76, %c0_77] : memref<11x3x128x128xf32, #tpu.memory_space<vmem>>, vector<1x1x128x128xf32>
    %118 = vector.shape_cast %117 : vector<1x1x128x128xf32> to vector<128x128xf32>
    %c2_78 = arith.constant 2 : index
    %c2_79 = arith.constant 2 : index
    %c0_80 = arith.constant 0 : index
    %c0_81 = arith.constant 0 : index
    %119 = vector.load %arg4[%c2_78, %c2_79, %c0_80, %c0_81] : memref<11x3x128x128xf32, #tpu.memory_space<vmem>>, vector<1x1x128x128xf32>
    %120 = vector.shape_cast %119 : vector<1x1x128x128xf32> to vector<128x128xf32>
    %c2_82 = arith.constant 2 : index
    %c0_83 = arith.constant 0 : index
    %121 = vector.load %arg5[%c2_82, %c0_83] : memref<11x128xf32, #tpu.memory_space<vmem>>, vector<1x128xf32>
    %122 = vector.shape_cast %121 : vector<1x128xf32> to vector<128xf32>
    %cst_84 = arith.constant 0.000000e+00 : f32
    %123 = vector.broadcast %cst_84 : f32 to vector<1x128xf32>
    %124 = vector.extract_strided_slice %114 {offsets = [0, 0], sizes = [7, 128], strides = [1, 1]} : vector<8x128xf32> to vector<7x128xf32>
    %125 = tpu.concatenate %123, %124 in 0 : vector<1x128xf32>, vector<7x128xf32> -> vector<8x128xf32>
    %126 = vector.extract_strided_slice %114 {offsets = [1, 0], sizes = [7, 128], strides = [1, 1]} : vector<8x128xf32> to vector<7x128xf32>
    %127 = tpu.concatenate %126, %123 in 0 : vector<7x128xf32>, vector<1x128xf32> -> vector<8x128xf32>
    %cst_85 = arith.constant dense<0.000000e+00> : vector<8x128xf32>
    %128 = tpu.matmul %125, %116, %cst_85 {dimension_numbers = #tpu.dot_dimension_numbers<[1], [0], [0], [1], [0, 0, 1, 1], [], []>} : vector<8x128xf32>, vector<128x128xf32>, vector<8x128xf32> -> vector<8x128xf32>
    %cst_86 = arith.constant dense<0.000000e+00> : vector<8x128xf32>
    %129 = tpu.matmul %114, %118, %cst_86 {dimension_numbers = #tpu.dot_dimension_numbers<[1], [0], [0], [1], [0, 0, 1, 1], [], []>} : vector<8x128xf32>, vector<128x128xf32>, vector<8x128xf32> -> vector<8x128xf32>
    %130 = arith.addf %128, %129 : vector<8x128xf32>
    %cst_87 = arith.constant dense<0.000000e+00> : vector<8x128xf32>
    %131 = tpu.matmul %127, %120, %cst_87 {dimension_numbers = #tpu.dot_dimension_numbers<[1], [0], [0], [1], [0, 0, 1, 1], [], []>} : vector<8x128xf32>, vector<128x128xf32>, vector<8x128xf32> -> vector<8x128xf32>
    %132 = arith.addf %130, %131 : vector<8x128xf32>
    %133 = vector.shape_cast %122 : vector<128xf32> to vector<1x128xf32>
    %134 = vector.broadcast %133 : vector<1x128xf32> to vector<8x128xf32>
    %135 = arith.addf %132, %134 : vector<8x128xf32>
    %cst_88 = arith.constant 0.000000e+00 : f32
    %136 = vector.broadcast %cst_88 : f32 to vector<8x128xf32>
    %137 = arith.maximumf %135, %136 : vector<8x128xf32>
    %c3 = arith.constant 3 : index
    %c0_89 = arith.constant 0 : index
    %c0_90 = arith.constant 0 : index
    %c0_91 = arith.constant 0 : index
    %138 = vector.load %arg4[%c3, %c0_89, %c0_90, %c0_91] : memref<11x3x128x128xf32, #tpu.memory_space<vmem>>, vector<1x1x128x128xf32>
    %139 = vector.shape_cast %138 : vector<1x1x128x128xf32> to vector<128x128xf32>
    %c3_92 = arith.constant 3 : index
    %c1_93 = arith.constant 1 : index
    %c0_94 = arith.constant 0 : index
    %c0_95 = arith.constant 0 : index
    %140 = vector.load %arg4[%c3_92, %c1_93, %c0_94, %c0_95] : memref<11x3x128x128xf32, #tpu.memory_space<vmem>>, vector<1x1x128x128xf32>
    %141 = vector.shape_cast %140 : vector<1x1x128x128xf32> to vector<128x128xf32>
    %c3_96 = arith.constant 3 : index
    %c2_97 = arith.constant 2 : index
    %c0_98 = arith.constant 0 : index
    %c0_99 = arith.constant 0 : index
    %142 = vector.load %arg4[%c3_96, %c2_97, %c0_98, %c0_99] : memref<11x3x128x128xf32, #tpu.memory_space<vmem>>, vector<1x1x128x128xf32>
    %143 = vector.shape_cast %142 : vector<1x1x128x128xf32> to vector<128x128xf32>
    %c3_100 = arith.constant 3 : index
    %c0_101 = arith.constant 0 : index
    %144 = vector.load %arg5[%c3_100, %c0_101] : memref<11x128xf32, #tpu.memory_space<vmem>>, vector<1x128xf32>
    %145 = vector.shape_cast %144 : vector<1x128xf32> to vector<128xf32>
    %cst_102 = arith.constant 0.000000e+00 : f32
    %146 = vector.broadcast %cst_102 : f32 to vector<1x128xf32>
    %147 = vector.extract_strided_slice %137 {offsets = [0, 0], sizes = [7, 128], strides = [1, 1]} : vector<8x128xf32> to vector<7x128xf32>
    %148 = tpu.concatenate %146, %147 in 0 : vector<1x128xf32>, vector<7x128xf32> -> vector<8x128xf32>
    %149 = vector.extract_strided_slice %137 {offsets = [1, 0], sizes = [7, 128], strides = [1, 1]} : vector<8x128xf32> to vector<7x128xf32>
    %150 = tpu.concatenate %149, %146 in 0 : vector<7x128xf32>, vector<1x128xf32> -> vector<8x128xf32>
    %cst_103 = arith.constant dense<0.000000e+00> : vector<8x128xf32>
    %151 = tpu.matmul %148, %139, %cst_103 {dimension_numbers = #tpu.dot_dimension_numbers<[1], [0], [0], [1], [0, 0, 1, 1], [], []>} : vector<8x128xf32>, vector<128x128xf32>, vector<8x128xf32> -> vector<8x128xf32>
    %cst_104 = arith.constant dense<0.000000e+00> : vector<8x128xf32>
    %152 = tpu.matmul %137, %141, %cst_104 {dimension_numbers = #tpu.dot_dimension_numbers<[1], [0], [0], [1], [0, 0, 1, 1], [], []>} : vector<8x128xf32>, vector<128x128xf32>, vector<8x128xf32> -> vector<8x128xf32>
    %153 = arith.addf %151, %152 : vector<8x128xf32>
    %cst_105 = arith.constant dense<0.000000e+00> : vector<8x128xf32>
    %154 = tpu.matmul %150, %143, %cst_105 {dimension_numbers = #tpu.dot_dimension_numbers<[1], [0], [0], [1], [0, 0, 1, 1], [], []>} : vector<8x128xf32>, vector<128x128xf32>, vector<8x128xf32> -> vector<8x128xf32>
    %155 = arith.addf %153, %154 : vector<8x128xf32>
    %156 = vector.shape_cast %145 : vector<128xf32> to vector<1x128xf32>
    %157 = vector.broadcast %156 : vector<1x128xf32> to vector<8x128xf32>
    %158 = arith.addf %155, %157 : vector<8x128xf32>
    %c1_106 = arith.constant 1 : index
    %c0_107 = arith.constant 0 : index
    %c0_108 = arith.constant 0 : index
    %159 = vector.load %arg6[%c1_106, %c0_107, %c0_108] : memref<4x4x16xf32, #tpu.memory_space<vmem>>, vector<1x4x16xf32>
    %160 = vector.shape_cast %159 : vector<1x4x16xf32> to vector<4x16xf32>
    %c1_109 = arith.constant 1 : index
    %c0_110 = arith.constant 0 : index
    %c0_111 = arith.constant 0 : index
    %161 = vector.load %arg7[%c1_109, %c0_110, %c0_111] : memref<4x4x1xf32, #tpu.memory_space<vmem>>, vector<1x4x1xf32>
    %162 = vector.shape_cast %161 : vector<1x4x1xf32> to vector<4x1xf32>
    %c1_112 = arith.constant 1 : index
    %c0_113 = arith.constant 0 : index
    %c0_114 = arith.constant 0 : index
    %163 = vector.load %arg8[%c1_112, %c0_113, %c0_114] : memref<4x4x16xf32, #tpu.memory_space<vmem>>, vector<1x4x16xf32>
    %164 = vector.shape_cast %163 : vector<1x4x16xf32> to vector<4x16xf32>
    %c1_115 = arith.constant 1 : index
    %c0_116 = arith.constant 0 : index
    %c0_117 = arith.constant 0 : index
    %165 = vector.load %arg9[%c1_115, %c0_116, %c0_117] : memref<4x1x16xf32, #tpu.memory_space<vmem>>, vector<1x1x16xf32>
    %166 = vector.shape_cast %165 : vector<1x1x16xf32> to vector<1x16xf32>
    %cst_118 = arith.constant dense<0.000000e+00> : vector<128xf32>
    %167 = vector.multi_reduction <add>, %158, %cst_118 [0] : vector<8x128xf32> to vector<128xf32>
    %168 = vector.shape_cast %167 : vector<128xf32> to vector<1x128xf32>
    %cst_119 = arith.constant 8.000000e+00 : f32
    %169 = vector.broadcast %cst_119 : f32 to vector<1x128xf32>
    %170 = arith.divf %168, %169 : vector<1x128xf32>
    %171 = vector.extract_strided_slice %170 {offsets = [0, 0], sizes = [1, 16], strides = [1, 1]} : vector<1x128xf32> to vector<1x16xf32>
    %172 = vector.extract_strided_slice %170 {offsets = [0, 16], sizes = [1, 16], strides = [1, 1]} : vector<1x128xf32> to vector<1x16xf32>
    %173 = arith.addf %171, %172 : vector<1x16xf32>
    %174 = vector.extract_strided_slice %170 {offsets = [0, 32], sizes = [1, 16], strides = [1, 1]} : vector<1x128xf32> to vector<1x16xf32>
    %175 = arith.addf %173, %174 : vector<1x16xf32>
    %176 = vector.extract_strided_slice %170 {offsets = [0, 48], sizes = [1, 16], strides = [1, 1]} : vector<1x128xf32> to vector<1x16xf32>
    %177 = arith.addf %175, %176 : vector<1x16xf32>
    %178 = vector.extract_strided_slice %170 {offsets = [0, 64], sizes = [1, 16], strides = [1, 1]} : vector<1x128xf32> to vector<1x16xf32>
    %179 = arith.addf %177, %178 : vector<1x16xf32>
    %180 = vector.extract_strided_slice %170 {offsets = [0, 80], sizes = [1, 16], strides = [1, 1]} : vector<1x128xf32> to vector<1x16xf32>
    %181 = arith.addf %179, %180 : vector<1x16xf32>
    %182 = vector.extract_strided_slice %170 {offsets = [0, 96], sizes = [1, 16], strides = [1, 1]} : vector<1x128xf32> to vector<1x16xf32>
    %183 = arith.addf %181, %182 : vector<1x16xf32>
    %184 = vector.extract_strided_slice %170 {offsets = [0, 112], sizes = [1, 16], strides = [1, 1]} : vector<1x128xf32> to vector<1x16xf32>
    %185 = arith.addf %183, %184 : vector<1x16xf32>
    %cst_120 = arith.constant 1.250000e-01 : f32
    %186 = vector.broadcast %cst_120 : f32 to vector<1x16xf32>
    %187 = arith.mulf %185, %186 : vector<1x16xf32>
    %188 = vector.broadcast %187 : vector<1x16xf32> to vector<4x16xf32>
    %189 = arith.mulf %160, %188 : vector<4x16xf32>
    %cst_121 = arith.constant dense<0.000000e+00> : vector<4xf32>
    %190 = vector.multi_reduction <add>, %189, %cst_121 [1] : vector<4x16xf32> to vector<4xf32>
    %191 = vector.shape_cast %190 : vector<4xf32> to vector<4x1xf32>
    %192 = arith.addf %191, %162 : vector<4x1xf32>
    %cst_122 = arith.constant 0.000000e+00 : f32
    %193 = vector.broadcast %cst_122 : f32 to vector<4x1xf32>
    %194 = arith.maximumf %192, %193 : vector<4x1xf32>
    %195 = vector.broadcast %194 : vector<4x1xf32> to vector<4x16xf32>
    %196 = arith.mulf %195, %164 : vector<4x16xf32>
    %cst_123 = arith.constant dense<0.000000e+00> : vector<16xf32>
    %197 = vector.multi_reduction <add>, %196, %cst_123 [0] : vector<4x16xf32> to vector<16xf32>
    %198 = vector.shape_cast %197 : vector<16xf32> to vector<1x16xf32>
    %199 = arith.addf %198, %166 : vector<1x16xf32>
    %200 = arith.negf %199 : vector<1x16xf32>
    %201 = math.exp %200 : vector<1x16xf32>
    %cst_124 = arith.constant 1.000000e+00 : f32
    %202 = vector.broadcast %cst_124 : f32 to vector<1x16xf32>
    %203 = arith.addf %202, %201 : vector<1x16xf32>
    %204 = arith.divf %202, %203 : vector<1x16xf32>
    %205 = tpu.concatenate %204, %204, %204, %204, %204, %204, %204, %204 in 1 : vector<1x16xf32>, vector<1x16xf32>, vector<1x16xf32>, vector<1x16xf32>, vector<1x16xf32>, vector<1x16xf32>, vector<1x16xf32>, vector<1x16xf32> -> vector<1x128xf32>
    %206 = vector.broadcast %205 : vector<1x128xf32> to vector<8x128xf32>
    %207 = arith.mulf %158, %206 : vector<8x128xf32>
    %208 = arith.addf %114, %207 : vector<8x128xf32>
    %c4 = arith.constant 4 : index
    %c0_125 = arith.constant 0 : index
    %c0_126 = arith.constant 0 : index
    %c0_127 = arith.constant 0 : index
    %209 = vector.load %arg4[%c4, %c0_125, %c0_126, %c0_127] : memref<11x3x128x128xf32, #tpu.memory_space<vmem>>, vector<1x1x128x128xf32>
    %210 = vector.shape_cast %209 : vector<1x1x128x128xf32> to vector<128x128xf32>
    %c4_128 = arith.constant 4 : index
    %c1_129 = arith.constant 1 : index
    %c0_130 = arith.constant 0 : index
    %c0_131 = arith.constant 0 : index
    %211 = vector.load %arg4[%c4_128, %c1_129, %c0_130, %c0_131] : memref<11x3x128x128xf32, #tpu.memory_space<vmem>>, vector<1x1x128x128xf32>
    %212 = vector.shape_cast %211 : vector<1x1x128x128xf32> to vector<128x128xf32>
    %c4_132 = arith.constant 4 : index
    %c2_133 = arith.constant 2 : index
    %c0_134 = arith.constant 0 : index
    %c0_135 = arith.constant 0 : index
    %213 = vector.load %arg4[%c4_132, %c2_133, %c0_134, %c0_135] : memref<11x3x128x128xf32, #tpu.memory_space<vmem>>, vector<1x1x128x128xf32>
    %214 = vector.shape_cast %213 : vector<1x1x128x128xf32> to vector<128x128xf32>
    %c4_136 = arith.constant 4 : index
    %c0_137 = arith.constant 0 : index
    %215 = vector.load %arg5[%c4_136, %c0_137] : memref<11x128xf32, #tpu.memory_space<vmem>>, vector<1x128xf32>
    %216 = vector.shape_cast %215 : vector<1x128xf32> to vector<128xf32>
    %cst_138 = arith.constant 0.000000e+00 : f32
    %217 = vector.broadcast %cst_138 : f32 to vector<1x128xf32>
    %218 = vector.extract_strided_slice %208 {offsets = [0, 0], sizes = [7, 128], strides = [1, 1]} : vector<8x128xf32> to vector<7x128xf32>
    %219 = tpu.concatenate %217, %218 in 0 : vector<1x128xf32>, vector<7x128xf32> -> vector<8x128xf32>
    %220 = vector.extract_strided_slice %208 {offsets = [1, 0], sizes = [7, 128], strides = [1, 1]} : vector<8x128xf32> to vector<7x128xf32>
    %221 = tpu.concatenate %220, %217 in 0 : vector<7x128xf32>, vector<1x128xf32> -> vector<8x128xf32>
    %cst_139 = arith.constant dense<0.000000e+00> : vector<8x128xf32>
    %222 = tpu.matmul %219, %210, %cst_139 {dimension_numbers = #tpu.dot_dimension_numbers<[1], [0], [0], [1], [0, 0, 1, 1], [], []>} : vector<8x128xf32>, vector<128x128xf32>, vector<8x128xf32> -> vector<8x128xf32>
    %cst_140 = arith.constant dense<0.000000e+00> : vector<8x128xf32>
    %223 = tpu.matmul %208, %212, %cst_140 {dimension_numbers = #tpu.dot_dimension_numbers<[1], [0], [0], [1], [0, 0, 1, 1], [], []>} : vector<8x128xf32>, vector<128x128xf32>, vector<8x128xf32> -> vector<8x128xf32>
    %224 = arith.addf %222, %223 : vector<8x128xf32>
    %cst_141 = arith.constant dense<0.000000e+00> : vector<8x128xf32>
    %225 = tpu.matmul %221, %214, %cst_141 {dimension_numbers = #tpu.dot_dimension_numbers<[1], [0], [0], [1], [0, 0, 1, 1], [], []>} : vector<8x128xf32>, vector<128x128xf32>, vector<8x128xf32> -> vector<8x128xf32>
    %226 = arith.addf %224, %225 : vector<8x128xf32>
    %227 = vector.shape_cast %216 : vector<128xf32> to vector<1x128xf32>
    %228 = vector.broadcast %227 : vector<1x128xf32> to vector<8x128xf32>
    %229 = arith.addf %226, %228 : vector<8x128xf32>
    %230 = arith.addf %20, %229 : vector<8x128xf32>
    %c5 = arith.constant 5 : index
    %c0_142 = arith.constant 0 : index
    %c0_143 = arith.constant 0 : index
    %c0_144 = arith.constant 0 : index
    %231 = vector.load %arg4[%c5, %c0_142, %c0_143, %c0_144] : memref<11x3x128x128xf32, #tpu.memory_space<vmem>>, vector<1x1x128x128xf32>
    %232 = vector.shape_cast %231 : vector<1x1x128x128xf32> to vector<128x128xf32>
    %c5_145 = arith.constant 5 : index
    %c1_146 = arith.constant 1 : index
    %c0_147 = arith.constant 0 : index
    %c0_148 = arith.constant 0 : index
    %233 = vector.load %arg4[%c5_145, %c1_146, %c0_147, %c0_148] : memref<11x3x128x128xf32, #tpu.memory_space<vmem>>, vector<1x1x128x128xf32>
    %234 = vector.shape_cast %233 : vector<1x1x128x128xf32> to vector<128x128xf32>
    %c5_149 = arith.constant 5 : index
    %c2_150 = arith.constant 2 : index
    %c0_151 = arith.constant 0 : index
    %c0_152 = arith.constant 0 : index
    %235 = vector.load %arg4[%c5_149, %c2_150, %c0_151, %c0_152] : memref<11x3x128x128xf32, #tpu.memory_space<vmem>>, vector<1x1x128x128xf32>
    %236 = vector.shape_cast %235 : vector<1x1x128x128xf32> to vector<128x128xf32>
    %c5_153 = arith.constant 5 : index
    %c0_154 = arith.constant 0 : index
    %237 = vector.load %arg5[%c5_153, %c0_154] : memref<11x128xf32, #tpu.memory_space<vmem>>, vector<1x128xf32>
    %238 = vector.shape_cast %237 : vector<1x128xf32> to vector<128xf32>
    %cst_155 = arith.constant 0.000000e+00 : f32
    %239 = vector.broadcast %cst_155 : f32 to vector<1x128xf32>
    %240 = vector.extract_strided_slice %230 {offsets = [0, 0], sizes = [7, 128], strides = [1, 1]} : vector<8x128xf32> to vector<7x128xf32>
    %241 = tpu.concatenate %239, %240 in 0 : vector<1x128xf32>, vector<7x128xf32> -> vector<8x128xf32>
    %242 = vector.extract_strided_slice %230 {offsets = [1, 0], sizes = [7, 128], strides = [1, 1]} : vector<8x128xf32> to vector<7x128xf32>
    %243 = tpu.concatenate %242, %239 in 0 : vector<7x128xf32>, vector<1x128xf32> -> vector<8x128xf32>
    %cst_156 = arith.constant dense<0.000000e+00> : vector<8x128xf32>
    %244 = tpu.matmul %241, %232, %cst_156 {dimension_numbers = #tpu.dot_dimension_numbers<[1], [0], [0], [1], [0, 0, 1, 1], [], []>} : vector<8x128xf32>, vector<128x128xf32>, vector<8x128xf32> -> vector<8x128xf32>
    %cst_157 = arith.constant dense<0.000000e+00> : vector<8x128xf32>
    %245 = tpu.matmul %230, %234, %cst_157 {dimension_numbers = #tpu.dot_dimension_numbers<[1], [0], [0], [1], [0, 0, 1, 1], [], []>} : vector<8x128xf32>, vector<128x128xf32>, vector<8x128xf32> -> vector<8x128xf32>
    %246 = arith.addf %244, %245 : vector<8x128xf32>
    %cst_158 = arith.constant dense<0.000000e+00> : vector<8x128xf32>
    %247 = tpu.matmul %243, %236, %cst_158 {dimension_numbers = #tpu.dot_dimension_numbers<[1], [0], [0], [1], [0, 0, 1, 1], [], []>} : vector<8x128xf32>, vector<128x128xf32>, vector<8x128xf32> -> vector<8x128xf32>
    %248 = arith.addf %246, %247 : vector<8x128xf32>
    %249 = vector.shape_cast %238 : vector<128xf32> to vector<1x128xf32>
    %250 = vector.broadcast %249 : vector<1x128xf32> to vector<8x128xf32>
    %251 = arith.addf %248, %250 : vector<8x128xf32>
    %cst_159 = arith.constant 0.000000e+00 : f32
    %252 = vector.broadcast %cst_159 : f32 to vector<8x128xf32>
    %253 = arith.maximumf %251, %252 : vector<8x128xf32>
    %c6 = arith.constant 6 : index
    %c0_160 = arith.constant 0 : index
    %c0_161 = arith.constant 0 : index
    %c0_162 = arith.constant 0 : index
    %254 = vector.load %arg4[%c6, %c0_160, %c0_161, %c0_162] : memref<11x3x128x128xf32, #tpu.memory_space<vmem>>, vector<1x1x128x128xf32>
    %255 = vector.shape_cast %254 : vector<1x1x128x128xf32> to vector<128x128xf32>
    %c6_163 = arith.constant 6 : index
    %c1_164 = arith.constant 1 : index
    %c0_165 = arith.constant 0 : index
    %c0_166 = arith.constant 0 : index
    %256 = vector.load %arg4[%c6_163, %c1_164, %c0_165, %c0_166] : memref<11x3x128x128xf32, #tpu.memory_space<vmem>>, vector<1x1x128x128xf32>
    %257 = vector.shape_cast %256 : vector<1x1x128x128xf32> to vector<128x128xf32>
    %c6_167 = arith.constant 6 : index
    %c2_168 = arith.constant 2 : index
    %c0_169 = arith.constant 0 : index
    %c0_170 = arith.constant 0 : index
    %258 = vector.load %arg4[%c6_167, %c2_168, %c0_169, %c0_170] : memref<11x3x128x128xf32, #tpu.memory_space<vmem>>, vector<1x1x128x128xf32>
    %259 = vector.shape_cast %258 : vector<1x1x128x128xf32> to vector<128x128xf32>
    %c6_171 = arith.constant 6 : index
    %c0_172 = arith.constant 0 : index
    %260 = vector.load %arg5[%c6_171, %c0_172] : memref<11x128xf32, #tpu.memory_space<vmem>>, vector<1x128xf32>
    %261 = vector.shape_cast %260 : vector<1x128xf32> to vector<128xf32>
    %cst_173 = arith.constant 0.000000e+00 : f32
    %262 = vector.broadcast %cst_173 : f32 to vector<1x128xf32>
    %263 = vector.extract_strided_slice %253 {offsets = [0, 0], sizes = [7, 128], strides = [1, 1]} : vector<8x128xf32> to vector<7x128xf32>
    %264 = tpu.concatenate %262, %263 in 0 : vector<1x128xf32>, vector<7x128xf32> -> vector<8x128xf32>
    %265 = vector.extract_strided_slice %253 {offsets = [1, 0], sizes = [7, 128], strides = [1, 1]} : vector<8x128xf32> to vector<7x128xf32>
    %266 = tpu.concatenate %265, %262 in 0 : vector<7x128xf32>, vector<1x128xf32> -> vector<8x128xf32>
    %cst_174 = arith.constant dense<0.000000e+00> : vector<8x128xf32>
    %267 = tpu.matmul %264, %255, %cst_174 {dimension_numbers = #tpu.dot_dimension_numbers<[1], [0], [0], [1], [0, 0, 1, 1], [], []>} : vector<8x128xf32>, vector<128x128xf32>, vector<8x128xf32> -> vector<8x128xf32>
    %cst_175 = arith.constant dense<0.000000e+00> : vector<8x128xf32>
    %268 = tpu.matmul %253, %257, %cst_175 {dimension_numbers = #tpu.dot_dimension_numbers<[1], [0], [0], [1], [0, 0, 1, 1], [], []>} : vector<8x128xf32>, vector<128x128xf32>, vector<8x128xf32> -> vector<8x128xf32>
    %269 = arith.addf %267, %268 : vector<8x128xf32>
    %cst_176 = arith.constant dense<0.000000e+00> : vector<8x128xf32>
    %270 = tpu.matmul %266, %259, %cst_176 {dimension_numbers = #tpu.dot_dimension_numbers<[1], [0], [0], [1], [0, 0, 1, 1], [], []>} : vector<8x128xf32>, vector<128x128xf32>, vector<8x128xf32> -> vector<8x128xf32>
    %271 = arith.addf %269, %270 : vector<8x128xf32>
    %272 = vector.shape_cast %261 : vector<128xf32> to vector<1x128xf32>
    %273 = vector.broadcast %272 : vector<1x128xf32> to vector<8x128xf32>
    %274 = arith.addf %271, %273 : vector<8x128xf32>
    %c2_177 = arith.constant 2 : index
    %c0_178 = arith.constant 0 : index
    %c0_179 = arith.constant 0 : index
    %275 = vector.load %arg6[%c2_177, %c0_178, %c0_179] : memref<4x4x16xf32, #tpu.memory_space<vmem>>, vector<1x4x16xf32>
    %276 = vector.shape_cast %275 : vector<1x4x16xf32> to vector<4x16xf32>
    %c2_180 = arith.constant 2 : index
    %c0_181 = arith.constant 0 : index
    %c0_182 = arith.constant 0 : index
    %277 = vector.load %arg7[%c2_180, %c0_181, %c0_182] : memref<4x4x1xf32, #tpu.memory_space<vmem>>, vector<1x4x1xf32>
    %278 = vector.shape_cast %277 : vector<1x4x1xf32> to vector<4x1xf32>
    %c2_183 = arith.constant 2 : index
    %c0_184 = arith.constant 0 : index
    %c0_185 = arith.constant 0 : index
    %279 = vector.load %arg8[%c2_183, %c0_184, %c0_185] : memref<4x4x16xf32, #tpu.memory_space<vmem>>, vector<1x4x16xf32>
    %280 = vector.shape_cast %279 : vector<1x4x16xf32> to vector<4x16xf32>
    %c2_186 = arith.constant 2 : index
    %c0_187 = arith.constant 0 : index
    %c0_188 = arith.constant 0 : index
    %281 = vector.load %arg9[%c2_186, %c0_187, %c0_188] : memref<4x1x16xf32, #tpu.memory_space<vmem>>, vector<1x1x16xf32>
    %282 = vector.shape_cast %281 : vector<1x1x16xf32> to vector<1x16xf32>
    %cst_189 = arith.constant dense<0.000000e+00> : vector<128xf32>
    %283 = vector.multi_reduction <add>, %274, %cst_189 [0] : vector<8x128xf32> to vector<128xf32>
    %284 = vector.shape_cast %283 : vector<128xf32> to vector<1x128xf32>
    %cst_190 = arith.constant 8.000000e+00 : f32
    %285 = vector.broadcast %cst_190 : f32 to vector<1x128xf32>
    %286 = arith.divf %284, %285 : vector<1x128xf32>
    %287 = vector.extract_strided_slice %286 {offsets = [0, 0], sizes = [1, 16], strides = [1, 1]} : vector<1x128xf32> to vector<1x16xf32>
    %288 = vector.extract_strided_slice %286 {offsets = [0, 16], sizes = [1, 16], strides = [1, 1]} : vector<1x128xf32> to vector<1x16xf32>
    %289 = arith.addf %287, %288 : vector<1x16xf32>
    %290 = vector.extract_strided_slice %286 {offsets = [0, 32], sizes = [1, 16], strides = [1, 1]} : vector<1x128xf32> to vector<1x16xf32>
    %291 = arith.addf %289, %290 : vector<1x16xf32>
    %292 = vector.extract_strided_slice %286 {offsets = [0, 48], sizes = [1, 16], strides = [1, 1]} : vector<1x128xf32> to vector<1x16xf32>
    %293 = arith.addf %291, %292 : vector<1x16xf32>
    %294 = vector.extract_strided_slice %286 {offsets = [0, 64], sizes = [1, 16], strides = [1, 1]} : vector<1x128xf32> to vector<1x16xf32>
    %295 = arith.addf %293, %294 : vector<1x16xf32>
    %296 = vector.extract_strided_slice %286 {offsets = [0, 80], sizes = [1, 16], strides = [1, 1]} : vector<1x128xf32> to vector<1x16xf32>
    %297 = arith.addf %295, %296 : vector<1x16xf32>
    %298 = vector.extract_strided_slice %286 {offsets = [0, 96], sizes = [1, 16], strides = [1, 1]} : vector<1x128xf32> to vector<1x16xf32>
    %299 = arith.addf %297, %298 : vector<1x16xf32>
    %300 = vector.extract_strided_slice %286 {offsets = [0, 112], sizes = [1, 16], strides = [1, 1]} : vector<1x128xf32> to vector<1x16xf32>
    %301 = arith.addf %299, %300 : vector<1x16xf32>
    %cst_191 = arith.constant 1.250000e-01 : f32
    %302 = vector.broadcast %cst_191 : f32 to vector<1x16xf32>
    %303 = arith.mulf %301, %302 : vector<1x16xf32>
    %304 = vector.broadcast %303 : vector<1x16xf32> to vector<4x16xf32>
    %305 = arith.mulf %276, %304 : vector<4x16xf32>
    %cst_192 = arith.constant dense<0.000000e+00> : vector<4xf32>
    %306 = vector.multi_reduction <add>, %305, %cst_192 [1] : vector<4x16xf32> to vector<4xf32>
    %307 = vector.shape_cast %306 : vector<4xf32> to vector<4x1xf32>
    %308 = arith.addf %307, %278 : vector<4x1xf32>
    %cst_193 = arith.constant 0.000000e+00 : f32
    %309 = vector.broadcast %cst_193 : f32 to vector<4x1xf32>
    %310 = arith.maximumf %308, %309 : vector<4x1xf32>
    %311 = vector.broadcast %310 : vector<4x1xf32> to vector<4x16xf32>
    %312 = arith.mulf %311, %280 : vector<4x16xf32>
    %cst_194 = arith.constant dense<0.000000e+00> : vector<16xf32>
    %313 = vector.multi_reduction <add>, %312, %cst_194 [0] : vector<4x16xf32> to vector<16xf32>
    %314 = vector.shape_cast %313 : vector<16xf32> to vector<1x16xf32>
    %315 = arith.addf %314, %282 : vector<1x16xf32>
    %316 = arith.negf %315 : vector<1x16xf32>
    %317 = math.exp %316 : vector<1x16xf32>
    %cst_195 = arith.constant 1.000000e+00 : f32
    %318 = vector.broadcast %cst_195 : f32 to vector<1x16xf32>
    %319 = arith.addf %318, %317 : vector<1x16xf32>
    %320 = arith.divf %318, %319 : vector<1x16xf32>
    %321 = tpu.concatenate %320, %320, %320, %320, %320, %320, %320, %320 in 1 : vector<1x16xf32>, vector<1x16xf32>, vector<1x16xf32>, vector<1x16xf32>, vector<1x16xf32>, vector<1x16xf32>, vector<1x16xf32>, vector<1x16xf32> -> vector<1x128xf32>
    %322 = vector.broadcast %321 : vector<1x128xf32> to vector<8x128xf32>
    %323 = arith.mulf %274, %322 : vector<8x128xf32>
    %324 = arith.addf %230, %323 : vector<8x128xf32>
    %c7 = arith.constant 7 : index
    %c0_196 = arith.constant 0 : index
    %c0_197 = arith.constant 0 : index
    %c0_198 = arith.constant 0 : index
    %325 = vector.load %arg4[%c7, %c0_196, %c0_197, %c0_198] : memref<11x3x128x128xf32, #tpu.memory_space<vmem>>, vector<1x1x128x128xf32>
    %326 = vector.shape_cast %325 : vector<1x1x128x128xf32> to vector<128x128xf32>
    %c7_199 = arith.constant 7 : index
    %c1_200 = arith.constant 1 : index
    %c0_201 = arith.constant 0 : index
    %c0_202 = arith.constant 0 : index
    %327 = vector.load %arg4[%c7_199, %c1_200, %c0_201, %c0_202] : memref<11x3x128x128xf32, #tpu.memory_space<vmem>>, vector<1x1x128x128xf32>
    %328 = vector.shape_cast %327 : vector<1x1x128x128xf32> to vector<128x128xf32>
    %c7_203 = arith.constant 7 : index
    %c2_204 = arith.constant 2 : index
    %c0_205 = arith.constant 0 : index
    %c0_206 = arith.constant 0 : index
    %329 = vector.load %arg4[%c7_203, %c2_204, %c0_205, %c0_206] : memref<11x3x128x128xf32, #tpu.memory_space<vmem>>, vector<1x1x128x128xf32>
    %330 = vector.shape_cast %329 : vector<1x1x128x128xf32> to vector<128x128xf32>
    %c7_207 = arith.constant 7 : index
    %c0_208 = arith.constant 0 : index
    %331 = vector.load %arg5[%c7_207, %c0_208] : memref<11x128xf32, #tpu.memory_space<vmem>>, vector<1x128xf32>
    %332 = vector.shape_cast %331 : vector<1x128xf32> to vector<128xf32>
    %cst_209 = arith.constant 0.000000e+00 : f32
    %333 = vector.broadcast %cst_209 : f32 to vector<1x128xf32>
    %334 = vector.extract_strided_slice %324 {offsets = [0, 0], sizes = [7, 128], strides = [1, 1]} : vector<8x128xf32> to vector<7x128xf32>
    %335 = tpu.concatenate %333, %334 in 0 : vector<1x128xf32>, vector<7x128xf32> -> vector<8x128xf32>
    %336 = vector.extract_strided_slice %324 {offsets = [1, 0], sizes = [7, 128], strides = [1, 1]} : vector<8x128xf32> to vector<7x128xf32>
    %337 = tpu.concatenate %336, %333 in 0 : vector<7x128xf32>, vector<1x128xf32> -> vector<8x128xf32>
    %cst_210 = arith.constant dense<0.000000e+00> : vector<8x128xf32>
    %338 = tpu.matmul %335, %326, %cst_210 {dimension_numbers = #tpu.dot_dimension_numbers<[1], [0], [0], [1], [0, 0, 1, 1], [], []>} : vector<8x128xf32>, vector<128x128xf32>, vector<8x128xf32> -> vector<8x128xf32>
    %cst_211 = arith.constant dense<0.000000e+00> : vector<8x128xf32>
    %339 = tpu.matmul %324, %328, %cst_211 {dimension_numbers = #tpu.dot_dimension_numbers<[1], [0], [0], [1], [0, 0, 1, 1], [], []>} : vector<8x128xf32>, vector<128x128xf32>, vector<8x128xf32> -> vector<8x128xf32>
    %340 = arith.addf %338, %339 : vector<8x128xf32>
    %cst_212 = arith.constant dense<0.000000e+00> : vector<8x128xf32>
    %341 = tpu.matmul %337, %330, %cst_212 {dimension_numbers = #tpu.dot_dimension_numbers<[1], [0], [0], [1], [0, 0, 1, 1], [], []>} : vector<8x128xf32>, vector<128x128xf32>, vector<8x128xf32> -> vector<8x128xf32>
    %342 = arith.addf %340, %341 : vector<8x128xf32>
    %343 = vector.shape_cast %332 : vector<128xf32> to vector<1x128xf32>
    %344 = vector.broadcast %343 : vector<1x128xf32> to vector<8x128xf32>
    %345 = arith.addf %342, %344 : vector<8x128xf32>
    %cst_213 = arith.constant 0.000000e+00 : f32
    %346 = vector.broadcast %cst_213 : f32 to vector<8x128xf32>
    %347 = arith.maximumf %345, %346 : vector<8x128xf32>
    %c8 = arith.constant 8 : index
    %c0_214 = arith.constant 0 : index
    %c0_215 = arith.constant 0 : index
    %c0_216 = arith.constant 0 : index
    %348 = vector.load %arg4[%c8, %c0_214, %c0_215, %c0_216] : memref<11x3x128x128xf32, #tpu.memory_space<vmem>>, vector<1x1x128x128xf32>
    %349 = vector.shape_cast %348 : vector<1x1x128x128xf32> to vector<128x128xf32>
    %c8_217 = arith.constant 8 : index
    %c1_218 = arith.constant 1 : index
    %c0_219 = arith.constant 0 : index
    %c0_220 = arith.constant 0 : index
    %350 = vector.load %arg4[%c8_217, %c1_218, %c0_219, %c0_220] : memref<11x3x128x128xf32, #tpu.memory_space<vmem>>, vector<1x1x128x128xf32>
    %351 = vector.shape_cast %350 : vector<1x1x128x128xf32> to vector<128x128xf32>
    %c8_221 = arith.constant 8 : index
    %c2_222 = arith.constant 2 : index
    %c0_223 = arith.constant 0 : index
    %c0_224 = arith.constant 0 : index
    %352 = vector.load %arg4[%c8_221, %c2_222, %c0_223, %c0_224] : memref<11x3x128x128xf32, #tpu.memory_space<vmem>>, vector<1x1x128x128xf32>
    %353 = vector.shape_cast %352 : vector<1x1x128x128xf32> to vector<128x128xf32>
    %c8_225 = arith.constant 8 : index
    %c0_226 = arith.constant 0 : index
    %354 = vector.load %arg5[%c8_225, %c0_226] : memref<11x128xf32, #tpu.memory_space<vmem>>, vector<1x128xf32>
    %355 = vector.shape_cast %354 : vector<1x128xf32> to vector<128xf32>
    %cst_227 = arith.constant 0.000000e+00 : f32
    %356 = vector.broadcast %cst_227 : f32 to vector<1x128xf32>
    %357 = vector.extract_strided_slice %347 {offsets = [0, 0], sizes = [7, 128], strides = [1, 1]} : vector<8x128xf32> to vector<7x128xf32>
    %358 = tpu.concatenate %356, %357 in 0 : vector<1x128xf32>, vector<7x128xf32> -> vector<8x128xf32>
    %359 = vector.extract_strided_slice %347 {offsets = [1, 0], sizes = [7, 128], strides = [1, 1]} : vector<8x128xf32> to vector<7x128xf32>
    %360 = tpu.concatenate %359, %356 in 0 : vector<7x128xf32>, vector<1x128xf32> -> vector<8x128xf32>
    %cst_228 = arith.constant dense<0.000000e+00> : vector<8x128xf32>
    %361 = tpu.matmul %358, %349, %cst_228 {dimension_numbers = #tpu.dot_dimension_numbers<[1], [0], [0], [1], [0, 0, 1, 1], [], []>} : vector<8x128xf32>, vector<128x128xf32>, vector<8x128xf32> -> vector<8x128xf32>
    %cst_229 = arith.constant dense<0.000000e+00> : vector<8x128xf32>
    %362 = tpu.matmul %347, %351, %cst_229 {dimension_numbers = #tpu.dot_dimension_numbers<[1], [0], [0], [1], [0, 0, 1, 1], [], []>} : vector<8x128xf32>, vector<128x128xf32>, vector<8x128xf32> -> vector<8x128xf32>
    %363 = arith.addf %361, %362 : vector<8x128xf32>
    %cst_230 = arith.constant dense<0.000000e+00> : vector<8x128xf32>
    %364 = tpu.matmul %360, %353, %cst_230 {dimension_numbers = #tpu.dot_dimension_numbers<[1], [0], [0], [1], [0, 0, 1, 1], [], []>} : vector<8x128xf32>, vector<128x128xf32>, vector<8x128xf32> -> vector<8x128xf32>
    %365 = arith.addf %363, %364 : vector<8x128xf32>
    %366 = vector.shape_cast %355 : vector<128xf32> to vector<1x128xf32>
    %367 = vector.broadcast %366 : vector<1x128xf32> to vector<8x128xf32>
    %368 = arith.addf %365, %367 : vector<8x128xf32>
    %c3_231 = arith.constant 3 : index
    %c0_232 = arith.constant 0 : index
    %c0_233 = arith.constant 0 : index
    %369 = vector.load %arg6[%c3_231, %c0_232, %c0_233] : memref<4x4x16xf32, #tpu.memory_space<vmem>>, vector<1x4x16xf32>
    %370 = vector.shape_cast %369 : vector<1x4x16xf32> to vector<4x16xf32>
    %c3_234 = arith.constant 3 : index
    %c0_235 = arith.constant 0 : index
    %c0_236 = arith.constant 0 : index
    %371 = vector.load %arg7[%c3_234, %c0_235, %c0_236] : memref<4x4x1xf32, #tpu.memory_space<vmem>>, vector<1x4x1xf32>
    %372 = vector.shape_cast %371 : vector<1x4x1xf32> to vector<4x1xf32>
    %c3_237 = arith.constant 3 : index
    %c0_238 = arith.constant 0 : index
    %c0_239 = arith.constant 0 : index
    %373 = vector.load %arg8[%c3_237, %c0_238, %c0_239] : memref<4x4x16xf32, #tpu.memory_space<vmem>>, vector<1x4x16xf32>
    %374 = vector.shape_cast %373 : vector<1x4x16xf32> to vector<4x16xf32>
    %c3_240 = arith.constant 3 : index
    %c0_241 = arith.constant 0 : index
    %c0_242 = arith.constant 0 : index
    %375 = vector.load %arg9[%c3_240, %c0_241, %c0_242] : memref<4x1x16xf32, #tpu.memory_space<vmem>>, vector<1x1x16xf32>
    %376 = vector.shape_cast %375 : vector<1x1x16xf32> to vector<1x16xf32>
    %cst_243 = arith.constant dense<0.000000e+00> : vector<128xf32>
    %377 = vector.multi_reduction <add>, %368, %cst_243 [0] : vector<8x128xf32> to vector<128xf32>
    %378 = vector.shape_cast %377 : vector<128xf32> to vector<1x128xf32>
    %cst_244 = arith.constant 8.000000e+00 : f32
    %379 = vector.broadcast %cst_244 : f32 to vector<1x128xf32>
    %380 = arith.divf %378, %379 : vector<1x128xf32>
    %381 = vector.extract_strided_slice %380 {offsets = [0, 0], sizes = [1, 16], strides = [1, 1]} : vector<1x128xf32> to vector<1x16xf32>
    %382 = vector.extract_strided_slice %380 {offsets = [0, 16], sizes = [1, 16], strides = [1, 1]} : vector<1x128xf32> to vector<1x16xf32>
    %383 = arith.addf %381, %382 : vector<1x16xf32>
    %384 = vector.extract_strided_slice %380 {offsets = [0, 32], sizes = [1, 16], strides = [1, 1]} : vector<1x128xf32> to vector<1x16xf32>
    %385 = arith.addf %383, %384 : vector<1x16xf32>
    %386 = vector.extract_strided_slice %380 {offsets = [0, 48], sizes = [1, 16], strides = [1, 1]} : vector<1x128xf32> to vector<1x16xf32>
    %387 = arith.addf %385, %386 : vector<1x16xf32>
    %388 = vector.extract_strided_slice %380 {offsets = [0, 64], sizes = [1, 16], strides = [1, 1]} : vector<1x128xf32> to vector<1x16xf32>
    %389 = arith.addf %387, %388 : vector<1x16xf32>
    %390 = vector.extract_strided_slice %380 {offsets = [0, 80], sizes = [1, 16], strides = [1, 1]} : vector<1x128xf32> to vector<1x16xf32>
    %391 = arith.addf %389, %390 : vector<1x16xf32>
    %392 = vector.extract_strided_slice %380 {offsets = [0, 96], sizes = [1, 16], strides = [1, 1]} : vector<1x128xf32> to vector<1x16xf32>
    %393 = arith.addf %391, %392 : vector<1x16xf32>
    %394 = vector.extract_strided_slice %380 {offsets = [0, 112], sizes = [1, 16], strides = [1, 1]} : vector<1x128xf32> to vector<1x16xf32>
    %395 = arith.addf %393, %394 : vector<1x16xf32>
    %cst_245 = arith.constant 1.250000e-01 : f32
    %396 = vector.broadcast %cst_245 : f32 to vector<1x16xf32>
    %397 = arith.mulf %395, %396 : vector<1x16xf32>
    %398 = vector.broadcast %397 : vector<1x16xf32> to vector<4x16xf32>
    %399 = arith.mulf %370, %398 : vector<4x16xf32>
    %cst_246 = arith.constant dense<0.000000e+00> : vector<4xf32>
    %400 = vector.multi_reduction <add>, %399, %cst_246 [1] : vector<4x16xf32> to vector<4xf32>
    %401 = vector.shape_cast %400 : vector<4xf32> to vector<4x1xf32>
    %402 = arith.addf %401, %372 : vector<4x1xf32>
    %cst_247 = arith.constant 0.000000e+00 : f32
    %403 = vector.broadcast %cst_247 : f32 to vector<4x1xf32>
    %404 = arith.maximumf %402, %403 : vector<4x1xf32>
    %405 = vector.broadcast %404 : vector<4x1xf32> to vector<4x16xf32>
    %406 = arith.mulf %405, %374 : vector<4x16xf32>
    %cst_248 = arith.constant dense<0.000000e+00> : vector<16xf32>
    %407 = vector.multi_reduction <add>, %406, %cst_248 [0] : vector<4x16xf32> to vector<16xf32>
    %408 = vector.shape_cast %407 : vector<16xf32> to vector<1x16xf32>
    %409 = arith.addf %408, %376 : vector<1x16xf32>
    %410 = arith.negf %409 : vector<1x16xf32>
    %411 = math.exp %410 : vector<1x16xf32>
    %cst_249 = arith.constant 1.000000e+00 : f32
    %412 = vector.broadcast %cst_249 : f32 to vector<1x16xf32>
    %413 = arith.addf %412, %411 : vector<1x16xf32>
    %414 = arith.divf %412, %413 : vector<1x16xf32>
    %415 = tpu.concatenate %414, %414, %414, %414, %414, %414, %414, %414 in 1 : vector<1x16xf32>, vector<1x16xf32>, vector<1x16xf32>, vector<1x16xf32>, vector<1x16xf32>, vector<1x16xf32>, vector<1x16xf32>, vector<1x16xf32> -> vector<1x128xf32>
    %416 = vector.broadcast %415 : vector<1x128xf32> to vector<8x128xf32>
    %417 = arith.mulf %368, %416 : vector<8x128xf32>
    %418 = arith.addf %324, %417 : vector<8x128xf32>
    %c9 = arith.constant 9 : index
    %c0_250 = arith.constant 0 : index
    %c0_251 = arith.constant 0 : index
    %c0_252 = arith.constant 0 : index
    %419 = vector.load %arg4[%c9, %c0_250, %c0_251, %c0_252] : memref<11x3x128x128xf32, #tpu.memory_space<vmem>>, vector<1x1x128x128xf32>
    %420 = vector.shape_cast %419 : vector<1x1x128x128xf32> to vector<128x128xf32>
    %c9_253 = arith.constant 9 : index
    %c1_254 = arith.constant 1 : index
    %c0_255 = arith.constant 0 : index
    %c0_256 = arith.constant 0 : index
    %421 = vector.load %arg4[%c9_253, %c1_254, %c0_255, %c0_256] : memref<11x3x128x128xf32, #tpu.memory_space<vmem>>, vector<1x1x128x128xf32>
    %422 = vector.shape_cast %421 : vector<1x1x128x128xf32> to vector<128x128xf32>
    %c9_257 = arith.constant 9 : index
    %c2_258 = arith.constant 2 : index
    %c0_259 = arith.constant 0 : index
    %c0_260 = arith.constant 0 : index
    %423 = vector.load %arg4[%c9_257, %c2_258, %c0_259, %c0_260] : memref<11x3x128x128xf32, #tpu.memory_space<vmem>>, vector<1x1x128x128xf32>
    %424 = vector.shape_cast %423 : vector<1x1x128x128xf32> to vector<128x128xf32>
    %c9_261 = arith.constant 9 : index
    %c0_262 = arith.constant 0 : index
    %425 = vector.load %arg5[%c9_261, %c0_262] : memref<11x128xf32, #tpu.memory_space<vmem>>, vector<1x128xf32>
    %426 = vector.shape_cast %425 : vector<1x128xf32> to vector<128xf32>
    %cst_263 = arith.constant 0.000000e+00 : f32
    %427 = vector.broadcast %cst_263 : f32 to vector<1x128xf32>
    %428 = vector.extract_strided_slice %418 {offsets = [0, 0], sizes = [7, 128], strides = [1, 1]} : vector<8x128xf32> to vector<7x128xf32>
    %429 = tpu.concatenate %427, %428 in 0 : vector<1x128xf32>, vector<7x128xf32> -> vector<8x128xf32>
    %430 = vector.extract_strided_slice %418 {offsets = [1, 0], sizes = [7, 128], strides = [1, 1]} : vector<8x128xf32> to vector<7x128xf32>
    %431 = tpu.concatenate %430, %427 in 0 : vector<7x128xf32>, vector<1x128xf32> -> vector<8x128xf32>
    %cst_264 = arith.constant dense<0.000000e+00> : vector<8x128xf32>
    %432 = tpu.matmul %429, %420, %cst_264 {dimension_numbers = #tpu.dot_dimension_numbers<[1], [0], [0], [1], [0, 0, 1, 1], [], []>} : vector<8x128xf32>, vector<128x128xf32>, vector<8x128xf32> -> vector<8x128xf32>
    %cst_265 = arith.constant dense<0.000000e+00> : vector<8x128xf32>
    %433 = tpu.matmul %418, %422, %cst_265 {dimension_numbers = #tpu.dot_dimension_numbers<[1], [0], [0], [1], [0, 0, 1, 1], [], []>} : vector<8x128xf32>, vector<128x128xf32>, vector<8x128xf32> -> vector<8x128xf32>
    %434 = arith.addf %432, %433 : vector<8x128xf32>
    %cst_266 = arith.constant dense<0.000000e+00> : vector<8x128xf32>
    %435 = tpu.matmul %431, %424, %cst_266 {dimension_numbers = #tpu.dot_dimension_numbers<[1], [0], [0], [1], [0, 0, 1, 1], [], []>} : vector<8x128xf32>, vector<128x128xf32>, vector<8x128xf32> -> vector<8x128xf32>
    %436 = arith.addf %434, %435 : vector<8x128xf32>
    %437 = vector.shape_cast %426 : vector<128xf32> to vector<1x128xf32>
    %438 = vector.broadcast %437 : vector<1x128xf32> to vector<8x128xf32>
    %439 = arith.addf %436, %438 : vector<8x128xf32>
    %440 = arith.addf %230, %439 : vector<8x128xf32>
    %c10 = arith.constant 10 : index
    %c0_267 = arith.constant 0 : index
    %c0_268 = arith.constant 0 : index
    %c0_269 = arith.constant 0 : index
    %441 = vector.load %arg4[%c10, %c0_267, %c0_268, %c0_269] : memref<11x3x128x128xf32, #tpu.memory_space<vmem>>, vector<1x1x128x128xf32>
    %442 = vector.shape_cast %441 : vector<1x1x128x128xf32> to vector<128x128xf32>
    %c10_270 = arith.constant 10 : index
    %c1_271 = arith.constant 1 : index
    %c0_272 = arith.constant 0 : index
    %c0_273 = arith.constant 0 : index
    %443 = vector.load %arg4[%c10_270, %c1_271, %c0_272, %c0_273] : memref<11x3x128x128xf32, #tpu.memory_space<vmem>>, vector<1x1x128x128xf32>
    %444 = vector.shape_cast %443 : vector<1x1x128x128xf32> to vector<128x128xf32>
    %c10_274 = arith.constant 10 : index
    %c2_275 = arith.constant 2 : index
    %c0_276 = arith.constant 0 : index
    %c0_277 = arith.constant 0 : index
    %445 = vector.load %arg4[%c10_274, %c2_275, %c0_276, %c0_277] : memref<11x3x128x128xf32, #tpu.memory_space<vmem>>, vector<1x1x128x128xf32>
    %446 = vector.shape_cast %445 : vector<1x1x128x128xf32> to vector<128x128xf32>
    %c10_278 = arith.constant 10 : index
    %c0_279 = arith.constant 0 : index
    %447 = vector.load %arg5[%c10_278, %c0_279] : memref<11x128xf32, #tpu.memory_space<vmem>>, vector<1x128xf32>
    %448 = vector.shape_cast %447 : vector<1x128xf32> to vector<128xf32>
    %cst_280 = arith.constant 0.000000e+00 : f32
    %449 = vector.broadcast %cst_280 : f32 to vector<1x128xf32>
    %450 = vector.extract_strided_slice %440 {offsets = [0, 0], sizes = [7, 128], strides = [1, 1]} : vector<8x128xf32> to vector<7x128xf32>
    %451 = tpu.concatenate %449, %450 in 0 : vector<1x128xf32>, vector<7x128xf32> -> vector<8x128xf32>
    %452 = vector.extract_strided_slice %440 {offsets = [1, 0], sizes = [7, 128], strides = [1, 1]} : vector<8x128xf32> to vector<7x128xf32>
    %453 = tpu.concatenate %452, %449 in 0 : vector<7x128xf32>, vector<1x128xf32> -> vector<8x128xf32>
    %cst_281 = arith.constant dense<0.000000e+00> : vector<8x128xf32>
    %454 = tpu.matmul %451, %442, %cst_281 {dimension_numbers = #tpu.dot_dimension_numbers<[1], [0], [0], [1], [0, 0, 1, 1], [], []>} : vector<8x128xf32>, vector<128x128xf32>, vector<8x128xf32> -> vector<8x128xf32>
    %cst_282 = arith.constant dense<0.000000e+00> : vector<8x128xf32>
    %455 = tpu.matmul %440, %444, %cst_282 {dimension_numbers = #tpu.dot_dimension_numbers<[1], [0], [0], [1], [0, 0, 1, 1], [], []>} : vector<8x128xf32>, vector<128x128xf32>, vector<8x128xf32> -> vector<8x128xf32>
    %456 = arith.addf %454, %455 : vector<8x128xf32>
    %cst_283 = arith.constant dense<0.000000e+00> : vector<8x128xf32>
    %457 = tpu.matmul %453, %446, %cst_283 {dimension_numbers = #tpu.dot_dimension_numbers<[1], [0], [0], [1], [0, 0, 1, 1], [], []>} : vector<8x128xf32>, vector<128x128xf32>, vector<8x128xf32> -> vector<8x128xf32>
    %458 = arith.addf %456, %457 : vector<8x128xf32>
    %459 = vector.shape_cast %448 : vector<128xf32> to vector<1x128xf32>
    %460 = vector.broadcast %459 : vector<1x128xf32> to vector<8x128xf32>
    %461 = arith.addf %458, %460 : vector<8x128xf32>
    %462 = arith.addf %461, %20 : vector<8x128xf32>
    %c0_284 = arith.constant 0 : index
    %c0_285 = arith.constant 0 : index
    %c0_286 = arith.constant 0 : index
    %463 = vector.load %arg10[%c0_284, %c0_285, %c0_286] : memref<3x128x512xf32, #tpu.memory_space<vmem>>, vector<1x128x512xf32>
    %464 = vector.shape_cast %463 : vector<1x128x512xf32> to vector<128x512xf32>
    %c1_287 = arith.constant 1 : index
    %c0_288 = arith.constant 0 : index
    %c0_289 = arith.constant 0 : index
    %465 = vector.load %arg10[%c1_287, %c0_288, %c0_289] : memref<3x128x512xf32, #tpu.memory_space<vmem>>, vector<1x128x512xf32>
    %466 = vector.shape_cast %465 : vector<1x128x512xf32> to vector<128x512xf32>
    %c2_290 = arith.constant 2 : index
    %c0_291 = arith.constant 0 : index
    %c0_292 = arith.constant 0 : index
    %467 = vector.load %arg10[%c2_290, %c0_291, %c0_292] : memref<3x128x512xf32, #tpu.memory_space<vmem>>, vector<1x128x512xf32>
    %468 = vector.shape_cast %467 : vector<1x128x512xf32> to vector<128x512xf32>
    %c0_293 = arith.constant 0 : index
    %c0_294 = arith.constant 0 : index
    %469 = vector.load %arg11[%c0_293, %c0_294] : memref<1x512xf32, #tpu.memory_space<vmem>>, vector<1x512xf32>
    %cst_295 = arith.constant 0.000000e+00 : f32
    %470 = vector.broadcast %cst_295 : f32 to vector<1x128xf32>
    %471 = vector.extract_strided_slice %462 {offsets = [0, 0], sizes = [7, 128], strides = [1, 1]} : vector<8x128xf32> to vector<7x128xf32>
    %472 = tpu.concatenate %470, %471 in 0 : vector<1x128xf32>, vector<7x128xf32> -> vector<8x128xf32>
    %473 = vector.extract_strided_slice %462 {offsets = [1, 0], sizes = [7, 128], strides = [1, 1]} : vector<8x128xf32> to vector<7x128xf32>
    %474 = tpu.concatenate %473, %470 in 0 : vector<7x128xf32>, vector<1x128xf32> -> vector<8x128xf32>
    %cst_296 = arith.constant dense<0.000000e+00> : vector<8x512xf32>
    %475 = tpu.matmul %472, %464, %cst_296 {dimension_numbers = #tpu.dot_dimension_numbers<[1], [0], [0], [1], [0, 0, 1, 1], [], []>} : vector<8x128xf32>, vector<128x512xf32>, vector<8x512xf32> -> vector<8x512xf32>
    %cst_297 = arith.constant dense<0.000000e+00> : vector<8x512xf32>
    %476 = tpu.matmul %462, %466, %cst_297 {dimension_numbers = #tpu.dot_dimension_numbers<[1], [0], [0], [1], [0, 0, 1, 1], [], []>} : vector<8x128xf32>, vector<128x512xf32>, vector<8x512xf32> -> vector<8x512xf32>
    %477 = arith.addf %475, %476 : vector<8x512xf32>
    %cst_298 = arith.constant dense<0.000000e+00> : vector<8x512xf32>
    %478 = tpu.matmul %474, %468, %cst_298 {dimension_numbers = #tpu.dot_dimension_numbers<[1], [0], [0], [1], [0, 0, 1, 1], [], []>} : vector<8x128xf32>, vector<128x512xf32>, vector<8x512xf32> -> vector<8x512xf32>
    %479 = arith.addf %477, %478 : vector<8x512xf32>
    %480 = vector.broadcast %469 : vector<1x512xf32> to vector<8x512xf32>
    %481 = arith.addf %479, %480 : vector<8x512xf32>
    %482 = vector.shape_cast %481 : vector<8x512xf32> to vector<8x2x256xf32>
    %483 = vector.shape_cast %482 : vector<8x2x256xf32> to vector<16x256xf32>
    %c0_299 = arith.constant 0 : index
    %c0_300 = arith.constant 0 : index
    %c0_301 = arith.constant 0 : index
    %484 = vector.load %arg12[%c0_299, %c0_300, %c0_301] : memref<3x256x48xf32, #tpu.memory_space<vmem>>, vector<1x256x48xf32>
    %485 = vector.shape_cast %484 : vector<1x256x48xf32> to vector<256x48xf32>
    %c1_302 = arith.constant 1 : index
    %c0_303 = arith.constant 0 : index
    %c0_304 = arith.constant 0 : index
    %486 = vector.load %arg12[%c1_302, %c0_303, %c0_304] : memref<3x256x48xf32, #tpu.memory_space<vmem>>, vector<1x256x48xf32>
    %487 = vector.shape_cast %486 : vector<1x256x48xf32> to vector<256x48xf32>
    %c2_305 = arith.constant 2 : index
    %c0_306 = arith.constant 0 : index
    %c0_307 = arith.constant 0 : index
    %488 = vector.load %arg12[%c2_305, %c0_306, %c0_307] : memref<3x256x48xf32, #tpu.memory_space<vmem>>, vector<1x256x48xf32>
    %489 = vector.shape_cast %488 : vector<1x256x48xf32> to vector<256x48xf32>
    %c0_308 = arith.constant 0 : index
    %c0_309 = arith.constant 0 : index
    %490 = vector.load %arg13[%c0_308, %c0_309] : memref<1x48xf32, #tpu.memory_space<vmem>>, vector<1x48xf32>
    %cst_310 = arith.constant 0.000000e+00 : f32
    %491 = vector.broadcast %cst_310 : f32 to vector<1x256xf32>
    %492 = vector.extract_strided_slice %483 {offsets = [0, 0], sizes = [15, 256], strides = [1, 1]} : vector<16x256xf32> to vector<15x256xf32>
    %493 = tpu.concatenate %491, %492 in 0 : vector<1x256xf32>, vector<15x256xf32> -> vector<16x256xf32>
    %494 = vector.extract_strided_slice %483 {offsets = [1, 0], sizes = [15, 256], strides = [1, 1]} : vector<16x256xf32> to vector<15x256xf32>
    %495 = tpu.concatenate %494, %491 in 0 : vector<15x256xf32>, vector<1x256xf32> -> vector<16x256xf32>
    %cst_311 = arith.constant dense<0.000000e+00> : vector<16x48xf32>
    %496 = tpu.matmul %493, %485, %cst_311 {dimension_numbers = #tpu.dot_dimension_numbers<[1], [0], [0], [1], [0, 0, 1, 1], [], []>} : vector<16x256xf32>, vector<256x48xf32>, vector<16x48xf32> -> vector<16x48xf32>
    %cst_312 = arith.constant dense<0.000000e+00> : vector<16x48xf32>
    %497 = tpu.matmul %483, %487, %cst_312 {dimension_numbers = #tpu.dot_dimension_numbers<[1], [0], [0], [1], [0, 0, 1, 1], [], []>} : vector<16x256xf32>, vector<256x48xf32>, vector<16x48xf32> -> vector<16x48xf32>
    %498 = arith.addf %496, %497 : vector<16x48xf32>
    %cst_313 = arith.constant dense<0.000000e+00> : vector<16x48xf32>
    %499 = tpu.matmul %495, %489, %cst_313 {dimension_numbers = #tpu.dot_dimension_numbers<[1], [0], [0], [1], [0, 0, 1, 1], [], []>} : vector<16x256xf32>, vector<256x48xf32>, vector<16x48xf32> -> vector<16x48xf32>
    %500 = arith.addf %498, %499 : vector<16x48xf32>
    %501 = vector.broadcast %490 : vector<1x48xf32> to vector<16x48xf32>
    %502 = arith.addf %500, %501 : vector<16x48xf32>
    %c0_314 = arith.constant 0 : index
    %c0_315 = arith.constant 0 : index
    %c0_316 = arith.constant 0 : index
    %503 = vector.load %arg14[%c0_314, %c0_315, %c0_316] : memref<1x16x48xf32, #tpu.memory_space<vmem>>, vector<1x16x48xf32>
    %504 = vector.shape_cast %503 : vector<1x16x48xf32> to vector<16x48xf32>
    %505 = vector.shape_cast %502 : vector<16x48xf32> to vector<1x16x48xf32>
    tpu.vector_store %arg14[%c0_314, %c0_315, %c0_316], %505 {strides = array<i32>} : memref<1x16x48xf32, #tpu.memory_space<vmem>>, vector<1x16x48xf32>,
    return
  }
  func.func @transform_0(%arg0: i32) -> (i32, i32, i32) {
    %c0_i32 = arith.constant 0 : i32
    %c0_i32_0 = arith.constant 0 : i32
    %c0_i32_1 = arith.constant 0 : i32
    return %arg0, %c0_i32, %c0_i32_0 : i32, i32, i32
  }
  func.func @transform_1(%arg0: i32) -> (i32, i32, i32) {
    %c0_i32 = arith.constant 0 : i32
    %c0_i32_0 = arith.constant 0 : i32
    %c0_i32_1 = arith.constant 0 : i32
    %c0_i32_2 = arith.constant 0 : i32
    return %c0_i32, %c0_i32_0, %c0_i32_1 : i32, i32, i32
  }
  func.func @transform_2(%arg0: i32) -> (i32, i32) {
    %c0_i32 = arith.constant 0 : i32
    %c0_i32_0 = arith.constant 0 : i32
    %c0_i32_1 = arith.constant 0 : i32
    return %c0_i32, %c0_i32_0 : i32, i32
  }
  func.func @transform_3(%arg0: i32) -> (i32, i32, i32, i32) {
    %c0_i32 = arith.constant 0 : i32
    %c0_i32_0 = arith.constant 0 : i32
    %c0_i32_1 = arith.constant 0 : i32
    %c0_i32_2 = arith.constant 0 : i32
    %c0_i32_3 = arith.constant 0 : i32
    return %c0_i32, %c0_i32_0, %c0_i32_1, %c0_i32_2 : i32, i32, i32, i32
  }
  func.func @transform_4(%arg0: i32) -> (i32, i32) {
    %c0_i32 = arith.constant 0 : i32
    %c0_i32_0 = arith.constant 0 : i32
    %c0_i32_1 = arith.constant 0 : i32
    return %c0_i32, %c0_i32_0 : i32, i32
  }
  func.func @transform_5(%arg0: i32) -> (i32, i32, i32) {
    %c0_i32 = arith.constant 0 : i32
    %c0_i32_0 = arith.constant 0 : i32
    %c0_i32_1 = arith.constant 0 : i32
    %c0_i32_2 = arith.constant 0 : i32
    return %c0_i32, %c0_i32_0, %c0_i32_1 : i32, i32, i32
  }
  func.func @transform_6(%arg0: i32) -> (i32, i32, i32) {
    %c0_i32 = arith.constant 0 : i32
    %c0_i32_0 = arith.constant 0 : i32
    %c0_i32_1 = arith.constant 0 : i32
    %c0_i32_2 = arith.constant 0 : i32
    return %c0_i32, %c0_i32_0, %c0_i32_1 : i32, i32, i32
  }
  func.func @transform_7(%arg0: i32) -> (i32, i32, i32) {
    %c0_i32 = arith.constant 0 : i32
    %c0_i32_0 = arith.constant 0 : i32
    %c0_i32_1 = arith.constant 0 : i32
    %c0_i32_2 = arith.constant 0 : i32
    return %c0_i32, %c0_i32_0, %c0_i32_1 : i32, i32, i32
  }
  func.func @transform_8(%arg0: i32) -> (i32, i32, i32) {
    %c0_i32 = arith.constant 0 : i32
    %c0_i32_0 = arith.constant 0 : i32
    %c0_i32_1 = arith.constant 0 : i32
    %c0_i32_2 = arith.constant 0 : i32
    return %c0_i32, %c0_i32_0, %c0_i32_1 : i32, i32, i32
  }
  func.func @transform_9(%arg0: i32) -> (i32, i32, i32) {
    %c0_i32 = arith.constant 0 : i32
    %c0_i32_0 = arith.constant 0 : i32
    %c0_i32_1 = arith.constant 0 : i32
    %c0_i32_2 = arith.constant 0 : i32
    return %c0_i32, %c0_i32_0, %c0_i32_1 : i32, i32, i32
  }
  func.func @transform_10(%arg0: i32) -> (i32, i32) {
    %c0_i32 = arith.constant 0 : i32
    %c0_i32_0 = arith.constant 0 : i32
    %c0_i32_1 = arith.constant 0 : i32
    return %c0_i32, %c0_i32_0 : i32, i32
  }
  func.func @transform_11(%arg0: i32) -> (i32, i32, i32) {
    %c0_i32 = arith.constant 0 : i32
    %c0_i32_0 = arith.constant 0 : i32
    %c0_i32_1 = arith.constant 0 : i32
    %c0_i32_2 = arith.constant 0 : i32
    return %c0_i32, %c0_i32_0, %c0_i32_1 : i32, i32, i32
  }
  func.func @transform_12(%arg0: i32) -> (i32, i32) {
    %c0_i32 = arith.constant 0 : i32
    %c0_i32_0 = arith.constant 0 : i32
    %c0_i32_1 = arith.constant 0 : i32
    return %c0_i32, %c0_i32_0 : i32, i32
  }
  func.func @transform_13(%arg0: i32) -> (i32, i32, i32) {
    %c0_i32 = arith.constant 0 : i32
    %c0_i32_0 = arith.constant 0 : i32
    %c0_i32_1 = arith.constant 0 : i32
    return %arg0, %c0_i32, %c0_i32_0 : i32, i32, i32
  }
}

</mosaic_0001>

<llo_original>
// kernel: rcan_forward.1
$region0: #{rcan_forward.1}
  #allocation0 [shape = 'u32[]', space=smem, size = 0x4, offset = 0x4, fixed_abs, tag = 'smem constant byte address 0x4 - core index']
  #allocation1 [shape = 'u32[144,128]{1,0:T(1,128)}', space=vmem, size = 0x12000, scoped, tag = 'internal scratch']
  %s0 = inlined_call_operand.vmem [shape: f32[2,8,24], index: 0, kind: input, shape index: {}]
  %s1 = inlined_call_operand.hbm [shape: f32[3,24,128], index: 1, kind: input, shape index: {}]
  %s2 = inlined_call_operand.hbm [shape: f32[1,128], index: 2, kind: input, shape index: {}]
  %s3 = inlined_call_operand.hbm [shape: f32[11,3,128,128], index: 3, kind: input, shape index: {}]
  %s4 = inlined_call_operand.hbm [shape: f32[11,128], index: 4, kind: input, shape index: {}]
  %s5 = inlined_call_operand.hbm [shape: f32[4,4,16], index: 5, kind: input, shape index: {}]
  %s6 = inlined_call_operand.vmem [shape: f32[4,4,1], index: 6, kind: input, shape index: {}]
  %s7 = inlined_call_operand.hbm [shape: f32[4,4,16], index: 7, kind: input, shape index: {}]
  %s8 = inlined_call_operand.hbm [shape: f32[4,1,16], index: 8, kind: input, shape index: {}]
  %s9 = inlined_call_operand.hbm [shape: f32[3,128,512], index: 9, kind: input, shape index: {}]
  %s10 = inlined_call_operand.hbm [shape: f32[1,512], index: 10, kind: input, shape index: {}]
  %s11 = inlined_call_operand.vmem [shape: f32[3,256,48], index: 11, kind: input, shape index: {}]
  %s12 = inlined_call_operand.hbm [shape: f32[1,48], index: 12, kind: input, shape index: {}]
  %s13 = inlined_call_operand.vmem [shape: f32[2,16,48], index: 13, kind: output, shape index: {}]
  %s14 = sld [smem:[#allocation0]]
  $region125: #{rcan_forward.1} parent=0
    _
  %s16 = ssub.s32 1, %s14
  %s17 = scalar_select 0, %s16, %s14
  $region1: #{rcan_forward.1} parent=0
    #allocation2 [shape = 'u8[36864]{0}', space=vmem, size = 0x9000, scoped, tag = 'input window, operand 1, single buffered']
    #allocation3 [shape = 's32[2]{0}', space=sflag, size = 0x8, scoped, tag = 'scoped memory for rcan_forward.1']
    #allocation4 [shape = 'u8[512]{0}', space=vmem, size = 0x400, scoped, tag = 'input window, operand 2, single buffered']
    #allocation5 [shape = 's32[1]{0}', space=sflag, size = 0x4, scoped, tag = 'scoped memory for rcan_forward.1']
    #allocation6 [shape = 'u8[2162688]{0}', space=vmem, size = 0x210000, scoped, tag = 'input window, operand 3, single buffered']
    #allocation7 [shape = 'u8[8192]{0}', space=vmem, size = 0x2000, scoped, tag = 'input window, operand 4, single buffered']
    #allocation8 [shape = 's32[1]{0}', space=sflag, size = 0x4, scoped, tag = 'scoped memory for rcan_forward.1']
    #allocation9 [shape = 'u8[8192]{0}', space=vmem, size = 0x2000, scoped, tag = 'input window, operand 5, single buffered']
    #allocation10 [shape = 'u8[8192]{0}', space=vmem, size = 0x2000, scoped, tag = 'input window, operand 7, single buffered']
    #allocation11 [shape = 's32[1]{0}', space=sflag, size = 0x4, scoped, tag = 'scoped memory for rcan_forward.1']
    #allocation12 [shape = 'u8[2048]{0}', space=vmem, size = 0x800, scoped, tag = 'input window, operand 8, single buffered']
    #allocation13 [shape = 'u8[786432]{0}', space=vmem, size = 0xc0000, scoped, tag = 'input window, operand 9, single buffered']
    #allocation14 [shape = 's32[1]{0}', space=sflag, size = 0x4, scoped, tag = 'scoped memory for rcan_forward.1']
    #allocation15 [shape = 'u8[2048]{0}', space=vmem, size = 0x800, scoped, tag = 'input window, operand 10, single buffered']
    #allocation16 [shape = 'u8[512]{0}', space=vmem, size = 0x400, scoped, tag = 'input window, operand 12, single buffered']
    #allocation17 [shape = 's32[1]{0}', space=sflag, size = 0x4, scoped, tag = 'scoped memory for rcan_forward.1']
    %18 = vsyncpa [#allocation3], 0
    %19 = vsyncpa [#allocation5], 0
    %20 = vsyncpa [#allocation8], 0
    %21 = vsyncpa [#allocation11], 0
    %22 = vsyncpa [#allocation14], 0
    %23 = vsyncpa [#allocation17], 0
    loop: start=0, step=1, limit=4
    $region2: #{rcan_forward.1} parent=1 // loop_pre_header
      _
    $region3: #{rcan_forward.1} parent=1 // loop_header
      %s25 = sphi 0, %s29
      %p26 = scmp.ge.s32.totalorder %s25, 4
      %s35 = sphi 0, %s37
      %s38 = sphi 0, %s35
      %s39 = sphi 0, %s38
      %s55 = sphi 0, %s39
      %s59 = sphi 0, %s59
      %s61 = sphi 0, %s59
      %s62 = sphi 0, %s61
      %s76 = sphi 0, %s62
      %s80 = sphi 0, %s80
      %s82 = sphi 0, %s80
      %s83 = sphi 0, %s82
      %s97 = sphi 0, %s83
      %s101 = sphi 0, %s101
      %s103 = sphi 0, %s101
      %s104 = sphi 0, %s103
      %s118 = sphi 0, %s104
      %s122 = sphi 0, %s122
      %s124 = sphi 0, %s122
      %s125 = sphi 0, %s124
      %s139 = sphi 0, %s125
      %s143 = sphi 0, %s143
      %s145 = sphi 0, %s143
      %s146 = sphi 0, %s145
      %s160 = sphi 0, %s146
      %s164 = sphi 0, %s164
      %s166 = sphi 0, %s164
      %s167 = sphi 0, %s166
      %s181 = sphi 0, %s167
      %s185 = sphi 0, %s185
      %s187 = sphi 0, %s185
      %s188 = sphi 0, %s187
      %s202 = sphi 0, %s188
      %s206 = sphi 0, %s206
      %s208 = sphi 0, %s206
      %s209 = sphi 0, %s208
      %s223 = sphi 0, %s209
      %s227 = sphi 0, %s227
      %s229 = sphi 0, %s227
      %s230 = sphi 0, %s229
      %s244 = sphi 0, %s230
      %s248 = sphi 0, %s248
      %s250 = sphi 0, %s248
      %s251 = sphi 0, %s250
      %s265 = sphi 0, %s251
      %s269 = sphi 0, %s269
      %s271 = sphi 0, %s269
      %s272 = sphi 0, %s271
      %s286 = sphi 0, %s272
      %s290 = sphi 0, %s290
      %s292 = sphi 0, %s290
      %s293 = sphi 0, %s292
      %s307 = sphi 0, %s293
      %s313 = sphi 0, %s315
      %s316 = sphi 0, %s313
      %s317 = sphi 0, %s316
      %s333 = sphi 0, %s317
    $region4: #{rcan_forward.1} parent=1 // loop_header_branch
      %28 = sbr.rel (%p26) target = $region8
    $region5: #{rcan_forward.1} parent=1 // loop_body
      %s30 = ssub.s32 %s25, 1
      %s31 = ssub.s32 %s25, 2
      %s32 = sadd.s32 %s25, 1
      %s33 = ssub.s32 %s25, %s32
      %p34 = scmp.eq.s32.totalorder %s33, 0
      %s36 = sadd.s32 %s35, 1
      %s37 = scalar_select %p34, %s35, %s36
      %p40 = pneg %p34
      %p41 = scmp.eq.s32.totalorder %s25, 1
      %p42 = por %p40, %p41
      %p43 = scmp.ne.s32.totalorder %s35, %s38
      %p44 = scmp.eq.s32.totalorder %s25, 0
      %p45 = por %p43, %p44
      %p46 = scmp.ne.s32.totalorder %s35, %s38
      %p47 = scmp.eq.s32.totalorder %s30, 1
      %p48 = por %p46, %p47
      %p49 = scmp.ne.s32.totalorder %s38, %s39
      %p50 = scmp.eq.s32.totalorder %s30, 0
      %p51 = por %p49, %p50
      %p52 = scmp.ne.s32.totalorder %s38, %s39
      %p53 = scmp.eq.s32.totalorder %s31, 1
      %p54 = por %p52, %p53
      %p56 = scmp.ne.s32.totalorder %s39, %s55
      %p57 = scmp.eq.s32.totalorder %s31, 0
      %p58 = por %p56, %p57
      %s60 = sadd.s32 %s59, 1
      %p63 = scmp.eq.s32.totalorder %s25, 1
      %p64 = scmp.ne.s32.totalorder %s59, %s61
      %p65 = scmp.eq.s32.totalorder %s25, 0
      %p66 = por %p64, %p65
      %p67 = scmp.ne.s32.totalorder %s59, %s61
      %p68 = scmp.eq.s32.totalorder %s30, 1
      %p69 = por %p67, %p68
      %p70 = scmp.ne.s32.totalorder %s61, %s62
      %p71 = scmp.eq.s32.totalorder %s30, 0
      %p72 = por %p70, %p71
      %p73 = scmp.ne.s32.totalorder %s61, %s62
      %p74 = scmp.eq.s32.totalorder %s31, 1
      %p75 = por %p73, %p74
      %p77 = scmp.ne.s32.totalorder %s62, %s76
      %p78 = scmp.eq.s32.totalorder %s31, 0
      %p79 = por %p77, %p78
      %s81 = sadd.s32 %s80, 1
      %p84 = scmp.eq.s32.totalorder %s25, 1
      %p85 = scmp.ne.s32.totalorder %s80, %s82
      %p86 = scmp.eq.s32.totalorder %s25, 0
      %p87 = por %p85, %p86
      %p88 = scmp.ne.s32.totalorder %s80, %s82
      %p89 = scmp.eq.s32.totalorder %s30, 1
      %p90 = por %p88, %p89
      %p91 = scmp.ne.s32.totalorder %s82, %s83
      %p92 = scmp.eq.s32.totalorder %s30, 0
      %p93 = por %p91, %p92
      %p94 = scmp.ne.s32.totalorder %s82, %s83
      %p95 = scmp.eq.s32.totalorder %s31, 1
      %p96 = por %p94, %p95
      %p98 = scmp.ne.s32.totalorder %s83, %s97
      %p99 = scmp.eq.s32.totalorder %s31, 0
      %p100 = por %p98, %p99
      %s102 = sadd.s32 %s101, 1
      %p105 = scmp.eq.s32.totalorder %s25, 1
      %p106 = scmp.ne.s32.totalorder %s101, %s103
      %p107 = scmp.eq.s32.totalorder %s25, 0
      %p108 = por %p106, %p107
      %p109 = scmp.ne.s32.totalorder %s101, %s103
      %p110 = scmp.eq.s32.totalorder %s30, 1
      %p111 = por %p109, %p110
      %p112 = scmp.ne.s32.totalorder %s103, %s104
      %p113 = scmp.eq.s32.totalorder %s30, 0
      %p114 = por %p112, %p113
      %p115 = scmp.ne.s32.totalorder %s103, %s104
      %p116 = scmp.eq.s32.totalorder %s31, 1
      %p117 = por %p115, %p116
      %p119 = scmp.ne.s32.totalorder %s104, %s118
      %p120 = scmp.eq.s32.totalorder %s31, 0
      %p121 = por %p119, %p120
      %s123 = sadd.s32 %s122, 1
      %p126 = scmp.eq.s32.totalorder %s25, 1
      %p127 = scmp.ne.s32.totalorder %s122, %s124
      %p128 = scmp.eq.s32.totalorder %s25, 0
      %p129 = por %p127, %p128
      %p130 = scmp.ne.s32.totalorder %s122, %s124
      %p131 = scmp.eq.s32.totalorder %s30, 1
      %p132 = por %p130, %p131
      %p133 = scmp.ne.s32.totalorder %s124, %s125
      %p134 = scmp.eq.s32.totalorder %s30, 0
      %p135 = por %p133, %p134
      %p136 = scmp.ne.s32.totalorder %s124, %s125
      %p137 = scmp.eq.s32.totalorder %s31, 1
      %p138 = por %p136, %p137
      %p140 = scmp.ne.s32.totalorder %s125, %s139
      %p141 = scmp.eq.s32.totalorder %s31, 0
      %p142 = por %p140, %p141
      %s144 = sadd.s32 %s143, 1
      %p147 = scmp.eq.s32.totalorder %s25, 1
      %p148 = scmp.ne.s32.totalorder %s143, %s145
      %p149 = scmp.eq.s32.totalorder %s25, 0
      %p150 = por %p148, %p149
      %p151 = scmp.ne.s32.totalorder %s143, %s145
      %p152 = scmp.eq.s32.totalorder %s30, 1
      %p153 = por %p151, %p152
      %p154 = scmp.ne.s32.totalorder %s145, %s146
      %p155 = scmp.eq.s32.totalorder %s30, 0
      %p156 = por %p154, %p155
      %p157 = scmp.ne.s32.totalorder %s145, %s146
      %p158 = scmp.eq.s32.totalorder %s31, 1
      %p159 = por %p157, %p158
      %p161 = scmp.ne.s32.totalorder %s146, %s160
      %p162 = scmp.eq.s32.totalorder %s31, 0
      %p163 = por %p161, %p162
      %s165 = sadd.s32 %s164, 1
      %p168 = scmp.eq.s32.totalorder %s25, 1
      %p169 = scmp.ne.s32.totalorder %s164, %s166
      %p170 = scmp.eq.s32.totalorder %s25, 0
      %p171 = por %p169, %p170
      %p172 = scmp.ne.s32.totalorder %s164, %s166
      %p173 = scmp.eq.s32.totalorder %s30, 1
      %p174 = por %p172, %p173
      %p175 = scmp.ne.s32.totalorder %s166, %s167
      %p176 = scmp.eq.s32.totalorder %s30, 0
      %p177 = por %p175, %p176
      %p178 = scmp.ne.s32.totalorder %s166, %s167
      %p179 = scmp.eq.s32.totalorder %s31, 1
      %p180 = por %p178, %p179
      %p182 = scmp.ne.s32.totalorder %s167, %s181
      %p183 = scmp.eq.s32.totalorder %s31, 0
      %p184 = por %p182, %p183
      %s186 = sadd.s32 %s185, 1
      %p189 = scmp.eq.s32.totalorder %s25, 1
      %p190 = scmp.ne.s32.totalorder %s185, %s187
      %p191 = scmp.eq.s32.totalorder %s25, 0
      %p192 = por %p190, %p191
      %p193 = scmp.ne.s32.totalorder %s185, %s187
      %p194 = scmp.eq.s32.totalorder %s30, 1
      %p195 = por %p193, %p194
      %p196 = scmp.ne.s32.totalorder %s187, %s188
      %p197 = scmp.eq.s32.totalorder %s30, 0
      %p198 = por %p196, %p197
      %p199 = scmp.ne.s32.totalorder %s187, %s188
      %p200 = scmp.eq.s32.totalorder %s31, 1
      %p201 = por %p199, %p200
      %p203 = scmp.ne.s32.totalorder %s188, %s202
      %p204 = scmp.eq.s32.totalorder %s31, 0
      %p205 = por %p203, %p204
      %s207 = sadd.s32 %s206, 1
      %p210 = scmp.eq.s32.totalorder %s25, 1
      %p211 = scmp.ne.s32.totalorder %s206, %s208
      %p212 = scmp.eq.s32.totalorder %s25, 0
      %p213 = por %p211, %p212
      %p214 = scmp.ne.s32.totalorder %s206, %s208
      %p215 = scmp.eq.s32.totalorder %s30, 1
      %p216 = por %p214, %p215
      %p217 = scmp.ne.s32.totalorder %s208, %s209
      %p218 = scmp.eq.s32.totalorder %s30, 0
      %p219 = por %p217, %p218
      %p220 = scmp.ne.s32.totalorder %s208, %s209
      %p221 = scmp.eq.s32.totalorder %s31, 1
      %p222 = por %p220, %p221
      %p224 = scmp.ne.s32.totalorder %s209, %s223
      %p225 = scmp.eq.s32.totalorder %s31, 0
      %p226 = por %p224, %p225
      %s228 = sadd.s32 %s227, 1
      %p231 = scmp.eq.s32.totalorder %s25, 1
      %p232 = scmp.ne.s32.totalorder %s227, %s229
      %p233 = scmp.eq.s32.totalorder %s25, 0
      %p234 = por %p232, %p233
      %p235 = scmp.ne.s32.totalorder %s227, %s229
      %p236 = scmp.eq.s32.totalorder %s30, 1
      %p237 = por %p235, %p236
      %p238 = scmp.ne.s32.totalorder %s229, %s230
      %p239 = scmp.eq.s32.totalorder %s30, 0
      %p240 = por %p238, %p239
      %p241 = scmp.ne.s32.totalorder %s229, %s230
      %p242 = scmp.eq.s32.totalorder %s31, 1
      %p243 = por %p241, %p242
      %p245 = scmp.ne.s32.totalorder %s230, %s244
      %p246 = scmp.eq.s32.totalorder %s31, 0
      %p247 = por %p245, %p246
      %s249 = sadd.s32 %s248, 1
      %p252 = scmp.eq.s32.totalorder %s25, 1
      %p253 = scmp.ne.s32.totalorder %s248, %s250
      %p254 = scmp.eq.s32.totalorder %s25, 0
      %p255 = por %p253, %p254
      %p256 = scmp.ne.s32.totalorder %s248, %s250
      %p257 = scmp.eq.s32.totalorder %s30, 1
      %p258 = por %p256, %p257
      %p259 = scmp.ne.s32.totalorder %s250, %s251
      %p260 = scmp.eq.s32.totalorder %s30, 0
      %p261 = por %p259, %p260
      %p262 = scmp.ne.s32.totalorder %s250, %s251
      %p263 = scmp.eq.s32.totalorder %s31, 1
      %p264 = por %p262, %p263
      %p266 = scmp.ne.s32.totalorder %s251, %s265
      %p267 = scmp.eq.s32.totalorder %s31, 0
      %p268 = por %p266, %p267
      %s270 = sadd.s32 %s269, 1
      %p273 = scmp.eq.s32.totalorder %s25, 1
      %p274 = scmp.ne.s32.totalorder %s269, %s271
      %p275 = scmp.eq.s32.totalorder %s25, 0
      %p276 = por %p274, %p275
      %p277 = scmp.ne.s32.totalorder %s269, %s271
      %p278 = scmp.eq.s32.totalorder %s30, 1
      %p279 = por %p277, %p278
      %p280 = scmp.ne.s32.totalorder %s271, %s272
      %p281 = scmp.eq.s32.totalorder %s30, 0
      %p282 = por %p280, %p281
      %p283 = scmp.ne.s32.totalorder %s271, %s272
      %p284 = scmp.eq.s32.totalorder %s31, 1
      %p285 = por %p283, %p284
      %p287 = scmp.ne.s32.totalorder %s272, %s286
      %p288 = scmp.eq.s32.totalorder %s31, 0
      %p289 = por %p287, %p288
      %s291 = sadd.s32 %s290, 1
      %p294 = scmp.eq.s32.totalorder %s25, 1
      %p295 = scmp.ne.s32.totalorder %s290, %s292
      %p296 = scmp.eq.s32.totalorder %s25, 0
      %p297 = por %p295, %p296
      %p298 = scmp.ne.s32.totalorder %s290, %s292
      %p299 = scmp.eq.s32.totalorder %s30, 1
      %p300 = por %p298, %p299
      %p301 = scmp.ne.s32.totalorder %s292, %s293
      %p302 = scmp.eq.s32.totalorder %s30, 0
      %p303 = por %p301, %p302
      %p304 = scmp.ne.s32.totalorder %s292, %s293
      %p305 = scmp.eq.s32.totalorder %s31, 1
      %p306 = por %p304, %p305
      %p308 = scmp.ne.s32.totalorder %s293, %s307
      %p309 = scmp.eq.s32.totalorder %s31, 0
      %p310 = por %p308, %p309
      %s311 = ssub.s32 %s25, %s32
      %p312 = scmp.eq.s32.totalorder %s311, 0
      %s314 = sadd.s32 %s313, 1
      %s315 = scalar_select %p312, %s313, %s314
      %p318 = pneg %p312
      %p319 = scmp.eq.s32.totalorder %s25, 1
      %p320 = por %p318, %p319
      %p321 = scmp.ne.s32.totalorder %s313, %s316
      %p322 = scmp.eq.s32.totalorder %s25, 0
      %p323 = por %p321, %p322
      %p324 = scmp.ne.s32.totalorder %s313, %s316
      %p325 = scmp.eq.s32.totalorder %s30, 1
      %p326 = por %p324, %p325
      %p327 = scmp.ne.s32.totalorder %s316, %s317
      %p328 = scmp.eq.s32.totalorder %s30, 0
      %p329 = por %p327, %p328
      %p330 = scmp.ne.s32.totalorder %s316, %s317
      %p331 = scmp.eq.s32.totalorder %s31, 1
      %p332 = por %p330, %p331
      %p334 = scmp.ne.s32.totalorder %s317, %s333
      %p335 = scmp.eq.s32.totalorder %s31, 0
      %p336 = por %p334, %p335
      %p337 = scmp.le.s32.totalorder 1, %s25
      %p338 = scmp.lt.s32.totalorder %s25, 3
      %p339 = pnand %p337, %p338
      %p340 = pneg %p339
      // Predicated region
      $region9: #{rcan_forward.1} parent=5 // pred_check
        _
      $region10: #{rcan_forward.1} parent=5 // pred_check_branch
        %342 = sbr.rel (%p339) target = $region12
      $region11: #{rcan_forward.1} parent=5 // pred_region
        %s343 = ssub.s32 %s25, 1
        // Predicated region
        $region13: #{rcan_forward.1} parent=11 // pred_check
          %p344 = pneg %p72
        $region14: #{rcan_forward.1} parent=11 // pred_check_branch
          %346 = sbr.rel (%p344) target = $region16
        $region15: #{rcan_forward.1} parent=11 // pred_region
          %s348 = ssub.s32 1152, 1152
          %349 = vsyncadd [#allocation3], %s348
          %s350 = sshll.u32 [#allocation2], 4
          %s351 = int_to_ptr.vmem [resolvable:$true] %s350
          %356 = dma.hbm_to_vmem [thread:$0]  %s1, 1152, %s351, [#allocation3], 128, 128, 8
        $region16: #{rcan_forward.1} parent=11 // pred_fallthru
          _
        // Predicated region
        $region17: #{rcan_forward.1} parent=11 // pred_check
          %p357 = pneg %p93
        $region18: #{rcan_forward.1} parent=11 // pred_check_branch
          %359 = sbr.rel (%p357) target = $region20
        $region19: #{rcan_forward.1} parent=11 // pred_region
          %s361 = ssub.s32 16, 16
          %362 = vsyncadd [#allocation5], %s361
          %s364 = sshll.u32 [#allocation4], 4
          %s365 = int_to_ptr.vmem [resolvable:$true] %s364
          %367 = dma.hbm_to_vmem [thread:$0]  %s2, 16, %s365, [#allocation5]
        $region20: #{rcan_forward.1} parent=11 // pred_fallthru
          _
        // Predicated region
        $region21: #{rcan_forward.1} parent=11 // pred_check
          %p368 = pneg %p114
        $region22: #{rcan_forward.1} parent=11 // pred_check_branch
          %370 = sbr.rel (%p368) target = $region24
        $region23: #{rcan_forward.1} parent=11 // pred_region
          %s372 = ssub.s32 67584, 67584
          %373 = vsyncadd [#allocation5], %s372
          %s374 = sshll.u32 [#allocation6], 4
          %s375 = int_to_ptr.vmem [resolvable:$true] %s374
          %380 = dma.hbm_to_vmem [thread:$0]  %s3, 67584, %s375, [#allocation5], 128, 128, 8
        $region24: #{rcan_forward.1} parent=11 // pred_fallthru
          _
        // Predicated region
        $region25: #{rcan_forward.1} parent=11 // pred_check
          %p381 = pneg %p135
        $region26: #{rcan_forward.1} parent=11 // pred_check_branch
          %383 = sbr.rel (%p381) target = $region28
        $region27: #{rcan_forward.1} parent=11 // pred_region
          %s385 = ssub.s32 256, 256
          %386 = vsyncadd [#allocation8], %s385
          %s387 = sshll.u32 [#allocation7], 4
          %s388 = int_to_ptr.vmem [resolvable:$true] %s387
          %393 = dma.hbm_to_vmem [thread:$0]  %s4, 256, %s388, [#allocation8], 128, 128, 8
        $region28: #{rcan_forward.1} parent=11 // pred_fallthru
          _
        // Predicated region
        $region29: #{rcan_forward.1} parent=11 // pred_check
          %p394 = pneg %p156
        $region30: #{rcan_forward.1} parent=11 // pred_check_branch
          %396 = sbr.rel (%p394) target = $region32
        $region31: #{rcan_forward.1} parent=11 // pred_region
          %s398 = ssub.s32 256, 256
          %399 = vsyncadd [#allocation8], %s398
          %s400 = sshll.u32 [#allocation9], 4
          %s401 = int_to_ptr.vmem [resolvable:$true] %s400
          %406 = dma.hbm_to_vmem [thread:$0]  %s5, 256, %s401, [#allocation8], 64, 64, 4
        $region32: #{rcan_forward.1} parent=11 // pred_fallthru
          _
        // Predicated region
        $region33: #{rcan_forward.1} parent=11 // pred_check
          %p407 = pneg %p177
        $region34: #{rcan_forward.1} parent=11 // pred_check_branch
          %409 = sbr.rel (%p407) target = $region36
        $region35: #{rcan_forward.1} parent=11 // pred_region
          _
        $region36: #{rcan_forward.1} parent=11 // pred_fallthru
          _
        // Predicated region
        $region37: #{rcan_forward.1} parent=11 // pred_check
          %p410 = pneg %p198
        $region38: #{rcan_forward.1} parent=11 // pred_check_branch
          %412 = sbr.rel (%p410) target = $region40
        $region39: #{rcan_forward.1} parent=11 // pred_region
          %s414 = ssub.s32 256, 256
          %415 = vsyncadd [#allocation11], %s414
          %s416 = sshll.u32 [#allocation10], 4
          %s417 = int_to_ptr.vmem [resolvable:$true] %s416
          %422 = dma.hbm_to_vmem [thread:$0]  %s7, 256, %s417, [#allocation11], 64, 64, 4
        $region40: #{rcan_forward.1} parent=11 // pred_fallthru
          _
        // Predicated region
        $region41: #{rcan_forward.1} parent=11 // pred_check
          %p423 = pneg %p219
        $region42: #{rcan_forward.1} parent=11 // pred_check_branch
          %425 = sbr.rel (%p423) target = $region44
        $region43: #{rcan_forward.1} parent=11 // pred_region
          %s427 = ssub.s32 64, 64
          %428 = vsyncadd [#allocation11], %s427
          %s429 = sshll.u32 [#allocation12], 4
          %s430 = int_to_ptr.vmem [resolvable:$true] %s429
          %435 = dma.hbm_to_vmem [thread:$0]  %s8, 64, %s430, [#allocation11], 16, 16, 1
        $region44: #{rcan_forward.1} parent=11 // pred_fallthru
          _
        // Predicated region
        $region45: #{rcan_forward.1} parent=11 // pred_check
          %p436 = pneg %p240
        $region46: #{rcan_forward.1} parent=11 // pred_check_branch
          %438 = sbr.rel (%p436) target = $region48
        $region47: #{rcan_forward.1} parent=11 // pred_region
          %s440 = ssub.s32 24576, 24576
          %441 = vsyncadd [#allocation14], %s440
          %s442 = sshll.u32 [#allocation13], 4
          %s443 = int_to_ptr.vmem [resolvable:$true] %s442
          %448 = dma.hbm_to_vmem [thread:$0]  %s9, 24576, %s443, [#allocation14], 512, 512, 32
        $region48: #{rcan_forward.1} parent=11 // pred_fallthru
          _
        // Predicated region
        $region49: #{rcan_forward.1} parent=11 // pred_check
          %p449 = pneg %p261
        $region50: #{rcan_forward.1} parent=11 // pred_check_branch
          %451 = sbr.rel (%p449) target = $region52
        $region51: #{rcan_forward.1} parent=11 // pred_region
          %s453 = ssub.s32 64, 64
          %454 = vsyncadd [#allocation14], %s453
          %s456 = sshll.u32 [#allocation15], 4
          %s457 = int_to_ptr.vmem [resolvable:$true] %s456
          %459 = dma.hbm_to_vmem [thread:$0]  %s10, 64, %s457, [#allocation14]
        $region52: #{rcan_forward.1} parent=11 // pred_fallthru
          _
        // Predicated region
        $region53: #{rcan_forward.1} parent=11 // pred_check
          %p460 = pneg %p282
        $region54: #{rcan_forward.1} parent=11 // pred_check_branch
          %462 = sbr.rel (%p460) target = $region56
        $region55: #{rcan_forward.1} parent=11 // pred_region
          _
        $region56: #{rcan_forward.1} parent=11 // pred_fallthru
          _
        // Predicated region
        $region57: #{rcan_forward.1} parent=11 // pred_check
          %p463 = pneg %p303
        $region58: #{rcan_forward.1} parent=11 // pred_check_branch
          %465 = sbr.rel (%p463) target = $region60
        $region59: #{rcan_forward.1} parent=11 // pred_region
          %s467 = ssub.s32 16, 16
          %468 = vsyncadd [#allocation17], %s467
          %s470 = sshll.u32 [#allocation16], 4
          %s471 = int_to_ptr.vmem [resolvable:$true] %s470
          %473 = dma.hbm_to_vmem [thread:$0]  %s12, 16, %s471, [#allocation17]
        $region60: #{rcan_forward.1} parent=11 // pred_fallthru
          _
      $region12: #{rcan_forward.1} parent=5 // pred_fallthru
        _
      %p474 = scmp.lt.s32.totalorder %s25, 2
      // Predicated region
      $region61: #{rcan_forward.1} parent=5 // pred_check
        %p475 = pneg %p474
      $region62: #{rcan_forward.1} parent=5 // pred_check_branch
        %477 = sbr.rel (%p475) target = $region64
      $region63: #{rcan_forward.1} parent=5 // pred_region
        // Predicated region
        $region65: #{rcan_forward.1} parent=63 // pred_check
          %p478 = pneg %p45
        $region66: #{rcan_forward.1} parent=63 // pred_check_branch
          %480 = sbr.rel (%p478) target = $region68
        $region67: #{rcan_forward.1} parent=63 // pred_region
          %p481 = scmp.lt.s32.totalorder %s25, 1
          %s482 = scalar_select %p481, %s25, 1
          %s483 = smul.addr %s482, 8
          %s484 = scalar_lea.vmem %s0, %s483
        $region68: #{rcan_forward.1} parent=63 // pred_fallthru
          _
      $region64: #{rcan_forward.1} parent=5 // pred_fallthru
        _
      %p485 = scmp.le.s32.totalorder 1, %s25
      %p486 = scmp.lt.s32.totalorder %s25, 3
      %p487 = pnand %p485, %p486
      %p488 = pneg %p487
      // Predicated region
      $region69: #{rcan_forward.1} parent=5 // pred_check
        _
      $region70: #{rcan_forward.1} parent=5 // pred_check_branch
        %490 = sbr.rel (%p487) target = $region72
      $region71: #{rcan_forward.1} parent=5 // pred_region
        %s491 = ssub.s32 %s25, 1
        // Predicated region
        $region73: #{rcan_forward.1} parent=71 // pred_check
          %p492 = pneg %p72
        $region74: #{rcan_forward.1} parent=71 // pred_check_branch
          %494 = sbr.rel (%p492) target = $region76
        $region75: #{rcan_forward.1} parent=71 // pred_region
          %495 = dma.done [#allocation3], 1152
        $region76: #{rcan_forward.1} parent=71 // pred_fallthru
          _
        // Predicated region
        $region77: #{rcan_forward.1} parent=71 // pred_check
          %p496 = pneg %p93
        $region78: #{rcan_forward.1} parent=71 // pred_check_branch
          %498 = sbr.rel (%p496) target = $region80
        $region79: #{rcan_forward.1} parent=71 // pred_region
          %499 = dma.done [#allocation5], 16
        $region80: #{rcan_forward.1} parent=71 // pred_fallthru
          _
        // Predicated region
        $region81: #{rcan_forward.1} parent=71 // pred_check
          %p500 = pneg %p114
        $region82: #{rcan_forward.1} parent=71 // pred_check_branch
          %502 = sbr.rel (%p500) target = $region84
        $region83: #{rcan_forward.1} parent=71 // pred_region
          %503 = dma.done [#allocation5], 67584
        $region84: #{rcan_forward.1} parent=71 // pred_fallthru
          _
        // Predicated region
        $region85: #{rcan_forward.1} parent=71 // pred_check
          %p504 = pneg %p135
        $region86: #{rcan_forward.1} parent=71 // pred_check_branch
          %506 = sbr.rel (%p504) target = $region88
        $region87: #{rcan_forward.1} parent=71 // pred_region
          %507 = dma.done [#allocation8], 256
        $region88: #{rcan_forward.1} parent=71 // pred_fallthru
          _
        // Predicated region
        $region89: #{rcan_forward.1} parent=71 // pred_check
          %p508 = pneg %p156
        $region90: #{rcan_forward.1} parent=71 // pred_check_branch
          %510 = sbr.rel (%p508) target = $region92
        $region91: #{rcan_forward.1} parent=71 // pred_region
          %511 = dma.done [#allocation8], 256
        $region92: #{rcan_forward.1} parent=71 // pred_fallthru
          _
        // Predicated region
        $region93: #{rcan_forward.1} parent=71 // pred_check
          %p512 = pneg %p198
        $region94: #{rcan_forward.1} parent=71 // pred_check_branch
          %514 = sbr.rel (%p512) target = $region96
        $region95: #{rcan_forward.1} parent=71 // pred_region
          %515 = dma.done [#allocation11], 256
        $region96: #{rcan_forward.1} parent=71 // pred_fallthru
          _
        // Predicated region
        $region97: #{rcan_forward.1} parent=71 // pred_check
          %p516 = pneg %p219
        $region98: #{rcan_forward.1} parent=71 // pred_check_branch
          %518 = sbr.rel (%p516) target = $region100
        $region99: #{rcan_forward.1} parent=71 // pred_region
          %519 = dma.done [#allocation11], 64
        $region100: #{rcan_forward.1} parent=71 // pred_fallthru
          _
        // Predicated region
        $region101: #{rcan_forward.1} parent=71 // pred_check
          %p520 = pneg %p240
        $region102: #{rcan_forward.1} parent=71 // pred_check_branch
          %522 = sbr.rel (%p520) target = $region104
        $region103: #{rcan_forward.1} parent=71 // pred_region
          %523 = dma.done [#allocation14], 24576
        $region104: #{rcan_forward.1} parent=71 // pred_fallthru
          _
        // Predicated region
        $region105: #{rcan_forward.1} parent=71 // pred_check
          %p524 = pneg %p261
        $region106: #{rcan_forward.1} parent=71 // pred_check_branch
          %526 = sbr.rel (%p524) target = $region108
        $region107: #{rcan_forward.1} parent=71 // pred_region
          %527 = dma.done [#allocation14], 64
        $region108: #{rcan_forward.1} parent=71 // pred_fallthru
          _
        // Predicated region
        $region109: #{rcan_forward.1} parent=71 // pred_check
          %p528 = pneg %p303
        $region110: #{rcan_forward.1} parent=71 // pred_check_branch
          %530 = sbr.rel (%p528) target = $region112
        $region111: #{rcan_forward.1} parent=71 // pred_region
          %531 = dma.done [#allocation17], 16
        $region112: #{rcan_forward.1} parent=71 // pred_fallthru
          _
        %p532 = scmp.lt.s32.totalorder %s30, 1
        %s533 = scalar_select %p532, %s30, 1
        %s534 = smul.addr %s533, 8
        %s535 = scalar_lea.vmem %s0, %s534
        %p536 = pneg %p51
        %p537 = pneg %p48
        %p538 = pneg %p72
        %p539 = pneg %p69
        %p540 = pneg %p93
        %p541 = pneg %p90
        %p542 = pneg %p114
        %p543 = pneg %p111
        %p544 = pneg %p135
        %p545 = pneg %p132
        %p546 = pneg %p156
        %p547 = pneg %p153
        %p548 = pneg %p177
        %p549 = pneg %p174
        %p550 = pneg %p198
        %p551 = pneg %p195
        %p552 = pneg %p219
        %p553 = pneg %p216
        %p554 = pneg %p240
        %p555 = pneg %p237
        %p556 = pneg %p261
        %p557 = pneg %p258
        %p558 = pneg %p282
        %p559 = pneg %p279
        %p560 = pneg %p303
        %p561 = pneg %p300
        %p562 = pneg %p329
        %p563 = pneg %p326
        %p564 = scmp.lt.s32.totalorder %s30, 1
        %s565 = scalar_select %p564, %s30, 1
        %s566 = smul.addr %s565, 2
        %s567 = smul.addr %s566, 8
        %s568 = scalar_lea.vmem %s13, %s567
        %p569 = scmp.lt.s32.totalorder %s30, 1
        %s570 = scalar_select %p569, %s30, 1
        %s571 = smul.addr %s570, 8
        %s572 = scalar_lea.vmem %s0, %s571
        %p573 = scmp.lt.s32.totalorder %s30, 1
        %s574 = scalar_select %p573, %s30, 1
        %s575 = smul.addr %s574, 2
        %s576 = smul.addr %s575, 8
        %s577 = scalar_lea.vmem %s13, %s576
        %v578 = vld [vmem:[%s572] sm:$0xff]
        %v579 = vld [vmem:[#allocation2] sm:$0xff]
        %v580 = vld [vmem:[#allocation2 + $0x8] sm:$0xff]
        %v581 = vld [vmem:[#allocation2 + $0x10] sm:$0xff]
        %s582 = scalar_lea.vmem [#allocation2], 24
        %v583 = vld [vmem:[%s582] sm:$0xff]
        %v584 = vld [vmem:[%s582 + $0x8] sm:$0xff]
        %v585 = vld [vmem:[%s582 + $0x10] sm:$0xff]
        %s586 = scalar_lea.vmem [#allocation2], 48
        %v587 = vld [vmem:[%s586] sm:$0xff]
        %v588 = vld [vmem:[%s586 + $0x8] sm:$0xff]
        %v589 = vld [vmem:[%s586 + $0x10] sm:$0xff]
        %v590 = vld [vmem:[#allocation4] sm:$0x1]
        %v592 = vrot.slane %v578, 7
        %vm594 = vcmask 1040384
        %v595 = vsel %vm594, 0.0, %v592
        %v596 = vrot.slane %v578, 1
        %vm598 = vcmask 1046528
        %v599 = vsel %vm598, %v596, 0.0
        %vm600 = vcmask 195584
        %v601 = vsel %vm600, %v578, 0
        %603 = vmatprep.subr.mxu0 0.0
        %604 = vmatpush1.msra.mxu0 %v583
        %605 = vmatprep.subr.mxu0 0.0
        %606 = vmatpush1.msra.mxu0 %v584
        %607 = vmatprep.subr.mxu0 0.0
        %608 = vmatpush1.msra.mxu0 %v585
        %609 = vmatprep.subr.mxu0 0.0
        %610 = vmatpush1.msra.mxu0 0.0
        %611 = vmatprep.subr.mxu0 0.0
        %612 = vmatpush1.msra.mxu0 0.0
        %613 = vmatprep.subr.mxu0 0.0
        %614 = vmatpush1.msra.mxu0 0.0
        %615 = vmatprep.subr.mxu0 0.0
        %616 = vmatpush1.msra.mxu0 0.0
        %617 = vmatprep.subr.mxu0 0.0
        %618 = vmatpush1.msra.mxu0 0.0
        %619 = vmatprep.subr.mxu0 0.0
        %620 = vmatpush1.msra.mxu0 0.0
        %621 = vmatprep.subr.mxu0 0.0
        %622 = vmatpush1.msra.mxu0 0.0
        %623 = vmatprep.subr.mxu0 0.0
        %624 = vmatpush1.msra.mxu0 0.0
        %625 = vmatprep.subr.mxu0 0.0
        %626 = vmatpush1.msra.mxu0 0.0
        %627 = vmatprep.subr.mxu0 0.0
        %628 = vmatpush1.msra.mxu0 0.0
        %629 = vmatprep.subr.mxu0 0.0
        %630 = vmatpush1.msra.mxu0 0.0
        %631 = vmatprep.subr.mxu0 0.0
        %632 = vmatpush1.msra.mxu0 0.0
        %633 = vmatprep.subr.mxu0 0.0
        %634 = vmatpush1.msra.mxu0 0.0
        %635 = vmatprep.subr.mxu0 0.0
        %636 = vmatpush1.msra.mxu0 0.0
        %637 = vmatprep.subr.mxu0 0.0
        %638 = vmatpush1.msra.mxu0 0.0
        %639 = vmatprep.subr.mxu0 0.0
        %640 = vmatpush1.msra.mxu0 0.0
        %641 = vmatprep.subr.mxu0 0.0
        %642 = vmatpush1.msra.mxu0 0.0
        %643 = vmatprep.subr.mxu0 0.0
        %644 = vmatpush1.msra.mxu0 0.0
        %645 = vmatprep.subr.mxu0 0.0
        %646 = vmatpush1.msra.mxu0 0.0
        %647 = vmatprep.subr.mxu0 0.0
        %648 = vmatpush1.msra.mxu0 0.0
        %649 = vmatprep.subr.mxu0 0.0
        %650 = vmatpush1.msra.mxu0 0.0
        %651 = vmatprep.subr.mxu0 0.0
        %652 = vmatpush1.msra.mxu0 0.0
        %653 = vmatprep.subr.mxu0 0.0
        %654 = vmatpush1.msra.mxu0 0.0
        %655 = vmatprep.subr.mxu0 0.0
        %656 = vmatpush1.msra.mxu0 0.0
        %657 = vmatprep.subr.mxu0 0.0
        %658 = vmatpush1.msra.mxu0 0.0
        %659 = vmatprep.subr.mxu0 0.0
        %660 = vmatpush1.msra.mxu0 0.0
        %661 = vmatprep.subr.mxu0 0.0
        %662 = vmatpush1.msra.mxu0 0.0
        %663 = vmatprep.subr.mxu0 0.0
        %664 = vmatpush1.msra.mxu0 0.0
        %665 = vmatprep.subr.mxu0 0.0
        %666 = vmatpush1.msra.mxu0 0.0
        %667 = vmatprep.mubr.f32.mxu0 0.0
        %668 = vmatmul.mubr.f32.gmra.mrb[0].mxu0 %v601
        %v669 = vpop.f32.mrb[0].mxu0
        %v670 = vadd.f32 0.0, %v669
        %v671 = vpop.f32.mrb[0].mxu0
        %672 = vdwg.mxu0
        %v674 = vsel %vm600, %v595, 0
        %676 = vmatprep.subr.mxu0 0.0
        %677 = vmatpush1.msra.mxu0 %v579
        %678 = vmatprep.subr.mxu0 0.0
        %679 = vmatpush1.msra.mxu0 %v580
        %680 = vmatprep.subr.mxu0 0.0
        %681 = vmatpush1.msra.mxu0 %v581
        %682 = vmatprep.subr.mxu0 0.0
        %683 = vmatpush1.msra.mxu0 0.0
        %684 = vmatprep.subr.mxu0 0.0
        %685 = vmatpush1.msra.mxu0 0.0
        %686 = vmatprep.subr.mxu0 0.0
        %687 = vmatpush1.msra.mxu0 0.0
        %688 = vmatprep.subr.mxu0 0.0
        %689 = vmatpush1.msra.mxu0 0.0
        %690 = vmatprep.subr.mxu0 0.0
        %691 = vmatpush1.msra.mxu0 0.0
        %692 = vmatprep.subr.mxu0 0.0
        %693 = vmatpush1.msra.mxu0 0.0
        %694 = vmatprep.subr.mxu0 0.0
        %695 = vmatpush1.msra.mxu0 0.0
        %696 = vmatprep.subr.mxu0 0.0
        %697 = vmatpush1.msra.mxu0 0.0
        %698 = vmatprep.subr.mxu0 0.0
        %699 = vmatpush1.msra.mxu0 0.0
        %700 = vmatprep.subr.mxu0 0.0
        %701 = vmatpush1.msra.mxu0 0.0
        %702 = vmatprep.subr.mxu0 0.0
        %703 = vmatpush1.msra.mxu0 0.0
        %704 = vmatprep.subr.mxu0 0.0
        %705 = vmatpush1.msra.mxu0 0.0
        %706 = vmatprep.subr.mxu0 0.0
        %707 = vmatpush1.msra.mxu0 0.0
        %708 = vmatprep.subr.mxu0 0.0
        %709 = vmatpush1.msra.mxu0 0.0
        %710 = vmatprep.subr.mxu0 0.0
        %711 = vmatpush1.msra.mxu0 0.0
        %712 = vmatprep.subr.mxu0 0.0
        %713 = vmatpush1.msra.mxu0 0.0
        %714 = vmatprep.subr.mxu0 0.0
        %715 = vmatpush1.msra.mxu0 0.0
        %716 = vmatprep.subr.mxu0 0.0
        %717 = vmatpush1.msra.mxu0 0.0
        %718 = vmatprep.subr.mxu0 0.0
        %719 = vmatpush1.msra.mxu0 0.0
        %720 = vmatprep.subr.mxu0 0.0
        %721 = vmatpush1.msra.mxu0 0.0
        %722 = vmatprep.subr.mxu0 0.0
        %723 = vmatpush1.msra.mxu0 0.0
        %724 = vmatprep.subr.mxu0 0.0
        %725 = vmatpush1.msra.mxu0 0.0
        %726 = vmatprep.subr.mxu0 0.0
        %727 = vmatpush1.msra.mxu0 0.0
        %728 = vmatprep.subr.mxu0 0.0
        %729 = vmatpush1.msra.mxu0 0.0
        %730 = vmatprep.subr.mxu0 0.0
        %731 = vmatpush1.msra.mxu0 0.0
        %732 = vmatprep.subr.mxu0 0.0
        %733 = vmatpush1.msra.mxu0 0.0
        %734 = vmatprep.subr.mxu0 0.0
        %735 = vmatpush1.msra.mxu0 0.0
        %736 = vmatprep.subr.mxu0 0.0
        %737 = vmatpush1.msra.mxu0 0.0
        %738 = vmatprep.subr.mxu0 0.0
        %739 = vmatpush1.msra.mxu0 0.0
        %740 = vmatprep.mubr.f32.mxu0 0.0
        %741 = vmatmul.mubr.f32.gmra.mrb[0].mxu0 %v674
        %v742 = vpop.f32.mrb[0].mxu0
        %v743 = vadd.f32 %v670, %v742
        %v744 = vpop.f32.mrb[0].mxu0
        %745 = vdwg.mxu0
        %v747 = vsel %vm600, %v599, 0
        %749 = vmatprep.subr.mxu0 0.0
        %750 = vmatpush1.msra.mxu0 %v587
        %751 = vmatprep.subr.mxu0 0.0
        %752 = vmatpush1.msra.mxu0 %v588
        %753 = vmatprep.subr.mxu0 0.0
        %754 = vmatpush1.msra.mxu0 %v589
        %755 = vmatprep.subr.mxu0 0.0
        %756 = vmatpush1.msra.mxu0 0.0
        %757 = vmatprep.subr.mxu0 0.0
        %758 = vmatpush1.msra.mxu0 0.0
        %759 = vmatprep.subr.mxu0 0.0
        %760 = vmatpush1.msra.mxu0 0.0
        %761 = vmatprep.subr.mxu0 0.0
        %762 = vmatpush1.msra.mxu0 0.0
        %763 = vmatprep.subr.mxu0 0.0
        %764 = vmatpush1.msra.mxu0 0.0
        %765 = vmatprep.subr.mxu0 0.0
        %766 = vmatpush1.msra.mxu0 0.0
        %767 = vmatprep.subr.mxu0 0.0
        %768 = vmatpush1.msra.mxu0 0.0
        %769 = vmatprep.subr.mxu0 0.0
        %770 = vmatpush1.msra.mxu0 0.0
        %771 = vmatprep.subr.mxu0 0.0
        %772 = vmatpush1.msra.mxu0 0.0
        %773 = vmatprep.subr.mxu0 0.0
        %774 = vmatpush1.msra.mxu0 0.0
        %775 = vmatprep.subr.mxu0 0.0
        %776 = vmatpush1.msra.mxu0 0.0
        %777 = vmatprep.subr.mxu0 0.0
        %778 = vmatpush1.msra.mxu0 0.0
        %779 = vmatprep.subr.mxu0 0.0
        %780 = vmatpush1.msra.mxu0 0.0
        %781 = vmatprep.subr.mxu0 0.0
        %782 = vmatpush1.msra.mxu0 0.0
        %783 = vmatprep.subr.mxu0 0.0
        %784 = vmatpush1.msra.mxu0 0.0
        %785 = vmatprep.subr.mxu0 0.0
        %786 = vmatpush1.msra.mxu0 0.0
        %787 = vmatprep.subr.mxu0 0.0
        %788 = vmatpush1.msra.mxu0 0.0
        %789 = vmatprep.subr.mxu0 0.0
        %790 = vmatpush1.msra.mxu0 0.0
        %791 = vmatprep.subr.mxu0 0.0
        %792 = vmatpush1.msra.mxu0 0.0
        %793 = vmatprep.subr.mxu0 0.0
        %794 = vmatpush1.msra.mxu0 0.0
        %795 = vmatprep.subr.mxu0 0.0
        %796 = vmatpush1.msra.mxu0 0.0
        %797 = vmatprep.subr.mxu0 0.0
        %798 = vmatpush1.msra.mxu0 0.0
        %799 = vmatprep.subr.mxu0 0.0
        %800 = vmatpush1.msra.mxu0 0.0
        %801 = vmatprep.subr.mxu0 0.0
        %802 = vmatpush1.msra.mxu0 0.0
        %803 = vmatprep.subr.mxu0 0.0
        %804 = vmatpush1.msra.mxu0 0.0
        %805 = vmatprep.subr.mxu0 0.0
        %806 = vmatpush1.msra.mxu0 0.0
        %807 = vmatprep.subr.mxu0 0.0
        %808 = vmatpush1.msra.mxu0 0.0
        %809 = vmatprep.subr.mxu0 0.0
        %810 = vmatpush1.msra.mxu0 0.0
        %811 = vmatprep.subr.mxu0 0.0
        %812 = vmatpush1.msra.mxu0 0.0
        %813 = vmatprep.mubr.f32.mxu0 0.0
        %814 = vmatmul.mubr.f32.gmra.mrb[0].mxu0 %v747
        %v815 = vpop.f32.mrb[0].mxu0
        %v816 = vadd.f32 0.0, %v815
        %v817 = vpop.f32.mrb[0].mxu0
        %818 = vdwg.mxu0
        %v819 = vadd.f32 %v743, %v816
        %v821 = vlaneseq
        %v822 = vshrl.u32 %v821, 7
        %v823 = vsub.s32 0, %v822
        %v824 = vrot.slane %v590, %v823
        %v826 = vadd.f32 %v819, %v824
        %v827 = vld [vmem:[#allocation6] sm:$0xff]
        %v828 = vld [vmem:[#allocation6 + $0x8] sm:$0xff]
        %v829 = vld [vmem:[#allocation6 + $0x10] sm:$0xff]
        %v830 = vld [vmem:[#allocation6 + $0x18] sm:$0xff]
        %v831 = vld [vmem:[#allocation6 + $0x20] sm:$0xff]
        %v832 = vld [vmem:[#allocation6 + $0x28] sm:$0xff]
        %v833 = vld [vmem:[#allocation6 + $0x30] sm:$0xff]
        %v834 = vld [vmem:[#allocation6 + $0x38] sm:$0xff]
        %v835 = vld [vmem:[#allocation6 + $0x40] sm:$0xff]
        %v836 = vld [vmem:[#allocation6 + $0x48] sm:$0xff]
        %v837 = vld [vmem:[#allocation6 + $0x50] sm:$0xff]
        %v838 = vld [vmem:[#allocation6 + $0x58] sm:$0xff]
        %v839 = vld [vmem:[#allocation6 + $0x60] sm:$0xff]
        %v840 = vld [vmem:[#allocation6 + $0x68] sm:$0xff]
        %v841 = vld [vmem:[#allocation6 + $0x70] sm:$0xff]
        %v842 = vld [vmem:[#allocation6 + $0x78] sm:$0xff]
        %s843 = scalar_lea.vmem [#allocation6], 128
        %v844 = vld [vmem:[%s843] sm:$0xff]
        %v845 = vld [vmem:[%s843 + $0x8] sm:$0xff]
        %v846 = vld [vmem:[%s843 + $0x10] sm:$0xff]
        %v847 = vld [vmem:[%s843 + $0x18] sm:$0xff]
        %v848 = vld [vmem:[%s843 + $0x20] sm:$0xff]
        %v849 = vld [vmem:[%s843 + $0x28] sm:$0xff]
        %v850 = vld [vmem:[%s843 + $0x30] sm:$0xff]
        %v851 = vld [vmem:[%s843 + $0x38] sm:$0xff]
        %v852 = vld [vmem:[%s843 + $0x40] sm:$0xff]
        %v853 = vld [vmem:[%s843 + $0x48] sm:$0xff]
        %v854 = vld [vmem:[%s843 + $0x50] sm:$0xff]
        %v855 = vld [vmem:[%s843 + $0x58] sm:$0xff]
        %v856 = vld [vmem:[%s843 + $0x60] sm:$0xff]
        %v857 = vld [vmem:[%s843 + $0x68] sm:$0xff]
        %v858 = vld [vmem:[%s843 + $0x70] sm:$0xff]
        %v859 = vld [vmem:[%s843 + $0x78] sm:$0xff]
        %s860 = scalar_lea.vmem [#allocation6], 256
        %v861 = vld [vmem:[%s860] sm:$0xff]
        %v862 = vld [vmem:[%s860 + $0x8] sm:$0xff]
        %v863 = vld [vmem:[%s860 + $0x10] sm:$0xff]
        %v864 = vld [vmem:[%s860 + $0x18] sm:$0xff]
        %v865 = vld [vmem:[%s860 + $0x20] sm:$0xff]
        %v866 = vld [vmem:[%s860 + $0x28] sm:$0xff]
        %v867 = vld [vmem:[%s860 + $0x30] sm:$0xff]
        %v868 = vld [vmem:[%s860 + $0x38] sm:$0xff]
        %v869 = vld [vmem:[%s860 + $0x40] sm:$0xff]
        %v870 = vld [vmem:[%s860 + $0x48] sm:$0xff]
        %v871 = vld [vmem:[%s860 + $0x50] sm:$0xff]
        %v872 = vld [vmem:[%s860 + $0x58] sm:$0xff]
        %v873 = vld [vmem:[%s860 + $0x60] sm:$0xff]
        %v874 = vld [vmem:[%s860 + $0x68] sm:$0xff]
        %v875 = vld [vmem:[%s860 + $0x70] sm:$0xff]
        %v876 = vld [vmem:[%s860 + $0x78] sm:$0xff]
        %v877 = vld [vmem:[#allocation7] sm:$0x1]
        %v879 = vrot.slane %v826, 7
        %v881 = vsel %vm594, 0.0, %v879
        %v882 = vrot.slane %v826, 1
        %v884 = vsel %vm598, %v882, 0.0
        %885 = vmatprep.subr.mxu0 0.0
        %886 = vmatpush1.msra.mxu0 %v844
        %887 = vmatprep.subr.mxu0 0.0
        %888 = vmatpush1.msra.mxu0 %v845
        %889 = vmatprep.subr.mxu0 0.0
        %890 = vmatpush1.msra.mxu0 %v846
        %891 = vmatprep.subr.mxu0 0.0
        %892 = vmatpush1.msra.mxu0 %v847
        %893 = vmatprep.subr.mxu0 0.0
        %894 = vmatpush1.msra.mxu0 %v848
        %895 = vmatprep.subr.mxu0 0.0
        %896 = vmatpush1.msra.mxu0 %v849
        %897 = vmatprep.subr.mxu0 0.0
        %898 = vmatpush1.msra.mxu0 %v850
        %899 = vmatprep.subr.mxu0 0.0
        %900 = vmatpush1.msra.mxu0 %v851
        %901 = vmatprep.subr.mxu0 0.0
        %902 = vmatpush1.msra.mxu0 %v852
        %903 = vmatprep.subr.mxu0 0.0
        %904 = vmatpush1.msra.mxu0 %v853
        %905 = vmatprep.subr.mxu0 0.0
        %906 = vmatpush1.msra.mxu0 %v854
        %907 = vmatprep.subr.mxu0 0.0
        %908 = vmatpush1.msra.mxu0 %v855
        %909 = vmatprep.subr.mxu0 0.0
        %910 = vmatpush1.msra.mxu0 %v856
        %911 = vmatprep.subr.mxu0 0.0
        %912 = vmatpush1.msra.mxu0 %v857
        %913 = vmatprep.subr.mxu0 0.0
        %914 = vmatpush1.msra.mxu0 %v858
        %915 = vmatprep.subr.mxu0 0.0
        %916 = vmatpush1.msra.mxu0 %v859
        %917 = vmatprep.subr.mxu0 0.0
        %918 = vmatpush1.msra.mxu0 0.0
        %919 = vmatprep.subr.mxu0 0.0
        %920 = vmatpush1.msra.mxu0 0.0
        %921 = vmatprep.subr.mxu0 0.0
        %922 = vmatpush1.msra.mxu0 0.0
        %923 = vmatprep.subr.mxu0 0.0
        %924 = vmatpush1.msra.mxu0 0.0
        %925 = vmatprep.subr.mxu0 0.0
        %926 = vmatpush1.msra.mxu0 0.0
        %927 = vmatprep.subr.mxu0 0.0
        %928 = vmatpush1.msra.mxu0 0.0
        %929 = vmatprep.subr.mxu0 0.0
        %930 = vmatpush1.msra.mxu0 0.0
        %931 = vmatprep.subr.mxu0 0.0
        %932 = vmatpush1.msra.mxu0 0.0
        %933 = vmatprep.subr.mxu0 0.0
        %934 = vmatpush1.msra.mxu0 0.0
        %935 = vmatprep.subr.mxu0 0.0
        %936 = vmatpush1.msra.mxu0 0.0
        %937 = vmatprep.subr.mxu0 0.0
        %938 = vmatpush1.msra.mxu0 0.0
        %939 = vmatprep.subr.mxu0 0.0
        %940 = vmatpush1.msra.mxu0 0.0
        %941 = vmatprep.subr.mxu0 0.0
        %942 = vmatpush1.msra.mxu0 0.0
        %943 = vmatprep.subr.mxu0 0.0
        %944 = vmatpush1.msra.mxu0 0.0
        %945 = vmatprep.subr.mxu0 0.0
        %946 = vmatpush1.msra.mxu0 0.0
        %947 = vmatprep.subr.mxu0 0.0
        %948 = vmatpush1.msra.mxu0 0.0
        %949 = vmatprep.mubr.f32.mxu0 0.0
        %950 = vmatmul.mubr.f32.gmra.mrb[0].mxu0 %v826
        %v951 = vpop.f32.mrb[0].mxu0
        %v952 = vadd.f32 0.0, %v951
        %v953 = vpop.f32.mrb[0].mxu0
        %954 = vdwg.mxu0
        %955 = vmatprep.subr.mxu0 0.0
        %956 = vmatpush1.msra.mxu0 %v827
        %957 = vmatprep.subr.mxu0 0.0
        %958 = vmatpush1.msra.mxu0 %v828
        %959 = vmatprep.subr.mxu0 0.0
        %960 = vmatpush1.msra.mxu0 %v829
        %961 = vmatprep.subr.mxu0 0.0
        %962 = vmatpush1.msra.mxu0 %v830
        %963 = vmatprep.subr.mxu0 0.0
        %964 = vmatpush1.msra.mxu0 %v831
        %965 = vmatprep.subr.mxu0 0.0
        %966 = vmatpush1.msra.mxu0 %v832
        %967 = vmatprep.subr.mxu0 0.0
        %968 = vmatpush1.msra.mxu0 %v833
        %969 = vmatprep.subr.mxu0 0.0
        %970 = vmatpush1.msra.mxu0 %v834
        %971 = vmatprep.subr.mxu0 0.0
        %972 = vmatpush1.msra.mxu0 %v835
        %973 = vmatprep.subr.mxu0 0.0
        %974 = vmatpush1.msra.mxu0 %v836
        %975 = vmatprep.subr.mxu0 0.0
        %976 = vmatpush1.msra.mxu0 %v837
        %977 = vmatprep.subr.mxu0 0.0
        %978 = vmatpush1.msra.mxu0 %v838
        %979 = vmatprep.subr.mxu0 0.0
        %980 = vmatpush1.msra.mxu0 %v839
        %981 = vmatprep.subr.mxu0 0.0
        %982 = vmatpush1.msra.mxu0 %v840
        %983 = vmatprep.subr.mxu0 0.0
        %984 = vmatpush1.msra.mxu0 %v841
        %985 = vmatprep.subr.mxu0 0.0
        %986 = vmatpush1.msra.mxu0 %v842
        %987 = vmatprep.subr.mxu0 0.0
        %988 = vmatpush1.msra.mxu0 0.0
        %989 = vmatprep.subr.mxu0 0.0
        %990 = vmatpush1.msra.mxu0 0.0
        %991 = vmatprep.subr.mxu0 0.0
        %992 = vmatpush1.msra.mxu0 0.0
        %993 = vmatprep.subr.mxu0 0.0
        %994 = vmatpush1.msra.mxu0 0.0
        %995 = vmatprep.subr.mxu0 0.0
        %996 = vmatpush1.msra.mxu0 0.0
        %997 = vmatprep.subr.mxu0 0.0
        %998 = vmatpush1.msra.mxu0 0.0
        %999 = vmatprep.subr.mxu0 0.0
        %1000 = vmatpush1.msra.mxu0 0.0
        %1001 = vmatprep.subr.mxu0 0.0
        %1002 = vmatpush1.msra.mxu0 0.0
        %1003 = vmatprep.subr.mxu0 0.0
        %1004 = vmatpush1.msra.mxu0 0.0
        %1005 = vmatprep.subr.mxu0 0.0
        %1006 = vmatpush1.msra.mxu0 0.0
        %1007 = vmatprep.subr.mxu0 0.0
        %1008 = vmatpush1.msra.mxu0 0.0
        %1009 = vmatprep.subr.mxu0 0.0
        %1010 = vmatpush1.msra.mxu0 0.0
        %1011 = vmatprep.subr.mxu0 0.0
        %1012 = vmatpush1.msra.mxu0 0.0
        %1013 = vmatprep.subr.mxu0 0.0
        %1014 = vmatpush1.msra.mxu0 0.0
        %1015 = vmatprep.subr.mxu0 0.0
        %1016 = vmatpush1.msra.mxu0 0.0
        %1017 = vmatprep.subr.mxu0 0.0
        %1018 = vmatpush1.msra.mxu0 0.0
        %1019 = vmatprep.mubr.f32.mxu0 0.0
        %1020 = vmatmul.mubr.f32.gmra.mrb[0].mxu0 %v881
        %v1021 = vpop.f32.mrb[0].mxu0
        %v1022 = vadd.f32 %v952, %v1021
        %v1023 = vpop.f32.mrb[0].mxu0
        %1024 = vdwg.mxu0
        %1025 = vmatprep.subr.mxu0 0.0
        %1026 = vmatpush1.msra.mxu0 %v861
        %1027 = vmatprep.subr.mxu0 0.0
        %1028 = vmatpush1.msra.mxu0 %v862
        %1029 = vmatprep.subr.mxu0 0.0
        %1030 = vmatpush1.msra.mxu0 %v863
        %1031 = vmatprep.subr.mxu0 0.0
        %1032 = vmatpush1.msra.mxu0 %v864
        %1033 = vmatprep.subr.mxu0 0.0
        %1034 = vmatpush1.msra.mxu0 %v865
        %1035 = vmatprep.subr.mxu0 0.0
        %1036 = vmatpush1.msra.mxu0 %v866
        %1037 = vmatprep.subr.mxu0 0.0
        %1038 = vmatpush1.msra.mxu0 %v867
        %1039 = vmatprep.subr.mxu0 0.0
        %1040 = vmatpush1.msra.mxu0 %v868
        %1041 = vmatprep.subr.mxu0 0.0
        %1042 = vmatpush1.msra.mxu0 %v869
        %1043 = vmatprep.subr.mxu0 0.0
        %1044 = vmatpush1.msra.mxu0 %v870
        %1045 = vmatprep.subr.mxu0 0.0
        %1046 = vmatpush1.msra.mxu0 %v871
        %1047 = vmatprep.subr.mxu0 0.0
        %1048 = vmatpush1.msra.mxu0 %v872
        %1049 = vmatprep.subr.mxu0 0.0
        %1050 = vmatpush1.msra.mxu0 %v873
        %1051 = vmatprep.subr.mxu0 0.0
        %1052 = vmatpush1.msra.mxu0 %v874
        %1053 = vmatprep.subr.mxu0 0.0
        %1054 = vmatpush1.msra.mxu0 %v875
        %1055 = vmatprep.subr.mxu0 0.0
        %1056 = vmatpush1.msra.mxu0 %v876
        %1057 = vmatprep.subr.mxu0 0.0
        %1058 = vmatpush1.msra.mxu0 0.0
        %1059 = vmatprep.subr.mxu0 0.0
        %1060 = vmatpush1.msra.mxu0 0.0
        %1061 = vmatprep.subr.mxu0 0.0
        %1062 = vmatpush1.msra.mxu0 0.0
        %1063 = vmatprep.subr.mxu0 0.0
        %1064 = vmatpush1.msra.mxu0 0.0
        %1065 = vmatprep.subr.mxu0 0.0
        %1066 = vmatpush1.msra.mxu0 0.0
        %1067 = vmatprep.subr.mxu0 0.0
        %1068 = vmatpush1.msra.mxu0 0.0
        %1069 = vmatprep.subr.mxu0 0.0
        %1070 = vmatpush1.msra.mxu0 0.0
        %1071 = vmatprep.subr.mxu0 0.0
        %1072 = vmatpush1.msra.mxu0 0.0
        %1073 = vmatprep.subr.mxu0 0.0
        %1074 = vmatpush1.msra.mxu0 0.0
        %1075 = vmatprep.subr.mxu0 0.0
        %1076 = vmatpush1.msra.mxu0 0.0
        %1077 = vmatprep.subr.mxu0 0.0
        %1078 = vmatpush1.msra.mxu0 0.0
        %1079 = vmatprep.subr.mxu0 0.0
        %1080 = vmatpush1.msra.mxu0 0.0
        %1081 = vmatprep.subr.mxu0 0.0
        %1082 = vmatpush1.msra.mxu0 0.0
        %1083 = vmatprep.subr.mxu0 0.0
        %1084 = vmatpush1.msra.mxu0 0.0
        %1085 = vmatprep.subr.mxu0 0.0
        %1086 = vmatpush1.msra.mxu0 0.0
        %1087 = vmatprep.subr.mxu0 0.0
        %1088 = vmatpush1.msra.mxu0 0.0
        %1089 = vmatprep.mubr.f32.mxu0 0.0
        %1090 = vmatmul.mubr.f32.gmra.mrb[0].mxu0 %v884
        %v1091 = vpop.f32.mrb[0].mxu0
        %v1092 = vadd.f32 0.0, %v1091
        %v1093 = vpop.f32.mrb[0].mxu0
        %1094 = vdwg.mxu0
        %v1095 = vadd.f32 %v1022, %v1092
        %v1096 = vlaneseq
        %v1097 = vshrl.u32 %v1096, 7
        %v1098 = vsub.s32 0, %v1097
        %v1099 = vrot.slane %v877, %v1098
        %v1100 = vadd.f32 %v1095, %v1099
        %v1101 = vmax.f32 %v1100, 0.0
        %s1102 = scalar_lea.vmem [#allocation6], 384
        %v1103 = vld [vmem:[%s1102] sm:$0xff]
        %v1104 = vld [vmem:[%s1102 + $0x8] sm:$0xff]
        %v1105 = vld [vmem:[%s1102 + $0x10] sm:$0xff]
        %v1106 = vld [vmem:[%s1102 + $0x18] sm:$0xff]
        %v1107 = vld [vmem:[%s1102 + $0x20] sm:$0xff]
        %v1108 = vld [vmem:[%s1102 + $0x28] sm:$0xff]
        %v1109 = vld [vmem:[%s1102 + $0x30] sm:$0xff]
        %v1110 = vld [vmem:[%s1102 + $0x38] sm:$0xff]
        %v1111 = vld [vmem:[%s1102 + $0x40] sm:$0xff]
        %v1112 = vld [vmem:[%s1102 + $0x48] sm:$0xff]
        %v1113 = vld [vmem:[%s1102 + $0x50] sm:$0xff]
        %v1114 = vld [vmem:[%s1102 + $0x58] sm:$0xff]
        %v1115 = vld [vmem:[%s1102 + $0x60] sm:$0xff]
        %v1116 = vld [vmem:[%s1102 + $0x68] sm:$0xff]
        %v1117 = vld [vmem:[%s1102 + $0x70] sm:$0xff]
        %v1118 = vld [vmem:[%s1102 + $0x78] sm:$0xff]
        %s1119 = scalar_lea.vmem [#allocation6], 512
        %v1120 = vld [vmem:[%s1119] sm:$0xff]
        %v1121 = vld [vmem:[%s1119 + $0x8] sm:$0xff]
        %v1122 = vld [vmem:[%s1119 + $0x10] sm:$0xff]
        %v1123 = vld [vmem:[%s1119 + $0x18] sm:$0xff]
        %v1124 = vld [vmem:[%s1119 + $0x20] sm:$0xff]
        %v1125 = vld [vmem:[%s1119 + $0x28] sm:$0xff]
        %v1126 = vld [vmem:[%s1119 + $0x30] sm:$0xff]
        %v1127 = vld [vmem:[%s1119 + $0x38] sm:$0xff]
        %v1128 = vld [vmem:[%s1119 + $0x40] sm:$0xff]
        %v1129 = vld [vmem:[%s1119 + $0x48] sm:$0xff]
        %v1130 = vld [vmem:[%s1119 + $0x50] sm:$0xff]
        %v1131 = vld [vmem:[%s1119 + $0x58] sm:$0xff]
        %v1132 = vld [vmem:[%s1119 + $0x60] sm:$0xff]
        %v1133 = vld [vmem:[%s1119 + $0x68] sm:$0xff]
        %v1134 = vld [vmem:[%s1119 + $0x70] sm:$0xff]
        %v1135 = vld [vmem:[%s1119 + $0x78] sm:$0xff]
        %s1136 = scalar_lea.vmem [#allocation6], 640
        %v1137 = vld [vmem:[%s1136] sm:$0xff]
        %v1138 = vld [vmem:[%s1136 + $0x8] sm:$0xff]
        %v1139 = vld [vmem:[%s1136 + $0x10] sm:$0xff]
        %v1140 = vld [vmem:[%s1136 + $0x18] sm:$0xff]
        %v1141 = vld [vmem:[%s1136 + $0x20] sm:$0xff]
        %v1142 = vld [vmem:[%s1136 + $0x28] sm:$0xff]
        %v1143 = vld [vmem:[%s1136 + $0x30] sm:$0xff]
        %v1144 = vld [vmem:[%s1136 + $0x38] sm:$0xff]
        %v1145 = vld [vmem:[%s1136 + $0x40] sm:$0xff]
        %v1146 = vld [vmem:[%s1136 + $0x48] sm:$0xff]
        %v1147 = vld [vmem:[%s1136 + $0x50] sm:$0xff]
        %v1148 = vld [vmem:[%s1136 + $0x58] sm:$0xff]
        %v1149 = vld [vmem:[%s1136 + $0x60] sm:$0xff]
        %v1150 = vld [vmem:[%s1136 + $0x68] sm:$0xff]
        %v1151 = vld [vmem:[%s1136 + $0x70] sm:$0xff]
        %v1152 = vld [vmem:[%s1136 + $0x78] sm:$0xff]
        %v1153 = vld [vmem:[#allocation7 + $0x1] sm:$0x1]
        %v1155 = vrot.slane %v1101, 7
        %v1157 = vsel %vm594, 0.0, %v1155
        %v1158 = vrot.slane %v1101, 1
        %v1160 = vsel %vm598, %v1158, 0.0
        %1161 = vmatprep.subr.mxu0 0.0
        %1162 = vmatpush1.msra.mxu0 %v1120
        %1163 = vmatprep.subr.mxu0 0.0
        %1164 = vmatpush1.msra.mxu0 %v1121
        %1165 = vmatprep.subr.mxu0 0.0
        %1166 = vmatpush1.msra.mxu0 %v1122
        %1167 = vmatprep.subr.mxu0 0.0
        %1168 = vmatpush1.msra.mxu0 %v1123
        %1169 = vmatprep.subr.mxu0 0.0
        %1170 = vmatpush1.msra.mxu0 %v1124
        %1171 = vmatprep.subr.mxu0 0.0
        %1172 = vmatpush1.msra.mxu0 %v1125
        %1173 = vmatprep.subr.mxu0 0.0
        %1174 = vmatpush1.msra.mxu0 %v1126
        %1175 = vmatprep.subr.mxu0 0.0
        %1176 = vmatpush1.msra.mxu0 %v1127
        %1177 = vmatprep.subr.mxu0 0.0
        %1178 = vmatpush1.msra.mxu0 %v1128
        %1179 = vmatprep.subr.mxu0 0.0
        %1180 = vmatpush1.msra.mxu0 %v1129
        %1181 = vmatprep.subr.mxu0 0.0
        %1182 = vmatpush1.msra.mxu0 %v1130
        %1183 = vmatprep.subr.mxu0 0.0
        %1184 = vmatpush1.msra.mxu0 %v1131
        %1185 = vmatprep.subr.mxu0 0.0
        %1186 = vmatpush1.msra.mxu0 %v1132
        %1187 = vmatprep.subr.mxu0 0.0
        %1188 = vmatpush1.msra.mxu0 %v1133
        %1189 = vmatprep.subr.mxu0 0.0
        %1190 = vmatpush1.msra.mxu0 %v1134
        %1191 = vmatprep.subr.mxu0 0.0
        %1192 = vmatpush1.msra.mxu0 %v1135
        %1193 = vmatprep.subr.mxu0 0.0
        %1194 = vmatpush1.msra.mxu0 0.0
        %1195 = vmatprep.subr.mxu0 0.0
        %1196 = vmatpush1.msra.mxu0 0.0
        %1197 = vmatprep.subr.mxu0 0.0
        %1198 = vmatpush1.msra.mxu0 0.0
        %1199 = vmatprep.subr.mxu0 0.0
        %1200 = vmatpush1.msra.mxu0 0.0
        %1201 = vmatprep.subr.mxu0 0.0
        %1202 = vmatpush1.msra.mxu0 0.0
        %1203 = vmatprep.subr.mxu0 0.0
        %1204 = vmatpush1.msra.mxu0 0.0
        %1205 = vmatprep.subr.mxu0 0.0
        %1206 = vmatpush1.msra.mxu0 0.0
        %1207 = vmatprep.subr.mxu0 0.0
        %1208 = vmatpush1.msra.mxu0 0.0
        %1209 = vmatprep.subr.mxu0 0.0
        %1210 = vmatpush1.msra.mxu0 0.0
        %1211 = vmatprep.subr.mxu0 0.0
        %1212 = vmatpush1.msra.mxu0 0.0
        %1213 = vmatprep.subr.mxu0 0.0
        %1214 = vmatpush1.msra.mxu0 0.0
        %1215 = vmatprep.subr.mxu0 0.0
        %1216 = vmatpush1.msra.mxu0 0.0
        %1217 = vmatprep.subr.mxu0 0.0
        %1218 = vmatpush1.msra.mxu0 0.0
        %1219 = vmatprep.subr.mxu0 0.0
        %1220 = vmatpush1.msra.mxu0 0.0
        %1221 = vmatprep.subr.mxu0 0.0
        %1222 = vmatpush1.msra.mxu0 0.0
        %1223 = vmatprep.subr.mxu0 0.0
        %1224 = vmatpush1.msra.mxu0 0.0
        %1225 = vmatprep.mubr.f32.mxu0 0.0
        %1226 = vmatmul.mubr.f32.gmra.mrb[0].mxu0 %v1101
        %v1227 = vpop.f32.mrb[0].mxu0
        %v1228 = vadd.f32 0.0, %v1227
        %v1229 = vpop.f32.mrb[0].mxu0
        %1230 = vdwg.mxu0
        %1231 = vmatprep.subr.mxu0 0.0
        %1232 = vmatpush1.msra.mxu0 %v1103
        %1233 = vmatprep.subr.mxu0 0.0
        %1234 = vmatpush1.msra.mxu0 %v1104
        %1235 = vmatprep.subr.mxu0 0.0
        %1236 = vmatpush1.msra.mxu0 %v1105
        %1237 = vmatprep.subr.mxu0 0.0
        %1238 = vmatpush1.msra.mxu0 %v1106
        %1239 = vmatprep.subr.mxu0 0.0
        %1240 = vmatpush1.msra.mxu0 %v1107
        %1241 = vmatprep.subr.mxu0 0.0
        %1242 = vmatpush1.msra.mxu0 %v1108
        %1243 = vmatprep.subr.mxu0 0.0
        %1244 = vmatpush1.msra.mxu0 %v1109
        %1245 = vmatprep.subr.mxu0 0.0
        %1246 = vmatpush1.msra.mxu0 %v1110
        %1247 = vmatprep.subr.mxu0 0.0
        %1248 = vmatpush1.msra.mxu0 %v1111
        %1249 = vmatprep.subr.mxu0 0.0
        %1250 = vmatpush1.msra.mxu0 %v1112
        %1251 = vmatprep.subr.mxu0 0.0
        %1252 = vmatpush1.msra.mxu0 %v1113
        %1253 = vmatprep.subr.mxu0 0.0
        %1254 = vmatpush1.msra.mxu0 %v1114
        %1255 = vmatprep.subr.mxu0 0.0
        %1256 = vmatpush1.msra.mxu0 %v1115
        %1257 = vmatprep.subr.mxu0 0.0
        %1258 = vmatpush1.msra.mxu0 %v1116
        %1259 = vmatprep.subr.mxu0 0.0
        %1260 = vmatpush1.msra.mxu0 %v1117
        %1261 = vmatprep.subr.mxu0 0.0
        %1262 = vmatpush1.msra.mxu0 %v1118
        %1263 = vmatprep.subr.mxu0 0.0
        %1264 = vmatpush1.msra.mxu0 0.0
        %1265 = vmatprep.subr.mxu0 0.0
        %1266 = vmatpush1.msra.mxu0 0.0
        %1267 = vmatprep.subr.mxu0 0.0
        %1268 = vmatpush1.msra.mxu0 0.0
        %1269 = vmatprep.subr.mxu0 0.0
        %1270 = vmatpush1.msra.mxu0 0.0
        %1271 = vmatprep.subr.mxu0 0.0
        %1272 = vmatpush1.msra.mxu0 0.0
        %1273 = vmatprep.subr.mxu0 0.0
        %1274 = vmatpush1.msra.mxu0 0.0
        %1275 = vmatprep.subr.mxu0 0.0
        %1276 = vmatpush1.msra.mxu0 0.0
        %1277 = vmatprep.subr.mxu0 0.0
        %1278 = vmatpush1.msra.mxu0 0.0
        %1279 = vmatprep.subr.mxu0 0.0
        %1280 = vmatpush1.msra.mxu0 0.0
        %1281 = vmatprep.subr.mxu0 0.0
        %1282 = vmatpush1.msra.mxu0 0.0
        %1283 = vmatprep.subr.mxu0 0.0
        %1284 = vmatpush1.msra.mxu0 0.0
        %1285 = vmatprep.subr.mxu0 0.0
        %1286 = vmatpush1.msra.mxu0 0.0
        %1287 = vmatprep.subr.mxu0 0.0
        %1288 = vmatpush1.msra.mxu0 0.0
        %1289 = vmatprep.subr.mxu0 0.0
        %1290 = vmatpush1.msra.mxu0 0.0
        %1291 = vmatprep.subr.mxu0 0.0
        %1292 = vmatpush1.msra.mxu0 0.0
        %1293 = vmatprep.subr.mxu0 0.0
        %1294 = vmatpush1.msra.mxu0 0.0
        %1295 = vmatprep.mubr.f32.mxu0 0.0
        %1296 = vmatmul.mubr.f32.gmra.mrb[0].mxu0 %v1157
        %v1297 = vpop.f32.mrb[0].mxu0
        %v1298 = vadd.f32 %v1228, %v1297
        %v1299 = vpop.f32.mrb[0].mxu0
        %1300 = vdwg.mxu0
        %1301 = vmatprep.subr.mxu0 0.0
        %1302 = vmatpush1.msra.mxu0 %v1137
        %1303 = vmatprep.subr.mxu0 0.0
        %1304 = vmatpush1.msra.mxu0 %v1138
        %1305 = vmatprep.subr.mxu0 0.0
        %1306 = vmatpush1.msra.mxu0 %v1139
        %1307 = vmatprep.subr.mxu0 0.0
        %1308 = vmatpush1.msra.mxu0 %v1140
        %1309 = vmatprep.subr.mxu0 0.0
        %1310 = vmatpush1.msra.mxu0 %v1141
        %1311 = vmatprep.subr.mxu0 0.0
        %1312 = vmatpush1.msra.mxu0 %v1142
        %1313 = vmatprep.subr.mxu0 0.0
        %1314 = vmatpush1.msra.mxu0 %v1143
        %1315 = vmatprep.subr.mxu0 0.0
        %1316 = vmatpush1.msra.mxu0 %v1144
        %1317 = vmatprep.subr.mxu0 0.0
        %1318 = vmatpush1.msra.mxu0 %v1145
        %1319 = vmatprep.subr.mxu0 0.0
        %1320 = vmatpush1.msra.mxu0 %v1146
        %1321 = vmatprep.subr.mxu0 0.0
        %1322 = vmatpush1.msra.mxu0 %v1147
        %1323 = vmatprep.subr.mxu0 0.0
        %1324 = vmatpush1.msra.mxu0 %v1148
        %1325 = vmatprep.subr.mxu0 0.0
        %1326 = vmatpush1.msra.mxu0 %v1149
        %1327 = vmatprep.subr.mxu0 0.0
        %1328 = vmatpush1.msra.mxu0 %v1150
        %1329 = vmatprep.subr.mxu0 0.0
        %1330 = vmatpush1.msra.mxu0 %v1151
        %1331 = vmatprep.subr.mxu0 0.0
        %1332 = vmatpush1.msra.mxu0 %v1152
        %1333 = vmatprep.subr.mxu0 0.0
        %1334 = vmatpush1.msra.mxu0 0.0
        %1335 = vmatprep.subr.mxu0 0.0
        %1336 = vmatpush1.msra.mxu0 0.0
        %1337 = vmatprep.subr.mxu0 0.0
        %1338 = vmatpush1.msra.mxu0 0.0
        %1339 = vmatprep.subr.mxu0 0.0
        %1340 = vmatpush1.msra.mxu0 0.0
        %1341 = vmatprep.subr.mxu0 0.0
        %1342 = vmatpush1.msra.mxu0 0.0
        %1343 = vmatprep.subr.mxu0 0.0
        %1344 = vmatpush1.msra.mxu0 0.0
        %1345 = vmatprep.subr.mxu0 0.0
        %1346 = vmatpush1.msra.mxu0 0.0
        %1347 = vmatprep.subr.mxu0 0.0
        %1348 = vmatpush1.msra.mxu0 0.0
        %1349 = vmatprep.subr.mxu0 0.0
        %1350 = vmatpush1.msra.mxu0 0.0
        %1351 = vmatprep.subr.mxu0 0.0
        %1352 = vmatpush1.msra.mxu0 0.0
        %1353 = vmatprep.subr.mxu0 0.0
        %1354 = vmatpush1.msra.mxu0 0.0
        %1355 = vmatprep.subr.mxu0 0.0
        %1356 = vmatpush1.msra.mxu0 0.0
        %1357 = vmatprep.subr.mxu0 0.0
        %1358 = vmatpush1.msra.mxu0 0.0
        %1359 = vmatprep.subr.mxu0 0.0
        %1360 = vmatpush1.msra.mxu0 0.0
        %1361 = vmatprep.subr.mxu0 0.0
        %1362 = vmatpush1.msra.mxu0 0.0
        %1363 = vmatprep.subr.mxu0 0.0
        %1364 = vmatpush1.msra.mxu0 0.0
        %1365 = vmatprep.mubr.f32.mxu0 0.0
        %1366 = vmatmul.mubr.f32.gmra.mrb[0].mxu0 %v1160
        %v1367 = vpop.f32.mrb[0].mxu0
        %v1368 = vadd.f32 0.0, %v1367
        %v1369 = vpop.f32.mrb[0].mxu0
        %1370 = vdwg.mxu0
        %v1371 = vadd.f32 %v1298, %v1368
        %v1372 = vlaneseq
        %v1373 = vshrl.u32 %v1372, 7
        %v1374 = vsub.s32 0, %v1373
        %v1375 = vrot.slane %v1153, %v1374
        %v1376 = vadd.f32 %v1371, %v1375
        %v1377 = vld [vmem:[#allocation9] sm:$0xf]
        %v1378 = vld [vmem:[%s6] sm:$0xf]
        %v1379 = vld [vmem:[#allocation10] sm:$0xf]
        %v1380 = vld [vmem:[#allocation12] sm:$0x1]
        %v1381 = vrot.slane %v1376, 4
        %v1382 = vadd.f32 %v1376, %v1381
        %v1383 = vrot.slane %v1382, 2
        %v1384 = vadd.f32 %v1382, %v1383
        %v1385 = vrot.slane %v1384, 1
        %v1386 = vadd.f32 %v1384, %v1385
        %v1387 = vrcp.pop 8.0
        %v1388 = vmul.f32 %v1386, %v1387
        %1390 = vrot.lane.b32.xlu0 %v1388, 112
        %v1391 = vpop.permute.xlu0 %1390
        %v1393 = vadd.f32 %v1388, %v1391
        %1394 = vrot.lane.b32.xlu0 %v1388, 96
        %v1395 = vpop.permute.xlu0 %1394
        %v1397 = vadd.f32 %v1393, %v1395
        %1398 = vrot.lane.b32.xlu0 %v1388, 80
        %v1399 = vpop.permute.xlu0 %1398
        %v1401 = vadd.f32 %v1397, %v1399
        %1402 = vrot.lane.b32.xlu0 %v1388, 64
        %v1403 = vpop.permute.xlu0 %1402
        %v1405 = vadd.f32 %v1401, %v1403
        %1406 = vrot.lane.b32.xlu0 %v1388, 48
        %v1407 = vpop.permute.xlu0 %1406
        %v1409 = vadd.f32 %v1405, %v1407
        %1410 = vrot.lane.b32.xlu0 %v1388, 32
        %v1411 = vpop.permute.xlu0 %1410
        %v1413 = vadd.f32 %v1409, %v1411
        %1414 = vrot.lane.b32.xlu0 %v1388, 16
        %v1415 = vpop.permute.xlu0 %1414
        %v1417 = vadd.f32 %v1413, %v1415
        %v1418 = vmul.f32 %v1417, 0.125
        %v1419 = vlaneseq
        %v1420 = vshrl.u32 %v1419, 7
        %v1421 = vsub.s32 0, %v1420
        %v1422 = vrot.slane %v1418, %v1421
        %v1423 = vmul.f32 %v1377, %v1422
        %vm1424 = vcmask 125952
        %v1425 = vsel %vm1424, %v1423, 0.0
        %1426 = vadd.xlane.f32.xlu0 %v1425
        %v1427 = vpop.xlane.xlu0 %1426
        %v1428 = vadd.f32 %v1427, %v1378
        %v1429 = vmax.f32 %v1428, 0.0
        %1431 = vset.pattern.permute.xlu0 0
        %1432 = vperm.xlu0 %1431, %v1429
        %v1433 = vpop.permute.xlu0 %1432
        %v1435 = vmul.f32 %v1433, %v1379
        %v1436 = vsel %vm1424, %v1435, 0.0
        %v1437 = vrot.slane %v1436, 4
        %v1438 = vadd.f32 %v1436, %v1437
        %v1439 = vrot.slane %v1438, 2
        %v1440 = vadd.f32 %v1438, %v1439
        %v1441 = vrot.slane %v1440, 1
        %v1442 = vadd.f32 %v1440, %v1441
        %v1443 = vadd.f32 %v1442, %v1380
        %v1444 = vxor.u32 %v1443, 2147483648
        %v1445 = vmul.f32 %v1444, 1.442695
        %v1446 = vpow.pop %v1445
        %v1447 = vadd.f32 %v1446, 1.0
        %v1448 = vrcp.pop %v1447
        %v1449 = vmul.f32 1.0, %v1448
        %1451 = vrot.lane.b32.xlu0 %v1449, 16
        %v1452 = vpop.permute.xlu0 %1451
        %1454 = vrot.lane.b32.xlu0 %v1449, 32
        %v1455 = vpop.permute.xlu0 %1454
        %1457 = vrot.lane.b32.xlu0 %v1449, 48
        %v1458 = vpop.permute.xlu0 %1457
        %1460 = vrot.lane.b32.xlu0 %v1449, 64
        %v1461 = vpop.permute.xlu0 %1460
        %1463 = vrot.lane.b32.xlu0 %v1449, 80
        %v1464 = vpop.permute.xlu0 %1463
        %1466 = vrot.lane.b32.xlu0 %v1449, 96
        %v1467 = vpop.permute.xlu0 %1466
        %1469 = vrot.lane.b32.xlu0 %v1449, 112
        %v1470 = vpop.permute.xlu0 %1469
        %vm1472 = vcmask 130048
        %v1473 = vsel %vm1472, %v1449, %v1452
        %vm1474 = vcmask 261120
        %v1475 = vsel %vm1474, %v1473, %v1455
        %vm1476 = vcmask 392192
        %v1477 = vsel %vm1476, %v1475, %v1458
        %vm1478 = vcmask 523264
        %v1479 = vsel %vm1478, %v1477, %v1461
        %vm1480 = vcmask 654336
        %v1481 = vsel %vm1480, %v1479, %v1464
        %vm1482 = vcmask 785408
        %v1483 = vsel %vm1482, %v1481, %v1467
        %vm1484 = vcmask 916480
        %v1485 = vsel %vm1484, %v1483, %v1470
        %v1486 = vlaneseq
        %v1487 = vshrl.u32 %v1486, 7
        %v1488 = vsub.s32 0, %v1487
        %v1489 = vrot.slane %v1485, %v1488
        %v1490 = vmul.f32 %v1376, %v1489
        %v1491 = vadd.f32 %v826, %v1490
        %s1492 = scalar_lea.vmem [#allocation6], 768
        %v1493 = vld [vmem:[%s1492] sm:$0xff]
        %v1494 = vld [vmem:[%s1492 + $0x8] sm:$0xff]
        %v1495 = vld [vmem:[%s1492 + $0x10] sm:$0xff]
        %v1496 = vld [vmem:[%s1492 + $0x18] sm:$0xff]
        %v1497 = vld [vmem:[%s1492 + $0x20] sm:$0xff]
        %v1498 = vld [vmem:[%s1492 + $0x28] sm:$0xff]
        %v1499 = vld [vmem:[%s1492 + $0x30] sm:$0xff]
        %v1500 = vld [vmem:[%s1492 + $0x38] sm:$0xff]
        %v1501 = vld [vmem:[%s1492 + $0x40] sm:$0xff]
        %v1502 = vld [vmem:[%s1492 + $0x48] sm:$0xff]
        %v1503 = vld [vmem:[%s1492 + $0x50] sm:$0xff]
        %v1504 = vld [vmem:[%s1492 + $0x58] sm:$0xff]
        %v1505 = vld [vmem:[%s1492 + $0x60] sm:$0xff]
        %v1506 = vld [vmem:[%s1492 + $0x68] sm:$0xff]
        %v1507 = vld [vmem:[%s1492 + $0x70] sm:$0xff]
        %v1508 = vld [vmem:[%s1492 + $0x78] sm:$0xff]
        %s1509 = scalar_lea.vmem [#allocation6], 896
        %v1510 = vld [vmem:[%s1509] sm:$0xff]
        %v1511 = vld [vmem:[%s1509 + $0x8] sm:$0xff]
        %v1512 = vld [vmem:[%s1509 + $0x10] sm:$0xff]
        %v1513 = vld [vmem:[%s1509 + $0x18] sm:$0xff]
        %v1514 = vld [vmem:[%s1509 + $0x20] sm:$0xff]
        %v1515 = vld [vmem:[%s1509 + $0x28] sm:$0xff]
        %v1516 = vld [vmem:[%s1509 + $0x30] sm:$0xff]
        %v1517 = vld [vmem:[%s1509 + $0x38] sm:$0xff]
        %v1518 = vld [vmem:[%s1509 + $0x40] sm:$0xff]
        %v1519 = vld [vmem:[%s1509 + $0x48] sm:$0xff]
        %v1520 = vld [vmem:[%s1509 + $0x50] sm:$0xff]
        %v1521 = vld [vmem:[%s1509 + $0x58] sm:$0xff]
        %v1522 = vld [vmem:[%s1509 + $0x60] sm:$0xff]
        %v1523 = vld [vmem:[%s1509 + $0x68] sm:$0xff]
        %v1524 = vld [vmem:[%s1509 + $0x70] sm:$0xff]
        %v1525 = vld [vmem:[%s1509 + $0x78] sm:$0xff]
        %s1526 = scalar_lea.vmem [#allocation6], 1024
        %v1527 = vld [vmem:[%s1526] sm:$0xff]
        %v1528 = vld [vmem:[%s1526 + $0x8] sm:$0xff]
        %v1529 = vld [vmem:[%s1526 + $0x10] sm:$0xff]
        %v1530 = vld [vmem:[%s1526 + $0x18] sm:$0xff]
        %v1531 = vld [vmem:[%s1526 + $0x20] sm:$0xff]
        %v1532 = vld [vmem:[%s1526 + $0x28] sm:$0xff]
        %v1533 = vld [vmem:[%s1526 + $0x30] sm:$0xff]
        %v1534 = vld [vmem:[%s1526 + $0x38] sm:$0xff]
        %v1535 = vld [vmem:[%s1526 + $0x40] sm:$0xff]
        %v1536 = vld [vmem:[%s1526 + $0x48] sm:$0xff]
        %v1537 = vld [vmem:[%s1526 + $0x50] sm:$0xff]
        %v1538 = vld [vmem:[%s1526 + $0x58] sm:$0xff]
        %v1539 = vld [vmem:[%s1526 + $0x60] sm:$0xff]
        %v1540 = vld [vmem:[%s1526 + $0x68] sm:$0xff]
        %v1541 = vld [vmem:[%s1526 + $0x70] sm:$0xff]
        %v1542 = vld [vmem:[%s1526 + $0x78] sm:$0xff]
        %v1543 = vld [vmem:[#allocation7 + $0x2] sm:$0x1]
        %v1545 = vrot.slane %v1491, 7
        %v1547 = vsel %vm594, 0.0, %v1545
        %v1548 = vrot.slane %v1491, 1
        %v1550 = vsel %vm598, %v1548, 0.0
        %1551 = vmatprep.subr.mxu0 0.0
        %1552 = vmatpush1.msra.mxu0 %v1510
        %1553 = vmatprep.subr.mxu0 0.0
        %1554 = vmatpush1.msra.mxu0 %v1511
        %1555 = vmatprep.subr.mxu0 0.0
        %1556 = vmatpush1.msra.mxu0 %v1512
        %1557 = vmatprep.subr.mxu0 0.0
        %1558 = vmatpush1.msra.mxu0 %v1513
        %1559 = vmatprep.subr.mxu0 0.0
        %1560 = vmatpush1.msra.mxu0 %v1514
        %1561 = vmatprep.subr.mxu0 0.0
        %1562 = vmatpush1.msra.mxu0 %v1515
        %1563 = vmatprep.subr.mxu0 0.0
        %1564 = vmatpush1.msra.mxu0 %v1516
        %1565 = vmatprep.subr.mxu0 0.0
        %1566 = vmatpush1.msra.mxu0 %v1517
        %1567 = vmatprep.subr.mxu0 0.0
        %1568 = vmatpush1.msra.mxu0 %v1518
        %1569 = vmatprep.subr.mxu0 0.0
        %1570 = vmatpush1.msra.mxu0 %v1519
        %1571 = vmatprep.subr.mxu0 0.0
        %1572 = vmatpush1.msra.mxu0 %v1520
        %1573 = vmatprep.subr.mxu0 0.0
        %1574 = vmatpush1.msra.mxu0 %v1521
        %1575 = vmatprep.subr.mxu0 0.0
        %1576 = vmatpush1.msra.mxu0 %v1522
        %1577 = vmatprep.subr.mxu0 0.0
        %1578 = vmatpush1.msra.mxu0 %v1523
        %1579 = vmatprep.subr.mxu0 0.0
        %1580 = vmatpush1.msra.mxu0 %v1524
        %1581 = vmatprep.subr.mxu0 0.0
        %1582 = vmatpush1.msra.mxu0 %v1525
        %1583 = vmatprep.subr.mxu0 0.0
        %1584 = vmatpush1.msra.mxu0 0.0
        %1585 = vmatprep.subr.mxu0 0.0
        %1586 = vmatpush1.msra.mxu0 0.0
        %1587 = vmatprep.subr.mxu0 0.0
        %1588 = vmatpush1.msra.mxu0 0.0
        %1589 = vmatprep.subr.mxu0 0.0
        %1590 = vmatpush1.msra.mxu0 0.0
        %1591 = vmatprep.subr.mxu0 0.0
        %1592 = vmatpush1.msra.mxu0 0.0
        %1593 = vmatprep.subr.mxu0 0.0
        %1594 = vmatpush1.msra.mxu0 0.0
        %1595 = vmatprep.subr.mxu0 0.0
        %1596 = vmatpush1.msra.mxu0 0.0
        %1597 = vmatprep.subr.mxu0 0.0
        %1598 = vmatpush1.msra.mxu0 0.0
        %1599 = vmatprep.subr.mxu0 0.0
        %1600 = vmatpush1.msra.mxu0 0.0
        %1601 = vmatprep.subr.mxu0 0.0
        %1602 = vmatpush1.msra.mxu0 0.0
        %1603 = vmatprep.subr.mxu0 0.0
        %1604 = vmatpush1.msra.mxu0 0.0
        %1605 = vmatprep.subr.mxu0 0.0
        %1606 = vmatpush1.msra.mxu0 0.0
        %1607 = vmatprep.subr.mxu0 0.0
        %1608 = vmatpush1.msra.mxu0 0.0
        %1609 = vmatprep.subr.mxu0 0.0
        %1610 = vmatpush1.msra.mxu0 0.0
        %1611 = vmatprep.subr.mxu0 0.0
        %1612 = vmatpush1.msra.mxu0 0.0
        %1613 = vmatprep.subr.mxu0 0.0
        %1614 = vmatpush1.msra.mxu0 0.0
        %1615 = vmatprep.mubr.f32.mxu0 0.0
        %1616 = vmatmul.mubr.f32.gmra.mrb[0].mxu0 %v1491
        %v1617 = vpop.f32.mrb[0].mxu0
        %v1618 = vadd.f32 0.0, %v1617
        %v1619 = vpop.f32.mrb[0].mxu0
        %1620 = vdwg.mxu0
        %1621 = vmatprep.subr.mxu0 0.0
        %1622 = vmatpush1.msra.mxu0 %v1493
        %1623 = vmatprep.subr.mxu0 0.0
        %1624 = vmatpush1.msra.mxu0 %v1494
        %1625 = vmatprep.subr.mxu0 0.0
        %1626 = vmatpush1.msra.mxu0 %v1495
        %1627 = vmatprep.subr.mxu0 0.0
        %1628 = vmatpush1.msra.mxu0 %v1496
        %1629 = vmatprep.subr.mxu0 0.0
        %1630 = vmatpush1.msra.mxu0 %v1497
        %1631 = vmatprep.subr.mxu0 0.0
        %1632 = vmatpush1.msra.mxu0 %v1498
        %1633 = vmatprep.subr.mxu0 0.0
        %1634 = vmatpush1.msra.mxu0 %v1499
        %1635 = vmatprep.subr.mxu0 0.0
        %1636 = vmatpush1.msra.mxu0 %v1500
        %1637 = vmatprep.subr.mxu0 0.0
        %1638 = vmatpush1.msra.mxu0 %v1501
        %1639 = vmatprep.subr.mxu0 0.0
        %1640 = vmatpush1.msra.mxu0 %v1502
        %1641 = vmatprep.subr.mxu0 0.0
        %1642 = vmatpush1.msra.mxu0 %v1503
        %1643 = vmatprep.subr.mxu0 0.0
        %1644 = vmatpush1.msra.mxu0 %v1504
        %1645 = vmatprep.subr.mxu0 0.0
        %1646 = vmatpush1.msra.mxu0 %v1505
        %1647 = vmatprep.subr.mxu0 0.0
        %1648 = vmatpush1.msra.mxu0 %v1506
        %1649 = vmatprep.subr.mxu0 0.0
        %1650 = vmatpush1.msra.mxu0 %v1507
        %1651 = vmatprep.subr.mxu0 0.0
        %1652 = vmatpush1.msra.mxu0 %v1508
        %1653 = vmatprep.subr.mxu0 0.0
        %1654 = vmatpush1.msra.mxu0 0.0
        %1655 = vmatprep.subr.mxu0 0.0
        %1656 = vmatpush1.msra.mxu0 0.0
        %1657 = vmatprep.subr.mxu0 0.0
        %1658 = vmatpush1.msra.mxu0 0.0
        %1659 = vmatprep.subr.mxu0 0.0
        %1660 = vmatpush1.msra.mxu0 0.0
        %1661 = vmatprep.subr.mxu0 0.0
        %1662 = vmatpush1.msra.mxu0 0.0
        %1663 = vmatprep.subr.mxu0 0.0
        %1664 = vmatpush1.msra.mxu0 0.0
        %1665 = vmatprep.subr.mxu0 0.0
        %1666 = vmatpush1.msra.mxu0 0.0
        %1667 = vmatprep.subr.mxu0 0.0
        %1668 = vmatpush1.msra.mxu0 0.0
        %1669 = vmatprep.subr.mxu0 0.0
        %1670 = vmatpush1.msra.mxu0 0.0
        %1671 = vmatprep.subr.mxu0 0.0
        %1672 = vmatpush1.msra.mxu0 0.0
        %1673 = vmatprep.subr.mxu0 0.0
        %1674 = vmatpush1.msra.mxu0 0.0
        %1675 = vmatprep.subr.mxu0 0.0
        %1676 = vmatpush1.msra.mxu0 0.0
        %1677 = vmatprep.subr.mxu0 0.0
        %1678 = vmatpush1.msra.mxu0 0.0
        %1679 = vmatprep.subr.mxu0 0.0
        %1680 = vmatpush1.msra.mxu0 0.0
        %1681 = vmatprep.subr.mxu0 0.0
        %1682 = vmatpush1.msra.mxu0 0.0
        %1683 = vmatprep.subr.mxu0 0.0
        %1684 = vmatpush1.msra.mxu0 0.0
        %1685 = vmatprep.mubr.f32.mxu0 0.0
        %1686 = vmatmul.mubr.f32.gmra.mrb[0].mxu0 %v1547
        %v1687 = vpop.f32.mrb[0].mxu0
        %v1688 = vadd.f32 %v1618, %v1687
        %v1689 = vpop.f32.mrb[0].mxu0
        %1690 = vdwg.mxu0
        %1691 = vmatprep.subr.mxu0 0.0
        %1692 = vmatpush1.msra.mxu0 %v1527
        %1693 = vmatprep.subr.mxu0 0.0
        %1694 = vmatpush1.msra.mxu0 %v1528
        %1695 = vmatprep.subr.mxu0 0.0
        %1696 = vmatpush1.msra.mxu0 %v1529
        %1697 = vmatprep.subr.mxu0 0.0
        %1698 = vmatpush1.msra.mxu0 %v1530
        %1699 = vmatprep.subr.mxu0 0.0
        %1700 = vmatpush1.msra.mxu0 %v1531
        %1701 = vmatprep.subr.mxu0 0.0
        %1702 = vmatpush1.msra.mxu0 %v1532
        %1703 = vmatprep.subr.mxu0 0.0
        %1704 = vmatpush1.msra.mxu0 %v1533
        %1705 = vmatprep.subr.mxu0 0.0
        %1706 = vmatpush1.msra.mxu0 %v1534
        %1707 = vmatprep.subr.mxu0 0.0
        %1708 = vmatpush1.msra.mxu0 %v1535
        %1709 = vmatprep.subr.mxu0 0.0
        %1710 = vmatpush1.msra.mxu0 %v1536
        %1711 = vmatprep.subr.mxu0 0.0
        %1712 = vmatpush1.msra.mxu0 %v1537
        %1713 = vmatprep.subr.mxu0 0.0
        %1714 = vmatpush1.msra.mxu0 %v1538
        %1715 = vmatprep.subr.mxu0 0.0
        %1716 = vmatpush1.msra.mxu0 %v1539
        %1717 = vmatprep.subr.mxu0 0.0
        %1718 = vmatpush1.msra.mxu0 %v1540
        %1719 = vmatprep.subr.mxu0 0.0
        %1720 = vmatpush1.msra.mxu0 %v1541
        %1721 = vmatprep.subr.mxu0 0.0
        %1722 = vmatpush1.msra.mxu0 %v1542
        %1723 = vmatprep.subr.mxu0 0.0
        %1724 = vmatpush1.msra.mxu0 0.0
        %1725 = vmatprep.subr.mxu0 0.0
        %1726 = vmatpush1.msra.mxu0 0.0
        %1727 = vmatprep.subr.mxu0 0.0
        %1728 = vmatpush1.msra.mxu0 0.0
        %1729 = vmatprep.subr.mxu0 0.0
        %1730 = vmatpush1.msra.mxu0 0.0
        %1731 = vmatprep.subr.mxu0 0.0
        %1732 = vmatpush1.msra.mxu0 0.0
        %1733 = vmatprep.subr.mxu0 0.0
        %1734 = vmatpush1.msra.mxu0 0.0
        %1735 = vmatprep.subr.mxu0 0.0
        %1736 = vmatpush1.msra.mxu0 0.0
        %1737 = vmatprep.subr.mxu0 0.0
        %1738 = vmatpush1.msra.mxu0 0.0
        %1739 = vmatprep.subr.mxu0 0.0
        %1740 = vmatpush1.msra.mxu0 0.0
        %1741 = vmatprep.subr.mxu0 0.0
        %1742 = vmatpush1.msra.mxu0 0.0
        %1743 = vmatprep.subr.mxu0 0.0
        %1744 = vmatpush1.msra.mxu0 0.0
        %1745 = vmatprep.subr.mxu0 0.0
        %1746 = vmatpush1.msra.mxu0 0.0
        %1747 = vmatprep.subr.mxu0 0.0
        %1748 = vmatpush1.msra.mxu0 0.0
        %1749 = vmatprep.subr.mxu0 0.0
        %1750 = vmatpush1.msra.mxu0 0.0
        %1751 = vmatprep.subr.mxu0 0.0
        %1752 = vmatpush1.msra.mxu0 0.0
        %1753 = vmatprep.subr.mxu0 0.0
        %1754 = vmatpush1.msra.mxu0 0.0
        %1755 = vmatprep.mubr.f32.mxu0 0.0
        %1756 = vmatmul.mubr.f32.gmra.mrb[0].mxu0 %v1550
        %v1757 = vpop.f32.mrb[0].mxu0
        %v1758 = vadd.f32 0.0, %v1757
        %v1759 = vpop.f32.mrb[0].mxu0
        %1760 = vdwg.mxu0
        %v1761 = vadd.f32 %v1688, %v1758
        %v1762 = vlaneseq
        %v1763 = vshrl.u32 %v1762, 7
        %v1764 = vsub.s32 0, %v1763
        %v1765 = vrot.slane %v1543, %v1764
        %v1766 = vadd.f32 %v1761, %v1765
        %v1767 = vmax.f32 %v1766, 0.0
        %s1768 = scalar_lea.vmem [#allocation6], 1152
        %v1769 = vld [vmem:[%s1768] sm:$0xff]
        %v1770 = vld [vmem:[%s1768 + $0x8] sm:$0xff]
        %v1771 = vld [vmem:[%s1768 + $0x10] sm:$0xff]
        %v1772 = vld [vmem:[%s1768 + $0x18] sm:$0xff]
        %v1773 = vld [vmem:[%s1768 + $0x20] sm:$0xff]
        %v1774 = vld [vmem:[%s1768 + $0x28] sm:$0xff]
        %v1775 = vld [vmem:[%s1768 + $0x30] sm:$0xff]
        %v1776 = vld [vmem:[%s1768 + $0x38] sm:$0xff]
        %v1777 = vld [vmem:[%s1768 + $0x40] sm:$0xff]
        %v1778 = vld [vmem:[%s1768 + $0x48] sm:$0xff]
        %v1779 = vld [vmem:[%s1768 + $0x50] sm:$0xff]
        %v1780 = vld [vmem:[%s1768 + $0x58] sm:$0xff]
        %v1781 = vld [vmem:[%s1768 + $0x60] sm:$0xff]
        %v1782 = vld [vmem:[%s1768 + $0x68] sm:$0xff]
        %v1783 = vld [vmem:[%s1768 + $0x70] sm:$0xff]
        %v1784 = vld [vmem:[%s1768 + $0x78] sm:$0xff]
        %s1785 = scalar_lea.vmem [#allocation6], 1280
        %v1786 = vld [vmem:[%s1785] sm:$0xff]
        %v1787 = vld [vmem:[%s1785 + $0x8] sm:$0xff]
        %v1788 = vld [vmem:[%s1785 + $0x10] sm:$0xff]
        %v1789 = vld [vmem:[%s1785 + $0x18] sm:$0xff]
        %v1790 = vld [vmem:[%s1785 + $0x20] sm:$0xff]
        %v1791 = vld [vmem:[%s1785 + $0x28] sm:$0xff]
        %v1792 = vld [vmem:[%s1785 + $0x30] sm:$0xff]
        %v1793 = vld [vmem:[%s1785 + $0x38] sm:$0xff]
        %v1794 = vld [vmem:[%s1785 + $0x40] sm:$0xff]
        %v1795 = vld [vmem:[%s1785 + $0x48] sm:$0xff]
        %v1796 = vld [vmem:[%s1785 + $0x50] sm:$0xff]
        %v1797 = vld [vmem:[%s1785 + $0x58] sm:$0xff]
        %v1798 = vld [vmem:[%s1785 + $0x60] sm:$0xff]
        %v1799 = vld [vmem:[%s1785 + $0x68] sm:$0xff]
        %v1800 = vld [vmem:[%s1785 + $0x70] sm:$0xff]
        %v1801 = vld [vmem:[%s1785 + $0x78] sm:$0xff]
        %s1802 = scalar_lea.vmem [#allocation6], 1408
        %v1803 = vld [vmem:[%s1802] sm:$0xff]
        %v1804 = vld [vmem:[%s1802 + $0x8] sm:$0xff]
        %v1805 = vld [vmem:[%s1802 + $0x10] sm:$0xff]
        %v1806 = vld [vmem:[%s1802 + $0x18] sm:$0xff]
        %v1807 = vld [vmem:[%s1802 + $0x20] sm:$0xff]
        %v1808 = vld [vmem:[%s1802 + $0x28] sm:$0xff]
        %v1809 = vld [vmem:[%s1802 + $0x30] sm:$0xff]
        %v1810 = vld [vmem:[%s1802 + $0x38] sm:$0xff]
        %v1811 = vld [vmem:[%s1802 + $0x40] sm:$0xff]
        %v1812 = vld [vmem:[%s1802 + $0x48] sm:$0xff]
        %v1813 = vld [vmem:[%s1802 + $0x50] sm:$0xff]
        %v1814 = vld [vmem:[%s1802 + $0x58] sm:$0xff]
        %v1815 = vld [vmem:[%s1802 + $0x60] sm:$0xff]
        %v1816 = vld [vmem:[%s1802 + $0x68] sm:$0xff]
        %v1817 = vld [vmem:[%s1802 + $0x70] sm:$0xff]
        %v1818 = vld [vmem:[%s1802 + $0x78] sm:$0xff]
        %v1819 = vld [vmem:[#allocation7 + $0x3] sm:$0x1]
        %v1821 = vrot.slane %v1767, 7
        %v1823 = vsel %vm594, 0.0, %v1821
        %v1824 = vrot.slane %v1767, 1
        %v1826 = vsel %vm598, %v1824, 0.0
        %1827 = vmatprep.subr.mxu0 0.0
        %1828 = vmatpush1.msra.mxu0 %v1786
        %1829 = vmatprep.subr.mxu0 0.0
        %1830 = vmatpush1.msra.mxu0 %v1787
        %1831 = vmatprep.subr.mxu0 0.0
        %1832 = vmatpush1.msra.mxu0 %v1788
        %1833 = vmatprep.subr.mxu0 0.0
        %1834 = vmatpush1.msra.mxu0 %v1789
        %1835 = vmatprep.subr.mxu0 0.0
        %1836 = vmatpush1.msra.mxu0 %v1790
        %1837 = vmatprep.subr.mxu0 0.0
        %1838 = vmatpush1.msra.mxu0 %v1791
        %1839 = vmatprep.subr.mxu0 0.0
        %1840 = vmatpush1.msra.mxu0 %v1792
        %1841 = vmatprep.subr.mxu0 0.0
        %1842 = vmatpush1.msra.mxu0 %v1793
        %1843 = vmatprep.subr.mxu0 0.0
        %1844 = vmatpush1.msra.mxu0 %v1794
        %1845 = vmatprep.subr.mxu0 0.0
        %1846 = vmatpush1.msra.mxu0 %v1795
        %1847 = vmatprep.subr.mxu0 0.0
        %1848 = vmatpush1.msra.mxu0 %v1796
        %1849 = vmatprep.subr.mxu0 0.0
        %1850 = vmatpush1.msra.mxu0 %v1797
        %1851 = vmatprep.subr.mxu0 0.0
        %1852 = vmatpush1.msra.mxu0 %v1798
        %1853 = vmatprep.subr.mxu0 0.0
        %1854 = vmatpush1.msra.mxu0 %v1799
        %1855 = vmatprep.subr.mxu0 0.0
        %1856 = vmatpush1.msra.mxu0 %v1800
        %1857 = vmatprep.subr.mxu0 0.0
        %1858 = vmatpush1.msra.mxu0 %v1801
        %1859 = vmatprep.subr.mxu0 0.0
        %1860 = vmatpush1.msra.mxu0 0.0
        %1861 = vmatprep.subr.mxu0 0.0
        %1862 = vmatpush1.msra.mxu0 0.0
        %1863 = vmatprep.subr.mxu0 0.0
        %1864 = vmatpush1.msra.mxu0 0.0
        %1865 = vmatprep.subr.mxu0 0.0
        %1866 = vmatpush1.msra.mxu0 0.0
        %1867 = vmatprep.subr.mxu0 0.0
        %1868 = vmatpush1.msra.mxu0 0.0
        %1869 = vmatprep.subr.mxu0 0.0
        %1870 = vmatpush1.msra.mxu0 0.0
        %1871 = vmatprep.subr.mxu0 0.0
        %1872 = vmatpush1.msra.mxu0 0.0
        %1873 = vmatprep.subr.mxu0 0.0
        %1874 = vmatpush1.msra.mxu0 0.0
        %1875 = vmatprep.subr.mxu0 0.0
        %1876 = vmatpush1.msra.mxu0 0.0
        %1877 = vmatprep.subr.mxu0 0.0
        %1878 = vmatpush1.msra.mxu0 0.0
        %1879 = vmatprep.subr.mxu0 0.0
        %1880 = vmatpush1.msra.mxu0 0.0
        %1881 = vmatprep.subr.mxu0 0.0
        %1882 = vmatpush1.msra.mxu0 0.0
        %1883 = vmatprep.subr.mxu0 0.0
        %1884 = vmatpush1.msra.mxu0 0.0
        %1885 = vmatprep.subr.mxu0 0.0
        %1886 = vmatpush1.msra.mxu0 0.0
        %1887 = vmatprep.subr.mxu0 0.0
        %1888 = vmatpush1.msra.mxu0 0.0
        %1889 = vmatprep.subr.mxu0 0.0
        %1890 = vmatpush1.msra.mxu0 0.0
        %1891 = vmatprep.mubr.f32.mxu0 0.0
        %1892 = vmatmul.mubr.f32.gmra.mrb[0].mxu0 %v1767
        %v1893 = vpop.f32.mrb[0].mxu0
        %v1894 = vadd.f32 0.0, %v1893
        %v1895 = vpop.f32.mrb[0].mxu0
        %1896 = vdwg.mxu0
        %1897 = vmatprep.subr.mxu0 0.0
        %1898 = vmatpush1.msra.mxu0 %v1769
        %1899 = vmatprep.subr.mxu0 0.0
        %1900 = vmatpush1.msra.mxu0 %v1770
        %1901 = vmatprep.subr.mxu0 0.0
        %1902 = vmatpush1.msra.mxu0 %v1771
        %1903 = vmatprep.subr.mxu0 0.0
        %1904 = vmatpush1.msra.mxu0 %v1772
        %1905 = vmatprep.subr.mxu0 0.0
        %1906 = vmatpush1.msra.mxu0 %v1773
        %1907 = vmatprep.subr.mxu0 0.0
        %1908 = vmatpush1.msra.mxu0 %v1774
        %1909 = vmatprep.subr.mxu0 0.0
        %1910 = vmatpush1.msra.mxu0 %v1775
        %1911 = vmatprep.subr.mxu0 0.0
        %1912 = vmatpush1.msra.mxu0 %v1776
        %1913 = vmatprep.subr.mxu0 0.0
        %1914 = vmatpush1.msra.mxu0 %v1777
        %1915 = vmatprep.subr.mxu0 0.0
        %1916 = vmatpush1.msra.mxu0 %v1778
        %1917 = vmatprep.subr.mxu0 0.0
        %1918 = vmatpush1.msra.mxu0 %v1779
        %1919 = vmatprep.subr.mxu0 0.0
        %1920 = vmatpush1.msra.mxu0 %v1780
        %1921 = vmatprep.subr.mxu0 0.0
        %1922 = vmatpush1.msra.mxu0 %v1781
        %1923 = vmatprep.subr.mxu0 0.0
        %1924 = vmatpush1.msra.mxu0 %v1782
        %1925 = vmatprep.subr.mxu0 0.0
        %1926 = vmatpush1.msra.mxu0 %v1783
        %1927 = vmatprep.subr.mxu0 0.0
        %1928 = vmatpush1.msra.mxu0 %v1784
        %1929 = vmatprep.subr.mxu0 0.0
        %1930 = vmatpush1.msra.mxu0 0.0
        %1931 = vmatprep.subr.mxu0 0.0
        %1932 = vmatpush1.msra.mxu0 0.0
        %1933 = vmatprep.subr.mxu0 0.0
        %1934 = vmatpush1.msra.mxu0 0.0
        %1935 = vmatprep.subr.mxu0 0.0
        %1936 = vmatpush1.msra.mxu0 0.0
        %1937 = vmatprep.subr.mxu0 0.0
        %1938 = vmatpush1.msra.mxu0 0.0
        %1939 = vmatprep.subr.mxu0 0.0
        %1940 = vmatpush1.msra.mxu0 0.0
        %1941 = vmatprep.subr.mxu0 0.0
        %1942 = vmatpush1.msra.mxu0 0.0
        %1943 = vmatprep.subr.mxu0 0.0
        %1944 = vmatpush1.msra.mxu0 0.0
        %1945 = vmatprep.subr.mxu0 0.0
        %1946 = vmatpush1.msra.mxu0 0.0
        %1947 = vmatprep.subr.mxu0 0.0
        %1948 = vmatpush1.msra.mxu0 0.0
        %1949 = vmatprep.subr.mxu0 0.0
        %1950 = vmatpush1.msra.mxu0 0.0
        %1951 = vmatprep.subr.mxu0 0.0
        %1952 = vmatpush1.msra.mxu0 0.0
        %1953 = vmatprep.subr.mxu0 0.0
        %1954 = vmatpush1.msra.mxu0 0.0
        %1955 = vmatprep.subr.mxu0 0.0
        %1956 = vmatpush1.msra.mxu0 0.0
        %1957 = vmatprep.subr.mxu0 0.0
        %1958 = vmatpush1.msra.mxu0 0.0
        %1959 = vmatprep.subr.mxu0 0.0
        %1960 = vmatpush1.msra.mxu0 0.0
        %1961 = vmatprep.mubr.f32.mxu0 0.0
        %1962 = vmatmul.mubr.f32.gmra.mrb[0].mxu0 %v1823
        %v1963 = vpop.f32.mrb[0].mxu0
        %v1964 = vadd.f32 %v1894, %v1963
        %v1965 = vpop.f32.mrb[0].mxu0
        %1966 = vdwg.mxu0
        %1967 = vmatprep.subr.mxu0 0.0
        %1968 = vmatpush1.msra.mxu0 %v1803
        %1969 = vmatprep.subr.mxu0 0.0
        %1970 = vmatpush1.msra.mxu0 %v1804
        %1971 = vmatprep.subr.mxu0 0.0
        %1972 = vmatpush1.msra.mxu0 %v1805
        %1973 = vmatprep.subr.mxu0 0.0
        %1974 = vmatpush1.msra.mxu0 %v1806
        %1975 = vmatprep.subr.mxu0 0.0
        %1976 = vmatpush1.msra.mxu0 %v1807
        %1977 = vmatprep.subr.mxu0 0.0
        %1978 = vmatpush1.msra.mxu0 %v1808
        %1979 = vmatprep.subr.mxu0 0.0
        %1980 = vmatpush1.msra.mxu0 %v1809
        %1981 = vmatprep.subr.mxu0 0.0
        %1982 = vmatpush1.msra.mxu0 %v1810
        %1983 = vmatprep.subr.mxu0 0.0
        %1984 = vmatpush1.msra.mxu0 %v1811
        %1985 = vmatprep.subr.mxu0 0.0
        %1986 = vmatpush1.msra.mxu0 %v1812
        %1987 = vmatprep.subr.mxu0 0.0
        %1988 = vmatpush1.msra.mxu0 %v1813
        %1989 = vmatprep.subr.mxu0 0.0
        %1990 = vmatpush1.msra.mxu0 %v1814
        %1991 = vmatprep.subr.mxu0 0.0
        %1992 = vmatpush1.msra.mxu0 %v1815
        %1993 = vmatprep.subr.mxu0 0.0
        %1994 = vmatpush1.msra.mxu0 %v1816
        %1995 = vmatprep.subr.mxu0 0.0
        %1996 = vmatpush1.msra.mxu0 %v1817
        %1997 = vmatprep.subr.mxu0 0.0
        %1998 = vmatpush1.msra.mxu0 %v1818
        %1999 = vmatprep.subr.mxu0 0.0
        %2000 = vmatpush1.msra.mxu0 0.0
        %2001 = vmatprep.subr.mxu0 0.0
        %2002 = vmatpush1.msra.mxu0 0.0
        %2003 = vmatprep.subr.mxu0 0.0
        %2004 = vmatpush1.msra.mxu0 0.0
        %2005 = vmatprep.subr.mxu0 0.0
        %2006 = vmatpush1.msra.mxu0 0.0
        %2007 = vmatprep.subr.mxu0 0.0
        %2008 = vmatpush1.msra.mxu0 0.0
        %2009 = vmatprep.subr.mxu0 0.0
        %2010 = vmatpush1.msra.mxu0 0.0
        %2011 = vmatprep.subr.mxu0 0.0
        %2012 = vmatpush1.msra.mxu0 0.0
        %2013 = vmatprep.subr.mxu0 0.0
        %2014 = vmatpush1.msra.mxu0 0.0
        %2015 = vmatprep.subr.mxu0 0.0
        %2016 = vmatpush1.msra.mxu0 0.0
        %2017 = vmatprep.subr.mxu0 0.0
        %2018 = vmatpush1.msra.mxu0 0.0
        %2019 = vmatprep.subr.mxu0 0.0
        %2020 = vmatpush1.msra.mxu0 0.0
        %2021 = vmatprep.subr.mxu0 0.0
        %2022 = vmatpush1.msra.mxu0 0.0
        %2023 = vmatprep.subr.mxu0 0.0
        %2024 = vmatpush1.msra.mxu0 0.0
        %2025 = vmatprep.subr.mxu0 0.0
        %2026 = vmatpush1.msra.mxu0 0.0
        %2027 = vmatprep.subr.mxu0 0.0
        %2028 = vmatpush1.msra.mxu0 0.0
        %2029 = vmatprep.subr.mxu0 0.0
        %2030 = vmatpush1.msra.mxu0 0.0
        %2031 = vmatprep.mubr.f32.mxu0 0.0
        %2032 = vmatmul.mubr.f32.gmra.mrb[0].mxu0 %v1826
        %v2033 = vpop.f32.mrb[0].mxu0
        %v2034 = vadd.f32 0.0, %v2033
        %v2035 = vpop.f32.mrb[0].mxu0
        %2036 = vdwg.mxu0
        %v2037 = vadd.f32 %v1964, %v2034
        %v2038 = vlaneseq
        %v2039 = vshrl.u32 %v2038, 7
        %v2040 = vsub.s32 0, %v2039
        %v2041 = vrot.slane %v1819, %v2040
        %v2042 = vadd.f32 %v2037, %v2041
        %s2043 = scalar_lea.vmem [#allocation9], 4
        %v2044 = vld [vmem:[%s2043] sm:$0xf]
        %s2045 = scalar_lea.vmem %s6, 4
        %v2046 = vld [vmem:[%s2045] sm:$0xf]
        %s2047 = scalar_lea.vmem [#allocation10], 4
        %v2048 = vld [vmem:[%s2047] sm:$0xf]
        %s2049 = scalar_lea.vmem [#allocation12], 1
        %v2050 = vld [vmem:[%s2049] sm:$0x1]
        %v2051 = vrot.slane %v2042, 4
        %v2052 = vadd.f32 %v2042, %v2051
        %v2053 = vrot.slane %v2052, 2
        %v2054 = vadd.f32 %v2052, %v2053
        %v2055 = vrot.slane %v2054, 1
        %v2056 = vadd.f32 %v2054, %v2055
        %v2057 = vmul.f32 %v2056, %v1387
        %2059 = vrot.lane.b32.xlu0 %v2057, 112
        %v2060 = vpop.permute.xlu0 %2059
        %v2062 = vadd.f32 %v2057, %v2060
        %2063 = vrot.lane.b32.xlu0 %v2057, 96
        %v2064 = vpop.permute.xlu0 %2063
        %v2066 = vadd.f32 %v2062, %v2064
        %2067 = vrot.lane.b32.xlu0 %v2057, 80
        %v2068 = vpop.permute.xlu0 %2067
        %v2070 = vadd.f32 %v2066, %v2068
        %2071 = vrot.lane.b32.xlu0 %v2057, 64
        %v2072 = vpop.permute.xlu0 %2071
        %v2074 = vadd.f32 %v2070, %v2072
        %2075 = vrot.lane.b32.xlu0 %v2057, 48
        %v2076 = vpop.permute.xlu0 %2075
        %v2078 = vadd.f32 %v2074, %v2076
        %2079 = vrot.lane.b32.xlu0 %v2057, 32
        %v2080 = vpop.permute.xlu0 %2079
        %v2082 = vadd.f32 %v2078, %v2080
        %2083 = vrot.lane.b32.xlu0 %v2057, 16
        %v2084 = vpop.permute.xlu0 %2083
        %v2086 = vadd.f32 %v2082, %v2084
        %v2087 = vmul.f32 %v2086, 0.125
        %v2088 = vlaneseq
        %v2089 = vshrl.u32 %v2088, 7
        %v2090 = vsub.s32 0, %v2089
        %v2091 = vrot.slane %v2087, %v2090
        %v2092 = vmul.f32 %v2044, %v2091
        %v2093 = vsel %vm1424, %v2092, 0.0
        %2094 = vadd.xlane.f32.xlu0 %v2093
        %v2095 = vpop.xlane.xlu0 %2094
        %v2096 = vadd.f32 %v2095, %v2046
        %v2097 = vmax.f32 %v2096, 0.0
        %2099 = vset.pattern.permute.xlu0 0
        %2100 = vperm.xlu0 %2099, %v2097
        %v2101 = vpop.permute.xlu0 %2100
        %v2103 = vmul.f32 %v2101, %v2048
        %v2104 = vsel %vm1424, %v2103, 0.0
        %v2105 = vrot.slane %v2104, 4
        %v2106 = vadd.f32 %v2104, %v2105
        %v2107 = vrot.slane %v2106, 2
        %v2108 = vadd.f32 %v2106, %v2107
        %v2109 = vrot.slane %v2108, 1
        %v2110 = vadd.f32 %v2108, %v2109
        %v2111 = vadd.f32 %v2110, %v2050
        %v2112 = vxor.u32 %v2111, 2147483648
        %v2113 = vmul.f32 %v2112, 1.442695
        %v2114 = vpow.pop %v2113
        %v2115 = vadd.f32 %v2114, 1.0
        %v2116 = vrcp.pop %v2115
        %v2117 = vmul.f32 1.0, %v2116
        %2119 = vrot.lane.b32.xlu0 %v2117, 16
        %v2120 = vpop.permute.xlu0 %2119
        %2122 = vrot.lane.b32.xlu0 %v2117, 32
        %v2123 = vpop.permute.xlu0 %2122
        %2125 = vrot.lane.b32.xlu0 %v2117, 48
        %v2126 = vpop.permute.xlu0 %2125
        %2128 = vrot.lane.b32.xlu0 %v2117, 64
        %v2129 = vpop.permute.xlu0 %2128
        %2131 = vrot.lane.b32.xlu0 %v2117, 80
        %v2132 = vpop.permute.xlu0 %2131
        %2134 = vrot.lane.b32.xlu0 %v2117, 96
        %v2135 = vpop.permute.xlu0 %2134
        %2137 = vrot.lane.b32.xlu0 %v2117, 112
        %v2138 = vpop.permute.xlu0 %2137
        %v2140 = vsel %vm1472, %v2117, %v2120
        %v2141 = vsel %vm1474, %v2140, %v2123
        %v2142 = vsel %vm1476, %v2141, %v2126
        %v2143 = vsel %vm1478, %v2142, %v2129
        %v2144 = vsel %vm1480, %v2143, %v2132
        %v2145 = vsel %vm1482, %v2144, %v2135
        %v2146 = vsel %vm1484, %v2145, %v2138
        %v2147 = vlaneseq
        %v2148 = vshrl.u32 %v2147, 7
        %v2149 = vsub.s32 0, %v2148
        %v2150 = vrot.slane %v2146, %v2149
        %v2151 = vmul.f32 %v2042, %v2150
        %v2152 = vadd.f32 %v1491, %v2151
        %s2153 = scalar_lea.vmem [#allocation6], 1536
        %v2154 = vld [vmem:[%s2153] sm:$0xff]
        %v2155 = vld [vmem:[%s2153 + $0x8] sm:$0xff]
        %v2156 = vld [vmem:[%s2153 + $0x10] sm:$0xff]
        %v2157 = vld [vmem:[%s2153 + $0x18] sm:$0xff]
        %v2158 = vld [vmem:[%s2153 + $0x20] sm:$0xff]
        %v2159 = vld [vmem:[%s2153 + $0x28] sm:$0xff]
        %v2160 = vld [vmem:[%s2153 + $0x30] sm:$0xff]
        %v2161 = vld [vmem:[%s2153 + $0x38] sm:$0xff]
        %v2162 = vld [vmem:[%s2153 + $0x40] sm:$0xff]
        %v2163 = vld [vmem:[%s2153 + $0x48] sm:$0xff]
        %v2164 = vld [vmem:[%s2153 + $0x50] sm:$0xff]
        %v2165 = vld [vmem:[%s2153 + $0x58] sm:$0xff]
        %v2166 = vld [vmem:[%s2153 + $0x60] sm:$0xff]
        %v2167 = vld [vmem:[%s2153 + $0x68] sm:$0xff]
        %v2168 = vld [vmem:[%s2153 + $0x70] sm:$0xff]
        %v2169 = vld [vmem:[%s2153 + $0x78] sm:$0xff]
        %s2170 = scalar_lea.vmem [#allocation6], 1664
        %v2171 = vld [vmem:[%s2170] sm:$0xff]
        %v2172 = vld [vmem:[%s2170 + $0x8] sm:$0xff]
        %v2173 = vld [vmem:[%s2170 + $0x10] sm:$0xff]
        %v2174 = vld [vmem:[%s2170 + $0x18] sm:$0xff]
        %v2175 = vld [vmem:[%s2170 + $0x20] sm:$0xff]
        %v2176 = vld [vmem:[%s2170 + $0x28] sm:$0xff]
        %v2177 = vld [vmem:[%s2170 + $0x30] sm:$0xff]
        %v2178 = vld [vmem:[%s2170 + $0x38] sm:$0xff]
        %v2179 = vld [vmem:[%s2170 + $0x40] sm:$0xff]
        %v2180 = vld [vmem:[%s2170 + $0x48] sm:$0xff]
        %v2181 = vld [vmem:[%s2170 + $0x50] sm:$0xff]
        %v2182 = vld [vmem:[%s2170 + $0x58] sm:$0xff]
        %v2183 = vld [vmem:[%s2170 + $0x60] sm:$0xff]
        %v2184 = vld [vmem:[%s2170 + $0x68] sm:$0xff]
        %v2185 = vld [vmem:[%s2170 + $0x70] sm:$0xff]
        %v2186 = vld [vmem:[%s2170 + $0x78] sm:$0xff]
        %s2187 = scalar_lea.vmem [#allocation6], 1792
        %v2188 = vld [vmem:[%s2187] sm:$0xff]
        %v2189 = vld [vmem:[%s2187 + $0x8] sm:$0xff]
        %v2190 = vld [vmem:[%s2187 + $0x10] sm:$0xff]
        %v2191 = vld [vmem:[%s2187 + $0x18] sm:$0xff]
        %v2192 = vld [vmem:[%s2187 + $0x20] sm:$0xff]
        %v2193 = vld [vmem:[%s2187 + $0x28] sm:$0xff]
        %v2194 = vld [vmem:[%s2187 + $0x30] sm:$0xff]
        %v2195 = vld [vmem:[%s2187 + $0x38] sm:$0xff]
        %v2196 = vld [vmem:[%s2187 + $0x40] sm:$0xff]
        %v2197 = vld [vmem:[%s2187 + $0x48] sm:$0xff]
        %v2198 = vld [vmem:[%s2187 + $0x50] sm:$0xff]
        %v2199 = vld [vmem:[%s2187 + $0x58] sm:$0xff]
        %v2200 = vld [vmem:[%s2187 + $0x60] sm:$0xff]
        %v2201 = vld [vmem:[%s2187 + $0x68] sm:$0xff]
        %v2202 = vld [vmem:[%s2187 + $0x70] sm:$0xff]
        %v2203 = vld [vmem:[%s2187 + $0x78] sm:$0xff]
        %v2204 = vld [vmem:[#allocation7 + $0x4] sm:$0x1]
        %v2206 = vrot.slane %v2152, 7
        %v2208 = vsel %vm594, 0.0, %v2206
        %v2209 = vrot.slane %v2152, 1
        %v2211 = vsel %vm598, %v2209, 0.0
        %2212 = vmatprep.subr.mxu0 0.0
        %2213 = vmatpush1.msra.mxu0 %v2171
        %2214 = vmatprep.subr.mxu0 0.0
        %2215 = vmatpush1.msra.mxu0 %v2172
        %2216 = vmatprep.subr.mxu0 0.0
        %2217 = vmatpush1.msra.mxu0 %v2173
        %2218 = vmatprep.subr.mxu0 0.0
        %2219 = vmatpush1.msra.mxu0 %v2174
        %2220 = vmatprep.subr.mxu0 0.0
        %2221 = vmatpush1.msra.mxu0 %v2175
        %2222 = vmatprep.subr.mxu0 0.0
        %2223 = vmatpush1.msra.mxu0 %v2176
        %2224 = vmatprep.subr.mxu0 0.0
        %2225 = vmatpush1.msra.mxu0 %v2177
        %2226 = vmatprep.subr.mxu0 0.0
        %2227 = vmatpush1.msra.mxu0 %v2178
        %2228 = vmatprep.subr.mxu0 0.0
        %2229 = vmatpush1.msra.mxu0 %v2179
        %2230 = vmatprep.subr.mxu0 0.0
        %2231 = vmatpush1.msra.mxu0 %v2180
        %2232 = vmatprep.subr.mxu0 0.0
        %2233 = vmatpush1.msra.mxu0 %v2181
        %2234 = vmatprep.subr.mxu0 0.0
        %2235 = vmatpush1.msra.mxu0 %v2182
        %2236 = vmatprep.subr.mxu0 0.0
        %2237 = vmatpush1.msra.mxu0 %v2183
        %2238 = vmatprep.subr.mxu0 0.0
        %2239 = vmatpush1.msra.mxu0 %v2184
        %2240 = vmatprep.subr.mxu0 0.0
        %2241 = vmatpush1.msra.mxu0 %v2185
        %2242 = vmatprep.subr.mxu0 0.0
        %2243 = vmatpush1.msra.mxu0 %v2186
        %2244 = vmatprep.subr.mxu0 0.0
        %2245 = vmatpush1.msra.mxu0 0.0
        %2246 = vmatprep.subr.mxu0 0.0
        %2247 = vmatpush1.msra.mxu0 0.0
        %2248 = vmatprep.subr.mxu0 0.0
        %2249 = vmatpush1.msra.mxu0 0.0
        %2250 = vmatprep.subr.mxu0 0.0
        %2251 = vmatpush1.msra.mxu0 0.0
        %2252 = vmatprep.subr.mxu0 0.0
        %2253 = vmatpush1.msra.mxu0 0.0
        %2254 = vmatprep.subr.mxu0 0.0
        %2255 = vmatpush1.msra.mxu0 0.0
        %2256 = vmatprep.subr.mxu0 0.0
        %2257 = vmatpush1.msra.mxu0 0.0
        %2258 = vmatprep.subr.mxu0 0.0
        %2259 = vmatpush1.msra.mxu0 0.0
        %2260 = vmatprep.subr.mxu0 0.0
        %2261 = vmatpush1.msra.mxu0 0.0
        %2262 = vmatprep.subr.mxu0 0.0
        %2263 = vmatpush1.msra.mxu0 0.0
        %2264 = vmatprep.subr.mxu0 0.0
        %2265 = vmatpush1.msra.mxu0 0.0
        %2266 = vmatprep.subr.mxu0 0.0
        %2267 = vmatpush1.msra.mxu0 0.0
        %2268 = vmatprep.subr.mxu0 0.0
        %2269 = vmatpush1.msra.mxu0 0.0
        %2270 = vmatprep.subr.mxu0 0.0
        %2271 = vmatpush1.msra.mxu0 0.0
        %2272 = vmatprep.subr.mxu0 0.0
        %2273 = vmatpush1.msra.mxu0 0.0
        %2274 = vmatprep.subr.mxu0 0.0
        %2275 = vmatpush1.msra.mxu0 0.0
        %2276 = vmatprep.mubr.f32.mxu0 0.0
        %2277 = vmatmul.mubr.f32.gmra.mrb[0].mxu0 %v2152
        %v2278 = vpop.f32.mrb[0].mxu0
        %v2279 = vadd.f32 0.0, %v2278
        %v2280 = vpop.f32.mrb[0].mxu0
        %2281 = vdwg.mxu0
        %2282 = vmatprep.subr.mxu0 0.0
        %2283 = vmatpush1.msra.mxu0 %v2154
        %2284 = vmatprep.subr.mxu0 0.0
        %2285 = vmatpush1.msra.mxu0 %v2155
        %2286 = vmatprep.subr.mxu0 0.0
        %2287 = vmatpush1.msra.mxu0 %v2156
        %2288 = vmatprep.subr.mxu0 0.0
        %2289 = vmatpush1.msra.mxu0 %v2157
        %2290 = vmatprep.subr.mxu0 0.0
        %2291 = vmatpush1.msra.mxu0 %v2158
        %2292 = vmatprep.subr.mxu0 0.0
        %2293 = vmatpush1.msra.mxu0 %v2159
        %2294 = vmatprep.subr.mxu0 0.0
        %2295 = vmatpush1.msra.mxu0 %v2160
        %2296 = vmatprep.subr.mxu0 0.0
        %2297 = vmatpush1.msra.mxu0 %v2161
        %2298 = vmatprep.subr.mxu0 0.0
        %2299 = vmatpush1.msra.mxu0 %v2162
        %2300 = vmatprep.subr.mxu0 0.0
        %2301 = vmatpush1.msra.mxu0 %v2163
        %2302 = vmatprep.subr.mxu0 0.0
        %2303 = vmatpush1.msra.mxu0 %v2164
        %2304 = vmatprep.subr.mxu0 0.0
        %2305 = vmatpush1.msra.mxu0 %v2165
        %2306 = vmatprep.subr.mxu0 0.0
        %2307 = vmatpush1.msra.mxu0 %v2166
        %2308 = vmatprep.subr.mxu0 0.0
        %2309 = vmatpush1.msra.mxu0 %v2167
        %2310 = vmatprep.subr.mxu0 0.0
        %2311 = vmatpush1.msra.mxu0 %v2168
        %2312 = vmatprep.subr.mxu0 0.0
        %2313 = vmatpush1.msra.mxu0 %v2169
        %2314 = vmatprep.subr.mxu0 0.0
        %2315 = vmatpush1.msra.mxu0 0.0
        %2316 = vmatprep.subr.mxu0 0.0
        %2317 = vmatpush1.msra.mxu0 0.0
        %2318 = vmatprep.subr.mxu0 0.0
        %2319 = vmatpush1.msra.mxu0 0.0
        %2320 = vmatprep.subr.mxu0 0.0
        %2321 = vmatpush1.msra.mxu0 0.0
        %2322 = vmatprep.subr.mxu0 0.0
        %2323 = vmatpush1.msra.mxu0 0.0
        %2324 = vmatprep.subr.mxu0 0.0
        %2325 = vmatpush1.msra.mxu0 0.0
        %2326 = vmatprep.subr.mxu0 0.0
        %2327 = vmatpush1.msra.mxu0 0.0
        %2328 = vmatprep.subr.mxu0 0.0
        %2329 = vmatpush1.msra.mxu0 0.0
        %2330 = vmatprep.subr.mxu0 0.0
        %2331 = vmatpush1.msra.mxu0 0.0
        %2332 = vmatprep.subr.mxu0 0.0
        %2333 = vmatpush1.msra.mxu0 0.0
        %2334 = vmatprep.subr.mxu0 0.0
        %2335 = vmatpush1.msra.mxu0 0.0
        %2336 = vmatprep.subr.mxu0 0.0
        %2337 = vmatpush1.msra.mxu0 0.0
        %2338 = vmatprep.subr.mxu0 0.0
        %2339 = vmatpush1.msra.mxu0 0.0
        %2340 = vmatprep.subr.mxu0 0.0
        %2341 = vmatpush1.msra.mxu0 0.0
        %2342 = vmatprep.subr.mxu0 0.0
        %2343 = vmatpush1.msra.mxu0 0.0
        %2344 = vmatprep.subr.mxu0 0.0
        %2345 = vmatpush1.msra.mxu0 0.0
        %2346 = vmatprep.mubr.f32.mxu0 0.0
        %2347 = vmatmul.mubr.f32.gmra.mrb[0].mxu0 %v2208
        %v2348 = vpop.f32.mrb[0].mxu0
        %v2349 = vadd.f32 %v2279, %v2348
        %v2350 = vpop.f32.mrb[0].mxu0
        %2351 = vdwg.mxu0
        %2352 = vmatprep.subr.mxu0 0.0
        %2353 = vmatpush1.msra.mxu0 %v2188
        %2354 = vmatprep.subr.mxu0 0.0
        %2355 = vmatpush1.msra.mxu0 %v2189
        %2356 = vmatprep.subr.mxu0 0.0
        %2357 = vmatpush1.msra.mxu0 %v2190
        %2358 = vmatprep.subr.mxu0 0.0
        %2359 = vmatpush1.msra.mxu0 %v2191
        %2360 = vmatprep.subr.mxu0 0.0
        %2361 = vmatpush1.msra.mxu0 %v2192
        %2362 = vmatprep.subr.mxu0 0.0
        %2363 = vmatpush1.msra.mxu0 %v2193
        %2364 = vmatprep.subr.mxu0 0.0
        %2365 = vmatpush1.msra.mxu0 %v2194
        %2366 = vmatprep.subr.mxu0 0.0
        %2367 = vmatpush1.msra.mxu0 %v2195
        %2368 = vmatprep.subr.mxu0 0.0
        %2369 = vmatpush1.msra.mxu0 %v2196
        %2370 = vmatprep.subr.mxu0 0.0
        %2371 = vmatpush1.msra.mxu0 %v2197
        %2372 = vmatprep.subr.mxu0 0.0
        %2373 = vmatpush1.msra.mxu0 %v2198
        %2374 = vmatprep.subr.mxu0 0.0
        %2375 = vmatpush1.msra.mxu0 %v2199
        %2376 = vmatprep.subr.mxu0 0.0
        %2377 = vmatpush1.msra.mxu0 %v2200
        %2378 = vmatprep.subr.mxu0 0.0
        %2379 = vmatpush1.msra.mxu0 %v2201
        %2380 = vmatprep.subr.mxu0 0.0
        %2381 = vmatpush1.msra.mxu0 %v2202
        %2382 = vmatprep.subr.mxu0 0.0
        %2383 = vmatpush1.msra.mxu0 %v2203
        %2384 = vmatprep.subr.mxu0 0.0
        %2385 = vmatpush1.msra.mxu0 0.0
        %2386 = vmatprep.subr.mxu0 0.0
        %2387 = vmatpush1.msra.mxu0 0.0
        %2388 = vmatprep.subr.mxu0 0.0
        %2389 = vmatpush1.msra.mxu0 0.0
        %2390 = vmatprep.subr.mxu0 0.0
        %2391 = vmatpush1.msra.mxu0 0.0
        %2392 = vmatprep.subr.mxu0 0.0
        %2393 = vmatpush1.msra.mxu0 0.0
        %2394 = vmatprep.subr.mxu0 0.0
        %2395 = vmatpush1.msra.mxu0 0.0
        %2396 = vmatprep.subr.mxu0 0.0
        %2397 = vmatpush1.msra.mxu0 0.0
        %2398 = vmatprep.subr.mxu0 0.0
        %2399 = vmatpush1.msra.mxu0 0.0
        %2400 = vmatprep.subr.mxu0 0.0
        %2401 = vmatpush1.msra.mxu0 0.0
        %2402 = vmatprep.subr.mxu0 0.0
        %2403 = vmatpush1.msra.mxu0 0.0
        %2404 = vmatprep.subr.mxu0 0.0
        %2405 = vmatpush1.msra.mxu0 0.0
        %2406 = vmatprep.subr.mxu0 0.0
        %2407 = vmatpush1.msra.mxu0 0.0
        %2408 = vmatprep.subr.mxu0 0.0
        %2409 = vmatpush1.msra.mxu0 0.0
        %2410 = vmatprep.subr.mxu0 0.0
        %2411 = vmatpush1.msra.mxu0 0.0
        %2412 = vmatprep.subr.mxu0 0.0
        %2413 = vmatpush1.msra.mxu0 0.0
        %2414 = vmatprep.subr.mxu0 0.0
        %2415 = vmatpush1.msra.mxu0 0.0
        %2416 = vmatprep.mubr.f32.mxu0 0.0
        %2417 = vmatmul.mubr.f32.gmra.mrb[0].mxu0 %v2211
        %v2418 = vpop.f32.mrb[0].mxu0
        %v2419 = vadd.f32 0.0, %v2418
        %v2420 = vpop.f32.mrb[0].mxu0
        %2421 = vdwg.mxu0
        %v2422 = vadd.f32 %v2349, %v2419
        %v2423 = vlaneseq
        %v2424 = vshrl.u32 %v2423, 7
        %v2425 = vsub.s32 0, %v2424
        %v2426 = vrot.slane %v2204, %v2425
        %v2427 = vadd.f32 %v2422, %v2426
        %v2428 = vadd.f32 %v826, %v2427
        %s2429 = scalar_lea.vmem [#allocation6], 1920
        %v2430 = vld [vmem:[%s2429] sm:$0xff]
        %v2431 = vld [vmem:[%s2429 + $0x8] sm:$0xff]
        %v2432 = vld [vmem:[%s2429 + $0x10] sm:$0xff]
        %v2433 = vld [vmem:[%s2429 + $0x18] sm:$0xff]
        %v2434 = vld [vmem:[%s2429 + $0x20] sm:$0xff]
        %v2435 = vld [vmem:[%s2429 + $0x28] sm:$0xff]
        %v2436 = vld [vmem:[%s2429 + $0x30] sm:$0xff]
        %v2437 = vld [vmem:[%s2429 + $0x38] sm:$0xff]
        %v2438 = vld [vmem:[%s2429 + $0x40] sm:$0xff]
        %v2439 = vld [vmem:[%s2429 + $0x48] sm:$0xff]
        %v2440 = vld [vmem:[%s2429 + $0x50] sm:$0xff]
        %v2441 = vld [vmem:[%s2429 + $0x58] sm:$0xff]
        %v2442 = vld [vmem:[%s2429 + $0x60] sm:$0xff]
        %v2443 = vld [vmem:[%s2429 + $0x68] sm:$0xff]
        %v2444 = vld [vmem:[%s2429 + $0x70] sm:$0xff]
        %v2445 = vld [vmem:[%s2429 + $0x78] sm:$0xff]
        %s2446 = scalar_lea.vmem [#allocation6], 2048
        %v2447 = vld [vmem:[%s2446] sm:$0xff]
        %v2448 = vld [vmem:[%s2446 + $0x8] sm:$0xff]
        %v2449 = vld [vmem:[%s2446 + $0x10] sm:$0xff]
        %v2450 = vld [vmem:[%s2446 + $0x18] sm:$0xff]
        %v2451 = vld [vmem:[%s2446 + $0x20] sm:$0xff]
        %v2452 = vld [vmem:[%s2446 + $0x28] sm:$0xff]
        %v2453 = vld [vmem:[%s2446 + $0x30] sm:$0xff]
        %v2454 = vld [vmem:[%s2446 + $0x38] sm:$0xff]
        %v2455 = vld [vmem:[%s2446 + $0x40] sm:$0xff]
        %v2456 = vld [vmem:[%s2446 + $0x48] sm:$0xff]
        %v2457 = vld [vmem:[%s2446 + $0x50] sm:$0xff]
        %v2458 = vld [vmem:[%s2446 + $0x58] sm:$0xff]
        %v2459 = vld [vmem:[%s2446 + $0x60] sm:$0xff]
        %v2460 = vld [vmem:[%s2446 + $0x68] sm:$0xff]
        %v2461 = vld [vmem:[%s2446 + $0x70] sm:$0xff]
        %v2462 = vld [vmem:[%s2446 + $0x78] sm:$0xff]
        %s2463 = scalar_lea.vmem [#allocation6], 2176
        %v2464 = vld [vmem:[%s2463] sm:$0xff]
        %v2465 = vld [vmem:[%s2463 + $0x8] sm:$0xff]
        %v2466 = vld [vmem:[%s2463 + $0x10] sm:$0xff]
        %v2467 = vld [vmem:[%s2463 + $0x18] sm:$0xff]
        %v2468 = vld [vmem:[%s2463 + $0x20] sm:$0xff]
        %v2469 = vld [vmem:[%s2463 + $0x28] sm:$0xff]
        %v2470 = vld [vmem:[%s2463 + $0x30] sm:$0xff]
        %v2471 = vld [vmem:[%s2463 + $0x38] sm:$0xff]
        %v2472 = vld [vmem:[%s2463 + $0x40] sm:$0xff]
        %v2473 = vld [vmem:[%s2463 + $0x48] sm:$0xff]
        %v2474 = vld [vmem:[%s2463 + $0x50] sm:$0xff]
        %v2475 = vld [vmem:[%s2463 + $0x58] sm:$0xff]
        %v2476 = vld [vmem:[%s2463 + $0x60] sm:$0xff]
        %v2477 = vld [vmem:[%s2463 + $0x68] sm:$0xff]
        %v2478 = vld [vmem:[%s2463 + $0x70] sm:$0xff]
        %v2479 = vld [vmem:[%s2463 + $0x78] sm:$0xff]
        %v2480 = vld [vmem:[#allocation7 + $0x5] sm:$0x1]
        %v2482 = vrot.slane %v2428, 7
        %v2484 = vsel %vm594, 0.0, %v2482
        %v2485 = vrot.slane %v2428, 1
        %v2487 = vsel %vm598, %v2485, 0.0
        %2488 = vmatprep.subr.mxu0 0.0
        %2489 = vmatpush1.msra.mxu0 %v2447
        %2490 = vmatprep.subr.mxu0 0.0
        %2491 = vmatpush1.msra.mxu0 %v2448
        %2492 = vmatprep.subr.mxu0 0.0
        %2493 = vmatpush1.msra.mxu0 %v2449
        %2494 = vmatprep.subr.mxu0 0.0
        %2495 = vmatpush1.msra.mxu0 %v2450
        %2496 = vmatprep.subr.mxu0 0.0
        %2497 = vmatpush1.msra.mxu0 %v2451
        %2498 = vmatprep.subr.mxu0 0.0
        %2499 = vmatpush1.msra.mxu0 %v2452
        %2500 = vmatprep.subr.mxu0 0.0
        %2501 = vmatpush1.msra.mxu0 %v2453
        %2502 = vmatprep.subr.mxu0 0.0
        %2503 = vmatpush1.msra.mxu0 %v2454
        %2504 = vmatprep.subr.mxu0 0.0
        %2505 = vmatpush1.msra.mxu0 %v2455
        %2506 = vmatprep.subr.mxu0 0.0
        %2507 = vmatpush1.msra.mxu0 %v2456
        %2508 = vmatprep.subr.mxu0 0.0
        %2509 = vmatpush1.msra.mxu0 %v2457
        %2510 = vmatprep.subr.mxu0 0.0
        %2511 = vmatpush1.msra.mxu0 %v2458
        %2512 = vmatprep.subr.mxu0 0.0
        %2513 = vmatpush1.msra.mxu0 %v2459
        %2514 = vmatprep.subr.mxu0 0.0
        %2515 = vmatpush1.msra.mxu0 %v2460
        %2516 = vmatprep.subr.mxu0 0.0
        %2517 = vmatpush1.msra.mxu0 %v2461
        %2518 = vmatprep.subr.mxu0 0.0
        %2519 = vmatpush1.msra.mxu0 %v2462
        %2520 = vmatprep.subr.mxu0 0.0
        %2521 = vmatpush1.msra.mxu0 0.0
        %2522 = vmatprep.subr.mxu0 0.0
        %2523 = vmatpush1.msra.mxu0 0.0
        %2524 = vmatprep.subr.mxu0 0.0
        %2525 = vmatpush1.msra.mxu0 0.0
        %2526 = vmatprep.subr.mxu0 0.0
        %2527 = vmatpush1.msra.mxu0 0.0
        %2528 = vmatprep.subr.mxu0 0.0
        %2529 = vmatpush1.msra.mxu0 0.0
        %2530 = vmatprep.subr.mxu0 0.0
        %2531 = vmatpush1.msra.mxu0 0.0
        %2532 = vmatprep.subr.mxu0 0.0
        %2533 = vmatpush1.msra.mxu0 0.0
        %2534 = vmatprep.subr.mxu0 0.0
        %2535 = vmatpush1.msra.mxu0 0.0
        %2536 = vmatprep.subr.mxu0 0.0
        %2537 = vmatpush1.msra.mxu0 0.0
        %2538 = vmatprep.subr.mxu0 0.0
        %2539 = vmatpush1.msra.mxu0 0.0
        %2540 = vmatprep.subr.mxu0 0.0
        %2541 = vmatpush1.msra.mxu0 0.0
        %2542 = vmatprep.subr.mxu0 0.0
        %2543 = vmatpush1.msra.mxu0 0.0
        %2544 = vmatprep.subr.mxu0 0.0
        %2545 = vmatpush1.msra.mxu0 0.0
        %2546 = vmatprep.subr.mxu0 0.0
        %2547 = vmatpush1.msra.mxu0 0.0
        %2548 = vmatprep.subr.mxu0 0.0
        %2549 = vmatpush1.msra.mxu0 0.0
        %2550 = vmatprep.subr.mxu0 0.0
        %2551 = vmatpush1.msra.mxu0 0.0
        %2552 = vmatprep.mubr.f32.mxu0 0.0
        %2553 = vmatmul.mubr.f32.gmra.mrb[0].mxu0 %v2428
        %v2554 = vpop.f32.mrb[0].mxu0
        %v2555 = vadd.f32 0.0, %v2554
        %v2556 = vpop.f32.mrb[0].mxu0
        %2557 = vdwg.mxu0
        %2558 = vmatprep.subr.mxu0 0.0
        %2559 = vmatpush1.msra.mxu0 %v2430
        %2560 = vmatprep.subr.mxu0 0.0
        %2561 = vmatpush1.msra.mxu0 %v2431
        %2562 = vmatprep.subr.mxu0 0.0
        %2563 = vmatpush1.msra.mxu0 %v2432
        %2564 = vmatprep.subr.mxu0 0.0
        %2565 = vmatpush1.msra.mxu0 %v2433
        %2566 = vmatprep.subr.mxu0 0.0
        %2567 = vmatpush1.msra.mxu0 %v2434
        %2568 = vmatprep.subr.mxu0 0.0
        %2569 = vmatpush1.msra.mxu0 %v2435
        %2570 = vmatprep.subr.mxu0 0.0
        %2571 = vmatpush1.msra.mxu0 %v2436
        %2572 = vmatprep.subr.mxu0 0.0
        %2573 = vmatpush1.msra.mxu0 %v2437
        %2574 = vmatprep.subr.mxu0 0.0
        %2575 = vmatpush1.msra.mxu0 %v2438
        %2576 = vmatprep.subr.mxu0 0.0
        %2577 = vmatpush1.msra.mxu0 %v2439
        %2578 = vmatprep.subr.mxu0 0.0
        %2579 = vmatpush1.msra.mxu0 %v2440
        %2580 = vmatprep.subr.mxu0 0.0
        %2581 = vmatpush1.msra.mxu0 %v2441
        %2582 = vmatprep.subr.mxu0 0.0
        %2583 = vmatpush1.msra.mxu0 %v2442
        %2584 = vmatprep.subr.mxu0 0.0
        %2585 = vmatpush1.msra.mxu0 %v2443
        %2586 = vmatprep.subr.mxu0 0.0
        %2587 = vmatpush1.msra.mxu0 %v2444
        %2588 = vmatprep.subr.mxu0 0.0
        %2589 = vmatpush1.msra.mxu0 %v2445
        %2590 = vmatprep.subr.mxu0 0.0
        %2591 = vmatpush1.msra.mxu0 0.0
        %2592 = vmatprep.subr.mxu0 0.0
        %2593 = vmatpush1.msra.mxu0 0.0
        %2594 = vmatprep.subr.mxu0 0.0
        %2595 = vmatpush1.msra.mxu0 0.0
        %2596 = vmatprep.subr.mxu0 0.0
        %2597 = vmatpush1.msra.mxu0 0.0
        %2598 = vmatprep.subr.mxu0 0.0
        %2599 = vmatpush1.msra.mxu0 0.0
        %2600 = vmatprep.subr.mxu0 0.0
        %2601 = vmatpush1.msra.mxu0 0.0
        %2602 = vmatprep.subr.mxu0 0.0
        %2603 = vmatpush1.msra.mxu0 0.0
        %2604 = vmatprep.subr.mxu0 0.0
        %2605 = vmatpush1.msra.mxu0 0.0
        %2606 = vmatprep.subr.mxu0 0.0
        %2607 = vmatpush1.msra.mxu0 0.0
        %2608 = vmatprep.subr.mxu0 0.0
        %2609 = vmatpush1.msra.mxu0 0.0
        %2610 = vmatprep.subr.mxu0 0.0
        %2611 = vmatpush1.msra.mxu0 0.0
        %2612 = vmatprep.subr.mxu0 0.0
        %2613 = vmatpush1.msra.mxu0 0.0
        %2614 = vmatprep.subr.mxu0 0.0
        %2615 = vmatpush1.msra.mxu0 0.0
        %2616 = vmatprep.subr.mxu0 0.0
        %2617 = vmatpush1.msra.mxu0 0.0
        %2618 = vmatprep.subr.mxu0 0.0
        %2619 = vmatpush1.msra.mxu0 0.0
        %2620 = vmatprep.subr.mxu0 0.0
        %2621 = vmatpush1.msra.mxu0 0.0
        %2622 = vmatprep.mubr.f32.mxu0 0.0
        %2623 = vmatmul.mubr.f32.gmra.mrb[0].mxu0 %v2484
        %v2624 = vpop.f32.mrb[0].mxu0
        %v2625 = vadd.f32 %v2555, %v2624
        %v2626 = vpop.f32.mrb[0].mxu0
        %2627 = vdwg.mxu0
        %2628 = vmatprep.subr.mxu0 0.0
        %2629 = vmatpush1.msra.mxu0 %v2464
        %2630 = vmatprep.subr.mxu0 0.0
        %2631 = vmatpush1.msra.mxu0 %v2465
        %2632 = vmatprep.subr.mxu0 0.0
        %2633 = vmatpush1.msra.mxu0 %v2466
        %2634 = vmatprep.subr.mxu0 0.0
        %2635 = vmatpush1.msra.mxu0 %v2467
        %2636 = vmatprep.subr.mxu0 0.0
        %2637 = vmatpush1.msra.mxu0 %v2468
        %2638 = vmatprep.subr.mxu0 0.0
        %2639 = vmatpush1.msra.mxu0 %v2469
        %2640 = vmatprep.subr.mxu0 0.0
        %2641 = vmatpush1.msra.mxu0 %v2470
        %2642 = vmatprep.subr.mxu0 0.0
        %2643 = vmatpush1.msra.mxu0 %v2471
        %2644 = vmatprep.subr.mxu0 0.0
        %2645 = vmatpush1.msra.mxu0 %v2472
        %2646 = vmatprep.subr.mxu0 0.0
        %2647 = vmatpush1.msra.mxu0 %v2473
        %2648 = vmatprep.subr.mxu0 0.0
        %2649 = vmatpush1.msra.mxu0 %v2474
        %2650 = vmatprep.subr.mxu0 0.0
        %2651 = vmatpush1.msra.mxu0 %v2475
        %2652 = vmatprep.subr.mxu0 0.0
        %2653 = vmatpush1.msra.mxu0 %v2476
        %2654 = vmatprep.subr.mxu0 0.0
        %2655 = vmatpush1.msra.mxu0 %v2477
        %2656 = vmatprep.subr.mxu0 0.0
        %2657 = vmatpush1.msra.mxu0 %v2478
        %2658 = vmatprep.subr.mxu0 0.0
        %2659 = vmatpush1.msra.mxu0 %v2479
        %2660 = vmatprep.subr.mxu0 0.0
        %2661 = vmatpush1.msra.mxu0 0.0
        %2662 = vmatprep.subr.mxu0 0.0
        %2663 = vmatpush1.msra.mxu0 0.0
        %2664 = vmatprep.subr.mxu0 0.0
        %2665 = vmatpush1.msra.mxu0 0.0
        %2666 = vmatprep.subr.mxu0 0.0
        %2667 = vmatpush1.msra.mxu0 0.0
        %2668 = vmatprep.subr.mxu0 0.0
        %2669 = vmatpush1.msra.mxu0 0.0
        %2670 = vmatprep.subr.mxu0 0.0
        %2671 = vmatpush1.msra.mxu0 0.0
        %2672 = vmatprep.subr.mxu0 0.0
        %2673 = vmatpush1.msra.mxu0 0.0
        %2674 = vmatprep.subr.mxu0 0.0
        %2675 = vmatpush1.msra.mxu0 0.0
        %2676 = vmatprep.subr.mxu0 0.0
        %2677 = vmatpush1.msra.mxu0 0.0
        %2678 = vmatprep.subr.mxu0 0.0
        %2679 = vmatpush1.msra.mxu0 0.0
        %2680 = vmatprep.subr.mxu0 0.0
        %2681 = vmatpush1.msra.mxu0 0.0
        %2682 = vmatprep.subr.mxu0 0.0
        %2683 = vmatpush1.msra.mxu0 0.0
        %2684 = vmatprep.subr.mxu0 0.0
        %2685 = vmatpush1.msra.mxu0 0.0
        %2686 = vmatprep.subr.mxu0 0.0
        %2687 = vmatpush1.msra.mxu0 0.0
        %2688 = vmatprep.subr.mxu0 0.0
        %2689 = vmatpush1.msra.mxu0 0.0
        %2690 = vmatprep.subr.mxu0 0.0
        %2691 = vmatpush1.msra.mxu0 0.0
        %2692 = vmatprep.mubr.f32.mxu0 0.0
        %2693 = vmatmul.mubr.f32.gmra.mrb[0].mxu0 %v2487
        %v2694 = vpop.f32.mrb[0].mxu0
        %v2695 = vadd.f32 0.0, %v2694
        %v2696 = vpop.f32.mrb[0].mxu0
        %2697 = vdwg.mxu0
        %v2698 = vadd.f32 %v2625, %v2695
        %v2699 = vlaneseq
        %v2700 = vshrl.u32 %v2699, 7
        %v2701 = vsub.s32 0, %v2700
        %v2702 = vrot.slane %v2480, %v2701
        %v2703 = vadd.f32 %v2698, %v2702
        %v2704 = vmax.f32 %v2703, 0.0
        %s2705 = scalar_lea.vmem [#allocation6], 2304
        %v2706 = vld [vmem:[%s2705] sm:$0xff]
        %v2707 = vld [vmem:[%s2705 + $0x8] sm:$0xff]
        %v2708 = vld [vmem:[%s2705 + $0x10] sm:$0xff]
        %v2709 = vld [vmem:[%s2705 + $0x18] sm:$0xff]
        %v2710 = vld [vmem:[%s2705 + $0x20] sm:$0xff]
        %v2711 = vld [vmem:[%s2705 + $0x28] sm:$0xff]
        %v2712 = vld [vmem:[%s2705 + $0x30] sm:$0xff]
        %v2713 = vld [vmem:[%s2705 + $0x38] sm:$0xff]
        %v2714 = vld [vmem:[%s2705 + $0x40] sm:$0xff]
        %v2715 = vld [vmem:[%s2705 + $0x48] sm:$0xff]
        %v2716 = vld [vmem:[%s2705 + $0x50] sm:$0xff]
        %v2717 = vld [vmem:[%s2705 + $0x58] sm:$0xff]
        %v2718 = vld [vmem:[%s2705 + $0x60] sm:$0xff]
        %v2719 = vld [vmem:[%s2705 + $0x68] sm:$0xff]
        %v2720 = vld [vmem:[%s2705 + $0x70] sm:$0xff]
        %v2721 = vld [vmem:[%s2705 + $0x78] sm:$0xff]
        %s2722 = scalar_lea.vmem [#allocation6], 2432
        %v2723 = vld [vmem:[%s2722] sm:$0xff]
        %v2724 = vld [vmem:[%s2722 + $0x8] sm:$0xff]
        %v2725 = vld [vmem:[%s2722 + $0x10] sm:$0xff]
        %v2726 = vld [vmem:[%s2722 + $0x18] sm:$0xff]
        %v2727 = vld [vmem:[%s2722 + $0x20] sm:$0xff]
        %v2728 = vld [vmem:[%s2722 + $0x28] sm:$0xff]
        %v2729 = vld [vmem:[%s2722 + $0x30] sm:$0xff]
        %v2730 = vld [vmem:[%s2722 + $0x38] sm:$0xff]
        %v2731 = vld [vmem:[%s2722 + $0x40] sm:$0xff]
        %v2732 = vld [vmem:[%s2722 + $0x48] sm:$0xff]
        %v2733 = vld [vmem:[%s2722 + $0x50] sm:$0xff]
        %v2734 = vld [vmem:[%s2722 + $0x58] sm:$0xff]
        %v2735 = vld [vmem:[%s2722 + $0x60] sm:$0xff]
        %v2736 = vld [vmem:[%s2722 + $0x68] sm:$0xff]
        %v2737 = vld [vmem:[%s2722 + $0x70] sm:$0xff]
        %v2738 = vld [vmem:[%s2722 + $0x78] sm:$0xff]
        %s2739 = scalar_lea.vmem [#allocation6], 2560
        %v2740 = vld [vmem:[%s2739] sm:$0xff]
        %v2741 = vld [vmem:[%s2739 + $0x8] sm:$0xff]
        %v2742 = vld [vmem:[%s2739 + $0x10] sm:$0xff]
        %v2743 = vld [vmem:[%s2739 + $0x18] sm:$0xff]
        %v2744 = vld [vmem:[%s2739 + $0x20] sm:$0xff]
        %v2745 = vld [vmem:[%s2739 + $0x28] sm:$0xff]
        %v2746 = vld [vmem:[%s2739 + $0x30] sm:$0xff]
        %v2747 = vld [vmem:[%s2739 + $0x38] sm:$0xff]
        %v2748 = vld [vmem:[%s2739 + $0x40] sm:$0xff]
        %v2749 = vld [vmem:[%s2739 + $0x48] sm:$0xff]
        %v2750 = vld [vmem:[%s2739 + $0x50] sm:$0xff]
        %v2751 = vld [vmem:[%s2739 + $0x58] sm:$0xff]
        %v2752 = vld [vmem:[%s2739 + $0x60] sm:$0xff]
        %v2753 = vld [vmem:[%s2739 + $0x68] sm:$0xff]
        %v2754 = vld [vmem:[%s2739 + $0x70] sm:$0xff]
        %v2755 = vld [vmem:[%s2739 + $0x78] sm:$0xff]
        %v2756 = vld [vmem:[#allocation7 + $0x6] sm:$0x1]
        %v2758 = vrot.slane %v2704, 7
        %v2760 = vsel %vm594, 0.0, %v2758
        %v2761 = vrot.slane %v2704, 1
        %v2763 = vsel %vm598, %v2761, 0.0
        %2764 = vmatprep.subr.mxu0 0.0
        %2765 = vmatpush1.msra.mxu0 %v2723
        %2766 = vmatprep.subr.mxu0 0.0
        %2767 = vmatpush1.msra.mxu0 %v2724
        %2768 = vmatprep.subr.mxu0 0.0
        %2769 = vmatpush1.msra.mxu0 %v2725
        %2770 = vmatprep.subr.mxu0 0.0
        %2771 = vmatpush1.msra.mxu0 %v2726
        %2772 = vmatprep.subr.mxu0 0.0
        %2773 = vmatpush1.msra.mxu0 %v2727
        %2774 = vmatprep.subr.mxu0 0.0
        %2775 = vmatpush1.msra.mxu0 %v2728
        %2776 = vmatprep.subr.mxu0 0.0
        %2777 = vmatpush1.msra.mxu0 %v2729
        %2778 = vmatprep.subr.mxu0 0.0
        %2779 = vmatpush1.msra.mxu0 %v2730
        %2780 = vmatprep.subr.mxu0 0.0
        %2781 = vmatpush1.msra.mxu0 %v2731
        %2782 = vmatprep.subr.mxu0 0.0
        %2783 = vmatpush1.msra.mxu0 %v2732
        %2784 = vmatprep.subr.mxu0 0.0
        %2785 = vmatpush1.msra.mxu0 %v2733
        %2786 = vmatprep.subr.mxu0 0.0
        %2787 = vmatpush1.msra.mxu0 %v2734
        %2788 = vmatprep.subr.mxu0 0.0
        %2789 = vmatpush1.msra.mxu0 %v2735
        %2790 = vmatprep.subr.mxu0 0.0
        %2791 = vmatpush1.msra.mxu0 %v2736
        %2792 = vmatprep.subr.mxu0 0.0
        %2793 = vmatpush1.msra.mxu0 %v2737
        %2794 = vmatprep.subr.mxu0 0.0
        %2795 = vmatpush1.msra.mxu0 %v2738
        %2796 = vmatprep.subr.mxu0 0.0
        %2797 = vmatpush1.msra.mxu0 0.0
        %2798 = vmatprep.subr.mxu0 0.0
        %2799 = vmatpush1.msra.mxu0 0.0
        %2800 = vmatprep.subr.mxu0 0.0
        %2801 = vmatpush1.msra.mxu0 0.0
        %2802 = vmatprep.subr.mxu0 0.0
        %2803 = vmatpush1.msra.mxu0 0.0
        %2804 = vmatprep.subr.mxu0 0.0
        %2805 = vmatpush1.msra.mxu0 0.0
        %2806 = vmatprep.subr.mxu0 0.0
        %2807 = vmatpush1.msra.mxu0 0.0
        %2808 = vmatprep.subr.mxu0 0.0
        %2809 = vmatpush1.msra.mxu0 0.0
        %2810 = vmatprep.subr.mxu0 0.0
        %2811 = vmatpush1.msra.mxu0 0.0
        %2812 = vmatprep.subr.mxu0 0.0
        %2813 = vmatpush1.msra.mxu0 0.0
        %2814 = vmatprep.subr.mxu0 0.0
        %2815 = vmatpush1.msra.mxu0 0.0
        %2816 = vmatprep.subr.mxu0 0.0
        %2817 = vmatpush1.msra.mxu0 0.0
        %2818 = vmatprep.subr.mxu0 0.0
        %2819 = vmatpush1.msra.mxu0 0.0
        %2820 = vmatprep.subr.mxu0 0.0
        %2821 = vmatpush1.msra.mxu0 0.0
        %2822 = vmatprep.subr.mxu0 0.0
        %2823 = vmatpush1.msra.mxu0 0.0
        %2824 = vmatprep.subr.mxu0 0.0
        %2825 = vmatpush1.msra.mxu0 0.0
        %2826 = vmatprep.subr.mxu0 0.0
        %2827 = vmatpush1.msra.mxu0 0.0
        %2828 = vmatprep.mubr.f32.mxu0 0.0
        %2829 = vmatmul.mubr.f32.gmra.mrb[0].mxu0 %v2704
        %v2830 = vpop.f32.mrb[0].mxu0
        %v2831 = vadd.f32 0.0, %v2830
        %v2832 = vpop.f32.mrb[0].mxu0
        %2833 = vdwg.mxu0
        %2834 = vmatprep.subr.mxu0 0.0
        %2835 = vmatpush1.msra.mxu0 %v2706
        %2836 = vmatprep.subr.mxu0 0.0
        %2837 = vmatpush1.msra.mxu0 %v2707
        %2838 = vmatprep.subr.mxu0 0.0
        %2839 = vmatpush1.msra.mxu0 %v2708
        %2840 = vmatprep.subr.mxu0 0.0
        %2841 = vmatpush1.msra.mxu0 %v2709
        %2842 = vmatprep.subr.mxu0 0.0
        %2843 = vmatpush1.msra.mxu0 %v2710
        %2844 = vmatprep.subr.mxu0 0.0
        %2845 = vmatpush1.msra.mxu0 %v2711
        %2846 = vmatprep.subr.mxu0 0.0
        %2847 = vmatpush1.msra.mxu0 %v2712
        %2848 = vmatprep.subr.mxu0 0.0
        %2849 = vmatpush1.msra.mxu0 %v2713
        %2850 = vmatprep.subr.mxu0 0.0
        %2851 = vmatpush1.msra.mxu0 %v2714
        %2852 = vmatprep.subr.mxu0 0.0
        %2853 = vmatpush1.msra.mxu0 %v2715
        %2854 = vmatprep.subr.mxu0 0.0
        %2855 = vmatpush1.msra.mxu0 %v2716
        %2856 = vmatprep.subr.mxu0 0.0
        %2857 = vmatpush1.msra.mxu0 %v2717
        %2858 = vmatprep.subr.mxu0 0.0
        %2859 = vmatpush1.msra.mxu0 %v2718
        %2860 = vmatprep.subr.mxu0 0.0
        %2861 = vmatpush1.msra.mxu0 %v2719
        %2862 = vmatprep.subr.mxu0 0.0
        %2863 = vmatpush1.msra.mxu0 %v2720
        %2864 = vmatprep.subr.mxu0 0.0
        %2865 = vmatpush1.msra.mxu0 %v2721
        %2866 = vmatprep.subr.mxu0 0.0
        %2867 = vmatpush1.msra.mxu0 0.0
        %2868 = vmatprep.subr.mxu0 0.0
        %2869 = vmatpush1.msra.mxu0 0.0
        %2870 = vmatprep.subr.mxu0 0.0
        %2871 = vmatpush1.msra.mxu0 0.0
        %2872 = vmatprep.subr.mxu0 0.0
        %2873 = vmatpush1.msra.mxu0 0.0
        %2874 = vmatprep.subr.mxu0 0.0
        %2875 = vmatpush1.msra.mxu0 0.0
        %2876 = vmatprep.subr.mxu0 0.0
        %2877 = vmatpush1.msra.mxu0 0.0
        %2878 = vmatprep.subr.mxu0 0.0
        %2879 = vmatpush1.msra.mxu0 0.0
        %2880 = vmatprep.subr.mxu0 0.0
        %2881 = vmatpush1.msra.mxu0 0.0
        %2882 = vmatprep.subr.mxu0 0.0
        %2883 = vmatpush1.msra.mxu0 0.0
        %2884 = vmatprep.subr.mxu0 0.0
        %2885 = vmatpush1.msra.mxu0 0.0
        %2886 = vmatprep.subr.mxu0 0.0
        %2887 = vmatpush1.msra.mxu0 0.0
        %2888 = vmatprep.subr.mxu0 0.0
        %2889 = vmatpush1.msra.mxu0 0.0
        %2890 = vmatprep.subr.mxu0 0.0
        %2891 = vmatpush1.msra.mxu0 0.0
        %2892 = vmatprep.subr.mxu0 0.0
        %2893 = vmatpush1.msra.mxu0 0.0
        %2894 = vmatprep.subr.mxu0 0.0
        %2895 = vmatpush1.msra.mxu0 0.0
        %2896 = vmatprep.subr.mxu0 0.0
        %2897 = vmatpush1.msra.mxu0 0.0
        %2898 = vmatprep.mubr.f32.mxu0 0.0
        %2899 = vmatmul.mubr.f32.gmra.mrb[0].mxu0 %v2760
        %v2900 = vpop.f32.mrb[0].mxu0
        %v2901 = vadd.f32 %v2831, %v2900
        %v2902 = vpop.f32.mrb[0].mxu0
        %2903 = vdwg.mxu0
        %2904 = vmatprep.subr.mxu0 0.0
        %2905 = vmatpush1.msra.mxu0 %v2740
        %2906 = vmatprep.subr.mxu0 0.0
        %2907 = vmatpush1.msra.mxu0 %v2741
        %2908 = vmatprep.subr.mxu0 0.0
        %2909 = vmatpush1.msra.mxu0 %v2742
        %2910 = vmatprep.subr.mxu0 0.0
        %2911 = vmatpush1.msra.mxu0 %v2743
        %2912 = vmatprep.subr.mxu0 0.0
        %2913 = vmatpush1.msra.mxu0 %v2744
        %2914 = vmatprep.subr.mxu0 0.0
        %2915 = vmatpush1.msra.mxu0 %v2745
        %2916 = vmatprep.subr.mxu0 0.0
        %2917 = vmatpush1.msra.mxu0 %v2746
        %2918 = vmatprep.subr.mxu0 0.0
        %2919 = vmatpush1.msra.mxu0 %v2747
        %2920 = vmatprep.subr.mxu0 0.0
        %2921 = vmatpush1.msra.mxu0 %v2748
        %2922 = vmatprep.subr.mxu0 0.0
        %2923 = vmatpush1.msra.mxu0 %v2749
        %2924 = vmatprep.subr.mxu0 0.0
        %2925 = vmatpush1.msra.mxu0 %v2750
        %2926 = vmatprep.subr.mxu0 0.0
        %2927 = vmatpush1.msra.mxu0 %v2751
        %2928 = vmatprep.subr.mxu0 0.0
        %2929 = vmatpush1.msra.mxu0 %v2752
        %2930 = vmatprep.subr.mxu0 0.0
        %2931 = vmatpush1.msra.mxu0 %v2753
        %2932 = vmatprep.subr.mxu0 0.0
        %2933 = vmatpush1.msra.mxu0 %v2754
        %2934 = vmatprep.subr.mxu0 0.0
        %2935 = vmatpush1.msra.mxu0 %v2755
        %2936 = vmatprep.subr.mxu0 0.0
        %2937 = vmatpush1.msra.mxu0 0.0
        %2938 = vmatprep.subr.mxu0 0.0
        %2939 = vmatpush1.msra.mxu0 0.0
        %2940 = vmatprep.subr.mxu0 0.0
        %2941 = vmatpush1.msra.mxu0 0.0
        %2942 = vmatprep.subr.mxu0 0.0
        %2943 = vmatpush1.msra.mxu0 0.0
        %2944 = vmatprep.subr.mxu0 0.0
        %2945 = vmatpush1.msra.mxu0 0.0
        %2946 = vmatprep.subr.mxu0 0.0
        %2947 = vmatpush1.msra.mxu0 0.0
        %2948 = vmatprep.subr.mxu0 0.0
        %2949 = vmatpush1.msra.mxu0 0.0
        %2950 = vmatprep.subr.mxu0 0.0
        %2951 = vmatpush1.msra.mxu0 0.0
        %2952 = vmatprep.subr.mxu0 0.0
        %2953 = vmatpush1.msra.mxu0 0.0
        %2954 = vmatprep.subr.mxu0 0.0
        %2955 = vmatpush1.msra.mxu0 0.0
        %2956 = vmatprep.subr.mxu0 0.0
        %2957 = vmatpush1.msra.mxu0 0.0
        %2958 = vmatprep.subr.mxu0 0.0
        %2959 = vmatpush1.msra.mxu0 0.0
        %2960 = vmatprep.subr.mxu0 0.0
        %2961 = vmatpush1.msra.mxu0 0.0
        %2962 = vmatprep.subr.mxu0 0.0
        %2963 = vmatpush1.msra.mxu0 0.0
        %2964 = vmatprep.subr.mxu0 0.0
        %2965 = vmatpush1.msra.mxu0 0.0
        %2966 = vmatprep.subr.mxu0 0.0
        %2967 = vmatpush1.msra.mxu0 0.0
        %2968 = vmatprep.mubr.f32.mxu0 0.0
        %2969 = vmatmul.mubr.f32.gmra.mrb[0].mxu0 %v2763
        %v2970 = vpop.f32.mrb[0].mxu0
        %v2971 = vadd.f32 0.0, %v2970
        %v2972 = vpop.f32.mrb[0].mxu0
        %2973 = vdwg.mxu0
        %v2974 = vadd.f32 %v2901, %v2971
        %v2975 = vlaneseq
        %v2976 = vshrl.u32 %v2975, 7
        %v2977 = vsub.s32 0, %v2976
        %v2978 = vrot.slane %v2756, %v2977
        %v2979 = vadd.f32 %v2974, %v2978
        %s2980 = scalar_lea.vmem [#allocation9], 8
        %v2981 = vld [vmem:[%s2980] sm:$0xf]
        %s2982 = scalar_lea.vmem %s6, 8
        %v2983 = vld [vmem:[%s2982] sm:$0xf]
        %s2984 = scalar_lea.vmem [#allocation10], 8
        %v2985 = vld [vmem:[%s2984] sm:$0xf]
        %s2986 = scalar_lea.vmem [#allocation12], 2
        %v2987 = vld [vmem:[%s2986] sm:$0x1]
        %v2988 = vrot.slane %v2979, 4
        %v2989 = vadd.f32 %v2979, %v2988
        %v2990 = vrot.slane %v2989, 2
        %v2991 = vadd.f32 %v2989, %v2990
        %v2992 = vrot.slane %v2991, 1
        %v2993 = vadd.f32 %v2991, %v2992
        %v2994 = vmul.f32 %v2993, %v1387
        %2996 = vrot.lane.b32.xlu0 %v2994, 112
        %v2997 = vpop.permute.xlu0 %2996
        %v2999 = vadd.f32 %v2994, %v2997
        %3000 = vrot.lane.b32.xlu0 %v2994, 96
        %v3001 = vpop.permute.xlu0 %3000
        %v3003 = vadd.f32 %v2999, %v3001
        %3004 = vrot.lane.b32.xlu0 %v2994, 80
        %v3005 = vpop.permute.xlu0 %3004
        %v3007 = vadd.f32 %v3003, %v3005
        %3008 = vrot.lane.b32.xlu0 %v2994, 64
        %v3009 = vpop.permute.xlu0 %3008
        %v3011 = vadd.f32 %v3007, %v3009
        %3012 = vrot.lane.b32.xlu0 %v2994, 48
        %v3013 = vpop.permute.xlu0 %3012
        %v3015 = vadd.f32 %v3011, %v3013
        %3016 = vrot.lane.b32.xlu0 %v2994, 32
        %v3017 = vpop.permute.xlu0 %3016
        %v3019 = vadd.f32 %v3015, %v3017
        %3020 = vrot.lane.b32.xlu0 %v2994, 16
        %v3021 = vpop.permute.xlu0 %3020
        %v3023 = vadd.f32 %v3019, %v3021
        %v3024 = vmul.f32 %v3023, 0.125
        %v3025 = vlaneseq
        %v3026 = vshrl.u32 %v3025, 7
        %v3027 = vsub.s32 0, %v3026
        %v3028 = vrot.slane %v3024, %v3027
        %v3029 = vmul.f32 %v2981, %v3028
        %v3030 = vsel %vm1424, %v3029, 0.0
        %3031 = vadd.xlane.f32.xlu0 %v3030
        %v3032 = vpop.xlane.xlu0 %3031
        %v3033 = vadd.f32 %v3032, %v2983
        %v3034 = vmax.f32 %v3033, 0.0
        %3036 = vset.pattern.permute.xlu0 0
        %3037 = vperm.xlu0 %3036, %v3034
        %v3038 = vpop.permute.xlu0 %3037
        %v3040 = vmul.f32 %v3038, %v2985
        %v3041 = vsel %vm1424, %v3040, 0.0
        %v3042 = vrot.slane %v3041, 4
        %v3043 = vadd.f32 %v3041, %v3042
        %v3044 = vrot.slane %v3043, 2
        %v3045 = vadd.f32 %v3043, %v3044
        %v3046 = vrot.slane %v3045, 1
        %v3047 = vadd.f32 %v3045, %v3046
        %v3048 = vadd.f32 %v3047, %v2987
        %v3049 = vxor.u32 %v3048, 2147483648
        %v3050 = vmul.f32 %v3049, 1.442695
        %v3051 = vpow.pop %v3050
        %v3052 = vadd.f32 %v3051, 1.0
        %v3053 = vrcp.pop %v3052
        %v3054 = vmul.f32 1.0, %v3053
        %3056 = vrot.lane.b32.xlu0 %v3054, 16
        %v3057 = vpop.permute.xlu0 %3056
        %3059 = vrot.lane.b32.xlu0 %v3054, 32
        %v3060 = vpop.permute.xlu0 %3059
        %3062 = vrot.lane.b32.xlu0 %v3054, 48
        %v3063 = vpop.permute.xlu0 %3062
        %3065 = vrot.lane.b32.xlu0 %v3054, 64
        %v3066 = vpop.permute.xlu0 %3065
        %3068 = vrot.lane.b32.xlu0 %v3054, 80
        %v3069 = vpop.permute.xlu0 %3068
        %3071 = vrot.lane.b32.xlu0 %v3054, 96
        %v3072 = vpop.permute.xlu0 %3071
        %3074 = vrot.lane.b32.xlu0 %v3054, 112
        %v3075 = vpop.permute.xlu0 %3074
        %v3077 = vsel %vm1472, %v3054, %v3057
        %v3078 = vsel %vm1474, %v3077, %v3060
        %v3079 = vsel %vm1476, %v3078, %v3063
        %v3080 = vsel %vm1478, %v3079, %v3066
        %v3081 = vsel %vm1480, %v3080, %v3069
        %v3082 = vsel %vm1482, %v3081, %v3072
        %v3083 = vsel %vm1484, %v3082, %v3075
        %v3084 = vlaneseq
        %v3085 = vshrl.u32 %v3084, 7
        %v3086 = vsub.s32 0, %v3085
        %v3087 = vrot.slane %v3083, %v3086
        %v3088 = vmul.f32 %v2979, %v3087
        %v3089 = vadd.f32 %v2428, %v3088
        %s3090 = scalar_lea.vmem [#allocation6], 2688
        %v3091 = vld [vmem:[%s3090] sm:$0xff]
        %v3092 = vld [vmem:[%s3090 + $0x8] sm:$0xff]
        %v3093 = vld [vmem:[%s3090 + $0x10] sm:$0xff]
        %v3094 = vld [vmem:[%s3090 + $0x18] sm:$0xff]
        %v3095 = vld [vmem:[%s3090 + $0x20] sm:$0xff]
        %v3096 = vld [vmem:[%s3090 + $0x28] sm:$0xff]
        %v3097 = vld [vmem:[%s3090 + $0x30] sm:$0xff]
        %v3098 = vld [vmem:[%s3090 + $0x38] sm:$0xff]
        %v3099 = vld [vmem:[%s3090 + $0x40] sm:$0xff]
        %v3100 = vld [vmem:[%s3090 + $0x48] sm:$0xff]
        %v3101 = vld [vmem:[%s3090 + $0x50] sm:$0xff]
        %v3102 = vld [vmem:[%s3090 + $0x58] sm:$0xff]
        %v3103 = vld [vmem:[%s3090 + $0x60] sm:$0xff]
        %v3104 = vld [vmem:[%s3090 + $0x68] sm:$0xff]
        %v3105 = vld [vmem:[%s3090 + $0x70] sm:$0xff]
        %v3106 = vld [vmem:[%s3090 + $0x78] sm:$0xff]
        %s3107 = scalar_lea.vmem [#allocation6], 2816
        %v3108 = vld [vmem:[%s3107] sm:$0xff]
        %v3109 = vld [vmem:[%s3107 + $0x8] sm:$0xff]
        %v3110 = vld [vmem:[%s3107 + $0x10] sm:$0xff]
        %v3111 = vld [vmem:[%s3107 + $0x18] sm:$0xff]
        %v3112 = vld [vmem:[%s3107 + $0x20] sm:$0xff]
        %v3113 = vld [vmem:[%s3107 + $0x28] sm:$0xff]
        %v3114 = vld [vmem:[%s3107 + $0x30] sm:$0xff]
        %v3115 = vld [vmem:[%s3107 + $0x38] sm:$0xff]
        %v3116 = vld [vmem:[%s3107 + $0x40] sm:$0xff]
        %v3117 = vld [vmem:[%s3107 + $0x48] sm:$0xff]
        %v3118 = vld [vmem:[%s3107 + $0x50] sm:$0xff]
        %v3119 = vld [vmem:[%s3107 + $0x58] sm:$0xff]
        %v3120 = vld [vmem:[%s3107 + $0x60] sm:$0xff]
        %v3121 = vld [vmem:[%s3107 + $0x68] sm:$0xff]
        %v3122 = vld [vmem:[%s3107 + $0x70] sm:$0xff]
        %v3123 = vld [vmem:[%s3107 + $0x78] sm:$0xff]
        %s3124 = scalar_lea.vmem [#allocation6], 2944
        %v3125 = vld [vmem:[%s3124] sm:$0xff]
        %v3126 = vld [vmem:[%s3124 + $0x8] sm:$0xff]
        %v3127 = vld [vmem:[%s3124 + $0x10] sm:$0xff]
        %v3128 = vld [vmem:[%s3124 + $0x18] sm:$0xff]
        %v3129 = vld [vmem:[%s3124 + $0x20] sm:$0xff]
        %v3130 = vld [vmem:[%s3124 + $0x28] sm:$0xff]
        %v3131 = vld [vmem:[%s3124 + $0x30] sm:$0xff]
        %v3132 = vld [vmem:[%s3124 + $0x38] sm:$0xff]
        %v3133 = vld [vmem:[%s3124 + $0x40] sm:$0xff]
        %v3134 = vld [vmem:[%s3124 + $0x48] sm:$0xff]
        %v3135 = vld [vmem:[%s3124 + $0x50] sm:$0xff]
        %v3136 = vld [vmem:[%s3124 + $0x58] sm:$0xff]
        %v3137 = vld [vmem:[%s3124 + $0x60] sm:$0xff]
        %v3138 = vld [vmem:[%s3124 + $0x68] sm:$0xff]
        %v3139 = vld [vmem:[%s3124 + $0x70] sm:$0xff]
        %v3140 = vld [vmem:[%s3124 + $0x78] sm:$0xff]
        %v3141 = vld [vmem:[#allocation7 + $0x7] sm:$0x1]
        %v3143 = vrot.slane %v3089, 7
        %v3145 = vsel %vm594, 0.0, %v3143
        %v3146 = vrot.slane %v3089, 1
        %v3148 = vsel %vm598, %v3146, 0.0
        %3149 = vmatprep.subr.mxu0 0.0
        %3150 = vmatpush1.msra.mxu0 %v3108
        %3151 = vmatprep.subr.mxu0 0.0
        %3152 = vmatpush1.msra.mxu0 %v3109
        %3153 = vmatprep.subr.mxu0 0.0
        %3154 = vmatpush1.msra.mxu0 %v3110
        %3155 = vmatprep.subr.mxu0 0.0
        %3156 = vmatpush1.msra.mxu0 %v3111
        %3157 = vmatprep.subr.mxu0 0.0
        %3158 = vmatpush1.msra.mxu0 %v3112
        %3159 = vmatprep.subr.mxu0 0.0
        %3160 = vmatpush1.msra.mxu0 %v3113
        %3161 = vmatprep.subr.mxu0 0.0
        %3162 = vmatpush1.msra.mxu0 %v3114
        %3163 = vmatprep.subr.mxu0 0.0
        %3164 = vmatpush1.msra.mxu0 %v3115
        %3165 = vmatprep.subr.mxu0 0.0
        %3166 = vmatpush1.msra.mxu0 %v3116
        %3167 = vmatprep.subr.mxu0 0.0
        %3168 = vmatpush1.msra.mxu0 %v3117
        %3169 = vmatprep.subr.mxu0 0.0
        %3170 = vmatpush1.msra.mxu0 %v3118
        %3171 = vmatprep.subr.mxu0 0.0
        %3172 = vmatpush1.msra.mxu0 %v3119
        %3173 = vmatprep.subr.mxu0 0.0
        %3174 = vmatpush1.msra.mxu0 %v3120
        %3175 = vmatprep.subr.mxu0 0.0
        %3176 = vmatpush1.msra.mxu0 %v3121
        %3177 = vmatprep.subr.mxu0 0.0
        %3178 = vmatpush1.msra.mxu0 %v3122
        %3179 = vmatprep.subr.mxu0 0.0
        %3180 = vmatpush1.msra.mxu0 %v3123
        %3181 = vmatprep.subr.mxu0 0.0
        %3182 = vmatpush1.msra.mxu0 0.0
        %3183 = vmatprep.subr.mxu0 0.0
        %3184 = vmatpush1.msra.mxu0 0.0
        %3185 = vmatprep.subr.mxu0 0.0
        %3186 = vmatpush1.msra.mxu0 0.0
        %3187 = vmatprep.subr.mxu0 0.0
        %3188 = vmatpush1.msra.mxu0 0.0
        %3189 = vmatprep.subr.mxu0 0.0
        %3190 = vmatpush1.msra.mxu0 0.0
        %3191 = vmatprep.subr.mxu0 0.0
        %3192 = vmatpush1.msra.mxu0 0.0
        %3193 = vmatprep.subr.mxu0 0.0
        %3194 = vmatpush1.msra.mxu0 0.0
        %3195 = vmatprep.subr.mxu0 0.0
        %3196 = vmatpush1.msra.mxu0 0.0
        %3197 = vmatprep.subr.mxu0 0.0
        %3198 = vmatpush1.msra.mxu0 0.0
        %3199 = vmatprep.subr.mxu0 0.0
        %3200 = vmatpush1.msra.mxu0 0.0
        %3201 = vmatprep.subr.mxu0 0.0
        %3202 = vmatpush1.msra.mxu0 0.0
        %3203 = vmatprep.subr.mxu0 0.0
        %3204 = vmatpush1.msra.mxu0 0.0
        %3205 = vmatprep.subr.mxu0 0.0
        %3206 = vmatpush1.msra.mxu0 0.0
        %3207 = vmatprep.subr.mxu0 0.0
        %3208 = vmatpush1.msra.mxu0 0.0
        %3209 = vmatprep.subr.mxu0 0.0
        %3210 = vmatpush1.msra.mxu0 0.0
        %3211 = vmatprep.subr.mxu0 0.0
        %3212 = vmatpush1.msra.mxu0 0.0
        %3213 = vmatprep.mubr.f32.mxu0 0.0
        %3214 = vmatmul.mubr.f32.gmra.mrb[0].mxu0 %v3089
        %v3215 = vpop.f32.mrb[0].mxu0
        %v3216 = vadd.f32 0.0, %v3215
        %v3217 = vpop.f32.mrb[0].mxu0
        %3218 = vdwg.mxu0
        %3219 = vmatprep.subr.mxu0 0.0
        %3220 = vmatpush1.msra.mxu0 %v3091
        %3221 = vmatprep.subr.mxu0 0.0
        %3222 = vmatpush1.msra.mxu0 %v3092
        %3223 = vmatprep.subr.mxu0 0.0
        %3224 = vmatpush1.msra.mxu0 %v3093
        %3225 = vmatprep.subr.mxu0 0.0
        %3226 = vmatpush1.msra.mxu0 %v3094
        %3227 = vmatprep.subr.mxu0 0.0
        %3228 = vmatpush1.msra.mxu0 %v3095
        %3229 = vmatprep.subr.mxu0 0.0
        %3230 = vmatpush1.msra.mxu0 %v3096
        %3231 = vmatprep.subr.mxu0 0.0
        %3232 = vmatpush1.msra.mxu0 %v3097
        %3233 = vmatprep.subr.mxu0 0.0
        %3234 = vmatpush1.msra.mxu0 %v3098
        %3235 = vmatprep.subr.mxu0 0.0
        %3236 = vmatpush1.msra.mxu0 %v3099
        %3237 = vmatprep.subr.mxu0 0.0
        %3238 = vmatpush1.msra.mxu0 %v3100
        %3239 = vmatprep.subr.mxu0 0.0
        %3240 = vmatpush1.msra.mxu0 %v3101
        %3241 = vmatprep.subr.mxu0 0.0
        %3242 = vmatpush1.msra.mxu0 %v3102
        %3243 = vmatprep.subr.mxu0 0.0
        %3244 = vmatpush1.msra.mxu0 %v3103
        %3245 = vmatprep.subr.mxu0 0.0
        %3246 = vmatpush1.msra.mxu0 %v3104
        %3247 = vmatprep.subr.mxu0 0.0
        %3248 = vmatpush1.msra.mxu0 %v3105
        %3249 = vmatprep.subr.mxu0 0.0
        %3250 = vmatpush1.msra.mxu0 %v3106
        %3251 = vmatprep.subr.mxu0 0.0
        %3252 = vmatpush1.msra.mxu0 0.0
        %3253 = vmatprep.subr.mxu0 0.0
        %3254 = vmatpush1.msra.mxu0 0.0
        %3255 = vmatprep.subr.mxu0 0.0
        %3256 = vmatpush1.msra.mxu0 0.0
        %3257 = vmatprep.subr.mxu0 0.0
        %3258 = vmatpush1.msra.mxu0 0.0
        %3259 = vmatprep.subr.mxu0 0.0
        %3260 = vmatpush1.msra.mxu0 0.0
        %3261 = vmatprep.subr.mxu0 0.0
        %3262 = vmatpush1.msra.mxu0 0.0
        %3263 = vmatprep.subr.mxu0 0.0
        %3264 = vmatpush1.msra.mxu0 0.0
        %3265 = vmatprep.subr.mxu0 0.0
        %3266 = vmatpush1.msra.mxu0 0.0
        %3267 = vmatprep.subr.mxu0 0.0
        %3268 = vmatpush1.msra.mxu0 0.0
        %3269 = vmatprep.subr.mxu0 0.0
        %3270 = vmatpush1.msra.mxu0 0.0
        %3271 = vmatprep.subr.mxu0 0.0
        %3272 = vmatpush1.msra.mxu0 0.0
        %3273 = vmatprep.subr.mxu0 0.0
        %3274 = vmatpush1.msra.mxu0 0.0
        %3275 = vmatprep.subr.mxu0 0.0
        %3276 = vmatpush1.msra.mxu0 0.0
        %3277 = vmatprep.subr.mxu0 0.0
        %3278 = vmatpush1.msra.mxu0 0.0
        %3279 = vmatprep.subr.mxu0 0.0
        %3280 = vmatpush1.msra.mxu0 0.0
        %3281 = vmatprep.subr.mxu0 0.0
        %3282 = vmatpush1.msra.mxu0 0.0
        %3283 = vmatprep.mubr.f32.mxu0 0.0
        %3284 = vmatmul.mubr.f32.gmra.mrb[0].mxu0 %v3145
        %v3285 = vpop.f32.mrb[0].mxu0
        %v3286 = vadd.f32 %v3216, %v3285
        %v3287 = vpop.f32.mrb[0].mxu0
        %3288 = vdwg.mxu0
        %3289 = vmatprep.subr.mxu0 0.0
        %3290 = vmatpush1.msra.mxu0 %v3125
        %3291 = vmatprep.subr.mxu0 0.0
        %3292 = vmatpush1.msra.mxu0 %v3126
        %3293 = vmatprep.subr.mxu0 0.0
        %3294 = vmatpush1.msra.mxu0 %v3127
        %3295 = vmatprep.subr.mxu0 0.0
        %3296 = vmatpush1.msra.mxu0 %v3128
        %3297 = vmatprep.subr.mxu0 0.0
        %3298 = vmatpush1.msra.mxu0 %v3129
        %3299 = vmatprep.subr.mxu0 0.0
        %3300 = vmatpush1.msra.mxu0 %v3130
        %3301 = vmatprep.subr.mxu0 0.0
        %3302 = vmatpush1.msra.mxu0 %v3131
        %3303 = vmatprep.subr.mxu0 0.0
        %3304 = vmatpush1.msra.mxu0 %v3132
        %3305 = vmatprep.subr.mxu0 0.0
        %3306 = vmatpush1.msra.mxu0 %v3133
        %3307 = vmatprep.subr.mxu0 0.0
        %3308 = vmatpush1.msra.mxu0 %v3134
        %3309 = vmatprep.subr.mxu0 0.0
        %3310 = vmatpush1.msra.mxu0 %v3135
        %3311 = vmatprep.subr.mxu0 0.0
        %3312 = vmatpush1.msra.mxu0 %v3136
        %3313 = vmatprep.subr.mxu0 0.0
        %3314 = vmatpush1.msra.mxu0 %v3137
        %3315 = vmatprep.subr.mxu0 0.0
        %3316 = vmatpush1.msra.mxu0 %v3138
        %3317 = vmatprep.subr.mxu0 0.0
        %3318 = vmatpush1.msra.mxu0 %v3139
        %3319 = vmatprep.subr.mxu0 0.0
        %3320 = vmatpush1.msra.mxu0 %v3140
        %3321 = vmatprep.subr.mxu0 0.0
        %3322 = vmatpush1.msra.mxu0 0.0
        %3323 = vmatprep.subr.mxu0 0.0
        %3324 = vmatpush1.msra.mxu0 0.0
        %3325 = vmatprep.subr.mxu0 0.0
        %3326 = vmatpush1.msra.mxu0 0.0
        %3327 = vmatprep.subr.mxu0 0.0
        %3328 = vmatpush1.msra.mxu0 0.0
        %3329 = vmatprep.subr.mxu0 0.0
        %3330 = vmatpush1.msra.mxu0 0.0
        %3331 = vmatprep.subr.mxu0 0.0
        %3332 = vmatpush1.msra.mxu0 0.0
        %3333 = vmatprep.subr.mxu0 0.0
        %3334 = vmatpush1.msra.mxu0 0.0
        %3335 = vmatprep.subr.mxu0 0.0
        %3336 = vmatpush1.msra.mxu0 0.0
        %3337 = vmatprep.subr.mxu0 0.0
        %3338 = vmatpush1.msra.mxu0 0.0
        %3339 = vmatprep.subr.mxu0 0.0
        %3340 = vmatpush1.msra.mxu0 0.0
        %3341 = vmatprep.subr.mxu0 0.0
        %3342 = vmatpush1.msra.mxu0 0.0
        %3343 = vmatprep.subr.mxu0 0.0
        %3344 = vmatpush1.msra.mxu0 0.0
        %3345 = vmatprep.subr.mxu0 0.0
        %3346 = vmatpush1.msra.mxu0 0.0
        %3347 = vmatprep.subr.mxu0 0.0
        %3348 = vmatpush1.msra.mxu0 0.0
        %3349 = vmatprep.subr.mxu0 0.0
        %3350 = vmatpush1.msra.mxu0 0.0
        %3351 = vmatprep.subr.mxu0 0.0
        %3352 = vmatpush1.msra.mxu0 0.0
        %3353 = vmatprep.mubr.f32.mxu0 0.0
        %3354 = vmatmul.mubr.f32.gmra.mrb[0].mxu0 %v3148
        %v3355 = vpop.f32.mrb[0].mxu0
        %v3356 = vadd.f32 0.0, %v3355
        %v3357 = vpop.f32.mrb[0].mxu0
        %3358 = vdwg.mxu0
        %v3359 = vadd.f32 %v3286, %v3356
        %v3360 = vlaneseq
        %v3361 = vshrl.u32 %v3360, 7
        %v3362 = vsub.s32 0, %v3361
        %v3363 = vrot.slane %v3141, %v3362
        %v3364 = vadd.f32 %v3359, %v3363
        %v3365 = vmax.f32 %v3364, 0.0
        %s3366 = scalar_lea.vmem [#allocation6], 3072
        %v3367 = vld [vmem:[%s3366] sm:$0xff]
        %v3368 = vld [vmem:[%s3366 + $0x8] sm:$0xff]
        %v3369 = vld [vmem:[%s3366 + $0x10] sm:$0xff]
        %v3370 = vld [vmem:[%s3366 + $0x18] sm:$0xff]
        %v3371 = vld [vmem:[%s3366 + $0x20] sm:$0xff]
        %v3372 = vld [vmem:[%s3366 + $0x28] sm:$0xff]
        %v3373 = vld [vmem:[%s3366 + $0x30] sm:$0xff]
        %v3374 = vld [vmem:[%s3366 + $0x38] sm:$0xff]
        %v3375 = vld [vmem:[%s3366 + $0x40] sm:$0xff]
        %v3376 = vld [vmem:[%s3366 + $0x48] sm:$0xff]
        %v3377 = vld [vmem:[%s3366 + $0x50] sm:$0xff]
        %v3378 = vld [vmem:[%s3366 + $0x58] sm:$0xff]
        %v3379 = vld [vmem:[%s3366 + $0x60] sm:$0xff]
        %v3380 = vld [vmem:[%s3366 + $0x68] sm:$0xff]
        %v3381 = vld [vmem:[%s3366 + $0x70] sm:$0xff]
        %v3382 = vld [vmem:[%s3366 + $0x78] sm:$0xff]
        %s3383 = scalar_lea.vmem [#allocation6], 3200
        %v3384 = vld [vmem:[%s3383] sm:$0xff]
        %v3385 = vld [vmem:[%s3383 + $0x8] sm:$0xff]
        %v3386 = vld [vmem:[%s3383 + $0x10] sm:$0xff]
        %v3387 = vld [vmem:[%s3383 + $0x18] sm:$0xff]
        %v3388 = vld [vmem:[%s3383 + $0x20] sm:$0xff]
        %v3389 = vld [vmem:[%s3383 + $0x28] sm:$0xff]
        %v3390 = vld [vmem:[%s3383 + $0x30] sm:$0xff]
        %v3391 = vld [vmem:[%s3383 + $0x38] sm:$0xff]
        %v3392 = vld [vmem:[%s3383 + $0x40] sm:$0xff]
        %v3393 = vld [vmem:[%s3383 + $0x48] sm:$0xff]
        %v3394 = vld [vmem:[%s3383 + $0x50] sm:$0xff]
        %v3395 = vld [vmem:[%s3383 + $0x58] sm:$0xff]
        %v3396 = vld [vmem:[%s3383 + $0x60] sm:$0xff]
        %v3397 = vld [vmem:[%s3383 + $0x68] sm:$0xff]
        %v3398 = vld [vmem:[%s3383 + $0x70] sm:$0xff]
        %v3399 = vld [vmem:[%s3383 + $0x78] sm:$0xff]
        %s3400 = scalar_lea.vmem [#allocation6], 3328
        %v3401 = vld [vmem:[%s3400] sm:$0xff]
        %v3402 = vld [vmem:[%s3400 + $0x8] sm:$0xff]
        %v3403 = vld [vmem:[%s3400 + $0x10] sm:$0xff]
        %v3404 = vld [vmem:[%s3400 + $0x18] sm:$0xff]
        %v3405 = vld [vmem:[%s3400 + $0x20] sm:$0xff]
        %v3406 = vld [vmem:[%s3400 + $0x28] sm:$0xff]
        %v3407 = vld [vmem:[%s3400 + $0x30] sm:$0xff]
        %v3408 = vld [vmem:[%s3400 + $0x38] sm:$0xff]
        %v3409 = vld [vmem:[%s3400 + $0x40] sm:$0xff]
        %v3410 = vld [vmem:[%s3400 + $0x48] sm:$0xff]
        %v3411 = vld [vmem:[%s3400 + $0x50] sm:$0xff]
        %v3412 = vld [vmem:[%s3400 + $0x58] sm:$0xff]
        %v3413 = vld [vmem:[%s3400 + $0x60] sm:$0xff]
        %v3414 = vld [vmem:[%s3400 + $0x68] sm:$0xff]
        %v3415 = vld [vmem:[%s3400 + $0x70] sm:$0xff]
        %v3416 = vld [vmem:[%s3400 + $0x78] sm:$0xff]
        %v3417 = vld [vmem:[#allocation7 + $0x8] sm:$0x1]
        %v3419 = vrot.slane %v3365, 7
        %v3421 = vsel %vm594, 0.0, %v3419
        %v3422 = vrot.slane %v3365, 1
        %v3424 = vsel %vm598, %v3422, 0.0
        %3425 = vmatprep.subr.mxu0 0.0
        %3426 = vmatpush1.msra.mxu0 %v3384
        %3427 = vmatprep.subr.mxu0 0.0
        %3428 = vmatpush1.msra.mxu0 %v3385
        %3429 = vmatprep.subr.mxu0 0.0
        %3430 = vmatpush1.msra.mxu0 %v3386
        %3431 = vmatprep.subr.mxu0 0.0
        %3432 = vmatpush1.msra.mxu0 %v3387
        %3433 = vmatprep.subr.mxu0 0.0
        %3434 = vmatpush1.msra.mxu0 %v3388
        %3435 = vmatprep.subr.mxu0 0.0
        %3436 = vmatpush1.msra.mxu0 %v3389
        %3437 = vmatprep.subr.mxu0 0.0
        %3438 = vmatpush1.msra.mxu0 %v3390
        %3439 = vmatprep.subr.mxu0 0.0
        %3440 = vmatpush1.msra.mxu0 %v3391
        %3441 = vmatprep.subr.mxu0 0.0
        %3442 = vmatpush1.msra.mxu0 %v3392
        %3443 = vmatprep.subr.mxu0 0.0
        %3444 = vmatpush1.msra.mxu0 %v3393
        %3445 = vmatprep.subr.mxu0 0.0
        %3446 = vmatpush1.msra.mxu0 %v3394
        %3447 = vmatprep.subr.mxu0 0.0
        %3448 = vmatpush1.msra.mxu0 %v3395
        %3449 = vmatprep.subr.mxu0 0.0
        %3450 = vmatpush1.msra.mxu0 %v3396
        %3451 = vmatprep.subr.mxu0 0.0
        %3452 = vmatpush1.msra.mxu0 %v3397
        %3453 = vmatprep.subr.mxu0 0.0
        %3454 = vmatpush1.msra.mxu0 %v3398
        %3455 = vmatprep.subr.mxu0 0.0
        %3456 = vmatpush1.msra.mxu0 %v3399
        %3457 = vmatprep.subr.mxu0 0.0
        %3458 = vmatpush1.msra.mxu0 0.0
        %3459 = vmatprep.subr.mxu0 0.0
        %3460 = vmatpush1.msra.mxu0 0.0
        %3461 = vmatprep.subr.mxu0 0.0
        %3462 = vmatpush1.msra.mxu0 0.0
        %3463 = vmatprep.subr.mxu0 0.0
        %3464 = vmatpush1.msra.mxu0 0.0
        %3465 = vmatprep.subr.mxu0 0.0
        %3466 = vmatpush1.msra.mxu0 0.0
        %3467 = vmatprep.subr.mxu0 0.0
        %3468 = vmatpush1.msra.mxu0 0.0
        %3469 = vmatprep.subr.mxu0 0.0
        %3470 = vmatpush1.msra.mxu0 0.0
        %3471 = vmatprep.subr.mxu0 0.0
        %3472 = vmatpush1.msra.mxu0 0.0
        %3473 = vmatprep.subr.mxu0 0.0
        %3474 = vmatpush1.msra.mxu0 0.0
        %3475 = vmatprep.subr.mxu0 0.0
        %3476 = vmatpush1.msra.mxu0 0.0
        %3477 = vmatprep.subr.mxu0 0.0
        %3478 = vmatpush1.msra.mxu0 0.0
        %3479 = vmatprep.subr.mxu0 0.0
        %3480 = vmatpush1.msra.mxu0 0.0
        %3481 = vmatprep.subr.mxu0 0.0
        %3482 = vmatpush1.msra.mxu0 0.0
        %3483 = vmatprep.subr.mxu0 0.0
        %3484 = vmatpush1.msra.mxu0 0.0
        %3485 = vmatprep.subr.mxu0 0.0
        %3486 = vmatpush1.msra.mxu0 0.0
        %3487 = vmatprep.subr.mxu0 0.0
        %3488 = vmatpush1.msra.mxu0 0.0
        %3489 = vmatprep.mubr.f32.mxu0 0.0
        %3490 = vmatmul.mubr.f32.gmra.mrb[0].mxu0 %v3365
        %v3491 = vpop.f32.mrb[0].mxu0
        %v3492 = vadd.f32 0.0, %v3491
        %v3493 = vpop.f32.mrb[0].mxu0
        %3494 = vdwg.mxu0
        %3495 = vmatprep.subr.mxu0 0.0
        %3496 = vmatpush1.msra.mxu0 %v3367
        %3497 = vmatprep.subr.mxu0 0.0
        %3498 = vmatpush1.msra.mxu0 %v3368
        %3499 = vmatprep.subr.mxu0 0.0
        %3500 = vmatpush1.msra.mxu0 %v3369
        %3501 = vmatprep.subr.mxu0 0.0
        %3502 = vmatpush1.msra.mxu0 %v3370
        %3503 = vmatprep.subr.mxu0 0.0
        %3504 = vmatpush1.msra.mxu0 %v3371
        %3505 = vmatprep.subr.mxu0 0.0
        %3506 = vmatpush1.msra.mxu0 %v3372
        %3507 = vmatprep.subr.mxu0 0.0
        %3508 = vmatpush1.msra.mxu0 %v3373
        %3509 = vmatprep.subr.mxu0 0.0
        %3510 = vmatpush1.msra.mxu0 %v3374
        %3511 = vmatprep.subr.mxu0 0.0
        %3512 = vmatpush1.msra.mxu0 %v3375
        %3513 = vmatprep.subr.mxu0 0.0
        %3514 = vmatpush1.msra.mxu0 %v3376
        %3515 = vmatprep.subr.mxu0 0.0
        %3516 = vmatpush1.msra.mxu0 %v3377
        %3517 = vmatprep.subr.mxu0 0.0
        %3518 = vmatpush1.msra.mxu0 %v3378
        %3519 = vmatprep.subr.mxu0 0.0
        %3520 = vmatpush1.msra.mxu0 %v3379
        %3521 = vmatprep.subr.mxu0 0.0
        %3522 = vmatpush1.msra.mxu0 %v3380
        %3523 = vmatprep.subr.mxu0 0.0
        %3524 = vmatpush1.msra.mxu0 %v3381
        %3525 = vmatprep.subr.mxu0 0.0
        %3526 = vmatpush1.msra.mxu0 %v3382
        %3527 = vmatprep.subr.mxu0 0.0
        %3528 = vmatpush1.msra.mxu0 0.0
        %3529 = vmatprep.subr.mxu0 0.0
        %3530 = vmatpush1.msra.mxu0 0.0
        %3531 = vmatprep.subr.mxu0 0.0
        %3532 = vmatpush1.msra.mxu0 0.0
        %3533 = vmatprep.subr.mxu0 0.0
        %3534 = vmatpush1.msra.mxu0 0.0
        %3535 = vmatprep.subr.mxu0 0.0
        %3536 = vmatpush1.msra.mxu0 0.0
        %3537 = vmatprep.subr.mxu0 0.0
        %3538 = vmatpush1.msra.mxu0 0.0
        %3539 = vmatprep.subr.mxu0 0.0
        %3540 = vmatpush1.msra.mxu0 0.0
        %3541 = vmatprep.subr.mxu0 0.0
        %3542 = vmatpush1.msra.mxu0 0.0
        %3543 = vmatprep.subr.mxu0 0.0
        %3544 = vmatpush1.msra.mxu0 0.0
        %3545 = vmatprep.subr.mxu0 0.0
        %3546 = vmatpush1.msra.mxu0 0.0
        %3547 = vmatprep.subr.mxu0 0.0
        %3548 = vmatpush1.msra.mxu0 0.0
        %3549 = vmatprep.subr.mxu0 0.0
        %3550 = vmatpush1.msra.mxu0 0.0
        %3551 = vmatprep.subr.mxu0 0.0
        %3552 = vmatpush1.msra.mxu0 0.0
        %3553 = vmatprep.subr.mxu0 0.0
        %3554 = vmatpush1.msra.mxu0 0.0
        %3555 = vmatprep.subr.mxu0 0.0
        %3556 = vmatpush1.msra.mxu0 0.0
        %3557 = vmatprep.subr.mxu0 0.0
        %3558 = vmatpush1.msra.mxu0 0.0
        %3559 = vmatprep.mubr.f32.mxu0 0.0
        %3560 = vmatmul.mubr.f32.gmra.mrb[0].mxu0 %v3421
        %v3561 = vpop.f32.mrb[0].mxu0
        %v3562 = vadd.f32 %v3492, %v3561
        %v3563 = vpop.f32.mrb[0].mxu0
        %3564 = vdwg.mxu0
        %3565 = vmatprep.subr.mxu0 0.0
        %3566 = vmatpush1.msra.mxu0 %v3401
        %3567 = vmatprep.subr.mxu0 0.0
        %3568 = vmatpush1.msra.mxu0 %v3402
        %3569 = vmatprep.subr.mxu0 0.0
        %3570 = vmatpush1.msra.mxu0 %v3403
        %3571 = vmatprep.subr.mxu0 0.0
        %3572 = vmatpush1.msra.mxu0 %v3404
        %3573 = vmatprep.subr.mxu0 0.0
        %3574 = vmatpush1.msra.mxu0 %v3405
        %3575 = vmatprep.subr.mxu0 0.0
        %3576 = vmatpush1.msra.mxu0 %v3406
        %3577 = vmatprep.subr.mxu0 0.0
        %3578 = vmatpush1.msra.mxu0 %v3407
        %3579 = vmatprep.subr.mxu0 0.0
        %3580 = vmatpush1.msra.mxu0 %v3408
        %3581 = vmatprep.subr.mxu0 0.0
        %3582 = vmatpush1.msra.mxu0 %v3409
        %3583 = vmatprep.subr.mxu0 0.0
        %3584 = vmatpush1.msra.mxu0 %v3410
        %3585 = vmatprep.subr.mxu0 0.0
        %3586 = vmatpush1.msra.mxu0 %v3411
        %3587 = vmatprep.subr.mxu0 0.0
        %3588 = vmatpush1.msra.mxu0 %v3412
        %3589 = vmatprep.subr.mxu0 0.0
        %3590 = vmatpush1.msra.mxu0 %v3413
        %3591 = vmatprep.subr.mxu0 0.0
        %3592 = vmatpush1.msra.mxu0 %v3414
        %3593 = vmatprep.subr.mxu0 0.0
        %3594 = vmatpush1.msra.mxu0 %v3415
        %3595 = vmatprep.subr.mxu0 0.0
        %3596 = vmatpush1.msra.mxu0 %v3416
        %3597 = vmatprep.subr.mxu0 0.0
        %3598 = vmatpush1.msra.mxu0 0.0
        %3599 = vmatprep.subr.mxu0 0.0
        %3600 = vmatpush1.msra.mxu0 0.0
        %3601 = vmatprep.subr.mxu0 0.0
        %3602 = vmatpush1.msra.mxu0 0.0
        %3603 = vmatprep.subr.mxu0 0.0
        %3604 = vmatpush1.msra.mxu0 0.0
        %3605 = vmatprep.subr.mxu0 0.0
        %3606 = vmatpush1.msra.mxu0 0.0
        %3607 = vmatprep.subr.mxu0 0.0
        %3608 = vmatpush1.msra.mxu0 0.0
        %3609 = vmatprep.subr.mxu0 0.0
        %3610 = vmatpush1.msra.mxu0 0.0
        %3611 = vmatprep.subr.mxu0 0.0
        %3612 = vmatpush1.msra.mxu0 0.0
        %3613 = vmatprep.subr.mxu0 0.0
        %3614 = vmatpush1.msra.mxu0 0.0
        %3615 = vmatprep.subr.mxu0 0.0
        %3616 = vmatpush1.msra.mxu0 0.0
        %3617 = vmatprep.subr.mxu0 0.0
        %3618 = vmatpush1.msra.mxu0 0.0
        %3619 = vmatprep.subr.mxu0 0.0
        %3620 = vmatpush1.msra.mxu0 0.0
        %3621 = vmatprep.subr.mxu0 0.0
        %3622 = vmatpush1.msra.mxu0 0.0
        %3623 = vmatprep.subr.mxu0 0.0
        %3624 = vmatpush1.msra.mxu0 0.0
        %3625 = vmatprep.subr.mxu0 0.0
        %3626 = vmatpush1.msra.mxu0 0.0
        %3627 = vmatprep.subr.mxu0 0.0
        %3628 = vmatpush1.msra.mxu0 0.0
        %3629 = vmatprep.mubr.f32.mxu0 0.0
        %3630 = vmatmul.mubr.f32.gmra.mrb[0].mxu0 %v3424
        %v3631 = vpop.f32.mrb[0].mxu0
        %v3632 = vadd.f32 0.0, %v3631
        %v3633 = vpop.f32.mrb[0].mxu0
        %3634 = vdwg.mxu0
        %v3635 = vadd.f32 %v3562, %v3632
        %v3636 = vlaneseq
        %v3637 = vshrl.u32 %v3636, 7
        %v3638 = vsub.s32 0, %v3637
        %v3639 = vrot.slane %v3417, %v3638
        %v3640 = vadd.f32 %v3635, %v3639
        %s3641 = scalar_lea.vmem [#allocation9], 12
        %v3642 = vld [vmem:[%s3641] sm:$0xf]
        %s3643 = scalar_lea.vmem %s6, 12
        %v3644 = vld [vmem:[%s3643] sm:$0xf]
        %s3645 = scalar_lea.vmem [#allocation10], 12
        %v3646 = vld [vmem:[%s3645] sm:$0xf]
        %s3647 = scalar_lea.vmem [#allocation12], 3
        %v3648 = vld [vmem:[%s3647] sm:$0x1]
        %v3649 = vrot.slane %v3640, 4
        %v3650 = vadd.f32 %v3640, %v3649
        %v3651 = vrot.slane %v3650, 2
        %v3652 = vadd.f32 %v3650, %v3651
        %v3653 = vrot.slane %v3652, 1
        %v3654 = vadd.f32 %v3652, %v3653
        %v3655 = vmul.f32 %v3654, %v1387
        %3657 = vrot.lane.b32.xlu0 %v3655, 112
        %v3658 = vpop.permute.xlu0 %3657
        %v3660 = vadd.f32 %v3655, %v3658
        %3661 = vrot.lane.b32.xlu0 %v3655, 96
        %v3662 = vpop.permute.xlu0 %3661
        %v3664 = vadd.f32 %v3660, %v3662
        %3665 = vrot.lane.b32.xlu0 %v3655, 80
        %v3666 = vpop.permute.xlu0 %3665
        %v3668 = vadd.f32 %v3664, %v3666
        %3669 = vrot.lane.b32.xlu0 %v3655, 64
        %v3670 = vpop.permute.xlu0 %3669
        %v3672 = vadd.f32 %v3668, %v3670
        %3673 = vrot.lane.b32.xlu0 %v3655, 48
        %v3674 = vpop.permute.xlu0 %3673
        %v3676 = vadd.f32 %v3672, %v3674
        %3677 = vrot.lane.b32.xlu0 %v3655, 32
        %v3678 = vpop.permute.xlu0 %3677
        %v3680 = vadd.f32 %v3676, %v3678
        %3681 = vrot.lane.b32.xlu0 %v3655, 16
        %v3682 = vpop.permute.xlu0 %3681
        %v3684 = vadd.f32 %v3680, %v3682
        %v3685 = vmul.f32 %v3684, 0.125
        %v3686 = vlaneseq
        %v3687 = vshrl.u32 %v3686, 7
        %v3688 = vsub.s32 0, %v3687
        %v3689 = vrot.slane %v3685, %v3688
        %v3690 = vmul.f32 %v3642, %v3689
        %v3691 = vsel %vm1424, %v3690, 0.0
        %3692 = vadd.xlane.f32.xlu0 %v3691
        %v3693 = vpop.xlane.xlu0 %3692
        %v3694 = vadd.f32 %v3693, %v3644
        %v3695 = vmax.f32 %v3694, 0.0
        %3697 = vset.pattern.permute.xlu0 0
        %3698 = vperm.xlu0 %3697, %v3695
        %v3699 = vpop.permute.xlu0 %3698
        %v3701 = vmul.f32 %v3699, %v3646
        %v3702 = vsel %vm1424, %v3701, 0.0
        %v3703 = vrot.slane %v3702, 4
        %v3704 = vadd.f32 %v3702, %v3703
        %v3705 = vrot.slane %v3704, 2
        %v3706 = vadd.f32 %v3704, %v3705
        %v3707 = vrot.slane %v3706, 1
        %v3708 = vadd.f32 %v3706, %v3707
        %v3709 = vadd.f32 %v3708, %v3648
        %v3710 = vxor.u32 %v3709, 2147483648
        %v3711 = vmul.f32 %v3710, 1.442695
        %v3712 = vpow.pop %v3711
        %v3713 = vadd.f32 %v3712, 1.0
        %v3714 = vrcp.pop %v3713
        %v3715 = vmul.f32 1.0, %v3714
        %3717 = vrot.lane.b32.xlu0 %v3715, 16
        %v3718 = vpop.permute.xlu0 %3717
        %3720 = vrot.lane.b32.xlu0 %v3715, 32
        %v3721 = vpop.permute.xlu0 %3720
        %3723 = vrot.lane.b32.xlu0 %v3715, 48
        %v3724 = vpop.permute.xlu0 %3723
        %3726 = vrot.lane.b32.xlu0 %v3715, 64
        %v3727 = vpop.permute.xlu0 %3726
        %3729 = vrot.lane.b32.xlu0 %v3715, 80
        %v3730 = vpop.permute.xlu0 %3729
        %3732 = vrot.lane.b32.xlu0 %v3715, 96
        %v3733 = vpop.permute.xlu0 %3732
        %3735 = vrot.lane.b32.xlu0 %v3715, 112
        %v3736 = vpop.permute.xlu0 %3735
        %v3738 = vsel %vm1472, %v3715, %v3718
        %v3739 = vsel %vm1474, %v3738, %v3721
        %v3740 = vsel %vm1476, %v3739, %v3724
        %v3741 = vsel %vm1478, %v3740, %v3727
        %v3742 = vsel %vm1480, %v3741, %v3730
        %v3743 = vsel %vm1482, %v3742, %v3733
        %v3744 = vsel %vm1484, %v3743, %v3736
        %v3745 = vlaneseq
        %v3746 = vshrl.u32 %v3745, 7
        %v3747 = vsub.s32 0, %v3746
        %v3748 = vrot.slane %v3744, %v3747
        %v3749 = vmul.f32 %v3640, %v3748
        %v3750 = vadd.f32 %v3089, %v3749
        %s3751 = scalar_lea.vmem [#allocation6], 3456
        %v3752 = vld [vmem:[%s3751] sm:$0xff]
        %v3753 = vld [vmem:[%s3751 + $0x8] sm:$0xff]
        %v3754 = vld [vmem:[%s3751 + $0x10] sm:$0xff]
        %v3755 = vld [vmem:[%s3751 + $0x18] sm:$0xff]
        %v3756 = vld [vmem:[%s3751 + $0x20] sm:$0xff]
        %v3757 = vld [vmem:[%s3751 + $0x28] sm:$0xff]
        %v3758 = vld [vmem:[%s3751 + $0x30] sm:$0xff]
        %v3759 = vld [vmem:[%s3751 + $0x38] sm:$0xff]
        %v3760 = vld [vmem:[%s3751 + $0x40] sm:$0xff]
        %v3761 = vld [vmem:[%s3751 + $0x48] sm:$0xff]
        %v3762 = vld [vmem:[%s3751 + $0x50] sm:$0xff]
        %v3763 = vld [vmem:[%s3751 + $0x58] sm:$0xff]
        %v3764 = vld [vmem:[%s3751 + $0x60] sm:$0xff]
        %v3765 = vld [vmem:[%s3751 + $0x68] sm:$0xff]
        %v3766 = vld [vmem:[%s3751 + $0x70] sm:$0xff]
        %v3767 = vld [vmem:[%s3751 + $0x78] sm:$0xff]
        %s3768 = scalar_lea.vmem [#allocation6], 3584
        %v3769 = vld [vmem:[%s3768] sm:$0xff]
        %v3770 = vld [vmem:[%s3768 + $0x8] sm:$0xff]
        %v3771 = vld [vmem:[%s3768 + $0x10] sm:$0xff]
        %v3772 = vld [vmem:[%s3768 + $0x18] sm:$0xff]
        %v3773 = vld [vmem:[%s3768 + $0x20] sm:$0xff]
        %v3774 = vld [vmem:[%s3768 + $0x28] sm:$0xff]
        %v3775 = vld [vmem:[%s3768 + $0x30] sm:$0xff]
        %v3776 = vld [vmem:[%s3768 + $0x38] sm:$0xff]
        %v3777 = vld [vmem:[%s3768 + $0x40] sm:$0xff]
        %v3778 = vld [vmem:[%s3768 + $0x48] sm:$0xff]
        %v3779 = vld [vmem:[%s3768 + $0x50] sm:$0xff]
        %v3780 = vld [vmem:[%s3768 + $0x58] sm:$0xff]
        %v3781 = vld [vmem:[%s3768 + $0x60] sm:$0xff]
        %v3782 = vld [vmem:[%s3768 + $0x68] sm:$0xff]
        %v3783 = vld [vmem:[%s3768 + $0x70] sm:$0xff]
        %v3784 = vld [vmem:[%s3768 + $0x78] sm:$0xff]
        %s3785 = scalar_lea.vmem [#allocation6], 3712
        %v3786 = vld [vmem:[%s3785] sm:$0xff]
        %v3787 = vld [vmem:[%s3785 + $0x8] sm:$0xff]
        %v3788 = vld [vmem:[%s3785 + $0x10] sm:$0xff]
        %v3789 = vld [vmem:[%s3785 + $0x18] sm:$0xff]
        %v3790 = vld [vmem:[%s3785 + $0x20] sm:$0xff]
        %v3791 = vld [vmem:[%s3785 + $0x28] sm:$0xff]
        %v3792 = vld [vmem:[%s3785 + $0x30] sm:$0xff]
        %v3793 = vld [vmem:[%s3785 + $0x38] sm:$0xff]
        %v3794 = vld [vmem:[%s3785 + $0x40] sm:$0xff]
        %v3795 = vld [vmem:[%s3785 + $0x48] sm:$0xff]
        %v3796 = vld [vmem:[%s3785 + $0x50] sm:$0xff]
        %v3797 = vld [vmem:[%s3785 + $0x58] sm:$0xff]
        %v3798 = vld [vmem:[%s3785 + $0x60] sm:$0xff]
        %v3799 = vld [vmem:[%s3785 + $0x68] sm:$0xff]
        %v3800 = vld [vmem:[%s3785 + $0x70] sm:$0xff]
        %v3801 = vld [vmem:[%s3785 + $0x78] sm:$0xff]
        %v3802 = vld [vmem:[#allocation7 + $0x9] sm:$0x1]
        %v3804 = vrot.slane %v3750, 7
        %v3806 = vsel %vm594, 0.0, %v3804
        %v3807 = vrot.slane %v3750, 1
        %v3809 = vsel %vm598, %v3807, 0.0
        %3810 = vmatprep.subr.mxu0 0.0
        %3811 = vmatpush1.msra.mxu0 %v3769
        %3812 = vmatprep.subr.mxu0 0.0
        %3813 = vmatpush1.msra.mxu0 %v3770
        %3814 = vmatprep.subr.mxu0 0.0
        %3815 = vmatpush1.msra.mxu0 %v3771
        %3816 = vmatprep.subr.mxu0 0.0
        %3817 = vmatpush1.msra.mxu0 %v3772
        %3818 = vmatprep.subr.mxu0 0.0
        %3819 = vmatpush1.msra.mxu0 %v3773
        %3820 = vmatprep.subr.mxu0 0.0
        %3821 = vmatpush1.msra.mxu0 %v3774
        %3822 = vmatprep.subr.mxu0 0.0
        %3823 = vmatpush1.msra.mxu0 %v3775
        %3824 = vmatprep.subr.mxu0 0.0
        %3825 = vmatpush1.msra.mxu0 %v3776
        %3826 = vmatprep.subr.mxu0 0.0
        %3827 = vmatpush1.msra.mxu0 %v3777
        %3828 = vmatprep.subr.mxu0 0.0
        %3829 = vmatpush1.msra.mxu0 %v3778
        %3830 = vmatprep.subr.mxu0 0.0
        %3831 = vmatpush1.msra.mxu0 %v3779
        %3832 = vmatprep.subr.mxu0 0.0
        %3833 = vmatpush1.msra.mxu0 %v3780
        %3834 = vmatprep.subr.mxu0 0.0
        %3835 = vmatpush1.msra.mxu0 %v3781
        %3836 = vmatprep.subr.mxu0 0.0
        %3837 = vmatpush1.msra.mxu0 %v3782
        %3838 = vmatprep.subr.mxu0 0.0
        %3839 = vmatpush1.msra.mxu0 %v3783
        %3840 = vmatprep.subr.mxu0 0.0
        %3841 = vmatpush1.msra.mxu0 %v3784
        %3842 = vmatprep.subr.mxu0 0.0
        %3843 = vmatpush1.msra.mxu0 0.0
        %3844 = vmatprep.subr.mxu0 0.0
        %3845 = vmatpush1.msra.mxu0 0.0
        %3846 = vmatprep.subr.mxu0 0.0
        %3847 = vmatpush1.msra.mxu0 0.0
        %3848 = vmatprep.subr.mxu0 0.0
        %3849 = vmatpush1.msra.mxu0 0.0
        %3850 = vmatprep.subr.mxu0 0.0
        %3851 = vmatpush1.msra.mxu0 0.0
        %3852 = vmatprep.subr.mxu0 0.0
        %3853 = vmatpush1.msra.mxu0 0.0
        %3854 = vmatprep.subr.mxu0 0.0
        %3855 = vmatpush1.msra.mxu0 0.0
        %3856 = vmatprep.subr.mxu0 0.0
        %3857 = vmatpush1.msra.mxu0 0.0
        %3858 = vmatprep.subr.mxu0 0.0
        %3859 = vmatpush1.msra.mxu0 0.0
        %3860 = vmatprep.subr.mxu0 0.0
        %3861 = vmatpush1.msra.mxu0 0.0
        %3862 = vmatprep.subr.mxu0 0.0
        %3863 = vmatpush1.msra.mxu0 0.0
        %3864 = vmatprep.subr.mxu0 0.0
        %3865 = vmatpush1.msra.mxu0 0.0
        %3866 = vmatprep.subr.mxu0 0.0
        %3867 = vmatpush1.msra.mxu0 0.0
        %3868 = vmatprep.subr.mxu0 0.0
        %3869 = vmatpush1.msra.mxu0 0.0
        %3870 = vmatprep.subr.mxu0 0.0
        %3871 = vmatpush1.msra.mxu0 0.0
        %3872 = vmatprep.subr.mxu0 0.0
        %3873 = vmatpush1.msra.mxu0 0.0
        %3874 = vmatprep.mubr.f32.mxu0 0.0
        %3875 = vmatmul.mubr.f32.gmra.mrb[0].mxu0 %v3750
        %v3876 = vpop.f32.mrb[0].mxu0
        %v3877 = vadd.f32 0.0, %v3876
        %v3878 = vpop.f32.mrb[0].mxu0
        %3879 = vdwg.mxu0
        %3880 = vmatprep.subr.mxu0 0.0
        %3881 = vmatpush1.msra.mxu0 %v3752
        %3882 = vmatprep.subr.mxu0 0.0
        %3883 = vmatpush1.msra.mxu0 %v3753
        %3884 = vmatprep.subr.mxu0 0.0
        %3885 = vmatpush1.msra.mxu0 %v3754
        %3886 = vmatprep.subr.mxu0 0.0
        %3887 = vmatpush1.msra.mxu0 %v3755
        %3888 = vmatprep.subr.mxu0 0.0
        %3889 = vmatpush1.msra.mxu0 %v3756
        %3890 = vmatprep.subr.mxu0 0.0
        %3891 = vmatpush1.msra.mxu0 %v3757
        %3892 = vmatprep.subr.mxu0 0.0
        %3893 = vmatpush1.msra.mxu0 %v3758
        %3894 = vmatprep.subr.mxu0 0.0
        %3895 = vmatpush1.msra.mxu0 %v3759
        %3896 = vmatprep.subr.mxu0 0.0
        %3897 = vmatpush1.msra.mxu0 %v3760
        %3898 = vmatprep.subr.mxu0 0.0
        %3899 = vmatpush1.msra.mxu0 %v3761
        %3900 = vmatprep.subr.mxu0 0.0
        %3901 = vmatpush1.msra.mxu0 %v3762
        %3902 = vmatprep.subr.mxu0 0.0
        %3903 = vmatpush1.msra.mxu0 %v3763
        %3904 = vmatprep.subr.mxu0 0.0
        %3905 = vmatpush1.msra.mxu0 %v3764
        %3906 = vmatprep.subr.mxu0 0.0
        %3907 = vmatpush1.msra.mxu0 %v3765
        %3908 = vmatprep.subr.mxu0 0.0
        %3909 = vmatpush1.msra.mxu0 %v3766
        %3910 = vmatprep.subr.mxu0 0.0
        %3911 = vmatpush1.msra.mxu0 %v3767
        %3912 = vmatprep.subr.mxu0 0.0
        %3913 = vmatpush1.msra.mxu0 0.0
        %3914 = vmatprep.subr.mxu0 0.0
        %3915 = vmatpush1.msra.mxu0 0.0
        %3916 = vmatprep.subr.mxu0 0.0
        %3917 = vmatpush1.msra.mxu0 0.0
        %3918 = vmatprep.subr.mxu0 0.0
        %3919 = vmatpush1.msra.mxu0 0.0
        %3920 = vmatprep.subr.mxu0 0.0
        %3921 = vmatpush1.msra.mxu0 0.0
        %3922 = vmatprep.subr.mxu0 0.0
        %3923 = vmatpush1.msra.mxu0 0.0
        %3924 = vmatprep.subr.mxu0 0.0
        %3925 = vmatpush1.msra.mxu0 0.0
        %3926 = vmatprep.subr.mxu0 0.0
        %3927 = vmatpush1.msra.mxu0 0.0
        %3928 = vmatprep.subr.mxu0 0.0
        %3929 = vmatpush1.msra.mxu0 0.0
        %3930 = vmatprep.subr.mxu0 0.0
        %3931 = vmatpush1.msra.mxu0 0.0
        %3932 = vmatprep.subr.mxu0 0.0
        %3933 = vmatpush1.msra.mxu0 0.0
        %3934 = vmatprep.subr.mxu0 0.0
        %3935 = vmatpush1.msra.mxu0 0.0
        %3936 = vmatprep.subr.mxu0 0.0
        %3937 = vmatpush1.msra.mxu0 0.0
        %3938 = vmatprep.subr.mxu0 0.0
        %3939 = vmatpush1.msra.mxu0 0.0
        %3940 = vmatprep.subr.mxu0 0.0
        %3941 = vmatpush1.msra.mxu0 0.0
        %3942 = vmatprep.subr.mxu0 0.0
        %3943 = vmatpush1.msra.mxu0 0.0
        %3944 = vmatprep.mubr.f32.mxu0 0.0
        %3945 = vmatmul.mubr.f32.gmra.mrb[0].mxu0 %v3806
        %v3946 = vpop.f32.mrb[0].mxu0
        %v3947 = vadd.f32 %v3877, %v3946
        %v3948 = vpop.f32.mrb[0].mxu0
        %3949 = vdwg.mxu0
        %3950 = vmatprep.subr.mxu0 0.0
        %3951 = vmatpush1.msra.mxu0 %v3786
        %3952 = vmatprep.subr.mxu0 0.0
        %3953 = vmatpush1.msra.mxu0 %v3787
        %3954 = vmatprep.subr.mxu0 0.0
        %3955 = vmatpush1.msra.mxu0 %v3788
        %3956 = vmatprep.subr.mxu0 0.0
        %3957 = vmatpush1.msra.mxu0 %v3789
        %3958 = vmatprep.subr.mxu0 0.0
        %3959 = vmatpush1.msra.mxu0 %v3790
        %3960 = vmatprep.subr.mxu0 0.0
        %3961 = vmatpush1.msra.mxu0 %v3791
        %3962 = vmatprep.subr.mxu0 0.0
        %3963 = vmatpush1.msra.mxu0 %v3792
        %3964 = vmatprep.subr.mxu0 0.0
        %3965 = vmatpush1.msra.mxu0 %v3793
        %3966 = vmatprep.subr.mxu0 0.0
        %3967 = vmatpush1.msra.mxu0 %v3794
        %3968 = vmatprep.subr.mxu0 0.0
        %3969 = vmatpush1.msra.mxu0 %v3795
        %3970 = vmatprep.subr.mxu0 0.0
        %3971 = vmatpush1.msra.mxu0 %v3796
        %3972 = vmatprep.subr.mxu0 0.0
        %3973 = vmatpush1.msra.mxu0 %v3797
        %3974 = vmatprep.subr.mxu0 0.0
        %3975 = vmatpush1.msra.mxu0 %v3798
        %3976 = vmatprep.subr.mxu0 0.0
        %3977 = vmatpush1.msra.mxu0 %v3799
        %3978 = vmatprep.subr.mxu0 0.0
        %3979 = vmatpush1.msra.mxu0 %v3800
        %3980 = vmatprep.subr.mxu0 0.0
        %3981 = vmatpush1.msra.mxu0 %v3801
        %3982 = vmatprep.subr.mxu0 0.0
        %3983 = vmatpush1.msra.mxu0 0.0
        %3984 = vmatprep.subr.mxu0 0.0
        %3985 = vmatpush1.msra.mxu0 0.0
        %3986 = vmatprep.subr.mxu0 0.0
        %3987 = vmatpush1.msra.mxu0 0.0
        %3988 = vmatprep.subr.mxu0 0.0
        %3989 = vmatpush1.msra.mxu0 0.0
        %3990 = vmatprep.subr.mxu0 0.0
        %3991 = vmatpush1.msra.mxu0 0.0
        %3992 = vmatprep.subr.mxu0 0.0
        %3993 = vmatpush1.msra.mxu0 0.0
        %3994 = vmatprep.subr.mxu0 0.0
        %3995 = vmatpush1.msra.mxu0 0.0
        %3996 = vmatprep.subr.mxu0 0.0
        %3997 = vmatpush1.msra.mxu0 0.0
        %3998 = vmatprep.subr.mxu0 0.0
        %3999 = vmatpush1.msra.mxu0 0.0
        %4000 = vmatprep.subr.mxu0 0.0
        %4001 = vmatpush1.msra.mxu0 0.0
        %4002 = vmatprep.subr.mxu0 0.0
        %4003 = vmatpush1.msra.mxu0 0.0
        %4004 = vmatprep.subr.mxu0 0.0
        %4005 = vmatpush1.msra.mxu0 0.0
        %4006 = vmatprep.subr.mxu0 0.0
        %4007 = vmatpush1.msra.mxu0 0.0
        %4008 = vmatprep.subr.mxu0 0.0
        %4009 = vmatpush1.msra.mxu0 0.0
        %4010 = vmatprep.subr.mxu0 0.0
        %4011 = vmatpush1.msra.mxu0 0.0
        %4012 = vmatprep.subr.mxu0 0.0
        %4013 = vmatpush1.msra.mxu0 0.0
        %4014 = vmatprep.mubr.f32.mxu0 0.0
        %4015 = vmatmul.mubr.f32.gmra.mrb[0].mxu0 %v3809
        %v4016 = vpop.f32.mrb[0].mxu0
        %v4017 = vadd.f32 0.0, %v4016
        %v4018 = vpop.f32.mrb[0].mxu0
        %4019 = vdwg.mxu0
        %v4020 = vadd.f32 %v3947, %v4017
        %v4021 = vlaneseq
        %v4022 = vshrl.u32 %v4021, 7
        %v4023 = vsub.s32 0, %v4022
        %v4024 = vrot.slane %v3802, %v4023
        %v4025 = vadd.f32 %v4020, %v4024
        %v4026 = vadd.f32 %v2428, %v4025
        %s4027 = scalar_lea.vmem [#allocation6], 3840
        %v4028 = vld [vmem:[%s4027] sm:$0xff]
        %v4029 = vld [vmem:[%s4027 + $0x8] sm:$0xff]
        %v4030 = vld [vmem:[%s4027 + $0x10] sm:$0xff]
        %v4031 = vld [vmem:[%s4027 + $0x18] sm:$0xff]
        %v4032 = vld [vmem:[%s4027 + $0x20] sm:$0xff]
        %v4033 = vld [vmem:[%s4027 + $0x28] sm:$0xff]
        %v4034 = vld [vmem:[%s4027 + $0x30] sm:$0xff]
        %v4035 = vld [vmem:[%s4027 + $0x38] sm:$0xff]
        %v4036 = vld [vmem:[%s4027 + $0x40] sm:$0xff]
        %v4037 = vld [vmem:[%s4027 + $0x48] sm:$0xff]
        %v4038 = vld [vmem:[%s4027 + $0x50] sm:$0xff]
        %v4039 = vld [vmem:[%s4027 + $0x58] sm:$0xff]
        %v4040 = vld [vmem:[%s4027 + $0x60] sm:$0xff]
        %v4041 = vld [vmem:[%s4027 + $0x68] sm:$0xff]
        %v4042 = vld [vmem:[%s4027 + $0x70] sm:$0xff]
        %v4043 = vld [vmem:[%s4027 + $0x78] sm:$0xff]
        %s4044 = scalar_lea.vmem [#allocation6], 3968
        %v4045 = vld [vmem:[%s4044] sm:$0xff]
        %v4046 = vld [vmem:[%s4044 + $0x8] sm:$0xff]
        %v4047 = vld [vmem:[%s4044 + $0x10] sm:$0xff]
        %v4048 = vld [vmem:[%s4044 + $0x18] sm:$0xff]
        %v4049 = vld [vmem:[%s4044 + $0x20] sm:$0xff]
        %v4050 = vld [vmem:[%s4044 + $0x28] sm:$0xff]
        %v4051 = vld [vmem:[%s4044 + $0x30] sm:$0xff]
        %v4052 = vld [vmem:[%s4044 + $0x38] sm:$0xff]
        %v4053 = vld [vmem:[%s4044 + $0x40] sm:$0xff]
        %v4054 = vld [vmem:[%s4044 + $0x48] sm:$0xff]
        %v4055 = vld [vmem:[%s4044 + $0x50] sm:$0xff]
        %v4056 = vld [vmem:[%s4044 + $0x58] sm:$0xff]
        %v4057 = vld [vmem:[%s4044 + $0x60] sm:$0xff]
        %v4058 = vld [vmem:[%s4044 + $0x68] sm:$0xff]
        %v4059 = vld [vmem:[%s4044 + $0x70] sm:$0xff]
        %v4060 = vld [vmem:[%s4044 + $0x78] sm:$0xff]
        %s4061 = scalar_lea.vmem [#allocation6], 4096
        %v4062 = vld [vmem:[%s4061] sm:$0xff]
        %v4063 = vld [vmem:[%s4061 + $0x8] sm:$0xff]
        %v4064 = vld [vmem:[%s4061 + $0x10] sm:$0xff]
        %v4065 = vld [vmem:[%s4061 + $0x18] sm:$0xff]
        %v4066 = vld [vmem:[%s4061 + $0x20] sm:$0xff]
        %v4067 = vld [vmem:[%s4061 + $0x28] sm:$0xff]
        %v4068 = vld [vmem:[%s4061 + $0x30] sm:$0xff]
        %v4069 = vld [vmem:[%s4061 + $0x38] sm:$0xff]
        %v4070 = vld [vmem:[%s4061 + $0x40] sm:$0xff]
        %v4071 = vld [vmem:[%s4061 + $0x48] sm:$0xff]
        %v4072 = vld [vmem:[%s4061 + $0x50] sm:$0xff]
        %v4073 = vld [vmem:[%s4061 + $0x58] sm:$0xff]
        %v4074 = vld [vmem:[%s4061 + $0x60] sm:$0xff]
        %v4075 = vld [vmem:[%s4061 + $0x68] sm:$0xff]
        %v4076 = vld [vmem:[%s4061 + $0x70] sm:$0xff]
        %v4077 = vld [vmem:[%s4061 + $0x78] sm:$0xff]
        %v4078 = vld [vmem:[#allocation7 + $0xa] sm:$0x1]
        %v4080 = vrot.slane %v4026, 7
        %v4082 = vsel %vm594, 0.0, %v4080
        %v4083 = vrot.slane %v4026, 1
        %v4085 = vsel %vm598, %v4083, 0.0
        %4086 = vmatprep.subr.mxu0 0.0
        %4087 = vmatpush1.msra.mxu0 %v4045
        %4088 = vmatprep.subr.mxu0 0.0
        %4089 = vmatpush1.msra.mxu0 %v4046
        %4090 = vmatprep.subr.mxu0 0.0
        %4091 = vmatpush1.msra.mxu0 %v4047
        %4092 = vmatprep.subr.mxu0 0.0
        %4093 = vmatpush1.msra.mxu0 %v4048
        %4094 = vmatprep.subr.mxu0 0.0
        %4095 = vmatpush1.msra.mxu0 %v4049
        %4096 = vmatprep.subr.mxu0 0.0
        %4097 = vmatpush1.msra.mxu0 %v4050
        %4098 = vmatprep.subr.mxu0 0.0
        %4099 = vmatpush1.msra.mxu0 %v4051
        %4100 = vmatprep.subr.mxu0 0.0
        %4101 = vmatpush1.msra.mxu0 %v4052
        %4102 = vmatprep.subr.mxu0 0.0
        %4103 = vmatpush1.msra.mxu0 %v4053
        %4104 = vmatprep.subr.mxu0 0.0
        %4105 = vmatpush1.msra.mxu0 %v4054
        %4106 = vmatprep.subr.mxu0 0.0
        %4107 = vmatpush1.msra.mxu0 %v4055
        %4108 = vmatprep.subr.mxu0 0.0
        %4109 = vmatpush1.msra.mxu0 %v4056
        %4110 = vmatprep.subr.mxu0 0.0
        %4111 = vmatpush1.msra.mxu0 %v4057
        %4112 = vmatprep.subr.mxu0 0.0
        %4113 = vmatpush1.msra.mxu0 %v4058
        %4114 = vmatprep.subr.mxu0 0.0
        %4115 = vmatpush1.msra.mxu0 %v4059
        %4116 = vmatprep.subr.mxu0 0.0
        %4117 = vmatpush1.msra.mxu0 %v4060
        %4118 = vmatprep.subr.mxu0 0.0
        %4119 = vmatpush1.msra.mxu0 0.0
        %4120 = vmatprep.subr.mxu0 0.0
        %4121 = vmatpush1.msra.mxu0 0.0
        %4122 = vmatprep.subr.mxu0 0.0
        %4123 = vmatpush1.msra.mxu0 0.0
        %4124 = vmatprep.subr.mxu0 0.0
        %4125 = vmatpush1.msra.mxu0 0.0
        %4126 = vmatprep.subr.mxu0 0.0
        %4127 = vmatpush1.msra.mxu0 0.0
        %4128 = vmatprep.subr.mxu0 0.0
        %4129 = vmatpush1.msra.mxu0 0.0
        %4130 = vmatprep.subr.mxu0 0.0
        %4131 = vmatpush1.msra.mxu0 0.0
        %4132 = vmatprep.subr.mxu0 0.0
        %4133 = vmatpush1.msra.mxu0 0.0
        %4134 = vmatprep.subr.mxu0 0.0
        %4135 = vmatpush1.msra.mxu0 0.0
        %4136 = vmatprep.subr.mxu0 0.0
        %4137 = vmatpush1.msra.mxu0 0.0
        %4138 = vmatprep.subr.mxu0 0.0
        %4139 = vmatpush1.msra.mxu0 0.0
        %4140 = vmatprep.subr.mxu0 0.0
        %4141 = vmatpush1.msra.mxu0 0.0
        %4142 = vmatprep.subr.mxu0 0.0
        %4143 = vmatpush1.msra.mxu0 0.0
        %4144 = vmatprep.subr.mxu0 0.0
        %4145 = vmatpush1.msra.mxu0 0.0
        %4146 = vmatprep.subr.mxu0 0.0
        %4147 = vmatpush1.msra.mxu0 0.0
        %4148 = vmatprep.subr.mxu0 0.0
        %4149 = vmatpush1.msra.mxu0 0.0
        %4150 = vmatprep.mubr.f32.mxu0 0.0
        %4151 = vmatmul.mubr.f32.gmra.mrb[0].mxu0 %v4026
        %v4152 = vpop.f32.mrb[0].mxu0
        %v4153 = vadd.f32 0.0, %v4152
        %v4154 = vpop.f32.mrb[0].mxu0
        %4155 = vdwg.mxu0
        %4156 = vmatprep.subr.mxu0 0.0
        %4157 = vmatpush1.msra.mxu0 %v4028
        %4158 = vmatprep.subr.mxu0 0.0
        %4159 = vmatpush1.msra.mxu0 %v4029
        %4160 = vmatprep.subr.mxu0 0.0
        %4161 = vmatpush1.msra.mxu0 %v4030
        %4162 = vmatprep.subr.mxu0 0.0
        %4163 = vmatpush1.msra.mxu0 %v4031
        %4164 = vmatprep.subr.mxu0 0.0
        %4165 = vmatpush1.msra.mxu0 %v4032
        %4166 = vmatprep.subr.mxu0 0.0
        %4167 = vmatpush1.msra.mxu0 %v4033
        %4168 = vmatprep.subr.mxu0 0.0
        %4169 = vmatpush1.msra.mxu0 %v4034
        %4170 = vmatprep.subr.mxu0 0.0
        %4171 = vmatpush1.msra.mxu0 %v4035
        %4172 = vmatprep.subr.mxu0 0.0
        %4173 = vmatpush1.msra.mxu0 %v4036
        %4174 = vmatprep.subr.mxu0 0.0
        %4175 = vmatpush1.msra.mxu0 %v4037
        %4176 = vmatprep.subr.mxu0 0.0
        %4177 = vmatpush1.msra.mxu0 %v4038
        %4178 = vmatprep.subr.mxu0 0.0
        %4179 = vmatpush1.msra.mxu0 %v4039
        %4180 = vmatprep.subr.mxu0 0.0
        %4181 = vmatpush1.msra.mxu0 %v4040
        %4182 = vmatprep.subr.mxu0 0.0
        %4183 = vmatpush1.msra.mxu0 %v4041
        %4184 = vmatprep.subr.mxu0 0.0
        %4185 = vmatpush1.msra.mxu0 %v4042
        %4186 = vmatprep.subr.mxu0 0.0
        %4187 = vmatpush1.msra.mxu0 %v4043
        %4188 = vmatprep.subr.mxu0 0.0
        %4189 = vmatpush1.msra.mxu0 0.0
        %4190 = vmatprep.subr.mxu0 0.0
        %4191 = vmatpush1.msra.mxu0 0.0
        %4192 = vmatprep.subr.mxu0 0.0
        %4193 = vmatpush1.msra.mxu0 0.0
        %4194 = vmatprep.subr.mxu0 0.0
        %4195 = vmatpush1.msra.mxu0 0.0
        %4196 = vmatprep.subr.mxu0 0.0
        %4197 = vmatpush1.msra.mxu0 0.0
        %4198 = vmatprep.subr.mxu0 0.0
        %4199 = vmatpush1.msra.mxu0 0.0
        %4200 = vmatprep.subr.mxu0 0.0
        %4201 = vmatpush1.msra.mxu0 0.0
        %4202 = vmatprep.subr.mxu0 0.0
        %4203 = vmatpush1.msra.mxu0 0.0
        %4204 = vmatprep.subr.mxu0 0.0
        %4205 = vmatpush1.msra.mxu0 0.0
        %4206 = vmatprep.subr.mxu0 0.0
        %4207 = vmatpush1.msra.mxu0 0.0
        %4208 = vmatprep.subr.mxu0 0.0
        %4209 = vmatpush1.msra.mxu0 0.0
        %4210 = vmatprep.subr.mxu0 0.0
        %4211 = vmatpush1.msra.mxu0 0.0
        %4212 = vmatprep.subr.mxu0 0.0
        %4213 = vmatpush1.msra.mxu0 0.0
        %4214 = vmatprep.subr.mxu0 0.0
        %4215 = vmatpush1.msra.mxu0 0.0
        %4216 = vmatprep.subr.mxu0 0.0
        %4217 = vmatpush1.msra.mxu0 0.0
        %4218 = vmatprep.subr.mxu0 0.0
        %4219 = vmatpush1.msra.mxu0 0.0
        %4220 = vmatprep.mubr.f32.mxu0 0.0
        %4221 = vmatmul.mubr.f32.gmra.mrb[0].mxu0 %v4082
        %v4222 = vpop.f32.mrb[0].mxu0
        %v4223 = vadd.f32 %v4153, %v4222
        %v4224 = vpop.f32.mrb[0].mxu0
        %4225 = vdwg.mxu0
        %4226 = vmatprep.subr.mxu0 0.0
        %4227 = vmatpush1.msra.mxu0 %v4062
        %4228 = vmatprep.subr.mxu0 0.0
        %4229 = vmatpush1.msra.mxu0 %v4063
        %4230 = vmatprep.subr.mxu0 0.0
        %4231 = vmatpush1.msra.mxu0 %v4064
        %4232 = vmatprep.subr.mxu0 0.0
        %4233 = vmatpush1.msra.mxu0 %v4065
        %4234 = vmatprep.subr.mxu0 0.0
        %4235 = vmatpush1.msra.mxu0 %v4066
        %4236 = vmatprep.subr.mxu0 0.0
        %4237 = vmatpush1.msra.mxu0 %v4067
        %4238 = vmatprep.subr.mxu0 0.0
        %4239 = vmatpush1.msra.mxu0 %v4068
        %4240 = vmatprep.subr.mxu0 0.0
        %4241 = vmatpush1.msra.mxu0 %v4069
        %4242 = vmatprep.subr.mxu0 0.0
        %4243 = vmatpush1.msra.mxu0 %v4070
        %4244 = vmatprep.subr.mxu0 0.0
        %4245 = vmatpush1.msra.mxu0 %v4071
        %4246 = vmatprep.subr.mxu0 0.0
        %4247 = vmatpush1.msra.mxu0 %v4072
        %4248 = vmatprep.subr.mxu0 0.0
        %4249 = vmatpush1.msra.mxu0 %v4073
        %4250 = vmatprep.subr.mxu0 0.0
        %4251 = vmatpush1.msra.mxu0 %v4074
        %4252 = vmatprep.subr.mxu0 0.0
        %4253 = vmatpush1.msra.mxu0 %v4075
        %4254 = vmatprep.subr.mxu0 0.0
        %4255 = vmatpush1.msra.mxu0 %v4076
        %4256 = vmatprep.subr.mxu0 0.0
        %4257 = vmatpush1.msra.mxu0 %v4077
        %4258 = vmatprep.subr.mxu0 0.0
        %4259 = vmatpush1.msra.mxu0 0.0
        %4260 = vmatprep.subr.mxu0 0.0
        %4261 = vmatpush1.msra.mxu0 0.0
        %4262 = vmatprep.subr.mxu0 0.0
        %4263 = vmatpush1.msra.mxu0 0.0
        %4264 = vmatprep.subr.mxu0 0.0
        %4265 = vmatpush1.msra.mxu0 0.0
        %4266 = vmatprep.subr.mxu0 0.0
        %4267 = vmatpush1.msra.mxu0 0.0
        %4268 = vmatprep.subr.mxu0 0.0
        %4269 = vmatpush1.msra.mxu0 0.0
        %4270 = vmatprep.subr.mxu0 0.0
        %4271 = vmatpush1.msra.mxu0 0.0
        %4272 = vmatprep.subr.mxu0 0.0
        %4273 = vmatpush1.msra.mxu0 0.0
        %4274 = vmatprep.subr.mxu0 0.0
        %4275 = vmatpush1.msra.mxu0 0.0
        %4276 = vmatprep.subr.mxu0 0.0
        %4277 = vmatpush1.msra.mxu0 0.0
        %4278 = vmatprep.subr.mxu0 0.0
        %4279 = vmatpush1.msra.mxu0 0.0
        %4280 = vmatprep.subr.mxu0 0.0
        %4281 = vmatpush1.msra.mxu0 0.0
        %4282 = vmatprep.subr.mxu0 0.0
        %4283 = vmatpush1.msra.mxu0 0.0
        %4284 = vmatprep.subr.mxu0 0.0
        %4285 = vmatpush1.msra.mxu0 0.0
        %4286 = vmatprep.subr.mxu0 0.0
        %4287 = vmatpush1.msra.mxu0 0.0
        %4288 = vmatprep.subr.mxu0 0.0
        %4289 = vmatpush1.msra.mxu0 0.0
        %4290 = vmatprep.mubr.f32.mxu0 0.0
        %4291 = vmatmul.mubr.f32.gmra.mrb[0].mxu0 %v4085
        %v4292 = vpop.f32.mrb[0].mxu0
        %v4293 = vadd.f32 0.0, %v4292
        %v4294 = vpop.f32.mrb[0].mxu0
        %4295 = vdwg.mxu0
        %v4296 = vadd.f32 %v4223, %v4293
        %v4297 = vlaneseq
        %v4298 = vshrl.u32 %v4297, 7
        %v4299 = vsub.s32 0, %v4298
        %v4300 = vrot.slane %v4078, %v4299
        %v4301 = vadd.f32 %v4296, %v4300
        %v4302 = vadd.f32 %v4301, %v826
        %v4303 = vld [vmem:[#allocation13] sm:$0xff]
        %v4304 = vld [vmem:[#allocation13 + $0x8] sm:$0xff]
        %v4305 = vld [vmem:[#allocation13 + $0x10] sm:$0xff]
        %v4306 = vld [vmem:[#allocation13 + $0x18] sm:$0xff]
        %v4307 = vld [vmem:[#allocation13 + $0x20] sm:$0xff]
        %v4308 = vld [vmem:[#allocation13 + $0x28] sm:$0xff]
        %v4309 = vld [vmem:[#allocation13 + $0x30] sm:$0xff]
        %v4310 = vld [vmem:[#allocation13 + $0x38] sm:$0xff]
        %v4311 = vld [vmem:[#allocation13 + $0x40] sm:$0xff]
        %v4312 = vld [vmem:[#allocation13 + $0x48] sm:$0xff]
        %v4313 = vld [vmem:[#allocation13 + $0x50] sm:$0xff]
        %v4314 = vld [vmem:[#allocation13 + $0x58] sm:$0xff]
        %v4315 = vld [vmem:[#allocation13 + $0x60] sm:$0xff]
        %v4316 = vld [vmem:[#allocation13 + $0x68] sm:$0xff]
        %v4317 = vld [vmem:[#allocation13 + $0x70] sm:$0xff]
        %v4318 = vld [vmem:[#allocation13 + $0x78] sm:$0xff]
        %v4319 = vld [vmem:[#allocation13 + $0x80] sm:$0xff]
        %v4320 = vld [vmem:[#allocation13 + $0x88] sm:$0xff]
        %v4321 = vld [vmem:[#allocation13 + $0x90] sm:$0xff]
        %v4322 = vld [vmem:[#allocation13 + $0x98] sm:$0xff]
        %v4323 = vld [vmem:[#allocation13 + $0xa0] sm:$0xff]
        %v4324 = vld [vmem:[#allocation13 + $0xa8] sm:$0xff]
        %v4325 = vld [vmem:[#allocation13 + $0xb0] sm:$0xff]
        %v4326 = vld [vmem:[#allocation13 + $0xb8] sm:$0xff]
        %v4327 = vld [vmem:[#allocation13 + $0xc0] sm:$0xff]
        %v4328 = vld [vmem:[#allocation13 + $0xc8] sm:$0xff]
        %v4329 = vld [vmem:[#allocation13 + $0xd0] sm:$0xff]
        %v4330 = vld [vmem:[#allocation13 + $0xd8] sm:$0xff]
        %v4331 = vld [vmem:[#allocation13 + $0xe0] sm:$0xff]
        %v4332 = vld [vmem:[#allocation13 + $0xe8] sm:$0xff]
        %v4333 = vld [vmem:[#allocation13 + $0xf0] sm:$0xff]
        %v4334 = vld [vmem:[#allocation13 + $0xf8] sm:$0xff]
        %v4335 = vld [vmem:[#allocation13 + $0x100] sm:$0xff]
        %v4336 = vld [vmem:[#allocation13 + $0x108] sm:$0xff]
        %v4337 = vld [vmem:[#allocation13 + $0x110] sm:$0xff]
        %v4338 = vld [vmem:[#allocation13 + $0x118] sm:$0xff]
        %v4339 = vld [vmem:[#allocation13 + $0x120] sm:$0xff]
        %v4340 = vld [vmem:[#allocation13 + $0x128] sm:$0xff]
        %v4341 = vld [vmem:[#allocation13 + $0x130] sm:$0xff]
        %v4342 = vld [vmem:[#allocation13 + $0x138] sm:$0xff]
        %v4343 = vld [vmem:[#allocation13 + $0x140] sm:$0xff]
        %v4344 = vld [vmem:[#allocation13 + $0x148] sm:$0xff]
        %v4345 = vld [vmem:[#allocation13 + $0x150] sm:$0xff]
        %v4346 = vld [vmem:[#allocation13 + $0x158] sm:$0xff]
        %v4347 = vld [vmem:[#allocation13 + $0x160] sm:$0xff]
        %v4348 = vld [vmem:[#allocation13 + $0x168] sm:$0xff]
        %v4349 = vld [vmem:[#allocation13 + $0x170] sm:$0xff]
        %v4350 = vld [vmem:[#allocation13 + $0x178] sm:$0xff]
        %v4351 = vld [vmem:[#allocation13 + $0x180] sm:$0xff]
        %v4352 = vld [vmem:[#allocation13 + $0x188] sm:$0xff]
        %v4353 = vld [vmem:[#allocation13 + $0x190] sm:$0xff]
        %v4354 = vld [vmem:[#allocation13 + $0x198] sm:$0xff]
        %v4355 = vld [vmem:[#allocation13 + $0x1a0] sm:$0xff]
        %v4356 = vld [vmem:[#allocation13 + $0x1a8] sm:$0xff]
        %v4357 = vld [vmem:[#allocation13 + $0x1b0] sm:$0xff]
        %v4358 = vld [vmem:[#allocation13 + $0x1b8] sm:$0xff]
        %v4359 = vld [vmem:[#allocation13 + $0x1c0] sm:$0xff]
        %v4360 = vld [vmem:[#allocation13 + $0x1c8] sm:$0xff]
        %v4361 = vld [vmem:[#allocation13 + $0x1d0] sm:$0xff]
        %v4362 = vld [vmem:[#allocation13 + $0x1d8] sm:$0xff]
        %v4363 = vld [vmem:[#allocation13 + $0x1e0] sm:$0xff]
        %v4364 = vld [vmem:[#allocation13 + $0x1e8] sm:$0xff]
        %v4365 = vld [vmem:[#allocation13 + $0x1f0] sm:$0xff]
        %v4366 = vld [vmem:[#allocation13 + $0x1f8] sm:$0xff]
        %s4367 = scalar_lea.vmem [#allocation13], 512
        %v4368 = vld [vmem:[%s4367] sm:$0xff]
        %v4369 = vld [vmem:[%s4367 + $0x8] sm:$0xff]
        %v4370 = vld [vmem:[%s4367 + $0x10] sm:$0xff]
        %v4371 = vld [vmem:[%s4367 + $0x18] sm:$0xff]
        %v4372 = vld [vmem:[%s4367 + $0x20] sm:$0xff]
        %v4373 = vld [vmem:[%s4367 + $0x28] sm:$0xff]
        %v4374 = vld [vmem:[%s4367 + $0x30] sm:$0xff]
        %v4375 = vld [vmem:[%s4367 + $0x38] sm:$0xff]
        %v4376 = vld [vmem:[%s4367 + $0x40] sm:$0xff]
        %v4377 = vld [vmem:[%s4367 + $0x48] sm:$0xff]
        %v4378 = vld [vmem:[%s4367 + $0x50] sm:$0xff]
        %v4379 = vld [vmem:[%s4367 + $0x58] sm:$0xff]
        %v4380 = vld [vmem:[%s4367 + $0x60] sm:$0xff]
        %v4381 = vld [vmem:[%s4367 + $0x68] sm:$0xff]
        %v4382 = vld [vmem:[%s4367 + $0x70] sm:$0xff]
        %v4383 = vld [vmem:[%s4367 + $0x78] sm:$0xff]
        %v4384 = vld [vmem:[%s4367 + $0x80] sm:$0xff]
        %v4385 = vld [vmem:[%s4367 + $0x88] sm:$0xff]
        %v4386 = vld [vmem:[%s4367 + $0x90] sm:$0xff]
        %v4387 = vld [vmem:[%s4367 + $0x98] sm:$0xff]
        %v4388 = vld [vmem:[%s4367 + $0xa0] sm:$0xff]
        %v4389 = vld [vmem:[%s4367 + $0xa8] sm:$0xff]
        %v4390 = vld [vmem:[%s4367 + $0xb0] sm:$0xff]
        %v4391 = vld [vmem:[%s4367 + $0xb8] sm:$0xff]
        %v4392 = vld [vmem:[%s4367 + $0xc0] sm:$0xff]
        %v4393 = vld [vmem:[%s4367 + $0xc8] sm:$0xff]
        %v4394 = vld [vmem:[%s4367 + $0xd0] sm:$0xff]
        %v4395 = vld [vmem:[%s4367 + $0xd8] sm:$0xff]
        %v4396 = vld [vmem:[%s4367 + $0xe0] sm:$0xff]
        %v4397 = vld [vmem:[%s4367 + $0xe8] sm:$0xff]
        %v4398 = vld [vmem:[%s4367 + $0xf0] sm:$0xff]
        %v4399 = vld [vmem:[%s4367 + $0xf8] sm:$0xff]
        %v4400 = vld [vmem:[%s4367 + $0x100] sm:$0xff]
        %v4401 = vld [vmem:[%s4367 + $0x108] sm:$0xff]
        %v4402 = vld [vmem:[%s4367 + $0x110] sm:$0xff]
        %v4403 = vld [vmem:[%s4367 + $0x118] sm:$0xff]
        %v4404 = vld [vmem:[%s4367 + $0x120] sm:$0xff]
        %v4405 = vld [vmem:[%s4367 + $0x128] sm:$0xff]
        %v4406 = vld [vmem:[%s4367 + $0x130] sm:$0xff]
        %v4407 = vld [vmem:[%s4367 + $0x138] sm:$0xff]
        %v4408 = vld [vmem:[%s4367 + $0x140] sm:$0xff]
        %v4409 = vld [vmem:[%s4367 + $0x148] sm:$0xff]
        %v4410 = vld [vmem:[%s4367 + $0x150] sm:$0xff]
        %v4411 = vld [vmem:[%s4367 + $0x158] sm:$0xff]
        %v4412 = vld [vmem:[%s4367 + $0x160] sm:$0xff]
        %v4413 = vld [vmem:[%s4367 + $0x168] sm:$0xff]
        %v4414 = vld [vmem:[%s4367 + $0x170] sm:$0xff]
        %v4415 = vld [vmem:[%s4367 + $0x178] sm:$0xff]
        %v4416 = vld [vmem:[%s4367 + $0x180] sm:$0xff]
        %v4417 = vld [vmem:[%s4367 + $0x188] sm:$0xff]
        %v4418 = vld [vmem:[%s4367 + $0x190] sm:$0xff]
        %v4419 = vld [vmem:[%s4367 + $0x198] sm:$0xff]
        %v4420 = vld [vmem:[%s4367 + $0x1a0] sm:$0xff]
        %v4421 = vld [vmem:[%s4367 + $0x1a8] sm:$0xff]
        %v4422 = vld [vmem:[%s4367 + $0x1b0] sm:$0xff]
        %v4423 = vld [vmem:[%s4367 + $0x1b8] sm:$0xff]
        %v4424 = vld [vmem:[%s4367 + $0x1c0] sm:$0xff]
        %v4425 = vld [vmem:[%s4367 + $0x1c8] sm:$0xff]
        %v4426 = vld [vmem:[%s4367 + $0x1d0] sm:$0xff]
        %v4427 = vld [vmem:[%s4367 + $0x1d8] sm:$0xff]
        %v4428 = vld [vmem:[%s4367 + $0x1e0] sm:$0xff]
        %v4429 = vld [vmem:[%s4367 + $0x1e8] sm:$0xff]
        %v4430 = vld [vmem:[%s4367 + $0x1f0] sm:$0xff]
        %v4431 = vld [vmem:[%s4367 + $0x1f8] sm:$0xff]
        %s4432 = scalar_lea.vmem [#allocation13], 1024
        %v4433 = vld [vmem:[%s4432] sm:$0xff]
        %v4434 = vld [vmem:[%s4432 + $0x8] sm:$0xff]
        %v4435 = vld [vmem:[%s4432 + $0x10] sm:$0xff]
        %v4436 = vld [vmem:[%s4432 + $0x18] sm:$0xff]
        %v4437 = vld [vmem:[%s4432 + $0x20] sm:$0xff]
        %v4438 = vld [vmem:[%s4432 + $0x28] sm:$0xff]
        %v4439 = vld [vmem:[%s4432 + $0x30] sm:$0xff]
        %v4440 = vld [vmem:[%s4432 + $0x38] sm:$0xff]
        %v4441 = vld [vmem:[%s4432 + $0x40] sm:$0xff]
        %v4442 = vld [vmem:[%s4432 + $0x48] sm:$0xff]
        %v4443 = vld [vmem:[%s4432 + $0x50] sm:$0xff]
        %v4444 = vld [vmem:[%s4432 + $0x58] sm:$0xff]
        %v4445 = vld [vmem:[%s4432 + $0x60] sm:$0xff]
        %v4446 = vld [vmem:[%s4432 + $0x68] sm:$0xff]
        %v4447 = vld [vmem:[%s4432 + $0x70] sm:$0xff]
        %v4448 = vld [vmem:[%s4432 + $0x78] sm:$0xff]
        %v4449 = vld [vmem:[%s4432 + $0x80] sm:$0xff]
        %v4450 = vld [vmem:[%s4432 + $0x88] sm:$0xff]
        %v4451 = vld [vmem:[%s4432 + $0x90] sm:$0xff]
        %v4452 = vld [vmem:[%s4432 + $0x98] sm:$0xff]
        %v4453 = vld [vmem:[%s4432 + $0xa0] sm:$0xff]
        %v4454 = vld [vmem:[%s4432 + $0xa8] sm:$0xff]
        %v4455 = vld [vmem:[%s4432 + $0xb0] sm:$0xff]
        %v4456 = vld [vmem:[%s4432 + $0xb8] sm:$0xff]
        %v4457 = vld [vmem:[%s4432 + $0xc0] sm:$0xff]
        %v4458 = vld [vmem:[%s4432 + $0xc8] sm:$0xff]
        %v4459 = vld [vmem:[%s4432 + $0xd0] sm:$0xff]
        %v4460 = vld [vmem:[%s4432 + $0xd8] sm:$0xff]
        %v4461 = vld [vmem:[%s4432 + $0xe0] sm:$0xff]
        %v4462 = vld [vmem:[%s4432 + $0xe8] sm:$0xff]
        %v4463 = vld [vmem:[%s4432 + $0xf0] sm:$0xff]
        %v4464 = vld [vmem:[%s4432 + $0xf8] sm:$0xff]
        %v4465 = vld [vmem:[%s4432 + $0x100] sm:$0xff]
        %v4466 = vld [vmem:[%s4432 + $0x108] sm:$0xff]
        %v4467 = vld [vmem:[%s4432 + $0x110] sm:$0xff]
        %v4468 = vld [vmem:[%s4432 + $0x118] sm:$0xff]
        %v4469 = vld [vmem:[%s4432 + $0x120] sm:$0xff]
        %v4470 = vld [vmem:[%s4432 + $0x128] sm:$0xff]
        %v4471 = vld [vmem:[%s4432 + $0x130] sm:$0xff]
        %v4472 = vld [vmem:[%s4432 + $0x138] sm:$0xff]
        %v4473 = vld [vmem:[%s4432 + $0x140] sm:$0xff]
        %v4474 = vld [vmem:[%s4432 + $0x148] sm:$0xff]
        %v4475 = vld [vmem:[%s4432 + $0x150] sm:$0xff]
        %v4476 = vld [vmem:[%s4432 + $0x158] sm:$0xff]
        %v4477 = vld [vmem:[%s4432 + $0x160] sm:$0xff]
        %v4478 = vld [vmem:[%s4432 + $0x168] sm:$0xff]
        %v4479 = vld [vmem:[%s4432 + $0x170] sm:$0xff]
        %v4480 = vld [vmem:[%s4432 + $0x178] sm:$0xff]
        %v4481 = vld [vmem:[%s4432 + $0x180] sm:$0xff]
        %v4482 = vld [vmem:[%s4432 + $0x188] sm:$0xff]
        %v4483 = vld [vmem:[%s4432 + $0x190] sm:$0xff]
        %v4484 = vld [vmem:[%s4432 + $0x198] sm:$0xff]
        %v4485 = vld [vmem:[%s4432 + $0x1a0] sm:$0xff]
        %v4486 = vld [vmem:[%s4432 + $0x1a8] sm:$0xff]
        %v4487 = vld [vmem:[%s4432 + $0x1b0] sm:$0xff]
        %v4488 = vld [vmem:[%s4432 + $0x1b8] sm:$0xff]
        %v4489 = vld [vmem:[%s4432 + $0x1c0] sm:$0xff]
        %v4490 = vld [vmem:[%s4432 + $0x1c8] sm:$0xff]
        %v4491 = vld [vmem:[%s4432 + $0x1d0] sm:$0xff]
        %v4492 = vld [vmem:[%s4432 + $0x1d8] sm:$0xff]
        %v4493 = vld [vmem:[%s4432 + $0x1e0] sm:$0xff]
        %v4494 = vld [vmem:[%s4432 + $0x1e8] sm:$0xff]
        %v4495 = vld [vmem:[%s4432 + $0x1f0] sm:$0xff]
        %v4496 = vld [vmem:[%s4432 + $0x1f8] sm:$0xff]
        %v4497 = vld [vmem:[#allocation15] sm:$0xf]
        %v4499 = vrot.slane %v4302, 7
        %v4501 = vsel %vm594, 0.0, %v4499
        %v4502 = vrot.slane %v4302, 1
        %v4504 = vsel %vm598, %v4502, 0.0
        %4505 = vmatprep.subr.mxu0 %v4369
        %4506 = vmatpush1.msra.mxu0 %v4368
        %4507 = vmatprep.subr.mxu0 %v4373
        %4508 = vmatpush1.msra.mxu0 %v4372
        %4509 = vmatprep.subr.mxu0 %v4377
        %4510 = vmatpush1.msra.mxu0 %v4376
        %4511 = vmatprep.subr.mxu0 %v4381
        %4512 = vmatpush1.msra.mxu0 %v4380
        %4513 = vmatprep.subr.mxu0 %v4385
        %4514 = vmatpush1.msra.mxu0 %v4384
        %4515 = vmatprep.subr.mxu0 %v4389
        %4516 = vmatpush1.msra.mxu0 %v4388
        %4517 = vmatprep.subr.mxu0 %v4393
        %4518 = vmatpush1.msra.mxu0 %v4392
        %4519 = vmatprep.subr.mxu0 %v4397
        %4520 = vmatpush1.msra.mxu0 %v4396
        %4521 = vmatprep.subr.mxu0 %v4401
        %4522 = vmatpush1.msra.mxu0 %v4400
        %4523 = vmatprep.subr.mxu0 %v4405
        %4524 = vmatpush1.msra.mxu0 %v4404
        %4525 = vmatprep.subr.mxu0 %v4409
        %4526 = vmatpush1.msra.mxu0 %v4408
        %4527 = vmatprep.subr.mxu0 %v4413
        %4528 = vmatpush1.msra.mxu0 %v4412
        %4529 = vmatprep.subr.mxu0 %v4417
        %4530 = vmatpush1.msra.mxu0 %v4416
        %4531 = vmatprep.subr.mxu0 %v4421
        %4532 = vmatpush1.msra.mxu0 %v4420
        %4533 = vmatprep.subr.mxu0 %v4425
        %4534 = vmatpush1.msra.mxu0 %v4424
        %4535 = vmatprep.subr.mxu0 %v4429
        %4536 = vmatpush1.msra.mxu0 %v4428
        %4537 = vmatprep.subr.mxu0 0.0
        %4538 = vmatpush1.msra.mxu0 0.0
        %4539 = vmatprep.subr.mxu0 0.0
        %4540 = vmatpush1.msra.mxu0 0.0
        %4541 = vmatprep.subr.mxu0 0.0
        %4542 = vmatpush1.msra.mxu0 0.0
        %4543 = vmatprep.subr.mxu0 0.0
        %4544 = vmatpush1.msra.mxu0 0.0
        %4545 = vmatprep.subr.mxu0 0.0
        %4546 = vmatpush1.msra.mxu0 0.0
        %4547 = vmatprep.subr.mxu0 0.0
        %4548 = vmatpush1.msra.mxu0 0.0
        %4549 = vmatprep.subr.mxu0 0.0
        %4550 = vmatpush1.msra.mxu0 0.0
        %4551 = vmatprep.subr.mxu0 0.0
        %4552 = vmatpush1.msra.mxu0 0.0
        %4553 = vmatprep.subr.mxu0 0.0
        %4554 = vmatpush1.msra.mxu0 0.0
        %4555 = vmatprep.subr.mxu0 0.0
        %4556 = vmatpush1.msra.mxu0 0.0
        %4557 = vmatprep.subr.mxu0 0.0
        %4558 = vmatpush1.msra.mxu0 0.0
        %4559 = vmatprep.subr.mxu0 0.0
        %4560 = vmatpush1.msra.mxu0 0.0
        %4561 = vmatprep.subr.mxu0 0.0
        %4562 = vmatpush1.msra.mxu0 0.0
        %4563 = vmatprep.subr.mxu0 0.0
        %4564 = vmatpush1.msra.mxu0 0.0
        %4565 = vmatprep.subr.mxu0 0.0
        %4566 = vmatpush1.msra.mxu0 0.0
        %4567 = vmatprep.subr.mxu0 0.0
        %4568 = vmatpush1.msra.mxu0 0.0
        %4569 = vmatprep.mubr.f32.mxu0 0.0
        %4570 = vmatmul.mubr.f32.gmra.mrb[0].mxu0 %v4302
        %v4571 = vpop.f32.mrb[0].mxu0
        %v4572 = vadd.f32 0.0, %v4571
        %v4573 = vpop.f32.mrb[0].mxu0
        %v4574 = vadd.f32 0.0, %v4573
        %4575 = vdwg.mxu0
        %4576 = vmatprep.subr.mxu0 %v4371
        %4577 = vmatpush1.msra.mxu0 %v4370
        %4578 = vmatprep.subr.mxu0 %v4375
        %4579 = vmatpush1.msra.mxu0 %v4374
        %4580 = vmatprep.subr.mxu0 %v4379
        %4581 = vmatpush1.msra.mxu0 %v4378
        %4582 = vmatprep.subr.mxu0 %v4383
        %4583 = vmatpush1.msra.mxu0 %v4382
        %4584 = vmatprep.subr.mxu0 %v4387
        %4585 = vmatpush1.msra.mxu0 %v4386
        %4586 = vmatprep.subr.mxu0 %v4391
        %4587 = vmatpush1.msra.mxu0 %v4390
        %4588 = vmatprep.subr.mxu0 %v4395
        %4589 = vmatpush1.msra.mxu0 %v4394
        %4590 = vmatprep.subr.mxu0 %v4399
        %4591 = vmatpush1.msra.mxu0 %v4398
        %4592 = vmatprep.subr.mxu0 %v4403
        %4593 = vmatpush1.msra.mxu0 %v4402
        %4594 = vmatprep.subr.mxu0 %v4407
        %4595 = vmatpush1.msra.mxu0 %v4406
        %4596 = vmatprep.subr.mxu0 %v4411
        %4597 = vmatpush1.msra.mxu0 %v4410
        %4598 = vmatprep.subr.mxu0 %v4415
        %4599 = vmatpush1.msra.mxu0 %v4414
        %4600 = vmatprep.subr.mxu0 %v4419
        %4601 = vmatpush1.msra.mxu0 %v4418
        %4602 = vmatprep.subr.mxu0 %v4423
        %4603 = vmatpush1.msra.mxu0 %v4422
        %4604 = vmatprep.subr.mxu0 %v4427
        %4605 = vmatpush1.msra.mxu0 %v4426
        %4606 = vmatprep.subr.mxu0 %v4431
        %4607 = vmatpush1.msra.mxu0 %v4430
        %4608 = vmatprep.subr.mxu0 0.0
        %4609 = vmatpush1.msra.mxu0 0.0
        %4610 = vmatprep.subr.mxu0 0.0
        %4611 = vmatpush1.msra.mxu0 0.0
        %4612 = vmatprep.subr.mxu0 0.0
        %4613 = vmatpush1.msra.mxu0 0.0
        %4614 = vmatprep.subr.mxu0 0.0
        %4615 = vmatpush1.msra.mxu0 0.0
        %4616 = vmatprep.subr.mxu0 0.0
        %4617 = vmatpush1.msra.mxu0 0.0
        %4618 = vmatprep.subr.mxu0 0.0
        %4619 = vmatpush1.msra.mxu0 0.0
        %4620 = vmatprep.subr.mxu0 0.0
        %4621 = vmatpush1.msra.mxu0 0.0
        %4622 = vmatprep.subr.mxu0 0.0
        %4623 = vmatpush1.msra.mxu0 0.0
        %4624 = vmatprep.subr.mxu0 0.0
        %4625 = vmatpush1.msra.mxu0 0.0
        %4626 = vmatprep.subr.mxu0 0.0
        %4627 = vmatpush1.msra.mxu0 0.0
        %4628 = vmatprep.subr.mxu0 0.0
        %4629 = vmatpush1.msra.mxu0 0.0
        %4630 = vmatprep.subr.mxu0 0.0
        %4631 = vmatpush1.msra.mxu0 0.0
        %4632 = vmatprep.subr.mxu0 0.0
        %4633 = vmatpush1.msra.mxu0 0.0
        %4634 = vmatprep.subr.mxu0 0.0
        %4635 = vmatpush1.msra.mxu0 0.0
        %4636 = vmatprep.subr.mxu0 0.0
        %4637 = vmatpush1.msra.mxu0 0.0
        %4638 = vmatprep.subr.mxu0 0.0
        %4639 = vmatpush1.msra.mxu0 0.0
        %4640 = vmatprep.mubr.f32.mxu0 0.0
        %4641 = vmatmul.mubr.f32.gmra.mrb[0].mxu0 %v4302
        %v4642 = vpop.f32.mrb[0].mxu0
        %v4643 = vadd.f32 0.0, %v4642
        %v4644 = vpop.f32.mrb[0].mxu0
        %v4645 = vadd.f32 0.0, %v4644
        %4646 = vdwg.mxu0
        %4647 = vmatprep.subr.mxu0 %v4304
        %4648 = vmatpush1.msra.mxu0 %v4303
        %4649 = vmatprep.subr.mxu0 %v4308
        %4650 = vmatpush1.msra.mxu0 %v4307
        %4651 = vmatprep.subr.mxu0 %v4312
        %4652 = vmatpush1.msra.mxu0 %v4311
        %4653 = vmatprep.subr.mxu0 %v4316
        %4654 = vmatpush1.msra.mxu0 %v4315
        %4655 = vmatprep.subr.mxu0 %v4320
        %4656 = vmatpush1.msra.mxu0 %v4319
        %4657 = vmatprep.subr.mxu0 %v4324
        %4658 = vmatpush1.msra.mxu0 %v4323
        %4659 = vmatprep.subr.mxu0 %v4328
        %4660 = vmatpush1.msra.mxu0 %v4327
        %4661 = vmatprep.subr.mxu0 %v4332
        %4662 = vmatpush1.msra.mxu0 %v4331
        %4663 = vmatprep.subr.mxu0 %v4336
        %4664 = vmatpush1.msra.mxu0 %v4335
        %4665 = vmatprep.subr.mxu0 %v4340
        %4666 = vmatpush1.msra.mxu0 %v4339
        %4667 = vmatprep.subr.mxu0 %v4344
        %4668 = vmatpush1.msra.mxu0 %v4343
        %4669 = vmatprep.subr.mxu0 %v4348
        %4670 = vmatpush1.msra.mxu0 %v4347
        %4671 = vmatprep.subr.mxu0 %v4352
        %4672 = vmatpush1.msra.mxu0 %v4351
        %4673 = vmatprep.subr.mxu0 %v4356
        %4674 = vmatpush1.msra.mxu0 %v4355
        %4675 = vmatprep.subr.mxu0 %v4360
        %4676 = vmatpush1.msra.mxu0 %v4359
        %4677 = vmatprep.subr.mxu0 %v4364
        %4678 = vmatpush1.msra.mxu0 %v4363
        %4679 = vmatprep.subr.mxu0 0.0
        %4680 = vmatpush1.msra.mxu0 0.0
        %4681 = vmatprep.subr.mxu0 0.0
        %4682 = vmatpush1.msra.mxu0 0.0
        %4683 = vmatprep.subr.mxu0 0.0
        %4684 = vmatpush1.msra.mxu0 0.0
        %4685 = vmatprep.subr.mxu0 0.0
        %4686 = vmatpush1.msra.mxu0 0.0
        %4687 = vmatprep.subr.mxu0 0.0
        %4688 = vmatpush1.msra.mxu0 0.0
        %4689 = vmatprep.subr.mxu0 0.0
        %4690 = vmatpush1.msra.mxu0 0.0
        %4691 = vmatprep.subr.mxu0 0.0
        %4692 = vmatpush1.msra.mxu0 0.0
        %4693 = vmatprep.subr.mxu0 0.0
        %4694 = vmatpush1.msra.mxu0 0.0
        %4695 = vmatprep.subr.mxu0 0.0
        %4696 = vmatpush1.msra.mxu0 0.0
        %4697 = vmatprep.subr.mxu0 0.0
        %4698 = vmatpush1.msra.mxu0 0.0
        %4699 = vmatprep.subr.mxu0 0.0
        %4700 = vmatpush1.msra.mxu0 0.0
        %4701 = vmatprep.subr.mxu0 0.0
        %4702 = vmatpush1.msra.mxu0 0.0
        %4703 = vmatprep.subr.mxu0 0.0
        %4704 = vmatpush1.msra.mxu0 0.0
        %4705 = vmatprep.subr.mxu0 0.0
        %4706 = vmatpush1.msra.mxu0 0.0
        %4707 = vmatprep.subr.mxu0 0.0
        %4708 = vmatpush1.msra.mxu0 0.0
        %4709 = vmatprep.subr.mxu0 0.0
        %4710 = vmatpush1.msra.mxu0 0.0
        %4711 = vmatprep.mubr.f32.mxu0 0.0
        %4712 = vmatmul.mubr.f32.gmra.mrb[0].mxu0 %v4501
        %v4713 = vpop.f32.mrb[0].mxu0
        %v4714 = vadd.f32 %v4572, %v4713
        %v4715 = vpop.f32.mrb[0].mxu0
        %v4716 = vadd.f32 %v4574, %v4715
        %4717 = vdwg.mxu0
        %4718 = vmatprep.subr.mxu0 %v4306
        %4719 = vmatpush1.msra.mxu0 %v4305
        %4720 = vmatprep.subr.mxu0 %v4310
        %4721 = vmatpush1.msra.mxu0 %v4309
        %4722 = vmatprep.subr.mxu0 %v4314
        %4723 = vmatpush1.msra.mxu0 %v4313
        %4724 = vmatprep.subr.mxu0 %v4318
        %4725 = vmatpush1.msra.mxu0 %v4317
        %4726 = vmatprep.subr.mxu0 %v4322
        %4727 = vmatpush1.msra.mxu0 %v4321
        %4728 = vmatprep.subr.mxu0 %v4326
        %4729 = vmatpush1.msra.mxu0 %v4325
        %4730 = vmatprep.subr.mxu0 %v4330
        %4731 = vmatpush1.msra.mxu0 %v4329
        %4732 = vmatprep.subr.mxu0 %v4334
        %4733 = vmatpush1.msra.mxu0 %v4333
        %4734 = vmatprep.subr.mxu0 %v4338
        %4735 = vmatpush1.msra.mxu0 %v4337
        %4736 = vmatprep.subr.mxu0 %v4342
        %4737 = vmatpush1.msra.mxu0 %v4341
        %4738 = vmatprep.subr.mxu0 %v4346
        %4739 = vmatpush1.msra.mxu0 %v4345
        %4740 = vmatprep.subr.mxu0 %v4350
        %4741 = vmatpush1.msra.mxu0 %v4349
        %4742 = vmatprep.subr.mxu0 %v4354
        %4743 = vmatpush1.msra.mxu0 %v4353
        %4744 = vmatprep.subr.mxu0 %v4358
        %4745 = vmatpush1.msra.mxu0 %v4357
        %4746 = vmatprep.subr.mxu0 %v4362
        %4747 = vmatpush1.msra.mxu0 %v4361
        %4748 = vmatprep.subr.mxu0 %v4366
        %4749 = vmatpush1.msra.mxu0 %v4365
        %4750 = vmatprep.subr.mxu0 0.0
        %4751 = vmatpush1.msra.mxu0 0.0
        %4752 = vmatprep.subr.mxu0 0.0
        %4753 = vmatpush1.msra.mxu0 0.0
        %4754 = vmatprep.subr.mxu0 0.0
        %4755 = vmatpush1.msra.mxu0 0.0
        %4756 = vmatprep.subr.mxu0 0.0
        %4757 = vmatpush1.msra.mxu0 0.0
        %4758 = vmatprep.subr.mxu0 0.0
        %4759 = vmatpush1.msra.mxu0 0.0
        %4760 = vmatprep.subr.mxu0 0.0
        %4761 = vmatpush1.msra.mxu0 0.0
        %4762 = vmatprep.subr.mxu0 0.0
        %4763 = vmatpush1.msra.mxu0 0.0
        %4764 = vmatprep.subr.mxu0 0.0
        %4765 = vmatpush1.msra.mxu0 0.0
        %4766 = vmatprep.subr.mxu0 0.0
        %4767 = vmatpush1.msra.mxu0 0.0
        %4768 = vmatprep.subr.mxu0 0.0
        %4769 = vmatpush1.msra.mxu0 0.0
        %4770 = vmatprep.subr.mxu0 0.0
        %4771 = vmatpush1.msra.mxu0 0.0
        %4772 = vmatprep.subr.mxu0 0.0
        %4773 = vmatpush1.msra.mxu0 0.0
        %4774 = vmatprep.subr.mxu0 0.0
        %4775 = vmatpush1.msra.mxu0 0.0
        %4776 = vmatprep.subr.mxu0 0.0
        %4777 = vmatpush1.msra.mxu0 0.0
        %4778 = vmatprep.subr.mxu0 0.0
        %4779 = vmatpush1.msra.mxu0 0.0
        %4780 = vmatprep.subr.mxu0 0.0
        %4781 = vmatpush1.msra.mxu0 0.0
        %4782 = vmatprep.mubr.f32.mxu0 0.0
        %4783 = vmatmul.mubr.f32.gmra.mrb[0].mxu0 %v4501
        %v4784 = vpop.f32.mrb[0].mxu0
        %v4785 = vadd.f32 %v4643, %v4784
        %v4786 = vpop.f32.mrb[0].mxu0
        %v4787 = vadd.f32 %v4645, %v4786
        %4788 = vdwg.mxu0
        %4789 = vmatprep.subr.mxu0 %v4434
        %4790 = vmatpush1.msra.mxu0 %v4433
        %4791 = vmatprep.subr.mxu0 %v4438
        %4792 = vmatpush1.msra.mxu0 %v4437
        %4793 = vmatprep.subr.mxu0 %v4442
        %4794 = vmatpush1.msra.mxu0 %v4441
        %4795 = vmatprep.subr.mxu0 %v4446
        %4796 = vmatpush1.msra.mxu0 %v4445
        %4797 = vmatprep.subr.mxu0 %v4450
        %4798 = vmatpush1.msra.mxu0 %v4449
        %4799 = vmatprep.subr.mxu0 %v4454
        %4800 = vmatpush1.msra.mxu0 %v4453
        %4801 = vmatprep.subr.mxu0 %v4458
        %4802 = vmatpush1.msra.mxu0 %v4457
        %4803 = vmatprep.subr.mxu0 %v4462
        %4804 = vmatpush1.msra.mxu0 %v4461
        %4805 = vmatprep.subr.mxu0 %v4466
        %4806 = vmatpush1.msra.mxu0 %v4465
        %4807 = vmatprep.subr.mxu0 %v4470
        %4808 = vmatpush1.msra.mxu0 %v4469
        %4809 = vmatprep.subr.mxu0 %v4474
        %4810 = vmatpush1.msra.mxu0 %v4473
        %4811 = vmatprep.subr.mxu0 %v4478
        %4812 = vmatpush1.msra.mxu0 %v4477
        %4813 = vmatprep.subr.mxu0 %v4482
        %4814 = vmatpush1.msra.mxu0 %v4481
        %4815 = vmatprep.subr.mxu0 %v4486
        %4816 = vmatpush1.msra.mxu0 %v4485
        %4817 = vmatprep.subr.mxu0 %v4490
        %4818 = vmatpush1.msra.mxu0 %v4489
        %4819 = vmatprep.subr.mxu0 %v4494
        %4820 = vmatpush1.msra.mxu0 %v4493
        %4821 = vmatprep.subr.mxu0 0.0
        %4822 = vmatpush1.msra.mxu0 0.0
        %4823 = vmatprep.subr.mxu0 0.0
        %4824 = vmatpush1.msra.mxu0 0.0
        %4825 = vmatprep.subr.mxu0 0.0
        %4826 = vmatpush1.msra.mxu0 0.0
        %4827 = vmatprep.subr.mxu0 0.0
        %4828 = vmatpush1.msra.mxu0 0.0
        %4829 = vmatprep.subr.mxu0 0.0
        %4830 = vmatpush1.msra.mxu0 0.0
        %4831 = vmatprep.subr.mxu0 0.0
        %4832 = vmatpush1.msra.mxu0 0.0
        %4833 = vmatprep.subr.mxu0 0.0
        %4834 = vmatpush1.msra.mxu0 0.0
        %4835 = vmatprep.subr.mxu0 0.0
        %4836 = vmatpush1.msra.mxu0 0.0
        %4837 = vmatprep.subr.mxu0 0.0
        %4838 = vmatpush1.msra.mxu0 0.0
        %4839 = vmatprep.subr.mxu0 0.0
        %4840 = vmatpush1.msra.mxu0 0.0
        %4841 = vmatprep.subr.mxu0 0.0
        %4842 = vmatpush1.msra.mxu0 0.0
        %4843 = vmatprep.subr.mxu0 0.0
        %4844 = vmatpush1.msra.mxu0 0.0
        %4845 = vmatprep.subr.mxu0 0.0
        %4846 = vmatpush1.msra.mxu0 0.0
        %4847 = vmatprep.subr.mxu0 0.0
        %4848 = vmatpush1.msra.mxu0 0.0
        %4849 = vmatprep.subr.mxu0 0.0
        %4850 = vmatpush1.msra.mxu0 0.0
        %4851 = vmatprep.subr.mxu0 0.0
        %4852 = vmatpush1.msra.mxu0 0.0
        %4853 = vmatprep.mubr.f32.mxu0 0.0
        %4854 = vmatmul.mubr.f32.gmra.mrb[0].mxu0 %v4504
        %v4855 = vpop.f32.mrb[0].mxu0
        %v4856 = vadd.f32 0.0, %v4855
        %v4857 = vpop.f32.mrb[0].mxu0
        %v4858 = vadd.f32 0.0, %v4857
        %4859 = vdwg.mxu0
        %4860 = vmatprep.subr.mxu0 %v4436
        %4861 = vmatpush1.msra.mxu0 %v4435
        %4862 = vmatprep.subr.mxu0 %v4440
        %4863 = vmatpush1.msra.mxu0 %v4439
        %4864 = vmatprep.subr.mxu0 %v4444
        %4865 = vmatpush1.msra.mxu0 %v4443
        %4866 = vmatprep.subr.mxu0 %v4448
        %4867 = vmatpush1.msra.mxu0 %v4447
        %4868 = vmatprep.subr.mxu0 %v4452
        %4869 = vmatpush1.msra.mxu0 %v4451
        %4870 = vmatprep.subr.mxu0 %v4456
        %4871 = vmatpush1.msra.mxu0 %v4455
        %4872 = vmatprep.subr.mxu0 %v4460
        %4873 = vmatpush1.msra.mxu0 %v4459
        %4874 = vmatprep.subr.mxu0 %v4464
        %4875 = vmatpush1.msra.mxu0 %v4463
        %4876 = vmatprep.subr.mxu0 %v4468
        %4877 = vmatpush1.msra.mxu0 %v4467
        %4878 = vmatprep.subr.mxu0 %v4472
        %4879 = vmatpush1.msra.mxu0 %v4471
        %4880 = vmatprep.subr.mxu0 %v4476
        %4881 = vmatpush1.msra.mxu0 %v4475
        %4882 = vmatprep.subr.mxu0 %v4480
        %4883 = vmatpush1.msra.mxu0 %v4479
        %4884 = vmatprep.subr.mxu0 %v4484
        %4885 = vmatpush1.msra.mxu0 %v4483
        %4886 = vmatprep.subr.mxu0 %v4488
        %4887 = vmatpush1.msra.mxu0 %v4487
        %4888 = vmatprep.subr.mxu0 %v4492
        %4889 = vmatpush1.msra.mxu0 %v4491
        %4890 = vmatprep.subr.mxu0 %v4496
        %4891 = vmatpush1.msra.mxu0 %v4495
        %4892 = vmatprep.subr.mxu0 0.0
        %4893 = vmatpush1.msra.mxu0 0.0
        %4894 = vmatprep.subr.mxu0 0.0
        %4895 = vmatpush1.msra.mxu0 0.0
        %4896 = vmatprep.subr.mxu0 0.0
        %4897 = vmatpush1.msra.mxu0 0.0
        %4898 = vmatprep.subr.mxu0 0.0
        %4899 = vmatpush1.msra.mxu0 0.0
        %4900 = vmatprep.subr.mxu0 0.0
        %4901 = vmatpush1.msra.mxu0 0.0
        %4902 = vmatprep.subr.mxu0 0.0
        %4903 = vmatpush1.msra.mxu0 0.0
        %4904 = vmatprep.subr.mxu0 0.0
        %4905 = vmatpush1.msra.mxu0 0.0
        %4906 = vmatprep.subr.mxu0 0.0
        %4907 = vmatpush1.msra.mxu0 0.0
        %4908 = vmatprep.subr.mxu0 0.0
        %4909 = vmatpush1.msra.mxu0 0.0
        %4910 = vmatprep.subr.mxu0 0.0
        %4911 = vmatpush1.msra.mxu0 0.0
        %4912 = vmatprep.subr.mxu0 0.0
        %4913 = vmatpush1.msra.mxu0 0.0
        %4914 = vmatprep.subr.mxu0 0.0
        %4915 = vmatpush1.msra.mxu0 0.0
        %4916 = vmatprep.subr.mxu0 0.0
        %4917 = vmatpush1.msra.mxu0 0.0
        %4918 = vmatprep.subr.mxu0 0.0
        %4919 = vmatpush1.msra.mxu0 0.0
        %4920 = vmatprep.subr.mxu0 0.0
        %4921 = vmatpush1.msra.mxu0 0.0
        %4922 = vmatprep.subr.mxu0 0.0
        %4923 = vmatpush1.msra.mxu0 0.0
        %4924 = vmatprep.mubr.f32.mxu0 0.0
        %4925 = vmatmul.mubr.f32.gmra.mrb[0].mxu0 %v4504
        %v4926 = vpop.f32.mrb[0].mxu0
        %v4927 = vadd.f32 0.0, %v4926
        %v4928 = vpop.f32.mrb[0].mxu0
        %v4929 = vadd.f32 0.0, %v4928
        %4930 = vdwg.mxu0
        %v4931 = vadd.f32 %v4714, %v4856
        %v4932 = vadd.f32 %v4716, %v4858
        %v4933 = vadd.f32 %v4785, %v4927
        %v4934 = vadd.f32 %v4787, %v4929
        %v4936 = vlaneseq
        %v4937 = vshrl.u32 %v4936, 7
        %v4938 = vsub.s32 0, %v4937
        %v4939 = vrot.slane %v4497, %v4938
        %v4940 = vlaneseq
        %v4941 = vshrl.u32 %v4940, 7
        %v4942 = vsub.s32 1, %v4941
        %v4943 = vrot.slane %v4497, %v4942
        %v4944 = vlaneseq
        %v4945 = vshrl.u32 %v4944, 7
        %v4946 = vsub.s32 2, %v4945
        %v4947 = vrot.slane %v4497, %v4946
        %v4948 = vlaneseq
        %v4949 = vshrl.u32 %v4948, 7
        %v4950 = vsub.s32 3, %v4949
        %v4951 = vrot.slane %v4497, %v4950
        %v4956 = vadd.f32 %v4931, %v4939
        %v4957 = vadd.f32 %v4932, %v4943
        %v4958 = vadd.f32 %v4933, %v4947
        %v4959 = vadd.f32 %v4934, %v4951
        %v4964 = vcombine.low %v4956, %v4957
        %v4965 = vcombine.high %v4956, %v4957
        %v4966 = vcombine.low %v4958, %v4959
        %v4967 = vcombine.high %v4958, %v4959
        %v4969 = vunpack.c.l.s4 1983009808
        %v4970 = vunpack.c.0.s8 %v4969
        %v4971 = vlaneseq
        %v4972 = vshrl.u32 %v4971, 7
        %v4973 = vsub.s32 %v4970, %v4972
        %v4974 = vrot.slane %v4964, %v4973
        %v4976 = vunpack.c.l.s4 1983009808
        %v4977 = vunpack.c.0.s8 %v4976
        %v4978 = vlaneseq
        %v4979 = vshrl.u32 %v4978, 7
        %v4980 = vsub.s32 %v4977, %v4979
        %v4981 = vrot.slane %v4965, %v4980
        %v4983 = vunpack.c.l.s4 1983009808
        %v4984 = vunpack.c.0.s8 %v4983
        %v4985 = vlaneseq
        %v4986 = vshrl.u32 %v4985, 7
        %v4987 = vsub.s32 %v4984, %v4986
        %v4988 = vrot.slane %v4966, %v4987
        %v4990 = vunpack.c.l.s4 1983009808
        %v4991 = vunpack.c.0.s8 %v4990
        %v4992 = vlaneseq
        %v4993 = vshrl.u32 %v4992, 7
        %v4994 = vsub.s32 %v4991, %v4993
        %v4995 = vrot.slane %v4967, %v4994
        %v4996 = vcombine.low %v4974, %v4988
        %v4997 = vcombine.high %v4974, %v4988
        %v4998 = vcombine.low %v4981, %v4995
        %v4999 = vcombine.high %v4981, %v4995
        %v5005 = vunpack.c.l.s4 1935823168
        %v5006 = vunpack.c.0.s8 %v5005
        %v5007 = vlaneseq
        %v5008 = vshrl.u32 %v5007, 7
        %v5009 = vsub.s32 %v5006, %v5008
        %v5010 = vrot.slane %v4996, %v5009
        %v5012 = vunpack.c.l.s4 1935823168
        %v5013 = vunpack.c.0.s8 %v5012
        %v5014 = vlaneseq
        %v5015 = vshrl.u32 %v5014, 7
        %v5016 = vsub.s32 %v5013, %v5015
        %v5017 = vrot.slane %v4997, %v5016
        %v5019 = vunpack.c.l.s4 1935823168
        %v5020 = vunpack.c.0.s8 %v5019
        %v5021 = vlaneseq
        %v5022 = vshrl.u32 %v5021, 7
        %v5023 = vsub.s32 %v5020, %v5022
        %v5024 = vrot.slane %v4998, %v5023
        %v5026 = vunpack.c.l.s4 1935823168
        %v5027 = vunpack.c.0.s8 %v5026
        %v5028 = vlaneseq
        %v5029 = vshrl.u32 %v5028, 7
        %v5030 = vsub.s32 %v5027, %v5029
        %v5031 = vrot.slane %v4999, %v5030
        %v5032 = vld [vmem:[%s11] sm:$0xff]
        %v5033 = vld [vmem:[%s11 + $0x8] sm:$0xff]
        %v5034 = vld [vmem:[%s11 + $0x10] sm:$0xff]
        %v5035 = vld [vmem:[%s11 + $0x18] sm:$0xff]
        %v5036 = vld [vmem:[%s11 + $0x20] sm:$0xff]
        %v5037 = vld [vmem:[%s11 + $0x28] sm:$0xff]
        %v5038 = vld [vmem:[%s11 + $0x30] sm:$0xff]
        %v5039 = vld [vmem:[%s11 + $0x38] sm:$0xff]
        %v5040 = vld [vmem:[%s11 + $0x40] sm:$0xff]
        %v5041 = vld [vmem:[%s11 + $0x48] sm:$0xff]
        %v5042 = vld [vmem:[%s11 + $0x50] sm:$0xff]
        %v5043 = vld [vmem:[%s11 + $0x58] sm:$0xff]
        %v5044 = vld [vmem:[%s11 + $0x60] sm:$0xff]
        %v5045 = vld [vmem:[%s11 + $0x68] sm:$0xff]
        %v5046 = vld [vmem:[%s11 + $0x70] sm:$0xff]
        %v5047 = vld [vmem:[%s11 + $0x78] sm:$0xff]
        %v5048 = vld [vmem:[%s11 + $0x80] sm:$0xff]
        %v5049 = vld [vmem:[%s11 + $0x88] sm:$0xff]
        %v5050 = vld [vmem:[%s11 + $0x90] sm:$0xff]
        %v5051 = vld [vmem:[%s11 + $0x98] sm:$0xff]
        %v5052 = vld [vmem:[%s11 + $0xa0] sm:$0xff]
        %v5053 = vld [vmem:[%s11 + $0xa8] sm:$0xff]
        %v5054 = vld [vmem:[%s11 + $0xb0] sm:$0xff]
        %v5055 = vld [vmem:[%s11 + $0xb8] sm:$0xff]
        %v5056 = vld [vmem:[%s11 + $0xc0] sm:$0xff]
        %v5057 = vld [vmem:[%s11 + $0xc8] sm:$0xff]
        %v5058 = vld [vmem:[%s11 + $0xd0] sm:$0xff]
        %v5059 = vld [vmem:[%s11 + $0xd8] sm:$0xff]
        %v5060 = vld [vmem:[%s11 + $0xe0] sm:$0xff]
        %v5061 = vld [vmem:[%s11 + $0xe8] sm:$0xff]
        %v5062 = vld [vmem:[%s11 + $0xf0] sm:$0xff]
        %v5063 = vld [vmem:[%s11 + $0xf8] sm:$0xff]
        %s5064 = scalar_lea.vmem %s11, 256
        %v5065 = vld [vmem:[%s5064] sm:$0xff]
        %v5066 = vld [vmem:[%s5064 + $0x8] sm:$0xff]
        %v5067 = vld [vmem:[%s5064 + $0x10] sm:$0xff]
        %v5068 = vld [vmem:[%s5064 + $0x18] sm:$0xff]
        %v5069 = vld [vmem:[%s5064 + $0x20] sm:$0xff]
        %v5070 = vld [vmem:[%s5064 + $0x28] sm:$0xff]
        %v5071 = vld [vmem:[%s5064 + $0x30] sm:$0xff]
        %v5072 = vld [vmem:[%s5064 + $0x38] sm:$0xff]
        %v5073 = vld [vmem:[%s5064 + $0x40] sm:$0xff]
        %v5074 = vld [vmem:[%s5064 + $0x48] sm:$0xff]
        %v5075 = vld [vmem:[%s5064 + $0x50] sm:$0xff]
        %v5076 = vld [vmem:[%s5064 + $0x58] sm:$0xff]
        %v5077 = vld [vmem:[%s5064 + $0x60] sm:$0xff]
        %v5078 = vld [vmem:[%s5064 + $0x68] sm:$0xff]
        %v5079 = vld [vmem:[%s5064 + $0x70] sm:$0xff]
        %v5080 = vld [vmem:[%s5064 + $0x78] sm:$0xff]
        %v5081 = vld [vmem:[%s5064 + $0x80] sm:$0xff]
        %v5082 = vld [vmem:[%s5064 + $0x88] sm:$0xff]
        %v5083 = vld [vmem:[%s5064 + $0x90] sm:$0xff]
        %v5084 = vld [vmem:[%s5064 + $0x98] sm:$0xff]
        %v5085 = vld [vmem:[%s5064 + $0xa0] sm:$0xff]
        %v5086 = vld [vmem:[%s5064 + $0xa8] sm:$0xff]
        %v5087 = vld [vmem:[%s5064 + $0xb0] sm:$0xff]
        %v5088 = vld [vmem:[%s5064 + $0xb8] sm:$0xff]
        %v5089 = vld [vmem:[%s5064 + $0xc0] sm:$0xff]
        %v5090 = vld [vmem:[%s5064 + $0xc8] sm:$0xff]
        %v5091 = vld [vmem:[%s5064 + $0xd0] sm:$0xff]
        %v5092 = vld [vmem:[%s5064 + $0xd8] sm:$0xff]
        %v5093 = vld [vmem:[%s5064 + $0xe0] sm:$0xff]
        %v5094 = vld [vmem:[%s5064 + $0xe8] sm:$0xff]
        %v5095 = vld [vmem:[%s5064 + $0xf0] sm:$0xff]
        %v5096 = vld [vmem:[%s5064 + $0xf8] sm:$0xff]
        %s5097 = scalar_lea.vmem %s11, 512
        %v5098 = vld [vmem:[%s5097] sm:$0xff]
        %v5099 = vld [vmem:[%s5097 + $0x8] sm:$0xff]
        %v5100 = vld [vmem:[%s5097 + $0x10] sm:$0xff]
        %v5101 = vld [vmem:[%s5097 + $0x18] sm:$0xff]
        %v5102 = vld [vmem:[%s5097 + $0x20] sm:$0xff]
        %v5103 = vld [vmem:[%s5097 + $0x28] sm:$0xff]
        %v5104 = vld [vmem:[%s5097 + $0x30] sm:$0xff]
        %v5105 = vld [vmem:[%s5097 + $0x38] sm:$0xff]
        %v5106 = vld [vmem:[%s5097 + $0x40] sm:$0xff]
        %v5107 = vld [vmem:[%s5097 + $0x48] sm:$0xff]
        %v5108 = vld [vmem:[%s5097 + $0x50] sm:$0xff]
        %v5109 = vld [vmem:[%s5097 + $0x58] sm:$0xff]
        %v5110 = vld [vmem:[%s5097 + $0x60] sm:$0xff]
        %v5111 = vld [vmem:[%s5097 + $0x68] sm:$0xff]
        %v5112 = vld [vmem:[%s5097 + $0x70] sm:$0xff]
        %v5113 = vld [vmem:[%s5097 + $0x78] sm:$0xff]
        %v5114 = vld [vmem:[%s5097 + $0x80] sm:$0xff]
        %v5115 = vld [vmem:[%s5097 + $0x88] sm:$0xff]
        %v5116 = vld [vmem:[%s5097 + $0x90] sm:$0xff]
        %v5117 = vld [vmem:[%s5097 + $0x98] sm:$0xff]
        %v5118 = vld [vmem:[%s5097 + $0xa0] sm:$0xff]
        %v5119 = vld [vmem:[%s5097 + $0xa8] sm:$0xff]
        %v5120 = vld [vmem:[%s5097 + $0xb0] sm:$0xff]
        %v5121 = vld [vmem:[%s5097 + $0xb8] sm:$0xff]
        %v5122 = vld [vmem:[%s5097 + $0xc0] sm:$0xff]
        %v5123 = vld [vmem:[%s5097 + $0xc8] sm:$0xff]
        %v5124 = vld [vmem:[%s5097 + $0xd0] sm:$0xff]
        %v5125 = vld [vmem:[%s5097 + $0xd8] sm:$0xff]
        %v5126 = vld [vmem:[%s5097 + $0xe0] sm:$0xff]
        %v5127 = vld [vmem:[%s5097 + $0xe8] sm:$0xff]
        %v5128 = vld [vmem:[%s5097 + $0xf0] sm:$0xff]
        %v5129 = vld [vmem:[%s5097 + $0xf8] sm:$0xff]
        %v5130 = vld [vmem:[#allocation16] sm:$0x1]
        %v5135 = vcombine.low %v5010, %v5017
        %v5136 = vcombine.high %v5010, %v5017
        %v5137 = vcombine.low %v5024, %v5031
        %v5138 = vcombine.high %v5024, %v5031
        %v5139 = vrot.slane %v5135, 7
        %v5140 = vrot.slane %v5136, 7
        %v5141 = vrot.slane %v5137, 7
        %v5142 = vsel %vm594, %v5139, %v5141
        %v5143 = vrot.slane %v5138, 7
        %v5144 = vsel %vm594, %v5140, %v5143
        %v5149 = vsel %vm594, 0.0, %v5139
        %v5150 = vsel %vm594, 0.0, %v5140
        %v5151 = vrot.slane %v5135, 1
        %v5152 = vrot.slane %v5137, 1
        %v5153 = vsel %vm598, %v5151, %v5152
        %v5154 = vrot.slane %v5136, 1
        %v5155 = vrot.slane %v5138, 1
        %v5156 = vsel %vm598, %v5154, %v5155
        %v5161 = vsel %vm598, %v5152, 0.0
        %v5162 = vsel %vm598, %v5155, 0.0
        %5167 = vmatprep.subr.mxu0 0.0
        %5168 = vmatpush1.msra.mxu0 %v5065
        %5169 = vmatprep.subr.mxu0 0.0
        %5170 = vmatpush1.msra.mxu0 %v5066
        %5171 = vmatprep.subr.mxu0 0.0
        %5172 = vmatpush1.msra.mxu0 %v5067
        %5173 = vmatprep.subr.mxu0 0.0
        %5174 = vmatpush1.msra.mxu0 %v5068
        %5175 = vmatprep.subr.mxu0 0.0
        %5176 = vmatpush1.msra.mxu0 %v5069
        %5177 = vmatprep.subr.mxu0 0.0
        %5178 = vmatpush1.msra.mxu0 %v5070
        %5179 = vmatprep.subr.mxu0 0.0
        %5180 = vmatpush1.msra.mxu0 %v5071
        %5181 = vmatprep.subr.mxu0 0.0
        %5182 = vmatpush1.msra.mxu0 %v5072
        %5183 = vmatprep.subr.mxu0 0.0
        %5184 = vmatpush1.msra.mxu0 %v5073
        %5185 = vmatprep.subr.mxu0 0.0
        %5186 = vmatpush1.msra.mxu0 %v5074
        %5187 = vmatprep.subr.mxu0 0.0
        %5188 = vmatpush1.msra.mxu0 %v5075
        %5189 = vmatprep.subr.mxu0 0.0
        %5190 = vmatpush1.msra.mxu0 %v5076
        %5191 = vmatprep.subr.mxu0 0.0
        %5192 = vmatpush1.msra.mxu0 %v5077
        %5193 = vmatprep.subr.mxu0 0.0
        %5194 = vmatpush1.msra.mxu0 %v5078
        %5195 = vmatprep.subr.mxu0 0.0
        %5196 = vmatpush1.msra.mxu0 %v5079
        %5197 = vmatprep.subr.mxu0 0.0
        %5198 = vmatpush1.msra.mxu0 %v5080
        %5199 = vmatprep.subr.mxu0 0.0
        %5200 = vmatpush1.msra.mxu0 %v5081
        %5201 = vmatprep.subr.mxu0 0.0
        %5202 = vmatpush1.msra.mxu0 %v5082
        %5203 = vmatprep.subr.mxu0 0.0
        %5204 = vmatpush1.msra.mxu0 %v5083
        %5205 = vmatprep.subr.mxu0 0.0
        %5206 = vmatpush1.msra.mxu0 %v5084
        %5207 = vmatprep.subr.mxu0 0.0
        %5208 = vmatpush1.msra.mxu0 %v5085
        %5209 = vmatprep.subr.mxu0 0.0
        %5210 = vmatpush1.msra.mxu0 %v5086
        %5211 = vmatprep.subr.mxu0 0.0
        %5212 = vmatpush1.msra.mxu0 %v5087
        %5213 = vmatprep.subr.mxu0 0.0
        %5214 = vmatpush1.msra.mxu0 %v5088
        %5215 = vmatprep.subr.mxu0 0.0
        %5216 = vmatpush1.msra.mxu0 %v5089
        %5217 = vmatprep.subr.mxu0 0.0
        %5218 = vmatpush1.msra.mxu0 %v5090
        %5219 = vmatprep.subr.mxu0 0.0
        %5220 = vmatpush1.msra.mxu0 %v5091
        %5221 = vmatprep.subr.mxu0 0.0
        %5222 = vmatpush1.msra.mxu0 %v5092
        %5223 = vmatprep.subr.mxu0 0.0
        %5224 = vmatpush1.msra.mxu0 %v5093
        %5225 = vmatprep.subr.mxu0 0.0
        %5226 = vmatpush1.msra.mxu0 %v5094
        %5227 = vmatprep.subr.mxu0 0.0
        %5228 = vmatpush1.msra.mxu0 %v5095
        %5229 = vmatprep.subr.mxu0 0.0
        %5230 = vmatpush1.msra.mxu0 %v5096
        %5231 = vmatprep.mubr.f32.mxu0 %v5136
        %5232 = vmatmul.mubr.f32.gmra.mrb[0].mxu0 %v5135
        %v5233 = vpop.f32.mrb[0].mxu0
        %v5234 = vadd.f32 0.0, %v5233
        %v5235 = vpop.f32.mrb[0].mxu0
        %5236 = vmatprep.mubr.f32.mxu0 %v5138
        %5237 = vmatmul.mubr.f32.gmra.mrb[0].mxu0 %v5137
        %v5238 = vpop.f32.mrb[0].mxu0
        %v5239 = vadd.f32 0.0, %v5238
        %v5240 = vpop.f32.mrb[0].mxu0
        %5241 = vdwg.mxu0
        %5242 = vmatprep.subr.mxu0 0.0
        %5243 = vmatpush1.msra.mxu0 %v5032
        %5244 = vmatprep.subr.mxu0 0.0
        %5245 = vmatpush1.msra.mxu0 %v5033
        %5246 = vmatprep.subr.mxu0 0.0
        %5247 = vmatpush1.msra.mxu0 %v5034
        %5248 = vmatprep.subr.mxu0 0.0
        %5249 = vmatpush1.msra.mxu0 %v5035
        %5250 = vmatprep.subr.mxu0 0.0
        %5251 = vmatpush1.msra.mxu0 %v5036
        %5252 = vmatprep.subr.mxu0 0.0
        %5253 = vmatpush1.msra.mxu0 %v5037
        %5254 = vmatprep.subr.mxu0 0.0
        %5255 = vmatpush1.msra.mxu0 %v5038
        %5256 = vmatprep.subr.mxu0 0.0
        %5257 = vmatpush1.msra.mxu0 %v5039
        %5258 = vmatprep.subr.mxu0 0.0
        %5259 = vmatpush1.msra.mxu0 %v5040
        %5260 = vmatprep.subr.mxu0 0.0
        %5261 = vmatpush1.msra.mxu0 %v5041
        %5262 = vmatprep.subr.mxu0 0.0
        %5263 = vmatpush1.msra.mxu0 %v5042
        %5264 = vmatprep.subr.mxu0 0.0
        %5265 = vmatpush1.msra.mxu0 %v5043
        %5266 = vmatprep.subr.mxu0 0.0
        %5267 = vmatpush1.msra.mxu0 %v5044
        %5268 = vmatprep.subr.mxu0 0.0
        %5269 = vmatpush1.msra.mxu0 %v5045
        %5270 = vmatprep.subr.mxu0 0.0
        %5271 = vmatpush1.msra.mxu0 %v5046
        %5272 = vmatprep.subr.mxu0 0.0
        %5273 = vmatpush1.msra.mxu0 %v5047
        %5274 = vmatprep.subr.mxu0 0.0
        %5275 = vmatpush1.msra.mxu0 %v5048
        %5276 = vmatprep.subr.mxu0 0.0
        %5277 = vmatpush1.msra.mxu0 %v5049
        %5278 = vmatprep.subr.mxu0 0.0
        %5279 = vmatpush1.msra.mxu0 %v5050
        %5280 = vmatprep.subr.mxu0 0.0
        %5281 = vmatpush1.msra.mxu0 %v5051
        %5282 = vmatprep.subr.mxu0 0.0
        %5283 = vmatpush1.msra.mxu0 %v5052
        %5284 = vmatprep.subr.mxu0 0.0
        %5285 = vmatpush1.msra.mxu0 %v5053
        %5286 = vmatprep.subr.mxu0 0.0
        %5287 = vmatpush1.msra.mxu0 %v5054
        %5288 = vmatprep.subr.mxu0 0.0
        %5289 = vmatpush1.msra.mxu0 %v5055
        %5290 = vmatprep.subr.mxu0 0.0
        %5291 = vmatpush1.msra.mxu0 %v5056
        %5292 = vmatprep.subr.mxu0 0.0
        %5293 = vmatpush1.msra.mxu0 %v5057
        %5294 = vmatprep.subr.mxu0 0.0
        %5295 = vmatpush1.msra.mxu0 %v5058
        %5296 = vmatprep.subr.mxu0 0.0
        %5297 = vmatpush1.msra.mxu0 %v5059
        %5298 = vmatprep.subr.mxu0 0.0
        %5299 = vmatpush1.msra.mxu0 %v5060
        %5300 = vmatprep.subr.mxu0 0.0
        %5301 = vmatpush1.msra.mxu0 %v5061
        %5302 = vmatprep.subr.mxu0 0.0
        %5303 = vmatpush1.msra.mxu0 %v5062
        %5304 = vmatprep.subr.mxu0 0.0
        %5305 = vmatpush1.msra.mxu0 %v5063
        %5306 = vmatprep.mubr.f32.mxu0 %v5150
        %5307 = vmatmul.mubr.f32.gmra.mrb[0].mxu0 %v5149
        %v5308 = vpop.f32.mrb[0].mxu0
        %v5309 = vadd.f32 %v5234, %v5308
        %v5310 = vpop.f32.mrb[0].mxu0
        %5311 = vmatprep.mubr.f32.mxu0 %v5144
        %5312 = vmatmul.mubr.f32.gmra.mrb[0].mxu0 %v5142
        %v5313 = vpop.f32.mrb[0].mxu0
        %v5314 = vadd.f32 %v5239, %v5313
        %v5315 = vpop.f32.mrb[0].mxu0
        %5316 = vdwg.mxu0
        %5317 = vmatprep.subr.mxu0 0.0
        %5318 = vmatpush1.msra.mxu0 %v5098
        %5319 = vmatprep.subr.mxu0 0.0
        %5320 = vmatpush1.msra.mxu0 %v5099
        %5321 = vmatprep.subr.mxu0 0.0
        %5322 = vmatpush1.msra.mxu0 %v5100
        %5323 = vmatprep.subr.mxu0 0.0
        %5324 = vmatpush1.msra.mxu0 %v5101
        %5325 = vmatprep.subr.mxu0 0.0
        %5326 = vmatpush1.msra.mxu0 %v5102
        %5327 = vmatprep.subr.mxu0 0.0
        %5328 = vmatpush1.msra.mxu0 %v5103
        %5329 = vmatprep.subr.mxu0 0.0
        %5330 = vmatpush1.msra.mxu0 %v5104
        %5331 = vmatprep.subr.mxu0 0.0
        %5332 = vmatpush1.msra.mxu0 %v5105
        %5333 = vmatprep.subr.mxu0 0.0
        %5334 = vmatpush1.msra.mxu0 %v5106
        %5335 = vmatprep.subr.mxu0 0.0
        %5336 = vmatpush1.msra.mxu0 %v5107
        %5337 = vmatprep.subr.mxu0 0.0
        %5338 = vmatpush1.msra.mxu0 %v5108
        %5339 = vmatprep.subr.mxu0 0.0
        %5340 = vmatpush1.msra.mxu0 %v5109
        %5341 = vmatprep.subr.mxu0 0.0
        %5342 = vmatpush1.msra.mxu0 %v5110
        %5343 = vmatprep.subr.mxu0 0.0
        %5344 = vmatpush1.msra.mxu0 %v5111
        %5345 = vmatprep.subr.mxu0 0.0
        %5346 = vmatpush1.msra.mxu0 %v5112
        %5347 = vmatprep.subr.mxu0 0.0
        %5348 = vmatpush1.msra.mxu0 %v5113
        %5349 = vmatprep.subr.mxu0 0.0
        %5350 = vmatpush1.msra.mxu0 %v5114
        %5351 = vmatprep.subr.mxu0 0.0
        %5352 = vmatpush1.msra.mxu0 %v5115
        %5353 = vmatprep.subr.mxu0 0.0
        %5354 = vmatpush1.msra.mxu0 %v5116
        %5355 = vmatprep.subr.mxu0 0.0
        %5356 = vmatpush1.msra.mxu0 %v5117
        %5357 = vmatprep.subr.mxu0 0.0
        %5358 = vmatpush1.msra.mxu0 %v5118
        %5359 = vmatprep.subr.mxu0 0.0
        %5360 = vmatpush1.msra.mxu0 %v5119
        %5361 = vmatprep.subr.mxu0 0.0
        %5362 = vmatpush1.msra.mxu0 %v5120
        %5363 = vmatprep.subr.mxu0 0.0
        %5364 = vmatpush1.msra.mxu0 %v5121
        %5365 = vmatprep.subr.mxu0 0.0
        %5366 = vmatpush1.msra.mxu0 %v5122
        %5367 = vmatprep.subr.mxu0 0.0
        %5368 = vmatpush1.msra.mxu0 %v5123
        %5369 = vmatprep.subr.mxu0 0.0
        %5370 = vmatpush1.msra.mxu0 %v5124
        %5371 = vmatprep.subr.mxu0 0.0
        %5372 = vmatpush1.msra.mxu0 %v5125
        %5373 = vmatprep.subr.mxu0 0.0
        %5374 = vmatpush1.msra.mxu0 %v5126
        %5375 = vmatprep.subr.mxu0 0.0
        %5376 = vmatpush1.msra.mxu0 %v5127
        %5377 = vmatprep.subr.mxu0 0.0
        %5378 = vmatpush1.msra.mxu0 %v5128
        %5379 = vmatprep.subr.mxu0 0.0
        %5380 = vmatpush1.msra.mxu0 %v5129
        %5381 = vmatprep.mubr.f32.mxu0 %v5156
        %5382 = vmatmul.mubr.f32.gmra.mrb[0].mxu0 %v5153
        %v5383 = vpop.f32.mrb[0].mxu0
        %v5384 = vadd.f32 0.0, %v5383
        %v5385 = vpop.f32.mrb[0].mxu0
        %5386 = vmatprep.mubr.f32.mxu0 %v5162
        %5387 = vmatmul.mubr.f32.gmra.mrb[0].mxu0 %v5161
        %v5388 = vpop.f32.mrb[0].mxu0
        %v5389 = vadd.f32 0.0, %v5388
        %v5390 = vpop.f32.mrb[0].mxu0
        %5391 = vdwg.mxu0
        %v5392 = vadd.f32 %v5309, %v5384
        %v5393 = vadd.f32 %v5314, %v5389
        %v5395 = vlaneseq
        %v5396 = vshrl.u32 %v5395, 7
        %v5397 = vsub.s32 0, %v5396
        %v5398 = vrot.slane %v5130, %v5397
        %v5400 = vadd.f32 %v5392, %v5398
        %v5401 = vadd.f32 %v5393, %v5398
        %5402 = vst.msk [vmem:[%s577] sm:$0xff] %vm1476, %v5400
        %5403 = vst.msk [vmem:[%s577 + $0x8] sm:$0xff] %vm1476, %v5401
        %p5404 = scmp.lt.s32.totalorder %s30, 1
        %s5405 = scalar_select %p5404, %s30, 1
        %s5406 = smul.addr %s5405, 2
        %s5407 = smul.addr %s5406, 8
        %s5408 = scalar_lea.vmem %s13, %s5407
        // Predicated region
        $region113: #{rcan_forward.1} parent=71 // pred_check
          %p5409 = pneg %p326
        $region114: #{rcan_forward.1} parent=71 // pred_check_branch
          %5411 = sbr.rel (%p5409) target = $region116
        $region115: #{rcan_forward.1} parent=71 // pred_region
          _
        $region116: #{rcan_forward.1} parent=71 // pred_fallthru
          _
      $region72: #{rcan_forward.1} parent=5 // pred_fallthru
        _
      %p5412 = scmp.le.s32.totalorder 2, %s25
      // Predicated region
      $region117: #{rcan_forward.1} parent=5 // pred_check
        %p5413 = pneg %p5412
      $region118: #{rcan_forward.1} parent=5 // pred_check_branch
        %5415 = sbr.rel (%p5413) target = $region120
      $region119: #{rcan_forward.1} parent=5 // pred_region
        %s5416 = ssub.s32 %s25, 2
        // Predicated region
        $region121: #{rcan_forward.1} parent=119 // pred_check
          %p5417 = pneg %p332
        $region122: #{rcan_forward.1} parent=119 // pred_check_branch
          %5419 = sbr.rel (%p5417) target = $region124
        $region123: #{rcan_forward.1} parent=119 // pred_region
          %p5420 = scmp.lt.s32.totalorder %s31, 1
          %s5421 = scalar_select %p5420, %s31, 1
          %s5422 = smul.addr %s5421, 2
          %s5423 = smul.addr %s5422, 8
          %s5424 = scalar_lea.vmem %s13, %s5423
        $region124: #{rcan_forward.1} parent=119 // pred_fallthru
          _
      $region120: #{rcan_forward.1} parent=5 // pred_fallthru
        _
    $region6: #{rcan_forward.1} parent=1 // loop_footer
      %s29 = sadd.s32 1, %s25
    $region7: #{rcan_forward.1} parent=1 // loop_footer_branch
      %24 = sbr.rel target = $region3
    $region8: #{rcan_forward.1} parent=1 // loop_exit
      _
    %5425 = vsyncpa [#allocation3], 1
    %s5426 = scalar_lea.sflag [#allocation3], 1
    %5427 = vsyncpa %s5426, 1
    %5428 = vsyncpa [#allocation5], 1
    %5429 = vsyncpa [#allocation8], 1
    %5430 = vsyncpa [#allocation11], 1
    %5431 = vsyncpa [#allocation14], 1
    %5432 = vsyncpa [#allocation17], 1

</llo_original>
